<compile_context>
chip_gen: v6e
topology: v6e:2x2x1
jax: 0.10.0
libtpu: 0.0.40
codegen_flags: <defaults>
</compile_context>

<pallas_src>
import jax
import jax.numpy as jnp
import numpy as np
from jax import lax
from jax.experimental import pallas as pl
from jax.experimental.pallas import tpu as pltpu

CHANNELS = 32
KSIZE = 5
PAD = 2
EPS = 1e-5
LANE_PAD = 128  # zero pad on the flattened-spatial (lane) axis; must be >= PAD*W + PAD

# Set to jnp.bfloat16 on v6e/v7x for ~2x MXU throughput (kept f32 here so the
# self-check against the f32 lax.conv reference stays tight).  Elementwise
# BN/ReLU math stays f32 regardless (v5e VPU/EUP have no bf16 path).
MATMUL_DTYPE = jnp.float32


def _make_resblock_kernel(N, C, H, W):
    HW = H * W
    K = KSIZE
    assert LANE_PAD >= PAD * W + PAD

    def kernel(x_ref, w1_ref, b1_ref, g1_ref, bt1_ref,
               w2_ref, b2_ref, g2_ref, bt2_ref,
               out_ref, pad_ref, col_ref):
        # pad_ref : (N, C, HW + 2*LANE_PAD)  zero-padded staging buffer so that a
        #           spatially shifted tap is a plain static lane slice (the H
        #           boundary falls into the zero pad; the W boundary / row wrap
        #           is handled by a static mask).
        # col_ref : (K*K*C, HW)  im2col matrix, reused for every image & stage.
        pad_ref[...] = jnp.zeros_like(pad_ref)

        # static row-wrap masks over the flattened spatial (lane) axis
        w_idx = lax.broadcasted_iota(jnp.int32, (1, HW), 1) % W

        def fill_im2col(n):
            apad = pad_ref[n]                                   # (C, HW + 2*LANE_PAD)
            for kh in range(K):
                for kw in range(K):
                    dh, dw = kh - PAD, kw - PAD
                    start = LANE_PAD + dh * W + dw
                    tap = apad[:, start:start + HW]             # (C, HW)
                    if dw:                                      # mask W-direction row wrap
                        ok = (w_idx + dw >= 0) & (w_idx + dw < W)
                        tap = jnp.where(ok, tap, 0.0)
                    k = kh * K + kw
                    col_ref[k * C:(k + 1) * C, :] = tap

        def conv(acts, w_ref, b_ref):
            # acts: list of N (C, HW) images -> list of N (C, HW) f32 conv+bias maps
            for n in range(N):
                pad_ref[n, :, LANE_PAD:LANE_PAD + HW] = acts[n]  # aligned lane store
            wm = w_ref[...].astype(MATMUL_DTYPE)                 # (C, K*K*C)
            bias = b_ref[...]                                    # (C, 1)
            outs = []
            for n in range(N):
                fill_im2col(n)
                cols = col_ref[...].astype(MATMUL_DTYPE)         # (K*K*C, HW)
                outs.append(jnp.dot(wm, cols, preferred_element_type=jnp.float32)
                            + bias)
            return outs

        def batchnorm(ys, g_ref, bt_ref):
            # training-mode BN over (N, H, W); single-pass sum / sum-of-squares
            inv_cnt = 1.0 / float(N * HW)
            s = sum(jnp.sum(y, axis=1, keepdims=True) for y in ys)        # (C, 1)
            s2 = sum(jnp.sum(y * y, axis=1, keepdims=True) for y in ys)   # (C, 1)
            mean = s * inv_cnt
            var = s2 * inv_cnt - mean * mean                              # biased var
            scale = g_ref[...] * lax.rsqrt(var + EPS)
            shift = bt_ref[...] - mean * scale
            return [y * scale + shift for y in ys]

        x = [x_ref[n] for n in range(N)]                         # residual, (C, HW)

        # stage 1: relu(bn1(conv1(x)))
        a1 = [jnp.maximum(y, 0.0)
              for y in batchnorm(conv(x, w1_ref, b1_ref), g1_ref, bt1_ref)]

        # stage 2: relu(bn2(conv2(a1)) + x)
        y2 = batchnorm(conv(a1, w2_ref, b2_ref), g2_ref, bt2_ref)
        for n in range(N):
            out_ref[n] = jnp.maximum(y2[n] + x[n], 0.0)

    return kernel


@jax.jit
def resblock_forward(x_nchw, params):
    N, C, H, W = x_nchw.shape
    # NCHW -> (N, C, H*W) is a layout-preserving reshape (no transpose needed;
    # channels land on sublanes, spatial on the 128-lane axis inside the kernel).
    x_flat = x_nchw.reshape(N, C, H * W).astype(jnp.float32)
    kernel = _make_resblock_kernel(N, C, H, W)
    out = pl.pallas_call(
        kernel,
        out_shape=jax.ShapeDtypeStruct((N, C, H * W), jnp.float32),
        in_specs=[pl.BlockSpec(memory_space=pltpu.MemorySpace.VMEM)] * 9,
        out_specs=pl.BlockSpec(memory_space=pltpu.MemorySpace.VMEM),
        scratch_shapes=[
            pltpu.VMEM((N, C, H * W + 2 * LANE_PAD), jnp.float32),   # padded acts
            pltpu.VMEM((KSIZE * KSIZE * C, H * W), jnp.float32),     # im2col matrix
        ],
        # TODO(synk): for large N/H/W add a spatial grid with
        # dimension_semantics=("parallel",) (2 TCs on v7x) plus a cross-tile BN
        # reduction; at this toy size a single fused launch is the right shape.
    )(x_flat, params["w1"], params["b1"], params["g1"], params["beta1"],
      params["w2"], params["b2"], params["g2"], params["beta2"])
    return out.reshape(N, C, H, W)


def _prep_conv_weight(w_oihw):
    # (Cout, Cin, KH, KW) -> (Cout, KH*KW*Cin): column index = (kh*KW + kw)*Cin + ci,
    # matching the im2col row order built in the kernel.
    Cout, Cin, KH, KW = w_oihw.shape
    return jnp.transpose(w_oihw, (0, 2, 3, 1)).reshape(Cout, KH * KW * Cin)


def make_params(key, channels=CHANNELS):
    k1, k2, k3, k4, k5, k6 = jax.random.split(key, 6)
    w1 = jax.random.normal(k1, (channels, channels, KSIZE, KSIZE), jnp.float32) * 0.05
    w2 = jax.random.normal(k2, (channels, channels, KSIZE, KSIZE), jnp.float32) * 0.05
    b1 = jax.random.normal(k3, (channels,), jnp.float32) * 0.01
    b2 = jax.random.normal(k4, (channels,), jnp.float32) * 0.01
    g1 = 1.0 + 0.1 * jax.random.normal(k5, (channels,), jnp.float32)
    g2 = 1.0 + 0.1 * jax.random.normal(k6, (channels,), jnp.float32)
    bt1 = jnp.zeros((channels,), jnp.float32)
    bt2 = jnp.zeros((channels,), jnp.float32)
    params = {
        "w1": _prep_conv_weight(w1),
        "w2": _prep_conv_weight(w2),
        "b1": b1.reshape(channels, 1),
        "b2": b2.reshape(channels, 1),
        "g1": g1.reshape(channels, 1),
        "beta1": bt1.reshape(channels, 1),
        "g2": g2.reshape(channels, 1),
        "beta2": bt2.reshape(channels, 1),
    }
    raw = {"w1": w1, "w2": w2, "b1": b1, "b2": b2}
    return params, raw


def reference_forward(x_nchw, raw, params):
    """Pure-JAX reference (lax.conv) for the correctness check."""
    def conv(x, w, b):
        y = lax.conv_general_dilated(
            x, w, window_strides=(1, 1), padding=((PAD, PAD), (PAD, PAD)),
            dimension_numbers=("NCHW", "OIHW", "NCHW"))
        return y + b[None, :, None, None]

    def bn(y, g, beta):
        mean = jnp.mean(y, axis=(0, 2, 3), keepdims=True)
        var = jnp.mean((y - mean) ** 2, axis=(0, 2, 3), keepdims=True)
        return ((y - mean) * lax.rsqrt(var + EPS) * g.reshape(1, -1, 1, 1)
                + beta.reshape(1, -1, 1, 1))

    first = jax.nn.relu(bn(conv(x_nchw, raw["w1"], raw["b1"]),
                           params["g1"], params["beta1"]))
    second = bn(conv(first, raw["w2"], raw["b2"]), params["g2"], params["beta2"])
    return jax.nn.relu(second + x_nchw)


if __name__ == "__main__":
    key = jax.random.PRNGKey(0)
    kx, kp = jax.random.split(key)

    # Shapes consistent with the module: batch=2, channels=32, spatial=16x16 (NCHW).
    x = jax.random.normal(kx, (2, CHANNELS, 16, 16), jnp.float32)
    params, raw = make_params(kp)

    out = jax.block_until_ready(resblock_forward(x, params))
    ref = jax.block_until_ready(reference_forward(x, raw, params))
    np.testing.assert_allclose(np.asarray(out), np.asarray(ref), rtol=1e-3, atol=1e-3)

    print("KERNEL_OK")
</pallas_src>

<mosaic_0001>
module attributes {stable_mosaic.version = 11 : i64} {
  func.func @kernel(%arg0: memref<2x32x256xf32, #tpu.memory_space<vmem>>, %arg1: memref<32x800xf32, #tpu.memory_space<vmem>>, %arg2: memref<32x1xf32, #tpu.memory_space<vmem>>, %arg3: memref<32x1xf32, #tpu.memory_space<vmem>>, %arg4: memref<32x1xf32, #tpu.memory_space<vmem>>, %arg5: memref<32x800xf32, #tpu.memory_space<vmem>>, %arg6: memref<32x1xf32, #tpu.memory_space<vmem>>, %arg7: memref<32x1xf32, #tpu.memory_space<vmem>>, %arg8: memref<32x1xf32, #tpu.memory_space<vmem>>, %arg9: memref<2x32x256xf32, #tpu.memory_space<vmem>>, %arg10: memref<2x32x512xf32, #tpu.memory_space<vmem>>, %arg11: memref<800x256xf32, #tpu.memory_space<vmem>>) attributes {dimension_semantics = [], scalar_prefetch = 0 : i64, scratch_operands = 2 : i64, tpu.core_type = #tpu.core_type<tc>} {
    %cst = arith.constant 0.000000e+00 : f32
    %0 = vector.broadcast %cst : f32 to vector<2x32x512xf32>
    %c0 = arith.constant 0 : index
    %c0_0 = arith.constant 0 : index
    %c0_1 = arith.constant 0 : index
    %1 = vector.load %arg10[%c0, %c0_0, %c0_1] : memref<2x32x512xf32, #tpu.memory_space<vmem>>, vector<2x32x512xf32>
    tpu.vector_store %arg10[%c0, %c0_0, %c0_1], %0 {strides = array<i32>} : memref<2x32x512xf32, #tpu.memory_space<vmem>>, vector<2x32x512xf32>,
    %2 = tpu.iota {dimensions = array<i32: 1>} : vector<1x256xi32>
    %c16_i32 = arith.constant 16 : i32
    %c0_i32 = arith.constant 0 : i32
    %3 = arith.cmpi eq, %c16_i32, %c0_i32 : i32
    %c1_i32 = arith.constant 1 : i32
    %4 = arith.select %3, %c1_i32, %c16_i32 : i32
    %5 = vector.broadcast %4 : i32 to vector<1x256xi32>
    %6 = arith.remsi %2, %5 : vector<1x256xi32>
    %c0_i32_2 = arith.constant 0 : i32
    %7 = vector.broadcast %c0_i32_2 : i32 to vector<1x256xi32>
    %8 = arith.cmpi ne, %6, %7 : vector<1x256xi32>
    %c0_i32_3 = arith.constant 0 : i32
    %9 = vector.broadcast %c0_i32_3 : i32 to vector<1x256xi32>
    %10 = arith.cmpi slt, %6, %9 : vector<1x256xi32>
    %c0_i32_4 = arith.constant 0 : i32
    %11 = arith.cmpi slt, %4, %c0_i32_4 : i32
    %12 = vector.broadcast %11 : i1 to vector<1x256xi1>
    %13 = vector.broadcast %12 : vector<1x256xi1> to vector<1x256xi1>
    %14 = arith.xori %10, %13 : vector<1x256xi1>
    %15 = arith.andi %14, %8 : vector<1x256xi1>
    %16 = vector.broadcast %4 : i32 to vector<1x256xi32>
    %17 = arith.addi %6, %16 : vector<1x256xi32>
    %18 = arith.select %15, %17, %6 : vector<1x256xi1>, vector<1x256xi32>
    %c0_5 = arith.constant 0 : index
    %c0_6 = arith.constant 0 : index
    %c0_7 = arith.constant 0 : index
    %19 = vector.load %arg0[%c0_5, %c0_6, %c0_7] : memref<2x32x256xf32, #tpu.memory_space<vmem>>, vector<1x32x256xf32>
    %20 = vector.shape_cast %19 : vector<1x32x256xf32> to vector<32x256xf32>
    %c1 = arith.constant 1 : index
    %c0_8 = arith.constant 0 : index
    %c0_9 = arith.constant 0 : index
    %21 = vector.load %arg0[%c1, %c0_8, %c0_9] : memref<2x32x256xf32, #tpu.memory_space<vmem>>, vector<1x32x256xf32>
    %22 = vector.shape_cast %21 : vector<1x32x256xf32> to vector<32x256xf32>
    %c0_10 = arith.constant 0 : index
    %c0_11 = arith.constant 0 : index
    %c128 = arith.constant 128 : index
    %23 = vector.load %arg10[%c0_10, %c0_11, %c128] : memref<2x32x512xf32, #tpu.memory_space<vmem>>, vector<1x32x256xf32>
    %24 = vector.shape_cast %23 : vector<1x32x256xf32> to vector<32x256xf32>
    %25 = vector.shape_cast %20 : vector<32x256xf32> to vector<1x32x256xf32>
    tpu.vector_store %arg10[%c0_10, %c0_11, %c128], %25 {strides = array<i32>} : memref<2x32x512xf32, #tpu.memory_space<vmem>>, vector<1x32x256xf32>,
    %c1_12 = arith.constant 1 : index
    %c0_13 = arith.constant 0 : index
    %c128_14 = arith.constant 128 : index
    %26 = vector.load %arg10[%c1_12, %c0_13, %c128_14] : memref<2x32x512xf32, #tpu.memory_space<vmem>>, vector<1x32x256xf32>
    %27 = vector.shape_cast %26 : vector<1x32x256xf32> to vector<32x256xf32>
    %28 = vector.shape_cast %22 : vector<32x256xf32> to vector<1x32x256xf32>
    tpu.vector_store %arg10[%c1_12, %c0_13, %c128_14], %28 {strides = array<i32>} : memref<2x32x512xf32, #tpu.memory_space<vmem>>, vector<1x32x256xf32>,
    %c0_15 = arith.constant 0 : index
    %c0_16 = arith.constant 0 : index
    %29 = vector.load %arg1[%c0_15, %c0_16] : memref<32x800xf32, #tpu.memory_space<vmem>>, vector<32x800xf32>
    %c0_17 = arith.constant 0 : index
    %c0_18 = arith.constant 0 : index
    %30 = vector.load %arg2[%c0_17, %c0_18] : memref<32x1xf32, #tpu.memory_space<vmem>>, vector<32x1xf32>
    %c0_19 = arith.constant 0 : index
    %c0_20 = arith.constant 0 : index
    %c0_21 = arith.constant 0 : index
    %31 = vector.load %arg10[%c0_19, %c0_20, %c0_21] : memref<2x32x512xf32, #tpu.memory_space<vmem>>, vector<1x32x512xf32>
    %32 = vector.shape_cast %31 : vector<1x32x512xf32> to vector<32x512xf32>
    %33 = vector.extract_strided_slice %32 {offsets = [0, 94], sizes = [32, 256], strides = [1, 1]} : vector<32x512xf32> to vector<32x256xf32>
    %c-2_i32 = arith.constant -2 : i32
    %34 = vector.broadcast %c-2_i32 : i32 to vector<1x256xi32>
    %35 = arith.addi %18, %34 : vector<1x256xi32>
    %c0_i32_22 = arith.constant 0 : i32
    %36 = vector.broadcast %c0_i32_22 : i32 to vector<1x256xi32>
    %37 = arith.cmpi sge, %35, %36 : vector<1x256xi32>
    %c-2_i32_23 = arith.constant -2 : i32
    %38 = vector.broadcast %c-2_i32_23 : i32 to vector<1x256xi32>
    %39 = arith.addi %18, %38 : vector<1x256xi32>
    %c16_i32_24 = arith.constant 16 : i32
    %40 = vector.broadcast %c16_i32_24 : i32 to vector<1x256xi32>
    %41 = arith.cmpi slt, %39, %40 : vector<1x256xi32>
    %42 = arith.andi %37, %41 : vector<1x256xi1>
    %cst_25 = arith.constant 0.000000e+00 : f32
    %43 = vector.shape_cast %42 : vector<1x256xi1> to vector<1x256xi1>
    %44 = vector.broadcast %43 : vector<1x256xi1> to vector<32x256xi1>
    %45 = vector.broadcast %cst_25 : f32 to vector<32x256xf32>
    %46 = arith.select %44, %33, %45 : vector<32x256xi1>, vector<32x256xf32>
    %c0_26 = arith.constant 0 : index
    %c0_27 = arith.constant 0 : index
    %47 = vector.load %arg11[%c0_26, %c0_27] : memref<800x256xf32, #tpu.memory_space<vmem>>, vector<32x256xf32>
    tpu.vector_store %arg11[%c0_26, %c0_27], %46 {strides = array<i32>} : memref<800x256xf32, #tpu.memory_space<vmem>>, vector<32x256xf32>,
    %48 = vector.extract_strided_slice %32 {offsets = [0, 95], sizes = [32, 256], strides = [1, 1]} : vector<32x512xf32> to vector<32x256xf32>
    %c-1_i32 = arith.constant -1 : i32
    %49 = vector.broadcast %c-1_i32 : i32 to vector<1x256xi32>
    %50 = arith.addi %18, %49 : vector<1x256xi32>
    %c0_i32_28 = arith.constant 0 : i32
    %51 = vector.broadcast %c0_i32_28 : i32 to vector<1x256xi32>
    %52 = arith.cmpi sge, %50, %51 : vector<1x256xi32>
    %c-1_i32_29 = arith.constant -1 : i32
    %53 = vector.broadcast %c-1_i32_29 : i32 to vector<1x256xi32>
    %54 = arith.addi %18, %53 : vector<1x256xi32>
    %c16_i32_30 = arith.constant 16 : i32
    %55 = vector.broadcast %c16_i32_30 : i32 to vector<1x256xi32>
    %56 = arith.cmpi slt, %54, %55 : vector<1x256xi32>
    %57 = arith.andi %52, %56 : vector<1x256xi1>
    %cst_31 = arith.constant 0.000000e+00 : f32
    %58 = vector.shape_cast %57 : vector<1x256xi1> to vector<1x256xi1>
    %59 = vector.broadcast %58 : vector<1x256xi1> to vector<32x256xi1>
    %60 = vector.broadcast %cst_31 : f32 to vector<32x256xf32>
    %61 = arith.select %59, %48, %60 : vector<32x256xi1>, vector<32x256xf32>
    %c32 = arith.constant 32 : index
    %c0_32 = arith.constant 0 : index
    %62 = vector.load %arg11[%c32, %c0_32] : memref<800x256xf32, #tpu.memory_space<vmem>>, vector<32x256xf32>
    tpu.vector_store %arg11[%c32, %c0_32], %61 {strides = array<i32>} : memref<800x256xf32, #tpu.memory_space<vmem>>, vector<32x256xf32>,
    %63 = vector.extract_strided_slice %32 {offsets = [0, 96], sizes = [32, 256], strides = [1, 1]} : vector<32x512xf32> to vector<32x256xf32>
    %c64 = arith.constant 64 : index
    %c0_33 = arith.constant 0 : index
    %64 = vector.load %arg11[%c64, %c0_33] : memref<800x256xf32, #tpu.memory_space<vmem>>, vector<32x256xf32>
    tpu.vector_store %arg11[%c64, %c0_33], %63 {strides = array<i32>} : memref<800x256xf32, #tpu.memory_space<vmem>>, vector<32x256xf32>,
    %65 = vector.extract_strided_slice %32 {offsets = [0, 97], sizes = [32, 256], strides = [1, 1]} : vector<32x512xf32> to vector<32x256xf32>
    %c1_i32_34 = arith.constant 1 : i32
    %66 = vector.broadcast %c1_i32_34 : i32 to vector<1x256xi32>
    %67 = arith.addi %18, %66 : vector<1x256xi32>
    %c0_i32_35 = arith.constant 0 : i32
    %68 = vector.broadcast %c0_i32_35 : i32 to vector<1x256xi32>
    %69 = arith.cmpi sge, %67, %68 : vector<1x256xi32>
    %c1_i32_36 = arith.constant 1 : i32
    %70 = vector.broadcast %c1_i32_36 : i32 to vector<1x256xi32>
    %71 = arith.addi %18, %70 : vector<1x256xi32>
    %c16_i32_37 = arith.constant 16 : i32
    %72 = vector.broadcast %c16_i32_37 : i32 to vector<1x256xi32>
    %73 = arith.cmpi slt, %71, %72 : vector<1x256xi32>
    %74 = arith.andi %69, %73 : vector<1x256xi1>
    %cst_38 = arith.constant 0.000000e+00 : f32
    %75 = vector.shape_cast %74 : vector<1x256xi1> to vector<1x256xi1>
    %76 = vector.broadcast %75 : vector<1x256xi1> to vector<32x256xi1>
    %77 = vector.broadcast %cst_38 : f32 to vector<32x256xf32>
    %78 = arith.select %76, %65, %77 : vector<32x256xi1>, vector<32x256xf32>
    %c96 = arith.constant 96 : index
    %c0_39 = arith.constant 0 : index
    %79 = vector.load %arg11[%c96, %c0_39] : memref<800x256xf32, #tpu.memory_space<vmem>>, vector<32x256xf32>
    tpu.vector_store %arg11[%c96, %c0_39], %78 {strides = array<i32>} : memref<800x256xf32, #tpu.memory_space<vmem>>, vector<32x256xf32>,
    %80 = vector.extract_strided_slice %32 {offsets = [0, 98], sizes = [32, 256], strides = [1, 1]} : vector<32x512xf32> to vector<32x256xf32>
    %c2_i32 = arith.constant 2 : i32
    %81 = vector.broadcast %c2_i32 : i32 to vector<1x256xi32>
    %82 = arith.addi %18, %81 : vector<1x256xi32>
    %c0_i32_40 = arith.constant 0 : i32
    %83 = vector.broadcast %c0_i32_40 : i32 to vector<1x256xi32>
    %84 = arith.cmpi sge, %82, %83 : vector<1x256xi32>
    %c2_i32_41 = arith.constant 2 : i32
    %85 = vector.broadcast %c2_i32_41 : i32 to vector<1x256xi32>
    %86 = arith.addi %18, %85 : vector<1x256xi32>
    %c16_i32_42 = arith.constant 16 : i32
    %87 = vector.broadcast %c16_i32_42 : i32 to vector<1x256xi32>
    %88 = arith.cmpi slt, %86, %87 : vector<1x256xi32>
    %89 = arith.andi %84, %88 : vector<1x256xi1>
    %cst_43 = arith.constant 0.000000e+00 : f32
    %90 = vector.shape_cast %89 : vector<1x256xi1> to vector<1x256xi1>
    %91 = vector.broadcast %90 : vector<1x256xi1> to vector<32x256xi1>
    %92 = vector.broadcast %cst_43 : f32 to vector<32x256xf32>
    %93 = arith.select %91, %80, %92 : vector<32x256xi1>, vector<32x256xf32>
    %c128_44 = arith.constant 128 : index
    %c0_45 = arith.constant 0 : index
    %94 = vector.load %arg11[%c128_44, %c0_45] : memref<800x256xf32, #tpu.memory_space<vmem>>, vector<32x256xf32>
    tpu.vector_store %arg11[%c128_44, %c0_45], %93 {strides = array<i32>} : memref<800x256xf32, #tpu.memory_space<vmem>>, vector<32x256xf32>,
    %95 = vector.extract_strided_slice %32 {offsets = [0, 110], sizes = [32, 256], strides = [1, 1]} : vector<32x512xf32> to vector<32x256xf32>
    %c-2_i32_46 = arith.constant -2 : i32
    %96 = vector.broadcast %c-2_i32_46 : i32 to vector<1x256xi32>
    %97 = arith.addi %18, %96 : vector<1x256xi32>
    %c0_i32_47 = arith.constant 0 : i32
    %98 = vector.broadcast %c0_i32_47 : i32 to vector<1x256xi32>
    %99 = arith.cmpi sge, %97, %98 : vector<1x256xi32>
    %c-2_i32_48 = arith.constant -2 : i32
    %100 = vector.broadcast %c-2_i32_48 : i32 to vector<1x256xi32>
    %101 = arith.addi %18, %100 : vector<1x256xi32>
    %c16_i32_49 = arith.constant 16 : i32
    %102 = vector.broadcast %c16_i32_49 : i32 to vector<1x256xi32>
    %103 = arith.cmpi slt, %101, %102 : vector<1x256xi32>
    %104 = arith.andi %99, %103 : vector<1x256xi1>
    %cst_50 = arith.constant 0.000000e+00 : f32
    %105 = vector.shape_cast %104 : vector<1x256xi1> to vector<1x256xi1>
    %106 = vector.broadcast %105 : vector<1x256xi1> to vector<32x256xi1>
    %107 = vector.broadcast %cst_50 : f32 to vector<32x256xf32>
    %108 = arith.select %106, %95, %107 : vector<32x256xi1>, vector<32x256xf32>
    %c160 = arith.constant 160 : index
    %c0_51 = arith.constant 0 : index
    %109 = vector.load %arg11[%c160, %c0_51] : memref<800x256xf32, #tpu.memory_space<vmem>>, vector<32x256xf32>
    tpu.vector_store %arg11[%c160, %c0_51], %108 {strides = array<i32>} : memref<800x256xf32, #tpu.memory_space<vmem>>, vector<32x256xf32>,
    %110 = vector.extract_strided_slice %32 {offsets = [0, 111], sizes = [32, 256], strides = [1, 1]} : vector<32x512xf32> to vector<32x256xf32>
    %c-1_i32_52 = arith.constant -1 : i32
    %111 = vector.broadcast %c-1_i32_52 : i32 to vector<1x256xi32>
    %112 = arith.addi %18, %111 : vector<1x256xi32>
    %c0_i32_53 = arith.constant 0 : i32
    %113 = vector.broadcast %c0_i32_53 : i32 to vector<1x256xi32>
    %114 = arith.cmpi sge, %112, %113 : vector<1x256xi32>
    %c-1_i32_54 = arith.constant -1 : i32
    %115 = vector.broadcast %c-1_i32_54 : i32 to vector<1x256xi32>
    %116 = arith.addi %18, %115 : vector<1x256xi32>
    %c16_i32_55 = arith.constant 16 : i32
    %117 = vector.broadcast %c16_i32_55 : i32 to vector<1x256xi32>
    %118 = arith.cmpi slt, %116, %117 : vector<1x256xi32>
    %119 = arith.andi %114, %118 : vector<1x256xi1>
    %cst_56 = arith.constant 0.000000e+00 : f32
    %120 = vector.shape_cast %119 : vector<1x256xi1> to vector<1x256xi1>
    %121 = vector.broadcast %120 : vector<1x256xi1> to vector<32x256xi1>
    %122 = vector.broadcast %cst_56 : f32 to vector<32x256xf32>
    %123 = arith.select %121, %110, %122 : vector<32x256xi1>, vector<32x256xf32>
    %c192 = arith.constant 192 : index
    %c0_57 = arith.constant 0 : index
    %124 = vector.load %arg11[%c192, %c0_57] : memref<800x256xf32, #tpu.memory_space<vmem>>, vector<32x256xf32>
    tpu.vector_store %arg11[%c192, %c0_57], %123 {strides = array<i32>} : memref<800x256xf32, #tpu.memory_space<vmem>>, vector<32x256xf32>,
    %125 = vector.extract_strided_slice %32 {offsets = [0, 112], sizes = [32, 256], strides = [1, 1]} : vector<32x512xf32> to vector<32x256xf32>
    %c224 = arith.constant 224 : index
    %c0_58 = arith.constant 0 : index
    %126 = vector.load %arg11[%c224, %c0_58] : memref<800x256xf32, #tpu.memory_space<vmem>>, vector<32x256xf32>
    tpu.vector_store %arg11[%c224, %c0_58], %125 {strides = array<i32>} : memref<800x256xf32, #tpu.memory_space<vmem>>, vector<32x256xf32>,
    %127 = vector.extract_strided_slice %32 {offsets = [0, 113], sizes = [32, 256], strides = [1, 1]} : vector<32x512xf32> to vector<32x256xf32>
    %c1_i32_59 = arith.constant 1 : i32
    %128 = vector.broadcast %c1_i32_59 : i32 to vector<1x256xi32>
    %129 = arith.addi %18, %128 : vector<1x256xi32>
    %c0_i32_60 = arith.constant 0 : i32
    %130 = vector.broadcast %c0_i32_60 : i32 to vector<1x256xi32>
    %131 = arith.cmpi sge, %129, %130 : vector<1x256xi32>
    %c1_i32_61 = arith.constant 1 : i32
    %132 = vector.broadcast %c1_i32_61 : i32 to vector<1x256xi32>
    %133 = arith.addi %18, %132 : vector<1x256xi32>
    %c16_i32_62 = arith.constant 16 : i32
    %134 = vector.broadcast %c16_i32_62 : i32 to vector<1x256xi32>
    %135 = arith.cmpi slt, %133, %134 : vector<1x256xi32>
    %136 = arith.andi %131, %135 : vector<1x256xi1>
    %cst_63 = arith.constant 0.000000e+00 : f32
    %137 = vector.shape_cast %136 : vector<1x256xi1> to vector<1x256xi1>
    %138 = vector.broadcast %137 : vector<1x256xi1> to vector<32x256xi1>
    %139 = vector.broadcast %cst_63 : f32 to vector<32x256xf32>
    %140 = arith.select %138, %127, %139 : vector<32x256xi1>, vector<32x256xf32>
    %c256 = arith.constant 256 : index
    %c0_64 = arith.constant 0 : index
    %141 = vector.load %arg11[%c256, %c0_64] : memref<800x256xf32, #tpu.memory_space<vmem>>, vector<32x256xf32>
    tpu.vector_store %arg11[%c256, %c0_64], %140 {strides = array<i32>} : memref<800x256xf32, #tpu.memory_space<vmem>>, vector<32x256xf32>,
    %142 = vector.extract_strided_slice %32 {offsets = [0, 114], sizes = [32, 256], strides = [1, 1]} : vector<32x512xf32> to vector<32x256xf32>
    %c2_i32_65 = arith.constant 2 : i32
    %143 = vector.broadcast %c2_i32_65 : i32 to vector<1x256xi32>
    %144 = arith.addi %18, %143 : vector<1x256xi32>
    %c0_i32_66 = arith.constant 0 : i32
    %145 = vector.broadcast %c0_i32_66 : i32 to vector<1x256xi32>
    %146 = arith.cmpi sge, %144, %145 : vector<1x256xi32>
    %c2_i32_67 = arith.constant 2 : i32
    %147 = vector.broadcast %c2_i32_67 : i32 to vector<1x256xi32>
    %148 = arith.addi %18, %147 : vector<1x256xi32>
    %c16_i32_68 = arith.constant 16 : i32
    %149 = vector.broadcast %c16_i32_68 : i32 to vector<1x256xi32>
    %150 = arith.cmpi slt, %148, %149 : vector<1x256xi32>
    %151 = arith.andi %146, %150 : vector<1x256xi1>
    %cst_69 = arith.constant 0.000000e+00 : f32
    %152 = vector.shape_cast %151 : vector<1x256xi1> to vector<1x256xi1>
    %153 = vector.broadcast %152 : vector<1x256xi1> to vector<32x256xi1>
    %154 = vector.broadcast %cst_69 : f32 to vector<32x256xf32>
    %155 = arith.select %153, %142, %154 : vector<32x256xi1>, vector<32x256xf32>
    %c288 = arith.constant 288 : index
    %c0_70 = arith.constant 0 : index
    %156 = vector.load %arg11[%c288, %c0_70] : memref<800x256xf32, #tpu.memory_space<vmem>>, vector<32x256xf32>
    tpu.vector_store %arg11[%c288, %c0_70], %155 {strides = array<i32>} : memref<800x256xf32, #tpu.memory_space<vmem>>, vector<32x256xf32>,
    %157 = vector.extract_strided_slice %32 {offsets = [0, 126], sizes = [32, 256], strides = [1, 1]} : vector<32x512xf32> to vector<32x256xf32>
    %c-2_i32_71 = arith.constant -2 : i32
    %158 = vector.broadcast %c-2_i32_71 : i32 to vector<1x256xi32>
    %159 = arith.addi %18, %158 : vector<1x256xi32>
    %c0_i32_72 = arith.constant 0 : i32
    %160 = vector.broadcast %c0_i32_72 : i32 to vector<1x256xi32>
    %161 = arith.cmpi sge, %159, %160 : vector<1x256xi32>
    %c-2_i32_73 = arith.constant -2 : i32
    %162 = vector.broadcast %c-2_i32_73 : i32 to vector<1x256xi32>
    %163 = arith.addi %18, %162 : vector<1x256xi32>
    %c16_i32_74 = arith.constant 16 : i32
    %164 = vector.broadcast %c16_i32_74 : i32 to vector<1x256xi32>
    %165 = arith.cmpi slt, %163, %164 : vector<1x256xi32>
    %166 = arith.andi %161, %165 : vector<1x256xi1>
    %cst_75 = arith.constant 0.000000e+00 : f32
    %167 = vector.shape_cast %166 : vector<1x256xi1> to vector<1x256xi1>
    %168 = vector.broadcast %167 : vector<1x256xi1> to vector<32x256xi1>
    %169 = vector.broadcast %cst_75 : f32 to vector<32x256xf32>
    %170 = arith.select %168, %157, %169 : vector<32x256xi1>, vector<32x256xf32>
    %c320 = arith.constant 320 : index
    %c0_76 = arith.constant 0 : index
    %171 = vector.load %arg11[%c320, %c0_76] : memref<800x256xf32, #tpu.memory_space<vmem>>, vector<32x256xf32>
    tpu.vector_store %arg11[%c320, %c0_76], %170 {strides = array<i32>} : memref<800x256xf32, #tpu.memory_space<vmem>>, vector<32x256xf32>,
    %172 = vector.extract_strided_slice %32 {offsets = [0, 127], sizes = [32, 256], strides = [1, 1]} : vector<32x512xf32> to vector<32x256xf32>
    %c-1_i32_77 = arith.constant -1 : i32
    %173 = vector.broadcast %c-1_i32_77 : i32 to vector<1x256xi32>
    %174 = arith.addi %18, %173 : vector<1x256xi32>
    %c0_i32_78 = arith.constant 0 : i32
    %175 = vector.broadcast %c0_i32_78 : i32 to vector<1x256xi32>
    %176 = arith.cmpi sge, %174, %175 : vector<1x256xi32>
    %c-1_i32_79 = arith.constant -1 : i32
    %177 = vector.broadcast %c-1_i32_79 : i32 to vector<1x256xi32>
    %178 = arith.addi %18, %177 : vector<1x256xi32>
    %c16_i32_80 = arith.constant 16 : i32
    %179 = vector.broadcast %c16_i32_80 : i32 to vector<1x256xi32>
    %180 = arith.cmpi slt, %178, %179 : vector<1x256xi32>
    %181 = arith.andi %176, %180 : vector<1x256xi1>
    %cst_81 = arith.constant 0.000000e+00 : f32
    %182 = vector.shape_cast %181 : vector<1x256xi1> to vector<1x256xi1>
    %183 = vector.broadcast %182 : vector<1x256xi1> to vector<32x256xi1>
    %184 = vector.broadcast %cst_81 : f32 to vector<32x256xf32>
    %185 = arith.select %183, %172, %184 : vector<32x256xi1>, vector<32x256xf32>
    %c352 = arith.constant 352 : index
    %c0_82 = arith.constant 0 : index
    %186 = vector.load %arg11[%c352, %c0_82] : memref<800x256xf32, #tpu.memory_space<vmem>>, vector<32x256xf32>
    tpu.vector_store %arg11[%c352, %c0_82], %185 {strides = array<i32>} : memref<800x256xf32, #tpu.memory_space<vmem>>, vector<32x256xf32>,
    %187 = vector.extract_strided_slice %32 {offsets = [0, 128], sizes = [32, 256], strides = [1, 1]} : vector<32x512xf32> to vector<32x256xf32>
    %c384 = arith.constant 384 : index
    %c0_83 = arith.constant 0 : index
    %188 = vector.load %arg11[%c384, %c0_83] : memref<800x256xf32, #tpu.memory_space<vmem>>, vector<32x256xf32>
    tpu.vector_store %arg11[%c384, %c0_83], %187 {strides = array<i32>} : memref<800x256xf32, #tpu.memory_space<vmem>>, vector<32x256xf32>,
    %189 = vector.extract_strided_slice %32 {offsets = [0, 129], sizes = [32, 256], strides = [1, 1]} : vector<32x512xf32> to vector<32x256xf32>
    %c1_i32_84 = arith.constant 1 : i32
    %190 = vector.broadcast %c1_i32_84 : i32 to vector<1x256xi32>
    %191 = arith.addi %18, %190 : vector<1x256xi32>
    %c0_i32_85 = arith.constant 0 : i32
    %192 = vector.broadcast %c0_i32_85 : i32 to vector<1x256xi32>
    %193 = arith.cmpi sge, %191, %192 : vector<1x256xi32>
    %c1_i32_86 = arith.constant 1 : i32
    %194 = vector.broadcast %c1_i32_86 : i32 to vector<1x256xi32>
    %195 = arith.addi %18, %194 : vector<1x256xi32>
    %c16_i32_87 = arith.constant 16 : i32
    %196 = vector.broadcast %c16_i32_87 : i32 to vector<1x256xi32>
    %197 = arith.cmpi slt, %195, %196 : vector<1x256xi32>
    %198 = arith.andi %193, %197 : vector<1x256xi1>
    %cst_88 = arith.constant 0.000000e+00 : f32
    %199 = vector.shape_cast %198 : vector<1x256xi1> to vector<1x256xi1>
    %200 = vector.broadcast %199 : vector<1x256xi1> to vector<32x256xi1>
    %201 = vector.broadcast %cst_88 : f32 to vector<32x256xf32>
    %202 = arith.select %200, %189, %201 : vector<32x256xi1>, vector<32x256xf32>
    %c416 = arith.constant 416 : index
    %c0_89 = arith.constant 0 : index
    %203 = vector.load %arg11[%c416, %c0_89] : memref<800x256xf32, #tpu.memory_space<vmem>>, vector<32x256xf32>
    tpu.vector_store %arg11[%c416, %c0_89], %202 {strides = array<i32>} : memref<800x256xf32, #tpu.memory_space<vmem>>, vector<32x256xf32>,
    %204 = vector.extract_strided_slice %32 {offsets = [0, 130], sizes = [32, 256], strides = [1, 1]} : vector<32x512xf32> to vector<32x256xf32>
    %c2_i32_90 = arith.constant 2 : i32
    %205 = vector.broadcast %c2_i32_90 : i32 to vector<1x256xi32>
    %206 = arith.addi %18, %205 : vector<1x256xi32>
    %c0_i32_91 = arith.constant 0 : i32
    %207 = vector.broadcast %c0_i32_91 : i32 to vector<1x256xi32>
    %208 = arith.cmpi sge, %206, %207 : vector<1x256xi32>
    %c2_i32_92 = arith.constant 2 : i32
    %209 = vector.broadcast %c2_i32_92 : i32 to vector<1x256xi32>
    %210 = arith.addi %18, %209 : vector<1x256xi32>
    %c16_i32_93 = arith.constant 16 : i32
    %211 = vector.broadcast %c16_i32_93 : i32 to vector<1x256xi32>
    %212 = arith.cmpi slt, %210, %211 : vector<1x256xi32>
    %213 = arith.andi %208, %212 : vector<1x256xi1>
    %cst_94 = arith.constant 0.000000e+00 : f32
    %214 = vector.shape_cast %213 : vector<1x256xi1> to vector<1x256xi1>
    %215 = vector.broadcast %214 : vector<1x256xi1> to vector<32x256xi1>
    %216 = vector.broadcast %cst_94 : f32 to vector<32x256xf32>
    %217 = arith.select %215, %204, %216 : vector<32x256xi1>, vector<32x256xf32>
    %c448 = arith.constant 448 : index
    %c0_95 = arith.constant 0 : index
    %218 = vector.load %arg11[%c448, %c0_95] : memref<800x256xf32, #tpu.memory_space<vmem>>, vector<32x256xf32>
    tpu.vector_store %arg11[%c448, %c0_95], %217 {strides = array<i32>} : memref<800x256xf32, #tpu.memory_space<vmem>>, vector<32x256xf32>,
    %219 = vector.extract_strided_slice %32 {offsets = [0, 142], sizes = [32, 256], strides = [1, 1]} : vector<32x512xf32> to vector<32x256xf32>
    %c-2_i32_96 = arith.constant -2 : i32
    %220 = vector.broadcast %c-2_i32_96 : i32 to vector<1x256xi32>
    %221 = arith.addi %18, %220 : vector<1x256xi32>
    %c0_i32_97 = arith.constant 0 : i32
    %222 = vector.broadcast %c0_i32_97 : i32 to vector<1x256xi32>
    %223 = arith.cmpi sge, %221, %222 : vector<1x256xi32>
    %c-2_i32_98 = arith.constant -2 : i32
    %224 = vector.broadcast %c-2_i32_98 : i32 to vector<1x256xi32>
    %225 = arith.addi %18, %224 : vector<1x256xi32>
    %c16_i32_99 = arith.constant 16 : i32
    %226 = vector.broadcast %c16_i32_99 : i32 to vector<1x256xi32>
    %227 = arith.cmpi slt, %225, %226 : vector<1x256xi32>
    %228 = arith.andi %223, %227 : vector<1x256xi1>
    %cst_100 = arith.constant 0.000000e+00 : f32
    %229 = vector.shape_cast %228 : vector<1x256xi1> to vector<1x256xi1>
    %230 = vector.broadcast %229 : vector<1x256xi1> to vector<32x256xi1>
    %231 = vector.broadcast %cst_100 : f32 to vector<32x256xf32>
    %232 = arith.select %230, %219, %231 : vector<32x256xi1>, vector<32x256xf32>
    %c480 = arith.constant 480 : index
    %c0_101 = arith.constant 0 : index
    %233 = vector.load %arg11[%c480, %c0_101] : memref<800x256xf32, #tpu.memory_space<vmem>>, vector<32x256xf32>
    tpu.vector_store %arg11[%c480, %c0_101], %232 {strides = array<i32>} : memref<800x256xf32, #tpu.memory_space<vmem>>, vector<32x256xf32>,
    %234 = vector.extract_strided_slice %32 {offsets = [0, 143], sizes = [32, 256], strides = [1, 1]} : vector<32x512xf32> to vector<32x256xf32>
    %c-1_i32_102 = arith.constant -1 : i32
    %235 = vector.broadcast %c-1_i32_102 : i32 to vector<1x256xi32>
    %236 = arith.addi %18, %235 : vector<1x256xi32>
    %c0_i32_103 = arith.constant 0 : i32
    %237 = vector.broadcast %c0_i32_103 : i32 to vector<1x256xi32>
    %238 = arith.cmpi sge, %236, %237 : vector<1x256xi32>
    %c-1_i32_104 = arith.constant -1 : i32
    %239 = vector.broadcast %c-1_i32_104 : i32 to vector<1x256xi32>
    %240 = arith.addi %18, %239 : vector<1x256xi32>
    %c16_i32_105 = arith.constant 16 : i32
    %241 = vector.broadcast %c16_i32_105 : i32 to vector<1x256xi32>
    %242 = arith.cmpi slt, %240, %241 : vector<1x256xi32>
    %243 = arith.andi %238, %242 : vector<1x256xi1>
    %cst_106 = arith.constant 0.000000e+00 : f32
    %244 = vector.shape_cast %243 : vector<1x256xi1> to vector<1x256xi1>
    %245 = vector.broadcast %244 : vector<1x256xi1> to vector<32x256xi1>
    %246 = vector.broadcast %cst_106 : f32 to vector<32x256xf32>
    %247 = arith.select %245, %234, %246 : vector<32x256xi1>, vector<32x256xf32>
    %c512 = arith.constant 512 : index
    %c0_107 = arith.constant 0 : index
    %248 = vector.load %arg11[%c512, %c0_107] : memref<800x256xf32, #tpu.memory_space<vmem>>, vector<32x256xf32>
    tpu.vector_store %arg11[%c512, %c0_107], %247 {strides = array<i32>} : memref<800x256xf32, #tpu.memory_space<vmem>>, vector<32x256xf32>,
    %249 = vector.extract_strided_slice %32 {offsets = [0, 144], sizes = [32, 256], strides = [1, 1]} : vector<32x512xf32> to vector<32x256xf32>
    %c544 = arith.constant 544 : index
    %c0_108 = arith.constant 0 : index
    %250 = vector.load %arg11[%c544, %c0_108] : memref<800x256xf32, #tpu.memory_space<vmem>>, vector<32x256xf32>
    tpu.vector_store %arg11[%c544, %c0_108], %249 {strides = array<i32>} : memref<800x256xf32, #tpu.memory_space<vmem>>, vector<32x256xf32>,
    %251 = vector.extract_strided_slice %32 {offsets = [0, 145], sizes = [32, 256], strides = [1, 1]} : vector<32x512xf32> to vector<32x256xf32>
    %c1_i32_109 = arith.constant 1 : i32
    %252 = vector.broadcast %c1_i32_109 : i32 to vector<1x256xi32>
    %253 = arith.addi %18, %252 : vector<1x256xi32>
    %c0_i32_110 = arith.constant 0 : i32
    %254 = vector.broadcast %c0_i32_110 : i32 to vector<1x256xi32>
    %255 = arith.cmpi sge, %253, %254 : vector<1x256xi32>
    %c1_i32_111 = arith.constant 1 : i32
    %256 = vector.broadcast %c1_i32_111 : i32 to vector<1x256xi32>
    %257 = arith.addi %18, %256 : vector<1x256xi32>
    %c16_i32_112 = arith.constant 16 : i32
    %258 = vector.broadcast %c16_i32_112 : i32 to vector<1x256xi32>
    %259 = arith.cmpi slt, %257, %258 : vector<1x256xi32>
    %260 = arith.andi %255, %259 : vector<1x256xi1>
    %cst_113 = arith.constant 0.000000e+00 : f32
    %261 = vector.shape_cast %260 : vector<1x256xi1> to vector<1x256xi1>
    %262 = vector.broadcast %261 : vector<1x256xi1> to vector<32x256xi1>
    %263 = vector.broadcast %cst_113 : f32 to vector<32x256xf32>
    %264 = arith.select %262, %251, %263 : vector<32x256xi1>, vector<32x256xf32>
    %c576 = arith.constant 576 : index
    %c0_114 = arith.constant 0 : index
    %265 = vector.load %arg11[%c576, %c0_114] : memref<800x256xf32, #tpu.memory_space<vmem>>, vector<32x256xf32>
    tpu.vector_store %arg11[%c576, %c0_114], %264 {strides = array<i32>} : memref<800x256xf32, #tpu.memory_space<vmem>>, vector<32x256xf32>,
    %266 = vector.extract_strided_slice %32 {offsets = [0, 146], sizes = [32, 256], strides = [1, 1]} : vector<32x512xf32> to vector<32x256xf32>
    %c2_i32_115 = arith.constant 2 : i32
    %267 = vector.broadcast %c2_i32_115 : i32 to vector<1x256xi32>
    %268 = arith.addi %18, %267 : vector<1x256xi32>
    %c0_i32_116 = arith.constant 0 : i32
    %269 = vector.broadcast %c0_i32_116 : i32 to vector<1x256xi32>
    %270 = arith.cmpi sge, %268, %269 : vector<1x256xi32>
    %c2_i32_117 = arith.constant 2 : i32
    %271 = vector.broadcast %c2_i32_117 : i32 to vector<1x256xi32>
    %272 = arith.addi %18, %271 : vector<1x256xi32>
    %c16_i32_118 = arith.constant 16 : i32
    %273 = vector.broadcast %c16_i32_118 : i32 to vector<1x256xi32>
    %274 = arith.cmpi slt, %272, %273 : vector<1x256xi32>
    %275 = arith.andi %270, %274 : vector<1x256xi1>
    %cst_119 = arith.constant 0.000000e+00 : f32
    %276 = vector.shape_cast %275 : vector<1x256xi1> to vector<1x256xi1>
    %277 = vector.broadcast %276 : vector<1x256xi1> to vector<32x256xi1>
    %278 = vector.broadcast %cst_119 : f32 to vector<32x256xf32>
    %279 = arith.select %277, %266, %278 : vector<32x256xi1>, vector<32x256xf32>
    %c608 = arith.constant 608 : index
    %c0_120 = arith.constant 0 : index
    %280 = vector.load %arg11[%c608, %c0_120] : memref<800x256xf32, #tpu.memory_space<vmem>>, vector<32x256xf32>
    tpu.vector_store %arg11[%c608, %c0_120], %279 {strides = array<i32>} : memref<800x256xf32, #tpu.memory_space<vmem>>, vector<32x256xf32>,
    %281 = vector.extract_strided_slice %32 {offsets = [0, 158], sizes = [32, 256], strides = [1, 1]} : vector<32x512xf32> to vector<32x256xf32>
    %c-2_i32_121 = arith.constant -2 : i32
    %282 = vector.broadcast %c-2_i32_121 : i32 to vector<1x256xi32>
    %283 = arith.addi %18, %282 : vector<1x256xi32>
    %c0_i32_122 = arith.constant 0 : i32
    %284 = vector.broadcast %c0_i32_122 : i32 to vector<1x256xi32>
    %285 = arith.cmpi sge, %283, %284 : vector<1x256xi32>
    %c-2_i32_123 = arith.constant -2 : i32
    %286 = vector.broadcast %c-2_i32_123 : i32 to vector<1x256xi32>
    %287 = arith.addi %18, %286 : vector<1x256xi32>
    %c16_i32_124 = arith.constant 16 : i32
    %288 = vector.broadcast %c16_i32_124 : i32 to vector<1x256xi32>
    %289 = arith.cmpi slt, %287, %288 : vector<1x256xi32>
    %290 = arith.andi %285, %289 : vector<1x256xi1>
    %cst_125 = arith.constant 0.000000e+00 : f32
    %291 = vector.shape_cast %290 : vector<1x256xi1> to vector<1x256xi1>
    %292 = vector.broadcast %291 : vector<1x256xi1> to vector<32x256xi1>
    %293 = vector.broadcast %cst_125 : f32 to vector<32x256xf32>
    %294 = arith.select %292, %281, %293 : vector<32x256xi1>, vector<32x256xf32>
    %c640 = arith.constant 640 : index
    %c0_126 = arith.constant 0 : index
    %295 = vector.load %arg11[%c640, %c0_126] : memref<800x256xf32, #tpu.memory_space<vmem>>, vector<32x256xf32>
    tpu.vector_store %arg11[%c640, %c0_126], %294 {strides = array<i32>} : memref<800x256xf32, #tpu.memory_space<vmem>>, vector<32x256xf32>,
    %296 = vector.extract_strided_slice %32 {offsets = [0, 159], sizes = [32, 256], strides = [1, 1]} : vector<32x512xf32> to vector<32x256xf32>
    %c-1_i32_127 = arith.constant -1 : i32
    %297 = vector.broadcast %c-1_i32_127 : i32 to vector<1x256xi32>
    %298 = arith.addi %18, %297 : vector<1x256xi32>
    %c0_i32_128 = arith.constant 0 : i32
    %299 = vector.broadcast %c0_i32_128 : i32 to vector<1x256xi32>
    %300 = arith.cmpi sge, %298, %299 : vector<1x256xi32>
    %c-1_i32_129 = arith.constant -1 : i32
    %301 = vector.broadcast %c-1_i32_129 : i32 to vector<1x256xi32>
    %302 = arith.addi %18, %301 : vector<1x256xi32>
    %c16_i32_130 = arith.constant 16 : i32
    %303 = vector.broadcast %c16_i32_130 : i32 to vector<1x256xi32>
    %304 = arith.cmpi slt, %302, %303 : vector<1x256xi32>
    %305 = arith.andi %300, %304 : vector<1x256xi1>
    %cst_131 = arith.constant 0.000000e+00 : f32
    %306 = vector.shape_cast %305 : vector<1x256xi1> to vector<1x256xi1>
    %307 = vector.broadcast %306 : vector<1x256xi1> to vector<32x256xi1>
    %308 = vector.broadcast %cst_131 : f32 to vector<32x256xf32>
    %309 = arith.select %307, %296, %308 : vector<32x256xi1>, vector<32x256xf32>
    %c672 = arith.constant 672 : index
    %c0_132 = arith.constant 0 : index
    %310 = vector.load %arg11[%c672, %c0_132] : memref<800x256xf32, #tpu.memory_space<vmem>>, vector<32x256xf32>
    tpu.vector_store %arg11[%c672, %c0_132], %309 {strides = array<i32>} : memref<800x256xf32, #tpu.memory_space<vmem>>, vector<32x256xf32>,
    %311 = vector.extract_strided_slice %32 {offsets = [0, 160], sizes = [32, 256], strides = [1, 1]} : vector<32x512xf32> to vector<32x256xf32>
    %c704 = arith.constant 704 : index
    %c0_133 = arith.constant 0 : index
    %312 = vector.load %arg11[%c704, %c0_133] : memref<800x256xf32, #tpu.memory_space<vmem>>, vector<32x256xf32>
    tpu.vector_store %arg11[%c704, %c0_133], %311 {strides = array<i32>} : memref<800x256xf32, #tpu.memory_space<vmem>>, vector<32x256xf32>,
    %313 = vector.extract_strided_slice %32 {offsets = [0, 161], sizes = [32, 256], strides = [1, 1]} : vector<32x512xf32> to vector<32x256xf32>
    %c1_i32_134 = arith.constant 1 : i32
    %314 = vector.broadcast %c1_i32_134 : i32 to vector<1x256xi32>
    %315 = arith.addi %18, %314 : vector<1x256xi32>
    %c0_i32_135 = arith.constant 0 : i32
    %316 = vector.broadcast %c0_i32_135 : i32 to vector<1x256xi32>
    %317 = arith.cmpi sge, %315, %316 : vector<1x256xi32>
    %c1_i32_136 = arith.constant 1 : i32
    %318 = vector.broadcast %c1_i32_136 : i32 to vector<1x256xi32>
    %319 = arith.addi %18, %318 : vector<1x256xi32>
    %c16_i32_137 = arith.constant 16 : i32
    %320 = vector.broadcast %c16_i32_137 : i32 to vector<1x256xi32>
    %321 = arith.cmpi slt, %319, %320 : vector<1x256xi32>
    %322 = arith.andi %317, %321 : vector<1x256xi1>
    %cst_138 = arith.constant 0.000000e+00 : f32
    %323 = vector.shape_cast %322 : vector<1x256xi1> to vector<1x256xi1>
    %324 = vector.broadcast %323 : vector<1x256xi1> to vector<32x256xi1>
    %325 = vector.broadcast %cst_138 : f32 to vector<32x256xf32>
    %326 = arith.select %324, %313, %325 : vector<32x256xi1>, vector<32x256xf32>
    %c736 = arith.constant 736 : index
    %c0_139 = arith.constant 0 : index
    %327 = vector.load %arg11[%c736, %c0_139] : memref<800x256xf32, #tpu.memory_space<vmem>>, vector<32x256xf32>
    tpu.vector_store %arg11[%c736, %c0_139], %326 {strides = array<i32>} : memref<800x256xf32, #tpu.memory_space<vmem>>, vector<32x256xf32>,
    %328 = vector.extract_strided_slice %32 {offsets = [0, 162], sizes = [32, 256], strides = [1, 1]} : vector<32x512xf32> to vector<32x256xf32>
    %c2_i32_140 = arith.constant 2 : i32
    %329 = vector.broadcast %c2_i32_140 : i32 to vector<1x256xi32>
    %330 = arith.addi %18, %329 : vector<1x256xi32>
    %c0_i32_141 = arith.constant 0 : i32
    %331 = vector.broadcast %c0_i32_141 : i32 to vector<1x256xi32>
    %332 = arith.cmpi sge, %330, %331 : vector<1x256xi32>
    %c2_i32_142 = arith.constant 2 : i32
    %333 = vector.broadcast %c2_i32_142 : i32 to vector<1x256xi32>
    %334 = arith.addi %18, %333 : vector<1x256xi32>
    %c16_i32_143 = arith.constant 16 : i32
    %335 = vector.broadcast %c16_i32_143 : i32 to vector<1x256xi32>
    %336 = arith.cmpi slt, %334, %335 : vector<1x256xi32>
    %337 = arith.andi %332, %336 : vector<1x256xi1>
    %cst_144 = arith.constant 0.000000e+00 : f32
    %338 = vector.shape_cast %337 : vector<1x256xi1> to vector<1x256xi1>
    %339 = vector.broadcast %338 : vector<1x256xi1> to vector<32x256xi1>
    %340 = vector.broadcast %cst_144 : f32 to vector<32x256xf32>
    %341 = arith.select %339, %328, %340 : vector<32x256xi1>, vector<32x256xf32>
    %c768 = arith.constant 768 : index
    %c0_145 = arith.constant 0 : index
    %342 = vector.load %arg11[%c768, %c0_145] : memref<800x256xf32, #tpu.memory_space<vmem>>, vector<32x256xf32>
    tpu.vector_store %arg11[%c768, %c0_145], %341 {strides = array<i32>} : memref<800x256xf32, #tpu.memory_space<vmem>>, vector<32x256xf32>,
    %c0_146 = arith.constant 0 : index
    %c0_147 = arith.constant 0 : index
    %343 = vector.load %arg11[%c0_146, %c0_147] : memref<800x256xf32, #tpu.memory_space<vmem>>, vector<800x256xf32>
    %cst_148 = arith.constant dense<0.000000e+00> : vector<32x256xf32>
    %344 = tpu.matmul %29, %343, %cst_148 {dimension_numbers = #tpu.dot_dimension_numbers<[1], [0], [0], [1], [0, 0, 1, 1], [], []>} : vector<32x800xf32>, vector<800x256xf32>, vector<32x256xf32> -> vector<32x256xf32>
    %345 = vector.broadcast %30 : vector<32x1xf32> to vector<32x256xf32>
    %346 = arith.addf %344, %345 : vector<32x256xf32>
    %c1_149 = arith.constant 1 : index
    %c0_150 = arith.constant 0 : index
    %c0_151 = arith.constant 0 : index
    %347 = vector.load %arg10[%c1_149, %c0_150, %c0_151] : memref<2x32x512xf32, #tpu.memory_space<vmem>>, vector<1x32x512xf32>
    %348 = vector.shape_cast %347 : vector<1x32x512xf32> to vector<32x512xf32>
    %349 = vector.extract_strided_slice %348 {offsets = [0, 94], sizes = [32, 256], strides = [1, 1]} : vector<32x512xf32> to vector<32x256xf32>
    %c-2_i32_152 = arith.constant -2 : i32
    %350 = vector.broadcast %c-2_i32_152 : i32 to vector<1x256xi32>
    %351 = arith.addi %18, %350 : vector<1x256xi32>
    %c0_i32_153 = arith.constant 0 : i32
    %352 = vector.broadcast %c0_i32_153 : i32 to vector<1x256xi32>
    %353 = arith.cmpi sge, %351, %352 : vector<1x256xi32>
    %c-2_i32_154 = arith.constant -2 : i32
    %354 = vector.broadcast %c-2_i32_154 : i32 to vector<1x256xi32>
    %355 = arith.addi %18, %354 : vector<1x256xi32>
    %c16_i32_155 = arith.constant 16 : i32
    %356 = vector.broadcast %c16_i32_155 : i32 to vector<1x256xi32>
    %357 = arith.cmpi slt, %355, %356 : vector<1x256xi32>
    %358 = arith.andi %353, %357 : vector<1x256xi1>
    %cst_156 = arith.constant 0.000000e+00 : f32
    %359 = vector.shape_cast %358 : vector<1x256xi1> to vector<1x256xi1>
    %360 = vector.broadcast %359 : vector<1x256xi1> to vector<32x256xi1>
    %361 = vector.broadcast %cst_156 : f32 to vector<32x256xf32>
    %362 = arith.select %360, %349, %361 : vector<32x256xi1>, vector<32x256xf32>
    %c0_157 = arith.constant 0 : index
    %c0_158 = arith.constant 0 : index
    %363 = vector.load %arg11[%c0_157, %c0_158] : memref<800x256xf32, #tpu.memory_space<vmem>>, vector<32x256xf32>
    tpu.vector_store %arg11[%c0_157, %c0_158], %362 {strides = array<i32>} : memref<800x256xf32, #tpu.memory_space<vmem>>, vector<32x256xf32>,
    %364 = vector.extract_strided_slice %348 {offsets = [0, 95], sizes = [32, 256], strides = [1, 1]} : vector<32x512xf32> to vector<32x256xf32>
    %c-1_i32_159 = arith.constant -1 : i32
    %365 = vector.broadcast %c-1_i32_159 : i32 to vector<1x256xi32>
    %366 = arith.addi %18, %365 : vector<1x256xi32>
    %c0_i32_160 = arith.constant 0 : i32
    %367 = vector.broadcast %c0_i32_160 : i32 to vector<1x256xi32>
    %368 = arith.cmpi sge, %366, %367 : vector<1x256xi32>
    %c-1_i32_161 = arith.constant -1 : i32
    %369 = vector.broadcast %c-1_i32_161 : i32 to vector<1x256xi32>
    %370 = arith.addi %18, %369 : vector<1x256xi32>
    %c16_i32_162 = arith.constant 16 : i32
    %371 = vector.broadcast %c16_i32_162 : i32 to vector<1x256xi32>
    %372 = arith.cmpi slt, %370, %371 : vector<1x256xi32>
    %373 = arith.andi %368, %372 : vector<1x256xi1>
    %cst_163 = arith.constant 0.000000e+00 : f32
    %374 = vector.shape_cast %373 : vector<1x256xi1> to vector<1x256xi1>
    %375 = vector.broadcast %374 : vector<1x256xi1> to vector<32x256xi1>
    %376 = vector.broadcast %cst_163 : f32 to vector<32x256xf32>
    %377 = arith.select %375, %364, %376 : vector<32x256xi1>, vector<32x256xf32>
    %c32_164 = arith.constant 32 : index
    %c0_165 = arith.constant 0 : index
    %378 = vector.load %arg11[%c32_164, %c0_165] : memref<800x256xf32, #tpu.memory_space<vmem>>, vector<32x256xf32>
    tpu.vector_store %arg11[%c32_164, %c0_165], %377 {strides = array<i32>} : memref<800x256xf32, #tpu.memory_space<vmem>>, vector<32x256xf32>,
    %379 = vector.extract_strided_slice %348 {offsets = [0, 96], sizes = [32, 256], strides = [1, 1]} : vector<32x512xf32> to vector<32x256xf32>
    %c64_166 = arith.constant 64 : index
    %c0_167 = arith.constant 0 : index
    %380 = vector.load %arg11[%c64_166, %c0_167] : memref<800x256xf32, #tpu.memory_space<vmem>>, vector<32x256xf32>
    tpu.vector_store %arg11[%c64_166, %c0_167], %379 {strides = array<i32>} : memref<800x256xf32, #tpu.memory_space<vmem>>, vector<32x256xf32>,
    %381 = vector.extract_strided_slice %348 {offsets = [0, 97], sizes = [32, 256], strides = [1, 1]} : vector<32x512xf32> to vector<32x256xf32>
    %c1_i32_168 = arith.constant 1 : i32
    %382 = vector.broadcast %c1_i32_168 : i32 to vector<1x256xi32>
    %383 = arith.addi %18, %382 : vector<1x256xi32>
    %c0_i32_169 = arith.constant 0 : i32
    %384 = vector.broadcast %c0_i32_169 : i32 to vector<1x256xi32>
    %385 = arith.cmpi sge, %383, %384 : vector<1x256xi32>
    %c1_i32_170 = arith.constant 1 : i32
    %386 = vector.broadcast %c1_i32_170 : i32 to vector<1x256xi32>
    %387 = arith.addi %18, %386 : vector<1x256xi32>
    %c16_i32_171 = arith.constant 16 : i32
    %388 = vector.broadcast %c16_i32_171 : i32 to vector<1x256xi32>
    %389 = arith.cmpi slt, %387, %388 : vector<1x256xi32>
    %390 = arith.andi %385, %389 : vector<1x256xi1>
    %cst_172 = arith.constant 0.000000e+00 : f32
    %391 = vector.shape_cast %390 : vector<1x256xi1> to vector<1x256xi1>
    %392 = vector.broadcast %391 : vector<1x256xi1> to vector<32x256xi1>
    %393 = vector.broadcast %cst_172 : f32 to vector<32x256xf32>
    %394 = arith.select %392, %381, %393 : vector<32x256xi1>, vector<32x256xf32>
    %c96_173 = arith.constant 96 : index
    %c0_174 = arith.constant 0 : index
    %395 = vector.load %arg11[%c96_173, %c0_174] : memref<800x256xf32, #tpu.memory_space<vmem>>, vector<32x256xf32>
    tpu.vector_store %arg11[%c96_173, %c0_174], %394 {strides = array<i32>} : memref<800x256xf32, #tpu.memory_space<vmem>>, vector<32x256xf32>,
    %396 = vector.extract_strided_slice %348 {offsets = [0, 98], sizes = [32, 256], strides = [1, 1]} : vector<32x512xf32> to vector<32x256xf32>
    %c2_i32_175 = arith.constant 2 : i32
    %397 = vector.broadcast %c2_i32_175 : i32 to vector<1x256xi32>
    %398 = arith.addi %18, %397 : vector<1x256xi32>
    %c0_i32_176 = arith.constant 0 : i32
    %399 = vector.broadcast %c0_i32_176 : i32 to vector<1x256xi32>
    %400 = arith.cmpi sge, %398, %399 : vector<1x256xi32>
    %c2_i32_177 = arith.constant 2 : i32
    %401 = vector.broadcast %c2_i32_177 : i32 to vector<1x256xi32>
    %402 = arith.addi %18, %401 : vector<1x256xi32>
    %c16_i32_178 = arith.constant 16 : i32
    %403 = vector.broadcast %c16_i32_178 : i32 to vector<1x256xi32>
    %404 = arith.cmpi slt, %402, %403 : vector<1x256xi32>
    %405 = arith.andi %400, %404 : vector<1x256xi1>
    %cst_179 = arith.constant 0.000000e+00 : f32
    %406 = vector.shape_cast %405 : vector<1x256xi1> to vector<1x256xi1>
    %407 = vector.broadcast %406 : vector<1x256xi1> to vector<32x256xi1>
    %408 = vector.broadcast %cst_179 : f32 to vector<32x256xf32>
    %409 = arith.select %407, %396, %408 : vector<32x256xi1>, vector<32x256xf32>
    %c128_180 = arith.constant 128 : index
    %c0_181 = arith.constant 0 : index
    %410 = vector.load %arg11[%c128_180, %c0_181] : memref<800x256xf32, #tpu.memory_space<vmem>>, vector<32x256xf32>
    tpu.vector_store %arg11[%c128_180, %c0_181], %409 {strides = array<i32>} : memref<800x256xf32, #tpu.memory_space<vmem>>, vector<32x256xf32>,
    %411 = vector.extract_strided_slice %348 {offsets = [0, 110], sizes = [32, 256], strides = [1, 1]} : vector<32x512xf32> to vector<32x256xf32>
    %c-2_i32_182 = arith.constant -2 : i32
    %412 = vector.broadcast %c-2_i32_182 : i32 to vector<1x256xi32>
    %413 = arith.addi %18, %412 : vector<1x256xi32>
    %c0_i32_183 = arith.constant 0 : i32
    %414 = vector.broadcast %c0_i32_183 : i32 to vector<1x256xi32>
    %415 = arith.cmpi sge, %413, %414 : vector<1x256xi32>
    %c-2_i32_184 = arith.constant -2 : i32
    %416 = vector.broadcast %c-2_i32_184 : i32 to vector<1x256xi32>
    %417 = arith.addi %18, %416 : vector<1x256xi32>
    %c16_i32_185 = arith.constant 16 : i32
    %418 = vector.broadcast %c16_i32_185 : i32 to vector<1x256xi32>
    %419 = arith.cmpi slt, %417, %418 : vector<1x256xi32>
    %420 = arith.andi %415, %419 : vector<1x256xi1>
    %cst_186 = arith.constant 0.000000e+00 : f32
    %421 = vector.shape_cast %420 : vector<1x256xi1> to vector<1x256xi1>
    %422 = vector.broadcast %421 : vector<1x256xi1> to vector<32x256xi1>
    %423 = vector.broadcast %cst_186 : f32 to vector<32x256xf32>
    %424 = arith.select %422, %411, %423 : vector<32x256xi1>, vector<32x256xf32>
    %c160_187 = arith.constant 160 : index
    %c0_188 = arith.constant 0 : index
    %425 = vector.load %arg11[%c160_187, %c0_188] : memref<800x256xf32, #tpu.memory_space<vmem>>, vector<32x256xf32>
    tpu.vector_store %arg11[%c160_187, %c0_188], %424 {strides = array<i32>} : memref<800x256xf32, #tpu.memory_space<vmem>>, vector<32x256xf32>,
    %426 = vector.extract_strided_slice %348 {offsets = [0, 111], sizes = [32, 256], strides = [1, 1]} : vector<32x512xf32> to vector<32x256xf32>
    %c-1_i32_189 = arith.constant -1 : i32
    %427 = vector.broadcast %c-1_i32_189 : i32 to vector<1x256xi32>
    %428 = arith.addi %18, %427 : vector<1x256xi32>
    %c0_i32_190 = arith.constant 0 : i32
    %429 = vector.broadcast %c0_i32_190 : i32 to vector<1x256xi32>
    %430 = arith.cmpi sge, %428, %429 : vector<1x256xi32>
    %c-1_i32_191 = arith.constant -1 : i32
    %431 = vector.broadcast %c-1_i32_191 : i32 to vector<1x256xi32>
    %432 = arith.addi %18, %431 : vector<1x256xi32>
    %c16_i32_192 = arith.constant 16 : i32
    %433 = vector.broadcast %c16_i32_192 : i32 to vector<1x256xi32>
    %434 = arith.cmpi slt, %432, %433 : vector<1x256xi32>
    %435 = arith.andi %430, %434 : vector<1x256xi1>
    %cst_193 = arith.constant 0.000000e+00 : f32
    %436 = vector.shape_cast %435 : vector<1x256xi1> to vector<1x256xi1>
    %437 = vector.broadcast %436 : vector<1x256xi1> to vector<32x256xi1>
    %438 = vector.broadcast %cst_193 : f32 to vector<32x256xf32>
    %439 = arith.select %437, %426, %438 : vector<32x256xi1>, vector<32x256xf32>
    %c192_194 = arith.constant 192 : index
    %c0_195 = arith.constant 0 : index
    %440 = vector.load %arg11[%c192_194, %c0_195] : memref<800x256xf32, #tpu.memory_space<vmem>>, vector<32x256xf32>
    tpu.vector_store %arg11[%c192_194, %c0_195], %439 {strides = array<i32>} : memref<800x256xf32, #tpu.memory_space<vmem>>, vector<32x256xf32>,
    %441 = vector.extract_strided_slice %348 {offsets = [0, 112], sizes = [32, 256], strides = [1, 1]} : vector<32x512xf32> to vector<32x256xf32>
    %c224_196 = arith.constant 224 : index
    %c0_197 = arith.constant 0 : index
    %442 = vector.load %arg11[%c224_196, %c0_197] : memref<800x256xf32, #tpu.memory_space<vmem>>, vector<32x256xf32>
    tpu.vector_store %arg11[%c224_196, %c0_197], %441 {strides = array<i32>} : memref<800x256xf32, #tpu.memory_space<vmem>>, vector<32x256xf32>,
    %443 = vector.extract_strided_slice %348 {offsets = [0, 113], sizes = [32, 256], strides = [1, 1]} : vector<32x512xf32> to vector<32x256xf32>
    %c1_i32_198 = arith.constant 1 : i32
    %444 = vector.broadcast %c1_i32_198 : i32 to vector<1x256xi32>
    %445 = arith.addi %18, %444 : vector<1x256xi32>
    %c0_i32_199 = arith.constant 0 : i32
    %446 = vector.broadcast %c0_i32_199 : i32 to vector<1x256xi32>
    %447 = arith.cmpi sge, %445, %446 : vector<1x256xi32>
    %c1_i32_200 = arith.constant 1 : i32
    %448 = vector.broadcast %c1_i32_200 : i32 to vector<1x256xi32>
    %449 = arith.addi %18, %448 : vector<1x256xi32>
    %c16_i32_201 = arith.constant 16 : i32
    %450 = vector.broadcast %c16_i32_201 : i32 to vector<1x256xi32>
    %451 = arith.cmpi slt, %449, %450 : vector<1x256xi32>
    %452 = arith.andi %447, %451 : vector<1x256xi1>
    %cst_202 = arith.constant 0.000000e+00 : f32
    %453 = vector.shape_cast %452 : vector<1x256xi1> to vector<1x256xi1>
    %454 = vector.broadcast %453 : vector<1x256xi1> to vector<32x256xi1>
    %455 = vector.broadcast %cst_202 : f32 to vector<32x256xf32>
    %456 = arith.select %454, %443, %455 : vector<32x256xi1>, vector<32x256xf32>
    %c256_203 = arith.constant 256 : index
    %c0_204 = arith.constant 0 : index
    %457 = vector.load %arg11[%c256_203, %c0_204] : memref<800x256xf32, #tpu.memory_space<vmem>>, vector<32x256xf32>
    tpu.vector_store %arg11[%c256_203, %c0_204], %456 {strides = array<i32>} : memref<800x256xf32, #tpu.memory_space<vmem>>, vector<32x256xf32>,
    %458 = vector.extract_strided_slice %348 {offsets = [0, 114], sizes = [32, 256], strides = [1, 1]} : vector<32x512xf32> to vector<32x256xf32>
    %c2_i32_205 = arith.constant 2 : i32
    %459 = vector.broadcast %c2_i32_205 : i32 to vector<1x256xi32>
    %460 = arith.addi %18, %459 : vector<1x256xi32>
    %c0_i32_206 = arith.constant 0 : i32
    %461 = vector.broadcast %c0_i32_206 : i32 to vector<1x256xi32>
    %462 = arith.cmpi sge, %460, %461 : vector<1x256xi32>
    %c2_i32_207 = arith.constant 2 : i32
    %463 = vector.broadcast %c2_i32_207 : i32 to vector<1x256xi32>
    %464 = arith.addi %18, %463 : vector<1x256xi32>
    %c16_i32_208 = arith.constant 16 : i32
    %465 = vector.broadcast %c16_i32_208 : i32 to vector<1x256xi32>
    %466 = arith.cmpi slt, %464, %465 : vector<1x256xi32>
    %467 = arith.andi %462, %466 : vector<1x256xi1>
    %cst_209 = arith.constant 0.000000e+00 : f32
    %468 = vector.shape_cast %467 : vector<1x256xi1> to vector<1x256xi1>
    %469 = vector.broadcast %468 : vector<1x256xi1> to vector<32x256xi1>
    %470 = vector.broadcast %cst_209 : f32 to vector<32x256xf32>
    %471 = arith.select %469, %458, %470 : vector<32x256xi1>, vector<32x256xf32>
    %c288_210 = arith.constant 288 : index
    %c0_211 = arith.constant 0 : index
    %472 = vector.load %arg11[%c288_210, %c0_211] : memref<800x256xf32, #tpu.memory_space<vmem>>, vector<32x256xf32>
    tpu.vector_store %arg11[%c288_210, %c0_211], %471 {strides = array<i32>} : memref<800x256xf32, #tpu.memory_space<vmem>>, vector<32x256xf32>,
    %473 = vector.extract_strided_slice %348 {offsets = [0, 126], sizes = [32, 256], strides = [1, 1]} : vector<32x512xf32> to vector<32x256xf32>
    %c-2_i32_212 = arith.constant -2 : i32
    %474 = vector.broadcast %c-2_i32_212 : i32 to vector<1x256xi32>
    %475 = arith.addi %18, %474 : vector<1x256xi32>
    %c0_i32_213 = arith.constant 0 : i32
    %476 = vector.broadcast %c0_i32_213 : i32 to vector<1x256xi32>
    %477 = arith.cmpi sge, %475, %476 : vector<1x256xi32>
    %c-2_i32_214 = arith.constant -2 : i32
    %478 = vector.broadcast %c-2_i32_214 : i32 to vector<1x256xi32>
    %479 = arith.addi %18, %478 : vector<1x256xi32>
    %c16_i32_215 = arith.constant 16 : i32
    %480 = vector.broadcast %c16_i32_215 : i32 to vector<1x256xi32>
    %481 = arith.cmpi slt, %479, %480 : vector<1x256xi32>
    %482 = arith.andi %477, %481 : vector<1x256xi1>
    %cst_216 = arith.constant 0.000000e+00 : f32
    %483 = vector.shape_cast %482 : vector<1x256xi1> to vector<1x256xi1>
    %484 = vector.broadcast %483 : vector<1x256xi1> to vector<32x256xi1>
    %485 = vector.broadcast %cst_216 : f32 to vector<32x256xf32>
    %486 = arith.select %484, %473, %485 : vector<32x256xi1>, vector<32x256xf32>
    %c320_217 = arith.constant 320 : index
    %c0_218 = arith.constant 0 : index
    %487 = vector.load %arg11[%c320_217, %c0_218] : memref<800x256xf32, #tpu.memory_space<vmem>>, vector<32x256xf32>
    tpu.vector_store %arg11[%c320_217, %c0_218], %486 {strides = array<i32>} : memref<800x256xf32, #tpu.memory_space<vmem>>, vector<32x256xf32>,
    %488 = vector.extract_strided_slice %348 {offsets = [0, 127], sizes = [32, 256], strides = [1, 1]} : vector<32x512xf32> to vector<32x256xf32>
    %c-1_i32_219 = arith.constant -1 : i32
    %489 = vector.broadcast %c-1_i32_219 : i32 to vector<1x256xi32>
    %490 = arith.addi %18, %489 : vector<1x256xi32>
    %c0_i32_220 = arith.constant 0 : i32
    %491 = vector.broadcast %c0_i32_220 : i32 to vector<1x256xi32>
    %492 = arith.cmpi sge, %490, %491 : vector<1x256xi32>
    %c-1_i32_221 = arith.constant -1 : i32
    %493 = vector.broadcast %c-1_i32_221 : i32 to vector<1x256xi32>
    %494 = arith.addi %18, %493 : vector<1x256xi32>
    %c16_i32_222 = arith.constant 16 : i32
    %495 = vector.broadcast %c16_i32_222 : i32 to vector<1x256xi32>
    %496 = arith.cmpi slt, %494, %495 : vector<1x256xi32>
    %497 = arith.andi %492, %496 : vector<1x256xi1>
    %cst_223 = arith.constant 0.000000e+00 : f32
    %498 = vector.shape_cast %497 : vector<1x256xi1> to vector<1x256xi1>
    %499 = vector.broadcast %498 : vector<1x256xi1> to vector<32x256xi1>
    %500 = vector.broadcast %cst_223 : f32 to vector<32x256xf32>
    %501 = arith.select %499, %488, %500 : vector<32x256xi1>, vector<32x256xf32>
    %c352_224 = arith.constant 352 : index
    %c0_225 = arith.constant 0 : index
    %502 = vector.load %arg11[%c352_224, %c0_225] : memref<800x256xf32, #tpu.memory_space<vmem>>, vector<32x256xf32>
    tpu.vector_store %arg11[%c352_224, %c0_225], %501 {strides = array<i32>} : memref<800x256xf32, #tpu.memory_space<vmem>>, vector<32x256xf32>,
    %503 = vector.extract_strided_slice %348 {offsets = [0, 128], sizes = [32, 256], strides = [1, 1]} : vector<32x512xf32> to vector<32x256xf32>
    %c384_226 = arith.constant 384 : index
    %c0_227 = arith.constant 0 : index
    %504 = vector.load %arg11[%c384_226, %c0_227] : memref<800x256xf32, #tpu.memory_space<vmem>>, vector<32x256xf32>
    tpu.vector_store %arg11[%c384_226, %c0_227], %503 {strides = array<i32>} : memref<800x256xf32, #tpu.memory_space<vmem>>, vector<32x256xf32>,
    %505 = vector.extract_strided_slice %348 {offsets = [0, 129], sizes = [32, 256], strides = [1, 1]} : vector<32x512xf32> to vector<32x256xf32>
    %c1_i32_228 = arith.constant 1 : i32
    %506 = vector.broadcast %c1_i32_228 : i32 to vector<1x256xi32>
    %507 = arith.addi %18, %506 : vector<1x256xi32>
    %c0_i32_229 = arith.constant 0 : i32
    %508 = vector.broadcast %c0_i32_229 : i32 to vector<1x256xi32>
    %509 = arith.cmpi sge, %507, %508 : vector<1x256xi32>
    %c1_i32_230 = arith.constant 1 : i32
    %510 = vector.broadcast %c1_i32_230 : i32 to vector<1x256xi32>
    %511 = arith.addi %18, %510 : vector<1x256xi32>
    %c16_i32_231 = arith.constant 16 : i32
    %512 = vector.broadcast %c16_i32_231 : i32 to vector<1x256xi32>
    %513 = arith.cmpi slt, %511, %512 : vector<1x256xi32>
    %514 = arith.andi %509, %513 : vector<1x256xi1>
    %cst_232 = arith.constant 0.000000e+00 : f32
    %515 = vector.shape_cast %514 : vector<1x256xi1> to vector<1x256xi1>
    %516 = vector.broadcast %515 : vector<1x256xi1> to vector<32x256xi1>
    %517 = vector.broadcast %cst_232 : f32 to vector<32x256xf32>
    %518 = arith.select %516, %505, %517 : vector<32x256xi1>, vector<32x256xf32>
    %c416_233 = arith.constant 416 : index
    %c0_234 = arith.constant 0 : index
    %519 = vector.load %arg11[%c416_233, %c0_234] : memref<800x256xf32, #tpu.memory_space<vmem>>, vector<32x256xf32>
    tpu.vector_store %arg11[%c416_233, %c0_234], %518 {strides = array<i32>} : memref<800x256xf32, #tpu.memory_space<vmem>>, vector<32x256xf32>,
    %520 = vector.extract_strided_slice %348 {offsets = [0, 130], sizes = [32, 256], strides = [1, 1]} : vector<32x512xf32> to vector<32x256xf32>
    %c2_i32_235 = arith.constant 2 : i32
    %521 = vector.broadcast %c2_i32_235 : i32 to vector<1x256xi32>
    %522 = arith.addi %18, %521 : vector<1x256xi32>
    %c0_i32_236 = arith.constant 0 : i32
    %523 = vector.broadcast %c0_i32_236 : i32 to vector<1x256xi32>
    %524 = arith.cmpi sge, %522, %523 : vector<1x256xi32>
    %c2_i32_237 = arith.constant 2 : i32
    %525 = vector.broadcast %c2_i32_237 : i32 to vector<1x256xi32>
    %526 = arith.addi %18, %525 : vector<1x256xi32>
    %c16_i32_238 = arith.constant 16 : i32
    %527 = vector.broadcast %c16_i32_238 : i32 to vector<1x256xi32>
    %528 = arith.cmpi slt, %526, %527 : vector<1x256xi32>
    %529 = arith.andi %524, %528 : vector<1x256xi1>
    %cst_239 = arith.constant 0.000000e+00 : f32
    %530 = vector.shape_cast %529 : vector<1x256xi1> to vector<1x256xi1>
    %531 = vector.broadcast %530 : vector<1x256xi1> to vector<32x256xi1>
    %532 = vector.broadcast %cst_239 : f32 to vector<32x256xf32>
    %533 = arith.select %531, %520, %532 : vector<32x256xi1>, vector<32x256xf32>
    %c448_240 = arith.constant 448 : index
    %c0_241 = arith.constant 0 : index
    %534 = vector.load %arg11[%c448_240, %c0_241] : memref<800x256xf32, #tpu.memory_space<vmem>>, vector<32x256xf32>
    tpu.vector_store %arg11[%c448_240, %c0_241], %533 {strides = array<i32>} : memref<800x256xf32, #tpu.memory_space<vmem>>, vector<32x256xf32>,
    %535 = vector.extract_strided_slice %348 {offsets = [0, 142], sizes = [32, 256], strides = [1, 1]} : vector<32x512xf32> to vector<32x256xf32>
    %c-2_i32_242 = arith.constant -2 : i32
    %536 = vector.broadcast %c-2_i32_242 : i32 to vector<1x256xi32>
    %537 = arith.addi %18, %536 : vector<1x256xi32>
    %c0_i32_243 = arith.constant 0 : i32
    %538 = vector.broadcast %c0_i32_243 : i32 to vector<1x256xi32>
    %539 = arith.cmpi sge, %537, %538 : vector<1x256xi32>
    %c-2_i32_244 = arith.constant -2 : i32
    %540 = vector.broadcast %c-2_i32_244 : i32 to vector<1x256xi32>
    %541 = arith.addi %18, %540 : vector<1x256xi32>
    %c16_i32_245 = arith.constant 16 : i32
    %542 = vector.broadcast %c16_i32_245 : i32 to vector<1x256xi32>
    %543 = arith.cmpi slt, %541, %542 : vector<1x256xi32>
    %544 = arith.andi %539, %543 : vector<1x256xi1>
    %cst_246 = arith.constant 0.000000e+00 : f32
    %545 = vector.shape_cast %544 : vector<1x256xi1> to vector<1x256xi1>
    %546 = vector.broadcast %545 : vector<1x256xi1> to vector<32x256xi1>
    %547 = vector.broadcast %cst_246 : f32 to vector<32x256xf32>
    %548 = arith.select %546, %535, %547 : vector<32x256xi1>, vector<32x256xf32>
    %c480_247 = arith.constant 480 : index
    %c0_248 = arith.constant 0 : index
    %549 = vector.load %arg11[%c480_247, %c0_248] : memref<800x256xf32, #tpu.memory_space<vmem>>, vector<32x256xf32>
    tpu.vector_store %arg11[%c480_247, %c0_248], %548 {strides = array<i32>} : memref<800x256xf32, #tpu.memory_space<vmem>>, vector<32x256xf32>,
    %550 = vector.extract_strided_slice %348 {offsets = [0, 143], sizes = [32, 256], strides = [1, 1]} : vector<32x512xf32> to vector<32x256xf32>
    %c-1_i32_249 = arith.constant -1 : i32
    %551 = vector.broadcast %c-1_i32_249 : i32 to vector<1x256xi32>
    %552 = arith.addi %18, %551 : vector<1x256xi32>
    %c0_i32_250 = arith.constant 0 : i32
    %553 = vector.broadcast %c0_i32_250 : i32 to vector<1x256xi32>
    %554 = arith.cmpi sge, %552, %553 : vector<1x256xi32>
    %c-1_i32_251 = arith.constant -1 : i32
    %555 = vector.broadcast %c-1_i32_251 : i32 to vector<1x256xi32>
    %556 = arith.addi %18, %555 : vector<1x256xi32>
    %c16_i32_252 = arith.constant 16 : i32
    %557 = vector.broadcast %c16_i32_252 : i32 to vector<1x256xi32>
    %558 = arith.cmpi slt, %556, %557 : vector<1x256xi32>
    %559 = arith.andi %554, %558 : vector<1x256xi1>
    %cst_253 = arith.constant 0.000000e+00 : f32
    %560 = vector.shape_cast %559 : vector<1x256xi1> to vector<1x256xi1>
    %561 = vector.broadcast %560 : vector<1x256xi1> to vector<32x256xi1>
    %562 = vector.broadcast %cst_253 : f32 to vector<32x256xf32>
    %563 = arith.select %561, %550, %562 : vector<32x256xi1>, vector<32x256xf32>
    %c512_254 = arith.constant 512 : index
    %c0_255 = arith.constant 0 : index
    %564 = vector.load %arg11[%c512_254, %c0_255] : memref<800x256xf32, #tpu.memory_space<vmem>>, vector<32x256xf32>
    tpu.vector_store %arg11[%c512_254, %c0_255], %563 {strides = array<i32>} : memref<800x256xf32, #tpu.memory_space<vmem>>, vector<32x256xf32>,
    %565 = vector.extract_strided_slice %348 {offsets = [0, 144], sizes = [32, 256], strides = [1, 1]} : vector<32x512xf32> to vector<32x256xf32>
    %c544_256 = arith.constant 544 : index
    %c0_257 = arith.constant 0 : index
    %566 = vector.load %arg11[%c544_256, %c0_257] : memref<800x256xf32, #tpu.memory_space<vmem>>, vector<32x256xf32>
    tpu.vector_store %arg11[%c544_256, %c0_257], %565 {strides = array<i32>} : memref<800x256xf32, #tpu.memory_space<vmem>>, vector<32x256xf32>,
    %567 = vector.extract_strided_slice %348 {offsets = [0, 145], sizes = [32, 256], strides = [1, 1]} : vector<32x512xf32> to vector<32x256xf32>
    %c1_i32_258 = arith.constant 1 : i32
    %568 = vector.broadcast %c1_i32_258 : i32 to vector<1x256xi32>
    %569 = arith.addi %18, %568 : vector<1x256xi32>
    %c0_i32_259 = arith.constant 0 : i32
    %570 = vector.broadcast %c0_i32_259 : i32 to vector<1x256xi32>
    %571 = arith.cmpi sge, %569, %570 : vector<1x256xi32>
    %c1_i32_260 = arith.constant 1 : i32
    %572 = vector.broadcast %c1_i32_260 : i32 to vector<1x256xi32>
    %573 = arith.addi %18, %572 : vector<1x256xi32>
    %c16_i32_261 = arith.constant 16 : i32
    %574 = vector.broadcast %c16_i32_261 : i32 to vector<1x256xi32>
    %575 = arith.cmpi slt, %573, %574 : vector<1x256xi32>
    %576 = arith.andi %571, %575 : vector<1x256xi1>
    %cst_262 = arith.constant 0.000000e+00 : f32
    %577 = vector.shape_cast %576 : vector<1x256xi1> to vector<1x256xi1>
    %578 = vector.broadcast %577 : vector<1x256xi1> to vector<32x256xi1>
    %579 = vector.broadcast %cst_262 : f32 to vector<32x256xf32>
    %580 = arith.select %578, %567, %579 : vector<32x256xi1>, vector<32x256xf32>
    %c576_263 = arith.constant 576 : index
    %c0_264 = arith.constant 0 : index
    %581 = vector.load %arg11[%c576_263, %c0_264] : memref<800x256xf32, #tpu.memory_space<vmem>>, vector<32x256xf32>
    tpu.vector_store %arg11[%c576_263, %c0_264], %580 {strides = array<i32>} : memref<800x256xf32, #tpu.memory_space<vmem>>, vector<32x256xf32>,
    %582 = vector.extract_strided_slice %348 {offsets = [0, 146], sizes = [32, 256], strides = [1, 1]} : vector<32x512xf32> to vector<32x256xf32>
    %c2_i32_265 = arith.constant 2 : i32
    %583 = vector.broadcast %c2_i32_265 : i32 to vector<1x256xi32>
    %584 = arith.addi %18, %583 : vector<1x256xi32>
    %c0_i32_266 = arith.constant 0 : i32
    %585 = vector.broadcast %c0_i32_266 : i32 to vector<1x256xi32>
    %586 = arith.cmpi sge, %584, %585 : vector<1x256xi32>
    %c2_i32_267 = arith.constant 2 : i32
    %587 = vector.broadcast %c2_i32_267 : i32 to vector<1x256xi32>
    %588 = arith.addi %18, %587 : vector<1x256xi32>
    %c16_i32_268 = arith.constant 16 : i32
    %589 = vector.broadcast %c16_i32_268 : i32 to vector<1x256xi32>
    %590 = arith.cmpi slt, %588, %589 : vector<1x256xi32>
    %591 = arith.andi %586, %590 : vector<1x256xi1>
    %cst_269 = arith.constant 0.000000e+00 : f32
    %592 = vector.shape_cast %591 : vector<1x256xi1> to vector<1x256xi1>
    %593 = vector.broadcast %592 : vector<1x256xi1> to vector<32x256xi1>
    %594 = vector.broadcast %cst_269 : f32 to vector<32x256xf32>
    %595 = arith.select %593, %582, %594 : vector<32x256xi1>, vector<32x256xf32>
    %c608_270 = arith.constant 608 : index
    %c0_271 = arith.constant 0 : index
    %596 = vector.load %arg11[%c608_270, %c0_271] : memref<800x256xf32, #tpu.memory_space<vmem>>, vector<32x256xf32>
    tpu.vector_store %arg11[%c608_270, %c0_271], %595 {strides = array<i32>} : memref<800x256xf32, #tpu.memory_space<vmem>>, vector<32x256xf32>,
    %597 = vector.extract_strided_slice %348 {offsets = [0, 158], sizes = [32, 256], strides = [1, 1]} : vector<32x512xf32> to vector<32x256xf32>
    %c-2_i32_272 = arith.constant -2 : i32
    %598 = vector.broadcast %c-2_i32_272 : i32 to vector<1x256xi32>
    %599 = arith.addi %18, %598 : vector<1x256xi32>
    %c0_i32_273 = arith.constant 0 : i32
    %600 = vector.broadcast %c0_i32_273 : i32 to vector<1x256xi32>
    %601 = arith.cmpi sge, %599, %600 : vector<1x256xi32>
    %c-2_i32_274 = arith.constant -2 : i32
    %602 = vector.broadcast %c-2_i32_274 : i32 to vector<1x256xi32>
    %603 = arith.addi %18, %602 : vector<1x256xi32>
    %c16_i32_275 = arith.constant 16 : i32
    %604 = vector.broadcast %c16_i32_275 : i32 to vector<1x256xi32>
    %605 = arith.cmpi slt, %603, %604 : vector<1x256xi32>
    %606 = arith.andi %601, %605 : vector<1x256xi1>
    %cst_276 = arith.constant 0.000000e+00 : f32
    %607 = vector.shape_cast %606 : vector<1x256xi1> to vector<1x256xi1>
    %608 = vector.broadcast %607 : vector<1x256xi1> to vector<32x256xi1>
    %609 = vector.broadcast %cst_276 : f32 to vector<32x256xf32>
    %610 = arith.select %608, %597, %609 : vector<32x256xi1>, vector<32x256xf32>
    %c640_277 = arith.constant 640 : index
    %c0_278 = arith.constant 0 : index
    %611 = vector.load %arg11[%c640_277, %c0_278] : memref<800x256xf32, #tpu.memory_space<vmem>>, vector<32x256xf32>
    tpu.vector_store %arg11[%c640_277, %c0_278], %610 {strides = array<i32>} : memref<800x256xf32, #tpu.memory_space<vmem>>, vector<32x256xf32>,
    %612 = vector.extract_strided_slice %348 {offsets = [0, 159], sizes = [32, 256], strides = [1, 1]} : vector<32x512xf32> to vector<32x256xf32>
    %c-1_i32_279 = arith.constant -1 : i32
    %613 = vector.broadcast %c-1_i32_279 : i32 to vector<1x256xi32>
    %614 = arith.addi %18, %613 : vector<1x256xi32>
    %c0_i32_280 = arith.constant 0 : i32
    %615 = vector.broadcast %c0_i32_280 : i32 to vector<1x256xi32>
    %616 = arith.cmpi sge, %614, %615 : vector<1x256xi32>
    %c-1_i32_281 = arith.constant -1 : i32
    %617 = vector.broadcast %c-1_i32_281 : i32 to vector<1x256xi32>
    %618 = arith.addi %18, %617 : vector<1x256xi32>
    %c16_i32_282 = arith.constant 16 : i32
    %619 = vector.broadcast %c16_i32_282 : i32 to vector<1x256xi32>
    %620 = arith.cmpi slt, %618, %619 : vector<1x256xi32>
    %621 = arith.andi %616, %620 : vector<1x256xi1>
    %cst_283 = arith.constant 0.000000e+00 : f32
    %622 = vector.shape_cast %621 : vector<1x256xi1> to vector<1x256xi1>
    %623 = vector.broadcast %622 : vector<1x256xi1> to vector<32x256xi1>
    %624 = vector.broadcast %cst_283 : f32 to vector<32x256xf32>
    %625 = arith.select %623, %612, %624 : vector<32x256xi1>, vector<32x256xf32>
    %c672_284 = arith.constant 672 : index
    %c0_285 = arith.constant 0 : index
    %626 = vector.load %arg11[%c672_284, %c0_285] : memref<800x256xf32, #tpu.memory_space<vmem>>, vector<32x256xf32>
    tpu.vector_store %arg11[%c672_284, %c0_285], %625 {strides = array<i32>} : memref<800x256xf32, #tpu.memory_space<vmem>>, vector<32x256xf32>,
    %627 = vector.extract_strided_slice %348 {offsets = [0, 160], sizes = [32, 256], strides = [1, 1]} : vector<32x512xf32> to vector<32x256xf32>
    %c704_286 = arith.constant 704 : index
    %c0_287 = arith.constant 0 : index
    %628 = vector.load %arg11[%c704_286, %c0_287] : memref<800x256xf32, #tpu.memory_space<vmem>>, vector<32x256xf32>
    tpu.vector_store %arg11[%c704_286, %c0_287], %627 {strides = array<i32>} : memref<800x256xf32, #tpu.memory_space<vmem>>, vector<32x256xf32>,
    %629 = vector.extract_strided_slice %348 {offsets = [0, 161], sizes = [32, 256], strides = [1, 1]} : vector<32x512xf32> to vector<32x256xf32>
    %c1_i32_288 = arith.constant 1 : i32
    %630 = vector.broadcast %c1_i32_288 : i32 to vector<1x256xi32>
    %631 = arith.addi %18, %630 : vector<1x256xi32>
    %c0_i32_289 = arith.constant 0 : i32
    %632 = vector.broadcast %c0_i32_289 : i32 to vector<1x256xi32>
    %633 = arith.cmpi sge, %631, %632 : vector<1x256xi32>
    %c1_i32_290 = arith.constant 1 : i32
    %634 = vector.broadcast %c1_i32_290 : i32 to vector<1x256xi32>
    %635 = arith.addi %18, %634 : vector<1x256xi32>
    %c16_i32_291 = arith.constant 16 : i32
    %636 = vector.broadcast %c16_i32_291 : i32 to vector<1x256xi32>
    %637 = arith.cmpi slt, %635, %636 : vector<1x256xi32>
    %638 = arith.andi %633, %637 : vector<1x256xi1>
    %cst_292 = arith.constant 0.000000e+00 : f32
    %639 = vector.shape_cast %638 : vector<1x256xi1> to vector<1x256xi1>
    %640 = vector.broadcast %639 : vector<1x256xi1> to vector<32x256xi1>
    %641 = vector.broadcast %cst_292 : f32 to vector<32x256xf32>
    %642 = arith.select %640, %629, %641 : vector<32x256xi1>, vector<32x256xf32>
    %c736_293 = arith.constant 736 : index
    %c0_294 = arith.constant 0 : index
    %643 = vector.load %arg11[%c736_293, %c0_294] : memref<800x256xf32, #tpu.memory_space<vmem>>, vector<32x256xf32>
    tpu.vector_store %arg11[%c736_293, %c0_294], %642 {strides = array<i32>} : memref<800x256xf32, #tpu.memory_space<vmem>>, vector<32x256xf32>,
    %644 = vector.extract_strided_slice %348 {offsets = [0, 162], sizes = [32, 256], strides = [1, 1]} : vector<32x512xf32> to vector<32x256xf32>
    %c2_i32_295 = arith.constant 2 : i32
    %645 = vector.broadcast %c2_i32_295 : i32 to vector<1x256xi32>
    %646 = arith.addi %18, %645 : vector<1x256xi32>
    %c0_i32_296 = arith.constant 0 : i32
    %647 = vector.broadcast %c0_i32_296 : i32 to vector<1x256xi32>
    %648 = arith.cmpi sge, %646, %647 : vector<1x256xi32>
    %c2_i32_297 = arith.constant 2 : i32
    %649 = vector.broadcast %c2_i32_297 : i32 to vector<1x256xi32>
    %650 = arith.addi %18, %649 : vector<1x256xi32>
    %c16_i32_298 = arith.constant 16 : i32
    %651 = vector.broadcast %c16_i32_298 : i32 to vector<1x256xi32>
    %652 = arith.cmpi slt, %650, %651 : vector<1x256xi32>
    %653 = arith.andi %648, %652 : vector<1x256xi1>
    %cst_299 = arith.constant 0.000000e+00 : f32
    %654 = vector.shape_cast %653 : vector<1x256xi1> to vector<1x256xi1>
    %655 = vector.broadcast %654 : vector<1x256xi1> to vector<32x256xi1>
    %656 = vector.broadcast %cst_299 : f32 to vector<32x256xf32>
    %657 = arith.select %655, %644, %656 : vector<32x256xi1>, vector<32x256xf32>
    %c768_300 = arith.constant 768 : index
    %c0_301 = arith.constant 0 : index
    %658 = vector.load %arg11[%c768_300, %c0_301] : memref<800x256xf32, #tpu.memory_space<vmem>>, vector<32x256xf32>
    tpu.vector_store %arg11[%c768_300, %c0_301], %657 {strides = array<i32>} : memref<800x256xf32, #tpu.memory_space<vmem>>, vector<32x256xf32>,
    %c0_302 = arith.constant 0 : index
    %c0_303 = arith.constant 0 : index
    %659 = vector.load %arg11[%c0_302, %c0_303] : memref<800x256xf32, #tpu.memory_space<vmem>>, vector<800x256xf32>
    %cst_304 = arith.constant dense<0.000000e+00> : vector<32x256xf32>
    %660 = tpu.matmul %29, %659, %cst_304 {dimension_numbers = #tpu.dot_dimension_numbers<[1], [0], [0], [1], [0, 0, 1, 1], [], []>} : vector<32x800xf32>, vector<800x256xf32>, vector<32x256xf32> -> vector<32x256xf32>
    %661 = vector.broadcast %30 : vector<32x1xf32> to vector<32x256xf32>
    %662 = arith.addf %660, %661 : vector<32x256xf32>
    %cst_305 = arith.constant dense<0.000000e+00> : vector<32xf32>
    %663 = vector.multi_reduction <add>, %346, %cst_305 [1] : vector<32x256xf32> to vector<32xf32>
    %664 = vector.shape_cast %663 : vector<32xf32> to vector<32x1xf32>
    %cst_306 = arith.constant 0.000000e+00 : f32
    %665 = vector.broadcast %cst_306 : f32 to vector<32x1xf32>
    %666 = arith.addf %665, %664 : vector<32x1xf32>
    %cst_307 = arith.constant dense<0.000000e+00> : vector<32xf32>
    %667 = vector.multi_reduction <add>, %662, %cst_307 [1] : vector<32x256xf32> to vector<32xf32>
    %668 = vector.shape_cast %667 : vector<32xf32> to vector<32x1xf32>
    %669 = arith.addf %666, %668 : vector<32x1xf32>
    %670 = arith.mulf %346, %346 : vector<32x256xf32>
    %cst_308 = arith.constant dense<0.000000e+00> : vector<32xf32>
    %671 = vector.multi_reduction <add>, %670, %cst_308 [1] : vector<32x256xf32> to vector<32xf32>
    %672 = vector.shape_cast %671 : vector<32xf32> to vector<32x1xf32>
    %cst_309 = arith.constant 0.000000e+00 : f32
    %673 = vector.broadcast %cst_309 : f32 to vector<32x1xf32>
    %674 = arith.addf %673, %672 : vector<32x1xf32>
    %675 = arith.mulf %662, %662 : vector<32x256xf32>
    %cst_310 = arith.constant dense<0.000000e+00> : vector<32xf32>
    %676 = vector.multi_reduction <add>, %675, %cst_310 [1] : vector<32x256xf32> to vector<32xf32>
    %677 = vector.shape_cast %676 : vector<32xf32> to vector<32x1xf32>
    %678 = arith.addf %674, %677 : vector<32x1xf32>
    %cst_311 = arith.constant 0.001953125 : f32
    %679 = vector.broadcast %cst_311 : f32 to vector<32x1xf32>
    %680 = arith.mulf %669, %679 : vector<32x1xf32>
    %cst_312 = arith.constant 0.001953125 : f32
    %681 = vector.broadcast %cst_312 : f32 to vector<32x1xf32>
    %682 = arith.mulf %678, %681 : vector<32x1xf32>
    %683 = arith.mulf %680, %680 : vector<32x1xf32>
    %684 = arith.subf %682, %683 : vector<32x1xf32>
    %c0_313 = arith.constant 0 : index
    %c0_314 = arith.constant 0 : index
    %685 = vector.load %arg3[%c0_313, %c0_314] : memref<32x1xf32, #tpu.memory_space<vmem>>, vector<32x1xf32>
    %cst_315 = arith.constant 9.99999974E-6 : f32
    %686 = vector.broadcast %cst_315 : f32 to vector<32x1xf32>
    %687 = arith.addf %684, %686 : vector<32x1xf32>
    %688 = math.rsqrt %687 : vector<32x1xf32>
    %689 = arith.mulf %685, %688 : vector<32x1xf32>
    %c0_316 = arith.constant 0 : index
    %c0_317 = arith.constant 0 : index
    %690 = vector.load %arg4[%c0_316, %c0_317] : memref<32x1xf32, #tpu.memory_space<vmem>>, vector<32x1xf32>
    %691 = arith.mulf %680, %689 : vector<32x1xf32>
    %692 = arith.subf %690, %691 : vector<32x1xf32>
    %693 = vector.broadcast %689 : vector<32x1xf32> to vector<32x256xf32>
    %694 = arith.mulf %346, %693 : vector<32x256xf32>
    %695 = vector.broadcast %692 : vector<32x1xf32> to vector<32x256xf32>
    %696 = arith.addf %694, %695 : vector<32x256xf32>
    %697 = vector.broadcast %689 : vector<32x1xf32> to vector<32x256xf32>
    %698 = arith.mulf %662, %697 : vector<32x256xf32>
    %699 = vector.broadcast %692 : vector<32x1xf32> to vector<32x256xf32>
    %700 = arith.addf %698, %699 : vector<32x256xf32>
    %cst_318 = arith.constant 0.000000e+00 : f32
    %701 = vector.broadcast %cst_318 : f32 to vector<32x256xf32>
    %702 = arith.maximumf %696, %701 : vector<32x256xf32>
    %cst_319 = arith.constant 0.000000e+00 : f32
    %703 = vector.broadcast %cst_319 : f32 to vector<32x256xf32>
    %704 = arith.maximumf %700, %703 : vector<32x256xf32>
    %c0_320 = arith.constant 0 : index
    %c0_321 = arith.constant 0 : index
    %c128_322 = arith.constant 128 : index
    %705 = vector.load %arg10[%c0_320, %c0_321, %c128_322] : memref<2x32x512xf32, #tpu.memory_space<vmem>>, vector<1x32x256xf32>
    %706 = vector.shape_cast %705 : vector<1x32x256xf32> to vector<32x256xf32>
    %707 = vector.shape_cast %702 : vector<32x256xf32> to vector<1x32x256xf32>
    tpu.vector_store %arg10[%c0_320, %c0_321, %c128_322], %707 {strides = array<i32>} : memref<2x32x512xf32, #tpu.memory_space<vmem>>, vector<1x32x256xf32>,
    %c1_323 = arith.constant 1 : index
    %c0_324 = arith.constant 0 : index
    %c128_325 = arith.constant 128 : index
    %708 = vector.load %arg10[%c1_323, %c0_324, %c128_325] : memref<2x32x512xf32, #tpu.memory_space<vmem>>, vector<1x32x256xf32>
    %709 = vector.shape_cast %708 : vector<1x32x256xf32> to vector<32x256xf32>
    %710 = vector.shape_cast %704 : vector<32x256xf32> to vector<1x32x256xf32>
    tpu.vector_store %arg10[%c1_323, %c0_324, %c128_325], %710 {strides = array<i32>} : memref<2x32x512xf32, #tpu.memory_space<vmem>>, vector<1x32x256xf32>,
    %c0_326 = arith.constant 0 : index
    %c0_327 = arith.constant 0 : index
    %711 = vector.load %arg5[%c0_326, %c0_327] : memref<32x800xf32, #tpu.memory_space<vmem>>, vector<32x800xf32>
    %c0_328 = arith.constant 0 : index
    %c0_329 = arith.constant 0 : index
    %712 = vector.load %arg6[%c0_328, %c0_329] : memref<32x1xf32, #tpu.memory_space<vmem>>, vector<32x1xf32>
    %c0_330 = arith.constant 0 : index
    %c0_331 = arith.constant 0 : index
    %c0_332 = arith.constant 0 : index
    %713 = vector.load %arg10[%c0_330, %c0_331, %c0_332] : memref<2x32x512xf32, #tpu.memory_space<vmem>>, vector<1x32x512xf32>
    %714 = vector.shape_cast %713 : vector<1x32x512xf32> to vector<32x512xf32>
    %715 = vector.extract_strided_slice %714 {offsets = [0, 94], sizes = [32, 256], strides = [1, 1]} : vector<32x512xf32> to vector<32x256xf32>
    %c-2_i32_333 = arith.constant -2 : i32
    %716 = vector.broadcast %c-2_i32_333 : i32 to vector<1x256xi32>
    %717 = arith.addi %18, %716 : vector<1x256xi32>
    %c0_i32_334 = arith.constant 0 : i32
    %718 = vector.broadcast %c0_i32_334 : i32 to vector<1x256xi32>
    %719 = arith.cmpi sge, %717, %718 : vector<1x256xi32>
    %c-2_i32_335 = arith.constant -2 : i32
    %720 = vector.broadcast %c-2_i32_335 : i32 to vector<1x256xi32>
    %721 = arith.addi %18, %720 : vector<1x256xi32>
    %c16_i32_336 = arith.constant 16 : i32
    %722 = vector.broadcast %c16_i32_336 : i32 to vector<1x256xi32>
    %723 = arith.cmpi slt, %721, %722 : vector<1x256xi32>
    %724 = arith.andi %719, %723 : vector<1x256xi1>
    %cst_337 = arith.constant 0.000000e+00 : f32
    %725 = vector.shape_cast %724 : vector<1x256xi1> to vector<1x256xi1>
    %726 = vector.broadcast %725 : vector<1x256xi1> to vector<32x256xi1>
    %727 = vector.broadcast %cst_337 : f32 to vector<32x256xf32>
    %728 = arith.select %726, %715, %727 : vector<32x256xi1>, vector<32x256xf32>
    %c0_338 = arith.constant 0 : index
    %c0_339 = arith.constant 0 : index
    %729 = vector.load %arg11[%c0_338, %c0_339] : memref<800x256xf32, #tpu.memory_space<vmem>>, vector<32x256xf32>
    tpu.vector_store %arg11[%c0_338, %c0_339], %728 {strides = array<i32>} : memref<800x256xf32, #tpu.memory_space<vmem>>, vector<32x256xf32>,
    %730 = vector.extract_strided_slice %714 {offsets = [0, 95], sizes = [32, 256], strides = [1, 1]} : vector<32x512xf32> to vector<32x256xf32>
    %c-1_i32_340 = arith.constant -1 : i32
    %731 = vector.broadcast %c-1_i32_340 : i32 to vector<1x256xi32>
    %732 = arith.addi %18, %731 : vector<1x256xi32>
    %c0_i32_341 = arith.constant 0 : i32
    %733 = vector.broadcast %c0_i32_341 : i32 to vector<1x256xi32>
    %734 = arith.cmpi sge, %732, %733 : vector<1x256xi32>
    %c-1_i32_342 = arith.constant -1 : i32
    %735 = vector.broadcast %c-1_i32_342 : i32 to vector<1x256xi32>
    %736 = arith.addi %18, %735 : vector<1x256xi32>
    %c16_i32_343 = arith.constant 16 : i32
    %737 = vector.broadcast %c16_i32_343 : i32 to vector<1x256xi32>
    %738 = arith.cmpi slt, %736, %737 : vector<1x256xi32>
    %739 = arith.andi %734, %738 : vector<1x256xi1>
    %cst_344 = arith.constant 0.000000e+00 : f32
    %740 = vector.shape_cast %739 : vector<1x256xi1> to vector<1x256xi1>
    %741 = vector.broadcast %740 : vector<1x256xi1> to vector<32x256xi1>
    %742 = vector.broadcast %cst_344 : f32 to vector<32x256xf32>
    %743 = arith.select %741, %730, %742 : vector<32x256xi1>, vector<32x256xf32>
    %c32_345 = arith.constant 32 : index
    %c0_346 = arith.constant 0 : index
    %744 = vector.load %arg11[%c32_345, %c0_346] : memref<800x256xf32, #tpu.memory_space<vmem>>, vector<32x256xf32>
    tpu.vector_store %arg11[%c32_345, %c0_346], %743 {strides = array<i32>} : memref<800x256xf32, #tpu.memory_space<vmem>>, vector<32x256xf32>,
    %745 = vector.extract_strided_slice %714 {offsets = [0, 96], sizes = [32, 256], strides = [1, 1]} : vector<32x512xf32> to vector<32x256xf32>
    %c64_347 = arith.constant 64 : index
    %c0_348 = arith.constant 0 : index
    %746 = vector.load %arg11[%c64_347, %c0_348] : memref<800x256xf32, #tpu.memory_space<vmem>>, vector<32x256xf32>
    tpu.vector_store %arg11[%c64_347, %c0_348], %745 {strides = array<i32>} : memref<800x256xf32, #tpu.memory_space<vmem>>, vector<32x256xf32>,
    %747 = vector.extract_strided_slice %714 {offsets = [0, 97], sizes = [32, 256], strides = [1, 1]} : vector<32x512xf32> to vector<32x256xf32>
    %c1_i32_349 = arith.constant 1 : i32
    %748 = vector.broadcast %c1_i32_349 : i32 to vector<1x256xi32>
    %749 = arith.addi %18, %748 : vector<1x256xi32>
    %c0_i32_350 = arith.constant 0 : i32
    %750 = vector.broadcast %c0_i32_350 : i32 to vector<1x256xi32>
    %751 = arith.cmpi sge, %749, %750 : vector<1x256xi32>
    %c1_i32_351 = arith.constant 1 : i32
    %752 = vector.broadcast %c1_i32_351 : i32 to vector<1x256xi32>
    %753 = arith.addi %18, %752 : vector<1x256xi32>
    %c16_i32_352 = arith.constant 16 : i32
    %754 = vector.broadcast %c16_i32_352 : i32 to vector<1x256xi32>
    %755 = arith.cmpi slt, %753, %754 : vector<1x256xi32>
    %756 = arith.andi %751, %755 : vector<1x256xi1>
    %cst_353 = arith.constant 0.000000e+00 : f32
    %757 = vector.shape_cast %756 : vector<1x256xi1> to vector<1x256xi1>
    %758 = vector.broadcast %757 : vector<1x256xi1> to vector<32x256xi1>
    %759 = vector.broadcast %cst_353 : f32 to vector<32x256xf32>
    %760 = arith.select %758, %747, %759 : vector<32x256xi1>, vector<32x256xf32>
    %c96_354 = arith.constant 96 : index
    %c0_355 = arith.constant 0 : index
    %761 = vector.load %arg11[%c96_354, %c0_355] : memref<800x256xf32, #tpu.memory_space<vmem>>, vector<32x256xf32>
    tpu.vector_store %arg11[%c96_354, %c0_355], %760 {strides = array<i32>} : memref<800x256xf32, #tpu.memory_space<vmem>>, vector<32x256xf32>,
    %762 = vector.extract_strided_slice %714 {offsets = [0, 98], sizes = [32, 256], strides = [1, 1]} : vector<32x512xf32> to vector<32x256xf32>
    %c2_i32_356 = arith.constant 2 : i32
    %763 = vector.broadcast %c2_i32_356 : i32 to vector<1x256xi32>
    %764 = arith.addi %18, %763 : vector<1x256xi32>
    %c0_i32_357 = arith.constant 0 : i32
    %765 = vector.broadcast %c0_i32_357 : i32 to vector<1x256xi32>
    %766 = arith.cmpi sge, %764, %765 : vector<1x256xi32>
    %c2_i32_358 = arith.constant 2 : i32
    %767 = vector.broadcast %c2_i32_358 : i32 to vector<1x256xi32>
    %768 = arith.addi %18, %767 : vector<1x256xi32>
    %c16_i32_359 = arith.constant 16 : i32
    %769 = vector.broadcast %c16_i32_359 : i32 to vector<1x256xi32>
    %770 = arith.cmpi slt, %768, %769 : vector<1x256xi32>
    %771 = arith.andi %766, %770 : vector<1x256xi1>
    %cst_360 = arith.constant 0.000000e+00 : f32
    %772 = vector.shape_cast %771 : vector<1x256xi1> to vector<1x256xi1>
    %773 = vector.broadcast %772 : vector<1x256xi1> to vector<32x256xi1>
    %774 = vector.broadcast %cst_360 : f32 to vector<32x256xf32>
    %775 = arith.select %773, %762, %774 : vector<32x256xi1>, vector<32x256xf32>
    %c128_361 = arith.constant 128 : index
    %c0_362 = arith.constant 0 : index
    %776 = vector.load %arg11[%c128_361, %c0_362] : memref<800x256xf32, #tpu.memory_space<vmem>>, vector<32x256xf32>
    tpu.vector_store %arg11[%c128_361, %c0_362], %775 {strides = array<i32>} : memref<800x256xf32, #tpu.memory_space<vmem>>, vector<32x256xf32>,
    %777 = vector.extract_strided_slice %714 {offsets = [0, 110], sizes = [32, 256], strides = [1, 1]} : vector<32x512xf32> to vector<32x256xf32>
    %c-2_i32_363 = arith.constant -2 : i32
    %778 = vector.broadcast %c-2_i32_363 : i32 to vector<1x256xi32>
    %779 = arith.addi %18, %778 : vector<1x256xi32>
    %c0_i32_364 = arith.constant 0 : i32
    %780 = vector.broadcast %c0_i32_364 : i32 to vector<1x256xi32>
    %781 = arith.cmpi sge, %779, %780 : vector<1x256xi32>
    %c-2_i32_365 = arith.constant -2 : i32
    %782 = vector.broadcast %c-2_i32_365 : i32 to vector<1x256xi32>
    %783 = arith.addi %18, %782 : vector<1x256xi32>
    %c16_i32_366 = arith.constant 16 : i32
    %784 = vector.broadcast %c16_i32_366 : i32 to vector<1x256xi32>
    %785 = arith.cmpi slt, %783, %784 : vector<1x256xi32>
    %786 = arith.andi %781, %785 : vector<1x256xi1>
    %cst_367 = arith.constant 0.000000e+00 : f32
    %787 = vector.shape_cast %786 : vector<1x256xi1> to vector<1x256xi1>
    %788 = vector.broadcast %787 : vector<1x256xi1> to vector<32x256xi1>
    %789 = vector.broadcast %cst_367 : f32 to vector<32x256xf32>
    %790 = arith.select %788, %777, %789 : vector<32x256xi1>, vector<32x256xf32>
    %c160_368 = arith.constant 160 : index
    %c0_369 = arith.constant 0 : index
    %791 = vector.load %arg11[%c160_368, %c0_369] : memref<800x256xf32, #tpu.memory_space<vmem>>, vector<32x256xf32>
    tpu.vector_store %arg11[%c160_368, %c0_369], %790 {strides = array<i32>} : memref<800x256xf32, #tpu.memory_space<vmem>>, vector<32x256xf32>,
    %792 = vector.extract_strided_slice %714 {offsets = [0, 111], sizes = [32, 256], strides = [1, 1]} : vector<32x512xf32> to vector<32x256xf32>
    %c-1_i32_370 = arith.constant -1 : i32
    %793 = vector.broadcast %c-1_i32_370 : i32 to vector<1x256xi32>
    %794 = arith.addi %18, %793 : vector<1x256xi32>
    %c0_i32_371 = arith.constant 0 : i32
    %795 = vector.broadcast %c0_i32_371 : i32 to vector<1x256xi32>
    %796 = arith.cmpi sge, %794, %795 : vector<1x256xi32>
    %c-1_i32_372 = arith.constant -1 : i32
    %797 = vector.broadcast %c-1_i32_372 : i32 to vector<1x256xi32>
    %798 = arith.addi %18, %797 : vector<1x256xi32>
    %c16_i32_373 = arith.constant 16 : i32
    %799 = vector.broadcast %c16_i32_373 : i32 to vector<1x256xi32>
    %800 = arith.cmpi slt, %798, %799 : vector<1x256xi32>
    %801 = arith.andi %796, %800 : vector<1x256xi1>
    %cst_374 = arith.constant 0.000000e+00 : f32
    %802 = vector.shape_cast %801 : vector<1x256xi1> to vector<1x256xi1>
    %803 = vector.broadcast %802 : vector<1x256xi1> to vector<32x256xi1>
    %804 = vector.broadcast %cst_374 : f32 to vector<32x256xf32>
    %805 = arith.select %803, %792, %804 : vector<32x256xi1>, vector<32x256xf32>
    %c192_375 = arith.constant 192 : index
    %c0_376 = arith.constant 0 : index
    %806 = vector.load %arg11[%c192_375, %c0_376] : memref<800x256xf32, #tpu.memory_space<vmem>>, vector<32x256xf32>
    tpu.vector_store %arg11[%c192_375, %c0_376], %805 {strides = array<i32>} : memref<800x256xf32, #tpu.memory_space<vmem>>, vector<32x256xf32>,
    %807 = vector.extract_strided_slice %714 {offsets = [0, 112], sizes = [32, 256], strides = [1, 1]} : vector<32x512xf32> to vector<32x256xf32>
    %c224_377 = arith.constant 224 : index
    %c0_378 = arith.constant 0 : index
    %808 = vector.load %arg11[%c224_377, %c0_378] : memref<800x256xf32, #tpu.memory_space<vmem>>, vector<32x256xf32>
    tpu.vector_store %arg11[%c224_377, %c0_378], %807 {strides = array<i32>} : memref<800x256xf32, #tpu.memory_space<vmem>>, vector<32x256xf32>,
    %809 = vector.extract_strided_slice %714 {offsets = [0, 113], sizes = [32, 256], strides = [1, 1]} : vector<32x512xf32> to vector<32x256xf32>
    %c1_i32_379 = arith.constant 1 : i32
    %810 = vector.broadcast %c1_i32_379 : i32 to vector<1x256xi32>
    %811 = arith.addi %18, %810 : vector<1x256xi32>
    %c0_i32_380 = arith.constant 0 : i32
    %812 = vector.broadcast %c0_i32_380 : i32 to vector<1x256xi32>
    %813 = arith.cmpi sge, %811, %812 : vector<1x256xi32>
    %c1_i32_381 = arith.constant 1 : i32
    %814 = vector.broadcast %c1_i32_381 : i32 to vector<1x256xi32>
    %815 = arith.addi %18, %814 : vector<1x256xi32>
    %c16_i32_382 = arith.constant 16 : i32
    %816 = vector.broadcast %c16_i32_382 : i32 to vector<1x256xi32>
    %817 = arith.cmpi slt, %815, %816 : vector<1x256xi32>
    %818 = arith.andi %813, %817 : vector<1x256xi1>
    %cst_383 = arith.constant 0.000000e+00 : f32
    %819 = vector.shape_cast %818 : vector<1x256xi1> to vector<1x256xi1>
    %820 = vector.broadcast %819 : vector<1x256xi1> to vector<32x256xi1>
    %821 = vector.broadcast %cst_383 : f32 to vector<32x256xf32>
    %822 = arith.select %820, %809, %821 : vector<32x256xi1>, vector<32x256xf32>
    %c256_384 = arith.constant 256 : index
    %c0_385 = arith.constant 0 : index
    %823 = vector.load %arg11[%c256_384, %c0_385] : memref<800x256xf32, #tpu.memory_space<vmem>>, vector<32x256xf32>
    tpu.vector_store %arg11[%c256_384, %c0_385], %822 {strides = array<i32>} : memref<800x256xf32, #tpu.memory_space<vmem>>, vector<32x256xf32>,
    %824 = vector.extract_strided_slice %714 {offsets = [0, 114], sizes = [32, 256], strides = [1, 1]} : vector<32x512xf32> to vector<32x256xf32>
    %c2_i32_386 = arith.constant 2 : i32
    %825 = vector.broadcast %c2_i32_386 : i32 to vector<1x256xi32>
    %826 = arith.addi %18, %825 : vector<1x256xi32>
    %c0_i32_387 = arith.constant 0 : i32
    %827 = vector.broadcast %c0_i32_387 : i32 to vector<1x256xi32>
    %828 = arith.cmpi sge, %826, %827 : vector<1x256xi32>
    %c2_i32_388 = arith.constant 2 : i32
    %829 = vector.broadcast %c2_i32_388 : i32 to vector<1x256xi32>
    %830 = arith.addi %18, %829 : vector<1x256xi32>
    %c16_i32_389 = arith.constant 16 : i32
    %831 = vector.broadcast %c16_i32_389 : i32 to vector<1x256xi32>
    %832 = arith.cmpi slt, %830, %831 : vector<1x256xi32>
    %833 = arith.andi %828, %832 : vector<1x256xi1>
    %cst_390 = arith.constant 0.000000e+00 : f32
    %834 = vector.shape_cast %833 : vector<1x256xi1> to vector<1x256xi1>
    %835 = vector.broadcast %834 : vector<1x256xi1> to vector<32x256xi1>
    %836 = vector.broadcast %cst_390 : f32 to vector<32x256xf32>
    %837 = arith.select %835, %824, %836 : vector<32x256xi1>, vector<32x256xf32>
    %c288_391 = arith.constant 288 : index
    %c0_392 = arith.constant 0 : index
    %838 = vector.load %arg11[%c288_391, %c0_392] : memref<800x256xf32, #tpu.memory_space<vmem>>, vector<32x256xf32>
    tpu.vector_store %arg11[%c288_391, %c0_392], %837 {strides = array<i32>} : memref<800x256xf32, #tpu.memory_space<vmem>>, vector<32x256xf32>,
    %839 = vector.extract_strided_slice %714 {offsets = [0, 126], sizes = [32, 256], strides = [1, 1]} : vector<32x512xf32> to vector<32x256xf32>
    %c-2_i32_393 = arith.constant -2 : i32
    %840 = vector.broadcast %c-2_i32_393 : i32 to vector<1x256xi32>
    %841 = arith.addi %18, %840 : vector<1x256xi32>
    %c0_i32_394 = arith.constant 0 : i32
    %842 = vector.broadcast %c0_i32_394 : i32 to vector<1x256xi32>
    %843 = arith.cmpi sge, %841, %842 : vector<1x256xi32>
    %c-2_i32_395 = arith.constant -2 : i32
    %844 = vector.broadcast %c-2_i32_395 : i32 to vector<1x256xi32>
    %845 = arith.addi %18, %844 : vector<1x256xi32>
    %c16_i32_396 = arith.constant 16 : i32
    %846 = vector.broadcast %c16_i32_396 : i32 to vector<1x256xi32>
    %847 = arith.cmpi slt, %845, %846 : vector<1x256xi32>
    %848 = arith.andi %843, %847 : vector<1x256xi1>
    %cst_397 = arith.constant 0.000000e+00 : f32
    %849 = vector.shape_cast %848 : vector<1x256xi1> to vector<1x256xi1>
    %850 = vector.broadcast %849 : vector<1x256xi1> to vector<32x256xi1>
    %851 = vector.broadcast %cst_397 : f32 to vector<32x256xf32>
    %852 = arith.select %850, %839, %851 : vector<32x256xi1>, vector<32x256xf32>
    %c320_398 = arith.constant 320 : index
    %c0_399 = arith.constant 0 : index
    %853 = vector.load %arg11[%c320_398, %c0_399] : memref<800x256xf32, #tpu.memory_space<vmem>>, vector<32x256xf32>
    tpu.vector_store %arg11[%c320_398, %c0_399], %852 {strides = array<i32>} : memref<800x256xf32, #tpu.memory_space<vmem>>, vector<32x256xf32>,
    %854 = vector.extract_strided_slice %714 {offsets = [0, 127], sizes = [32, 256], strides = [1, 1]} : vector<32x512xf32> to vector<32x256xf32>
    %c-1_i32_400 = arith.constant -1 : i32
    %855 = vector.broadcast %c-1_i32_400 : i32 to vector<1x256xi32>
    %856 = arith.addi %18, %855 : vector<1x256xi32>
    %c0_i32_401 = arith.constant 0 : i32
    %857 = vector.broadcast %c0_i32_401 : i32 to vector<1x256xi32>
    %858 = arith.cmpi sge, %856, %857 : vector<1x256xi32>
    %c-1_i32_402 = arith.constant -1 : i32
    %859 = vector.broadcast %c-1_i32_402 : i32 to vector<1x256xi32>
    %860 = arith.addi %18, %859 : vector<1x256xi32>
    %c16_i32_403 = arith.constant 16 : i32
    %861 = vector.broadcast %c16_i32_403 : i32 to vector<1x256xi32>
    %862 = arith.cmpi slt, %860, %861 : vector<1x256xi32>
    %863 = arith.andi %858, %862 : vector<1x256xi1>
    %cst_404 = arith.constant 0.000000e+00 : f32
    %864 = vector.shape_cast %863 : vector<1x256xi1> to vector<1x256xi1>
    %865 = vector.broadcast %864 : vector<1x256xi1> to vector<32x256xi1>
    %866 = vector.broadcast %cst_404 : f32 to vector<32x256xf32>
    %867 = arith.select %865, %854, %866 : vector<32x256xi1>, vector<32x256xf32>
    %c352_405 = arith.constant 352 : index
    %c0_406 = arith.constant 0 : index
    %868 = vector.load %arg11[%c352_405, %c0_406] : memref<800x256xf32, #tpu.memory_space<vmem>>, vector<32x256xf32>
    tpu.vector_store %arg11[%c352_405, %c0_406], %867 {strides = array<i32>} : memref<800x256xf32, #tpu.memory_space<vmem>>, vector<32x256xf32>,
    %869 = vector.extract_strided_slice %714 {offsets = [0, 128], sizes = [32, 256], strides = [1, 1]} : vector<32x512xf32> to vector<32x256xf32>
    %c384_407 = arith.constant 384 : index
    %c0_408 = arith.constant 0 : index
    %870 = vector.load %arg11[%c384_407, %c0_408] : memref<800x256xf32, #tpu.memory_space<vmem>>, vector<32x256xf32>
    tpu.vector_store %arg11[%c384_407, %c0_408], %869 {strides = array<i32>} : memref<800x256xf32, #tpu.memory_space<vmem>>, vector<32x256xf32>,
    %871 = vector.extract_strided_slice %714 {offsets = [0, 129], sizes = [32, 256], strides = [1, 1]} : vector<32x512xf32> to vector<32x256xf32>
    %c1_i32_409 = arith.constant 1 : i32
    %872 = vector.broadcast %c1_i32_409 : i32 to vector<1x256xi32>
    %873 = arith.addi %18, %872 : vector<1x256xi32>
    %c0_i32_410 = arith.constant 0 : i32
    %874 = vector.broadcast %c0_i32_410 : i32 to vector<1x256xi32>
    %875 = arith.cmpi sge, %873, %874 : vector<1x256xi32>
    %c1_i32_411 = arith.constant 1 : i32
    %876 = vector.broadcast %c1_i32_411 : i32 to vector<1x256xi32>
    %877 = arith.addi %18, %876 : vector<1x256xi32>
    %c16_i32_412 = arith.constant 16 : i32
    %878 = vector.broadcast %c16_i32_412 : i32 to vector<1x256xi32>
    %879 = arith.cmpi slt, %877, %878 : vector<1x256xi32>
    %880 = arith.andi %875, %879 : vector<1x256xi1>
    %cst_413 = arith.constant 0.000000e+00 : f32
    %881 = vector.shape_cast %880 : vector<1x256xi1> to vector<1x256xi1>
    %882 = vector.broadcast %881 : vector<1x256xi1> to vector<32x256xi1>
    %883 = vector.broadcast %cst_413 : f32 to vector<32x256xf32>
    %884 = arith.select %882, %871, %883 : vector<32x256xi1>, vector<32x256xf32>
    %c416_414 = arith.constant 416 : index
    %c0_415 = arith.constant 0 : index
    %885 = vector.load %arg11[%c416_414, %c0_415] : memref<800x256xf32, #tpu.memory_space<vmem>>, vector<32x256xf32>
    tpu.vector_store %arg11[%c416_414, %c0_415], %884 {strides = array<i32>} : memref<800x256xf32, #tpu.memory_space<vmem>>, vector<32x256xf32>,
    %886 = vector.extract_strided_slice %714 {offsets = [0, 130], sizes = [32, 256], strides = [1, 1]} : vector<32x512xf32> to vector<32x256xf32>
    %c2_i32_416 = arith.constant 2 : i32
    %887 = vector.broadcast %c2_i32_416 : i32 to vector<1x256xi32>
    %888 = arith.addi %18, %887 : vector<1x256xi32>
    %c0_i32_417 = arith.constant 0 : i32
    %889 = vector.broadcast %c0_i32_417 : i32 to vector<1x256xi32>
    %890 = arith.cmpi sge, %888, %889 : vector<1x256xi32>
    %c2_i32_418 = arith.constant 2 : i32
    %891 = vector.broadcast %c2_i32_418 : i32 to vector<1x256xi32>
    %892 = arith.addi %18, %891 : vector<1x256xi32>
    %c16_i32_419 = arith.constant 16 : i32
    %893 = vector.broadcast %c16_i32_419 : i32 to vector<1x256xi32>
    %894 = arith.cmpi slt, %892, %893 : vector<1x256xi32>
    %895 = arith.andi %890, %894 : vector<1x256xi1>
    %cst_420 = arith.constant 0.000000e+00 : f32
    %896 = vector.shape_cast %895 : vector<1x256xi1> to vector<1x256xi1>
    %897 = vector.broadcast %896 : vector<1x256xi1> to vector<32x256xi1>
    %898 = vector.broadcast %cst_420 : f32 to vector<32x256xf32>
    %899 = arith.select %897, %886, %898 : vector<32x256xi1>, vector<32x256xf32>
    %c448_421 = arith.constant 448 : index
    %c0_422 = arith.constant 0 : index
    %900 = vector.load %arg11[%c448_421, %c0_422] : memref<800x256xf32, #tpu.memory_space<vmem>>, vector<32x256xf32>
    tpu.vector_store %arg11[%c448_421, %c0_422], %899 {strides = array<i32>} : memref<800x256xf32, #tpu.memory_space<vmem>>, vector<32x256xf32>,
    %901 = vector.extract_strided_slice %714 {offsets = [0, 142], sizes = [32, 256], strides = [1, 1]} : vector<32x512xf32> to vector<32x256xf32>
    %c-2_i32_423 = arith.constant -2 : i32
    %902 = vector.broadcast %c-2_i32_423 : i32 to vector<1x256xi32>
    %903 = arith.addi %18, %902 : vector<1x256xi32>
    %c0_i32_424 = arith.constant 0 : i32
    %904 = vector.broadcast %c0_i32_424 : i32 to vector<1x256xi32>
    %905 = arith.cmpi sge, %903, %904 : vector<1x256xi32>
    %c-2_i32_425 = arith.constant -2 : i32
    %906 = vector.broadcast %c-2_i32_425 : i32 to vector<1x256xi32>
    %907 = arith.addi %18, %906 : vector<1x256xi32>
    %c16_i32_426 = arith.constant 16 : i32
    %908 = vector.broadcast %c16_i32_426 : i32 to vector<1x256xi32>
    %909 = arith.cmpi slt, %907, %908 : vector<1x256xi32>
    %910 = arith.andi %905, %909 : vector<1x256xi1>
    %cst_427 = arith.constant 0.000000e+00 : f32
    %911 = vector.shape_cast %910 : vector<1x256xi1> to vector<1x256xi1>
    %912 = vector.broadcast %911 : vector<1x256xi1> to vector<32x256xi1>
    %913 = vector.broadcast %cst_427 : f32 to vector<32x256xf32>
    %914 = arith.select %912, %901, %913 : vector<32x256xi1>, vector<32x256xf32>
    %c480_428 = arith.constant 480 : index
    %c0_429 = arith.constant 0 : index
    %915 = vector.load %arg11[%c480_428, %c0_429] : memref<800x256xf32, #tpu.memory_space<vmem>>, vector<32x256xf32>
    tpu.vector_store %arg11[%c480_428, %c0_429], %914 {strides = array<i32>} : memref<800x256xf32, #tpu.memory_space<vmem>>, vector<32x256xf32>,
    %916 = vector.extract_strided_slice %714 {offsets = [0, 143], sizes = [32, 256], strides = [1, 1]} : vector<32x512xf32> to vector<32x256xf32>
    %c-1_i32_430 = arith.constant -1 : i32
    %917 = vector.broadcast %c-1_i32_430 : i32 to vector<1x256xi32>
    %918 = arith.addi %18, %917 : vector<1x256xi32>
    %c0_i32_431 = arith.constant 0 : i32
    %919 = vector.broadcast %c0_i32_431 : i32 to vector<1x256xi32>
    %920 = arith.cmpi sge, %918, %919 : vector<1x256xi32>
    %c-1_i32_432 = arith.constant -1 : i32
    %921 = vector.broadcast %c-1_i32_432 : i32 to vector<1x256xi32>
    %922 = arith.addi %18, %921 : vector<1x256xi32>
    %c16_i32_433 = arith.constant 16 : i32
    %923 = vector.broadcast %c16_i32_433 : i32 to vector<1x256xi32>
    %924 = arith.cmpi slt, %922, %923 : vector<1x256xi32>
    %925 = arith.andi %920, %924 : vector<1x256xi1>
    %cst_434 = arith.constant 0.000000e+00 : f32
    %926 = vector.shape_cast %925 : vector<1x256xi1> to vector<1x256xi1>
    %927 = vector.broadcast %926 : vector<1x256xi1> to vector<32x256xi1>
    %928 = vector.broadcast %cst_434 : f32 to vector<32x256xf32>
    %929 = arith.select %927, %916, %928 : vector<32x256xi1>, vector<32x256xf32>
    %c512_435 = arith.constant 512 : index
    %c0_436 = arith.constant 0 : index
    %930 = vector.load %arg11[%c512_435, %c0_436] : memref<800x256xf32, #tpu.memory_space<vmem>>, vector<32x256xf32>
    tpu.vector_store %arg11[%c512_435, %c0_436], %929 {strides = array<i32>} : memref<800x256xf32, #tpu.memory_space<vmem>>, vector<32x256xf32>,
    %931 = vector.extract_strided_slice %714 {offsets = [0, 144], sizes = [32, 256], strides = [1, 1]} : vector<32x512xf32> to vector<32x256xf32>
    %c544_437 = arith.constant 544 : index
    %c0_438 = arith.constant 0 : index
    %932 = vector.load %arg11[%c544_437, %c0_438] : memref<800x256xf32, #tpu.memory_space<vmem>>, vector<32x256xf32>
    tpu.vector_store %arg11[%c544_437, %c0_438], %931 {strides = array<i32>} : memref<800x256xf32, #tpu.memory_space<vmem>>, vector<32x256xf32>,
    %933 = vector.extract_strided_slice %714 {offsets = [0, 145], sizes = [32, 256], strides = [1, 1]} : vector<32x512xf32> to vector<32x256xf32>
    %c1_i32_439 = arith.constant 1 : i32
    %934 = vector.broadcast %c1_i32_439 : i32 to vector<1x256xi32>
    %935 = arith.addi %18, %934 : vector<1x256xi32>
    %c0_i32_440 = arith.constant 0 : i32
    %936 = vector.broadcast %c0_i32_440 : i32 to vector<1x256xi32>
    %937 = arith.cmpi sge, %935, %936 : vector<1x256xi32>
    %c1_i32_441 = arith.constant 1 : i32
    %938 = vector.broadcast %c1_i32_441 : i32 to vector<1x256xi32>
    %939 = arith.addi %18, %938 : vector<1x256xi32>
    %c16_i32_442 = arith.constant 16 : i32
    %940 = vector.broadcast %c16_i32_442 : i32 to vector<1x256xi32>
    %941 = arith.cmpi slt, %939, %940 : vector<1x256xi32>
    %942 = arith.andi %937, %941 : vector<1x256xi1>
    %cst_443 = arith.constant 0.000000e+00 : f32
    %943 = vector.shape_cast %942 : vector<1x256xi1> to vector<1x256xi1>
    %944 = vector.broadcast %943 : vector<1x256xi1> to vector<32x256xi1>
    %945 = vector.broadcast %cst_443 : f32 to vector<32x256xf32>
    %946 = arith.select %944, %933, %945 : vector<32x256xi1>, vector<32x256xf32>
    %c576_444 = arith.constant 576 : index
    %c0_445 = arith.constant 0 : index
    %947 = vector.load %arg11[%c576_444, %c0_445] : memref<800x256xf32, #tpu.memory_space<vmem>>, vector<32x256xf32>
    tpu.vector_store %arg11[%c576_444, %c0_445], %946 {strides = array<i32>} : memref<800x256xf32, #tpu.memory_space<vmem>>, vector<32x256xf32>,
    %948 = vector.extract_strided_slice %714 {offsets = [0, 146], sizes = [32, 256], strides = [1, 1]} : vector<32x512xf32> to vector<32x256xf32>
    %c2_i32_446 = arith.constant 2 : i32
    %949 = vector.broadcast %c2_i32_446 : i32 to vector<1x256xi32>
    %950 = arith.addi %18, %949 : vector<1x256xi32>
    %c0_i32_447 = arith.constant 0 : i32
    %951 = vector.broadcast %c0_i32_447 : i32 to vector<1x256xi32>
    %952 = arith.cmpi sge, %950, %951 : vector<1x256xi32>
    %c2_i32_448 = arith.constant 2 : i32
    %953 = vector.broadcast %c2_i32_448 : i32 to vector<1x256xi32>
    %954 = arith.addi %18, %953 : vector<1x256xi32>
    %c16_i32_449 = arith.constant 16 : i32
    %955 = vector.broadcast %c16_i32_449 : i32 to vector<1x256xi32>
    %956 = arith.cmpi slt, %954, %955 : vector<1x256xi32>
    %957 = arith.andi %952, %956 : vector<1x256xi1>
    %cst_450 = arith.constant 0.000000e+00 : f32
    %958 = vector.shape_cast %957 : vector<1x256xi1> to vector<1x256xi1>
    %959 = vector.broadcast %958 : vector<1x256xi1> to vector<32x256xi1>
    %960 = vector.broadcast %cst_450 : f32 to vector<32x256xf32>
    %961 = arith.select %959, %948, %960 : vector<32x256xi1>, vector<32x256xf32>
    %c608_451 = arith.constant 608 : index
    %c0_452 = arith.constant 0 : index
    %962 = vector.load %arg11[%c608_451, %c0_452] : memref<800x256xf32, #tpu.memory_space<vmem>>, vector<32x256xf32>
    tpu.vector_store %arg11[%c608_451, %c0_452], %961 {strides = array<i32>} : memref<800x256xf32, #tpu.memory_space<vmem>>, vector<32x256xf32>,
    %963 = vector.extract_strided_slice %714 {offsets = [0, 158], sizes = [32, 256], strides = [1, 1]} : vector<32x512xf32> to vector<32x256xf32>
    %c-2_i32_453 = arith.constant -2 : i32
    %964 = vector.broadcast %c-2_i32_453 : i32 to vector<1x256xi32>
    %965 = arith.addi %18, %964 : vector<1x256xi32>
    %c0_i32_454 = arith.constant 0 : i32
    %966 = vector.broadcast %c0_i32_454 : i32 to vector<1x256xi32>
    %967 = arith.cmpi sge, %965, %966 : vector<1x256xi32>
    %c-2_i32_455 = arith.constant -2 : i32
    %968 = vector.broadcast %c-2_i32_455 : i32 to vector<1x256xi32>
    %969 = arith.addi %18, %968 : vector<1x256xi32>
    %c16_i32_456 = arith.constant 16 : i32
    %970 = vector.broadcast %c16_i32_456 : i32 to vector<1x256xi32>
    %971 = arith.cmpi slt, %969, %970 : vector<1x256xi32>
    %972 = arith.andi %967, %971 : vector<1x256xi1>
    %cst_457 = arith.constant 0.000000e+00 : f32
    %973 = vector.shape_cast %972 : vector<1x256xi1> to vector<1x256xi1>
    %974 = vector.broadcast %973 : vector<1x256xi1> to vector<32x256xi1>
    %975 = vector.broadcast %cst_457 : f32 to vector<32x256xf32>
    %976 = arith.select %974, %963, %975 : vector<32x256xi1>, vector<32x256xf32>
    %c640_458 = arith.constant 640 : index
    %c0_459 = arith.constant 0 : index
    %977 = vector.load %arg11[%c640_458, %c0_459] : memref<800x256xf32, #tpu.memory_space<vmem>>, vector<32x256xf32>
    tpu.vector_store %arg11[%c640_458, %c0_459], %976 {strides = array<i32>} : memref<800x256xf32, #tpu.memory_space<vmem>>, vector<32x256xf32>,
    %978 = vector.extract_strided_slice %714 {offsets = [0, 159], sizes = [32, 256], strides = [1, 1]} : vector<32x512xf32> to vector<32x256xf32>
    %c-1_i32_460 = arith.constant -1 : i32
    %979 = vector.broadcast %c-1_i32_460 : i32 to vector<1x256xi32>
    %980 = arith.addi %18, %979 : vector<1x256xi32>
    %c0_i32_461 = arith.constant 0 : i32
    %981 = vector.broadcast %c0_i32_461 : i32 to vector<1x256xi32>
    %982 = arith.cmpi sge, %980, %981 : vector<1x256xi32>
    %c-1_i32_462 = arith.constant -1 : i32
    %983 = vector.broadcast %c-1_i32_462 : i32 to vector<1x256xi32>
    %984 = arith.addi %18, %983 : vector<1x256xi32>
    %c16_i32_463 = arith.constant 16 : i32
    %985 = vector.broadcast %c16_i32_463 : i32 to vector<1x256xi32>
    %986 = arith.cmpi slt, %984, %985 : vector<1x256xi32>
    %987 = arith.andi %982, %986 : vector<1x256xi1>
    %cst_464 = arith.constant 0.000000e+00 : f32
    %988 = vector.shape_cast %987 : vector<1x256xi1> to vector<1x256xi1>
    %989 = vector.broadcast %988 : vector<1x256xi1> to vector<32x256xi1>
    %990 = vector.broadcast %cst_464 : f32 to vector<32x256xf32>
    %991 = arith.select %989, %978, %990 : vector<32x256xi1>, vector<32x256xf32>
    %c672_465 = arith.constant 672 : index
    %c0_466 = arith.constant 0 : index
    %992 = vector.load %arg11[%c672_465, %c0_466] : memref<800x256xf32, #tpu.memory_space<vmem>>, vector<32x256xf32>
    tpu.vector_store %arg11[%c672_465, %c0_466], %991 {strides = array<i32>} : memref<800x256xf32, #tpu.memory_space<vmem>>, vector<32x256xf32>,
    %993 = vector.extract_strided_slice %714 {offsets = [0, 160], sizes = [32, 256], strides = [1, 1]} : vector<32x512xf32> to vector<32x256xf32>
    %c704_467 = arith.constant 704 : index
    %c0_468 = arith.constant 0 : index
    %994 = vector.load %arg11[%c704_467, %c0_468] : memref<800x256xf32, #tpu.memory_space<vmem>>, vector<32x256xf32>
    tpu.vector_store %arg11[%c704_467, %c0_468], %993 {strides = array<i32>} : memref<800x256xf32, #tpu.memory_space<vmem>>, vector<32x256xf32>,
    %995 = vector.extract_strided_slice %714 {offsets = [0, 161], sizes = [32, 256], strides = [1, 1]} : vector<32x512xf32> to vector<32x256xf32>
    %c1_i32_469 = arith.constant 1 : i32
    %996 = vector.broadcast %c1_i32_469 : i32 to vector<1x256xi32>
    %997 = arith.addi %18, %996 : vector<1x256xi32>
    %c0_i32_470 = arith.constant 0 : i32
    %998 = vector.broadcast %c0_i32_470 : i32 to vector<1x256xi32>
    %999 = arith.cmpi sge, %997, %998 : vector<1x256xi32>
    %c1_i32_471 = arith.constant 1 : i32
    %1000 = vector.broadcast %c1_i32_471 : i32 to vector<1x256xi32>
    %1001 = arith.addi %18, %1000 : vector<1x256xi32>
    %c16_i32_472 = arith.constant 16 : i32
    %1002 = vector.broadcast %c16_i32_472 : i32 to vector<1x256xi32>
    %1003 = arith.cmpi slt, %1001, %1002 : vector<1x256xi32>
    %1004 = arith.andi %999, %1003 : vector<1x256xi1>
    %cst_473 = arith.constant 0.000000e+00 : f32
    %1005 = vector.shape_cast %1004 : vector<1x256xi1> to vector<1x256xi1>
    %1006 = vector.broadcast %1005 : vector<1x256xi1> to vector<32x256xi1>
    %1007 = vector.broadcast %cst_473 : f32 to vector<32x256xf32>
    %1008 = arith.select %1006, %995, %1007 : vector<32x256xi1>, vector<32x256xf32>
    %c736_474 = arith.constant 736 : index
    %c0_475 = arith.constant 0 : index
    %1009 = vector.load %arg11[%c736_474, %c0_475] : memref<800x256xf32, #tpu.memory_space<vmem>>, vector<32x256xf32>
    tpu.vector_store %arg11[%c736_474, %c0_475], %1008 {strides = array<i32>} : memref<800x256xf32, #tpu.memory_space<vmem>>, vector<32x256xf32>,
    %1010 = vector.extract_strided_slice %714 {offsets = [0, 162], sizes = [32, 256], strides = [1, 1]} : vector<32x512xf32> to vector<32x256xf32>
    %c2_i32_476 = arith.constant 2 : i32
    %1011 = vector.broadcast %c2_i32_476 : i32 to vector<1x256xi32>
    %1012 = arith.addi %18, %1011 : vector<1x256xi32>
    %c0_i32_477 = arith.constant 0 : i32
    %1013 = vector.broadcast %c0_i32_477 : i32 to vector<1x256xi32>
    %1014 = arith.cmpi sge, %1012, %1013 : vector<1x256xi32>
    %c2_i32_478 = arith.constant 2 : i32
    %1015 = vector.broadcast %c2_i32_478 : i32 to vector<1x256xi32>
    %1016 = arith.addi %18, %1015 : vector<1x256xi32>
    %c16_i32_479 = arith.constant 16 : i32
    %1017 = vector.broadcast %c16_i32_479 : i32 to vector<1x256xi32>
    %1018 = arith.cmpi slt, %1016, %1017 : vector<1x256xi32>
    %1019 = arith.andi %1014, %1018 : vector<1x256xi1>
    %cst_480 = arith.constant 0.000000e+00 : f32
    %1020 = vector.shape_cast %1019 : vector<1x256xi1> to vector<1x256xi1>
    %1021 = vector.broadcast %1020 : vector<1x256xi1> to vector<32x256xi1>
    %1022 = vector.broadcast %cst_480 : f32 to vector<32x256xf32>
    %1023 = arith.select %1021, %1010, %1022 : vector<32x256xi1>, vector<32x256xf32>
    %c768_481 = arith.constant 768 : index
    %c0_482 = arith.constant 0 : index
    %1024 = vector.load %arg11[%c768_481, %c0_482] : memref<800x256xf32, #tpu.memory_space<vmem>>, vector<32x256xf32>
    tpu.vector_store %arg11[%c768_481, %c0_482], %1023 {strides = array<i32>} : memref<800x256xf32, #tpu.memory_space<vmem>>, vector<32x256xf32>,
    %c0_483 = arith.constant 0 : index
    %c0_484 = arith.constant 0 : index
    %1025 = vector.load %arg11[%c0_483, %c0_484] : memref<800x256xf32, #tpu.memory_space<vmem>>, vector<800x256xf32>
    %cst_485 = arith.constant dense<0.000000e+00> : vector<32x256xf32>
    %1026 = tpu.matmul %711, %1025, %cst_485 {dimension_numbers = #tpu.dot_dimension_numbers<[1], [0], [0], [1], [0, 0, 1, 1], [], []>} : vector<32x800xf32>, vector<800x256xf32>, vector<32x256xf32> -> vector<32x256xf32>
    %1027 = vector.broadcast %712 : vector<32x1xf32> to vector<32x256xf32>
    %1028 = arith.addf %1026, %1027 : vector<32x256xf32>
    %c1_486 = arith.constant 1 : index
    %c0_487 = arith.constant 0 : index
    %c0_488 = arith.constant 0 : index
    %1029 = vector.load %arg10[%c1_486, %c0_487, %c0_488] : memref<2x32x512xf32, #tpu.memory_space<vmem>>, vector<1x32x512xf32>
    %1030 = vector.shape_cast %1029 : vector<1x32x512xf32> to vector<32x512xf32>
    %1031 = vector.extract_strided_slice %1030 {offsets = [0, 94], sizes = [32, 256], strides = [1, 1]} : vector<32x512xf32> to vector<32x256xf32>
    %c-2_i32_489 = arith.constant -2 : i32
    %1032 = vector.broadcast %c-2_i32_489 : i32 to vector<1x256xi32>
    %1033 = arith.addi %18, %1032 : vector<1x256xi32>
    %c0_i32_490 = arith.constant 0 : i32
    %1034 = vector.broadcast %c0_i32_490 : i32 to vector<1x256xi32>
    %1035 = arith.cmpi sge, %1033, %1034 : vector<1x256xi32>
    %c-2_i32_491 = arith.constant -2 : i32
    %1036 = vector.broadcast %c-2_i32_491 : i32 to vector<1x256xi32>
    %1037 = arith.addi %18, %1036 : vector<1x256xi32>
    %c16_i32_492 = arith.constant 16 : i32
    %1038 = vector.broadcast %c16_i32_492 : i32 to vector<1x256xi32>
    %1039 = arith.cmpi slt, %1037, %1038 : vector<1x256xi32>
    %1040 = arith.andi %1035, %1039 : vector<1x256xi1>
    %cst_493 = arith.constant 0.000000e+00 : f32
    %1041 = vector.shape_cast %1040 : vector<1x256xi1> to vector<1x256xi1>
    %1042 = vector.broadcast %1041 : vector<1x256xi1> to vector<32x256xi1>
    %1043 = vector.broadcast %cst_493 : f32 to vector<32x256xf32>
    %1044 = arith.select %1042, %1031, %1043 : vector<32x256xi1>, vector<32x256xf32>
    %c0_494 = arith.constant 0 : index
    %c0_495 = arith.constant 0 : index
    %1045 = vector.load %arg11[%c0_494, %c0_495] : memref<800x256xf32, #tpu.memory_space<vmem>>, vector<32x256xf32>
    tpu.vector_store %arg11[%c0_494, %c0_495], %1044 {strides = array<i32>} : memref<800x256xf32, #tpu.memory_space<vmem>>, vector<32x256xf32>,
    %1046 = vector.extract_strided_slice %1030 {offsets = [0, 95], sizes = [32, 256], strides = [1, 1]} : vector<32x512xf32> to vector<32x256xf32>
    %c-1_i32_496 = arith.constant -1 : i32
    %1047 = vector.broadcast %c-1_i32_496 : i32 to vector<1x256xi32>
    %1048 = arith.addi %18, %1047 : vector<1x256xi32>
    %c0_i32_497 = arith.constant 0 : i32
    %1049 = vector.broadcast %c0_i32_497 : i32 to vector<1x256xi32>
    %1050 = arith.cmpi sge, %1048, %1049 : vector<1x256xi32>
    %c-1_i32_498 = arith.constant -1 : i32
    %1051 = vector.broadcast %c-1_i32_498 : i32 to vector<1x256xi32>
    %1052 = arith.addi %18, %1051 : vector<1x256xi32>
    %c16_i32_499 = arith.constant 16 : i32
    %1053 = vector.broadcast %c16_i32_499 : i32 to vector<1x256xi32>
    %1054 = arith.cmpi slt, %1052, %1053 : vector<1x256xi32>
    %1055 = arith.andi %1050, %1054 : vector<1x256xi1>
    %cst_500 = arith.constant 0.000000e+00 : f32
    %1056 = vector.shape_cast %1055 : vector<1x256xi1> to vector<1x256xi1>
    %1057 = vector.broadcast %1056 : vector<1x256xi1> to vector<32x256xi1>
    %1058 = vector.broadcast %cst_500 : f32 to vector<32x256xf32>
    %1059 = arith.select %1057, %1046, %1058 : vector<32x256xi1>, vector<32x256xf32>
    %c32_501 = arith.constant 32 : index
    %c0_502 = arith.constant 0 : index
    %1060 = vector.load %arg11[%c32_501, %c0_502] : memref<800x256xf32, #tpu.memory_space<vmem>>, vector<32x256xf32>
    tpu.vector_store %arg11[%c32_501, %c0_502], %1059 {strides = array<i32>} : memref<800x256xf32, #tpu.memory_space<vmem>>, vector<32x256xf32>,
    %1061 = vector.extract_strided_slice %1030 {offsets = [0, 96], sizes = [32, 256], strides = [1, 1]} : vector<32x512xf32> to vector<32x256xf32>
    %c64_503 = arith.constant 64 : index
    %c0_504 = arith.constant 0 : index
    %1062 = vector.load %arg11[%c64_503, %c0_504] : memref<800x256xf32, #tpu.memory_space<vmem>>, vector<32x256xf32>
    tpu.vector_store %arg11[%c64_503, %c0_504], %1061 {strides = array<i32>} : memref<800x256xf32, #tpu.memory_space<vmem>>, vector<32x256xf32>,
    %1063 = vector.extract_strided_slice %1030 {offsets = [0, 97], sizes = [32, 256], strides = [1, 1]} : vector<32x512xf32> to vector<32x256xf32>
    %c1_i32_505 = arith.constant 1 : i32
    %1064 = vector.broadcast %c1_i32_505 : i32 to vector<1x256xi32>
    %1065 = arith.addi %18, %1064 : vector<1x256xi32>
    %c0_i32_506 = arith.constant 0 : i32
    %1066 = vector.broadcast %c0_i32_506 : i32 to vector<1x256xi32>
    %1067 = arith.cmpi sge, %1065, %1066 : vector<1x256xi32>
    %c1_i32_507 = arith.constant 1 : i32
    %1068 = vector.broadcast %c1_i32_507 : i32 to vector<1x256xi32>
    %1069 = arith.addi %18, %1068 : vector<1x256xi32>
    %c16_i32_508 = arith.constant 16 : i32
    %1070 = vector.broadcast %c16_i32_508 : i32 to vector<1x256xi32>
    %1071 = arith.cmpi slt, %1069, %1070 : vector<1x256xi32>
    %1072 = arith.andi %1067, %1071 : vector<1x256xi1>
    %cst_509 = arith.constant 0.000000e+00 : f32
    %1073 = vector.shape_cast %1072 : vector<1x256xi1> to vector<1x256xi1>
    %1074 = vector.broadcast %1073 : vector<1x256xi1> to vector<32x256xi1>
    %1075 = vector.broadcast %cst_509 : f32 to vector<32x256xf32>
    %1076 = arith.select %1074, %1063, %1075 : vector<32x256xi1>, vector<32x256xf32>
    %c96_510 = arith.constant 96 : index
    %c0_511 = arith.constant 0 : index
    %1077 = vector.load %arg11[%c96_510, %c0_511] : memref<800x256xf32, #tpu.memory_space<vmem>>, vector<32x256xf32>
    tpu.vector_store %arg11[%c96_510, %c0_511], %1076 {strides = array<i32>} : memref<800x256xf32, #tpu.memory_space<vmem>>, vector<32x256xf32>,
    %1078 = vector.extract_strided_slice %1030 {offsets = [0, 98], sizes = [32, 256], strides = [1, 1]} : vector<32x512xf32> to vector<32x256xf32>
    %c2_i32_512 = arith.constant 2 : i32
    %1079 = vector.broadcast %c2_i32_512 : i32 to vector<1x256xi32>
    %1080 = arith.addi %18, %1079 : vector<1x256xi32>
    %c0_i32_513 = arith.constant 0 : i32
    %1081 = vector.broadcast %c0_i32_513 : i32 to vector<1x256xi32>
    %1082 = arith.cmpi sge, %1080, %1081 : vector<1x256xi32>
    %c2_i32_514 = arith.constant 2 : i32
    %1083 = vector.broadcast %c2_i32_514 : i32 to vector<1x256xi32>
    %1084 = arith.addi %18, %1083 : vector<1x256xi32>
    %c16_i32_515 = arith.constant 16 : i32
    %1085 = vector.broadcast %c16_i32_515 : i32 to vector<1x256xi32>
    %1086 = arith.cmpi slt, %1084, %1085 : vector<1x256xi32>
    %1087 = arith.andi %1082, %1086 : vector<1x256xi1>
    %cst_516 = arith.constant 0.000000e+00 : f32
    %1088 = vector.shape_cast %1087 : vector<1x256xi1> to vector<1x256xi1>
    %1089 = vector.broadcast %1088 : vector<1x256xi1> to vector<32x256xi1>
    %1090 = vector.broadcast %cst_516 : f32 to vector<32x256xf32>
    %1091 = arith.select %1089, %1078, %1090 : vector<32x256xi1>, vector<32x256xf32>
    %c128_517 = arith.constant 128 : index
    %c0_518 = arith.constant 0 : index
    %1092 = vector.load %arg11[%c128_517, %c0_518] : memref<800x256xf32, #tpu.memory_space<vmem>>, vector<32x256xf32>
    tpu.vector_store %arg11[%c128_517, %c0_518], %1091 {strides = array<i32>} : memref<800x256xf32, #tpu.memory_space<vmem>>, vector<32x256xf32>,
    %1093 = vector.extract_strided_slice %1030 {offsets = [0, 110], sizes = [32, 256], strides = [1, 1]} : vector<32x512xf32> to vector<32x256xf32>
    %c-2_i32_519 = arith.constant -2 : i32
    %1094 = vector.broadcast %c-2_i32_519 : i32 to vector<1x256xi32>
    %1095 = arith.addi %18, %1094 : vector<1x256xi32>
    %c0_i32_520 = arith.constant 0 : i32
    %1096 = vector.broadcast %c0_i32_520 : i32 to vector<1x256xi32>
    %1097 = arith.cmpi sge, %1095, %1096 : vector<1x256xi32>
    %c-2_i32_521 = arith.constant -2 : i32
    %1098 = vector.broadcast %c-2_i32_521 : i32 to vector<1x256xi32>
    %1099 = arith.addi %18, %1098 : vector<1x256xi32>
    %c16_i32_522 = arith.constant 16 : i32
    %1100 = vector.broadcast %c16_i32_522 : i32 to vector<1x256xi32>
    %1101 = arith.cmpi slt, %1099, %1100 : vector<1x256xi32>
    %1102 = arith.andi %1097, %1101 : vector<1x256xi1>
    %cst_523 = arith.constant 0.000000e+00 : f32
    %1103 = vector.shape_cast %1102 : vector<1x256xi1> to vector<1x256xi1>
    %1104 = vector.broadcast %1103 : vector<1x256xi1> to vector<32x256xi1>
    %1105 = vector.broadcast %cst_523 : f32 to vector<32x256xf32>
    %1106 = arith.select %1104, %1093, %1105 : vector<32x256xi1>, vector<32x256xf32>
    %c160_524 = arith.constant 160 : index
    %c0_525 = arith.constant 0 : index
    %1107 = vector.load %arg11[%c160_524, %c0_525] : memref<800x256xf32, #tpu.memory_space<vmem>>, vector<32x256xf32>
    tpu.vector_store %arg11[%c160_524, %c0_525], %1106 {strides = array<i32>} : memref<800x256xf32, #tpu.memory_space<vmem>>, vector<32x256xf32>,
    %1108 = vector.extract_strided_slice %1030 {offsets = [0, 111], sizes = [32, 256], strides = [1, 1]} : vector<32x512xf32> to vector<32x256xf32>
    %c-1_i32_526 = arith.constant -1 : i32
    %1109 = vector.broadcast %c-1_i32_526 : i32 to vector<1x256xi32>
    %1110 = arith.addi %18, %1109 : vector<1x256xi32>
    %c0_i32_527 = arith.constant 0 : i32
    %1111 = vector.broadcast %c0_i32_527 : i32 to vector<1x256xi32>
    %1112 = arith.cmpi sge, %1110, %1111 : vector<1x256xi32>
    %c-1_i32_528 = arith.constant -1 : i32
    %1113 = vector.broadcast %c-1_i32_528 : i32 to vector<1x256xi32>
    %1114 = arith.addi %18, %1113 : vector<1x256xi32>
    %c16_i32_529 = arith.constant 16 : i32
    %1115 = vector.broadcast %c16_i32_529 : i32 to vector<1x256xi32>
    %1116 = arith.cmpi slt, %1114, %1115 : vector<1x256xi32>
    %1117 = arith.andi %1112, %1116 : vector<1x256xi1>
    %cst_530 = arith.constant 0.000000e+00 : f32
    %1118 = vector.shape_cast %1117 : vector<1x256xi1> to vector<1x256xi1>
    %1119 = vector.broadcast %1118 : vector<1x256xi1> to vector<32x256xi1>
    %1120 = vector.broadcast %cst_530 : f32 to vector<32x256xf32>
    %1121 = arith.select %1119, %1108, %1120 : vector<32x256xi1>, vector<32x256xf32>
    %c192_531 = arith.constant 192 : index
    %c0_532 = arith.constant 0 : index
    %1122 = vector.load %arg11[%c192_531, %c0_532] : memref<800x256xf32, #tpu.memory_space<vmem>>, vector<32x256xf32>
    tpu.vector_store %arg11[%c192_531, %c0_532], %1121 {strides = array<i32>} : memref<800x256xf32, #tpu.memory_space<vmem>>, vector<32x256xf32>,
    %1123 = vector.extract_strided_slice %1030 {offsets = [0, 112], sizes = [32, 256], strides = [1, 1]} : vector<32x512xf32> to vector<32x256xf32>
    %c224_533 = arith.constant 224 : index
    %c0_534 = arith.constant 0 : index
    %1124 = vector.load %arg11[%c224_533, %c0_534] : memref<800x256xf32, #tpu.memory_space<vmem>>, vector<32x256xf32>
    tpu.vector_store %arg11[%c224_533, %c0_534], %1123 {strides = array<i32>} : memref<800x256xf32, #tpu.memory_space<vmem>>, vector<32x256xf32>,
    %1125 = vector.extract_strided_slice %1030 {offsets = [0, 113], sizes = [32, 256], strides = [1, 1]} : vector<32x512xf32> to vector<32x256xf32>
    %c1_i32_535 = arith.constant 1 : i32
    %1126 = vector.broadcast %c1_i32_535 : i32 to vector<1x256xi32>
    %1127 = arith.addi %18, %1126 : vector<1x256xi32>
    %c0_i32_536 = arith.constant 0 : i32
    %1128 = vector.broadcast %c0_i32_536 : i32 to vector<1x256xi32>
    %1129 = arith.cmpi sge, %1127, %1128 : vector<1x256xi32>
    %c1_i32_537 = arith.constant 1 : i32
    %1130 = vector.broadcast %c1_i32_537 : i32 to vector<1x256xi32>
    %1131 = arith.addi %18, %1130 : vector<1x256xi32>
    %c16_i32_538 = arith.constant 16 : i32
    %1132 = vector.broadcast %c16_i32_538 : i32 to vector<1x256xi32>
    %1133 = arith.cmpi slt, %1131, %1132 : vector<1x256xi32>
    %1134 = arith.andi %1129, %1133 : vector<1x256xi1>
    %cst_539 = arith.constant 0.000000e+00 : f32
    %1135 = vector.shape_cast %1134 : vector<1x256xi1> to vector<1x256xi1>
    %1136 = vector.broadcast %1135 : vector<1x256xi1> to vector<32x256xi1>
    %1137 = vector.broadcast %cst_539 : f32 to vector<32x256xf32>
    %1138 = arith.select %1136, %1125, %1137 : vector<32x256xi1>, vector<32x256xf32>
    %c256_540 = arith.constant 256 : index
    %c0_541 = arith.constant 0 : index
    %1139 = vector.load %arg11[%c256_540, %c0_541] : memref<800x256xf32, #tpu.memory_space<vmem>>, vector<32x256xf32>
    tpu.vector_store %arg11[%c256_540, %c0_541], %1138 {strides = array<i32>} : memref<800x256xf32, #tpu.memory_space<vmem>>, vector<32x256xf32>,
    %1140 = vector.extract_strided_slice %1030 {offsets = [0, 114], sizes = [32, 256], strides = [1, 1]} : vector<32x512xf32> to vector<32x256xf32>
    %c2_i32_542 = arith.constant 2 : i32
    %1141 = vector.broadcast %c2_i32_542 : i32 to vector<1x256xi32>
    %1142 = arith.addi %18, %1141 : vector<1x256xi32>
    %c0_i32_543 = arith.constant 0 : i32
    %1143 = vector.broadcast %c0_i32_543 : i32 to vector<1x256xi32>
    %1144 = arith.cmpi sge, %1142, %1143 : vector<1x256xi32>
    %c2_i32_544 = arith.constant 2 : i32
    %1145 = vector.broadcast %c2_i32_544 : i32 to vector<1x256xi32>
    %1146 = arith.addi %18, %1145 : vector<1x256xi32>
    %c16_i32_545 = arith.constant 16 : i32
    %1147 = vector.broadcast %c16_i32_545 : i32 to vector<1x256xi32>
    %1148 = arith.cmpi slt, %1146, %1147 : vector<1x256xi32>
    %1149 = arith.andi %1144, %1148 : vector<1x256xi1>
    %cst_546 = arith.constant 0.000000e+00 : f32
    %1150 = vector.shape_cast %1149 : vector<1x256xi1> to vector<1x256xi1>
    %1151 = vector.broadcast %1150 : vector<1x256xi1> to vector<32x256xi1>
    %1152 = vector.broadcast %cst_546 : f32 to vector<32x256xf32>
    %1153 = arith.select %1151, %1140, %1152 : vector<32x256xi1>, vector<32x256xf32>
    %c288_547 = arith.constant 288 : index
    %c0_548 = arith.constant 0 : index
    %1154 = vector.load %arg11[%c288_547, %c0_548] : memref<800x256xf32, #tpu.memory_space<vmem>>, vector<32x256xf32>
    tpu.vector_store %arg11[%c288_547, %c0_548], %1153 {strides = array<i32>} : memref<800x256xf32, #tpu.memory_space<vmem>>, vector<32x256xf32>,
    %1155 = vector.extract_strided_slice %1030 {offsets = [0, 126], sizes = [32, 256], strides = [1, 1]} : vector<32x512xf32> to vector<32x256xf32>
    %c-2_i32_549 = arith.constant -2 : i32
    %1156 = vector.broadcast %c-2_i32_549 : i32 to vector<1x256xi32>
    %1157 = arith.addi %18, %1156 : vector<1x256xi32>
    %c0_i32_550 = arith.constant 0 : i32
    %1158 = vector.broadcast %c0_i32_550 : i32 to vector<1x256xi32>
    %1159 = arith.cmpi sge, %1157, %1158 : vector<1x256xi32>
    %c-2_i32_551 = arith.constant -2 : i32
    %1160 = vector.broadcast %c-2_i32_551 : i32 to vector<1x256xi32>
    %1161 = arith.addi %18, %1160 : vector<1x256xi32>
    %c16_i32_552 = arith.constant 16 : i32
    %1162 = vector.broadcast %c16_i32_552 : i32 to vector<1x256xi32>
    %1163 = arith.cmpi slt, %1161, %1162 : vector<1x256xi32>
    %1164 = arith.andi %1159, %1163 : vector<1x256xi1>
    %cst_553 = arith.constant 0.000000e+00 : f32
    %1165 = vector.shape_cast %1164 : vector<1x256xi1> to vector<1x256xi1>
    %1166 = vector.broadcast %1165 : vector<1x256xi1> to vector<32x256xi1>
    %1167 = vector.broadcast %cst_553 : f32 to vector<32x256xf32>
    %1168 = arith.select %1166, %1155, %1167 : vector<32x256xi1>, vector<32x256xf32>
    %c320_554 = arith.constant 320 : index
    %c0_555 = arith.constant 0 : index
    %1169 = vector.load %arg11[%c320_554, %c0_555] : memref<800x256xf32, #tpu.memory_space<vmem>>, vector<32x256xf32>
    tpu.vector_store %arg11[%c320_554, %c0_555], %1168 {strides = array<i32>} : memref<800x256xf32, #tpu.memory_space<vmem>>, vector<32x256xf32>,
    %1170 = vector.extract_strided_slice %1030 {offsets = [0, 127], sizes = [32, 256], strides = [1, 1]} : vector<32x512xf32> to vector<32x256xf32>
    %c-1_i32_556 = arith.constant -1 : i32
    %1171 = vector.broadcast %c-1_i32_556 : i32 to vector<1x256xi32>
    %1172 = arith.addi %18, %1171 : vector<1x256xi32>
    %c0_i32_557 = arith.constant 0 : i32
    %1173 = vector.broadcast %c0_i32_557 : i32 to vector<1x256xi32>
    %1174 = arith.cmpi sge, %1172, %1173 : vector<1x256xi32>
    %c-1_i32_558 = arith.constant -1 : i32
    %1175 = vector.broadcast %c-1_i32_558 : i32 to vector<1x256xi32>
    %1176 = arith.addi %18, %1175 : vector<1x256xi32>
    %c16_i32_559 = arith.constant 16 : i32
    %1177 = vector.broadcast %c16_i32_559 : i32 to vector<1x256xi32>
    %1178 = arith.cmpi slt, %1176, %1177 : vector<1x256xi32>
    %1179 = arith.andi %1174, %1178 : vector<1x256xi1>
    %cst_560 = arith.constant 0.000000e+00 : f32
    %1180 = vector.shape_cast %1179 : vector<1x256xi1> to vector<1x256xi1>
    %1181 = vector.broadcast %1180 : vector<1x256xi1> to vector<32x256xi1>
    %1182 = vector.broadcast %cst_560 : f32 to vector<32x256xf32>
    %1183 = arith.select %1181, %1170, %1182 : vector<32x256xi1>, vector<32x256xf32>
    %c352_561 = arith.constant 352 : index
    %c0_562 = arith.constant 0 : index
    %1184 = vector.load %arg11[%c352_561, %c0_562] : memref<800x256xf32, #tpu.memory_space<vmem>>, vector<32x256xf32>
    tpu.vector_store %arg11[%c352_561, %c0_562], %1183 {strides = array<i32>} : memref<800x256xf32, #tpu.memory_space<vmem>>, vector<32x256xf32>,
    %1185 = vector.extract_strided_slice %1030 {offsets = [0, 128], sizes = [32, 256], strides = [1, 1]} : vector<32x512xf32> to vector<32x256xf32>
    %c384_563 = arith.constant 384 : index
    %c0_564 = arith.constant 0 : index
    %1186 = vector.load %arg11[%c384_563, %c0_564] : memref<800x256xf32, #tpu.memory_space<vmem>>, vector<32x256xf32>
    tpu.vector_store %arg11[%c384_563, %c0_564], %1185 {strides = array<i32>} : memref<800x256xf32, #tpu.memory_space<vmem>>, vector<32x256xf32>,
    %1187 = vector.extract_strided_slice %1030 {offsets = [0, 129], sizes = [32, 256], strides = [1, 1]} : vector<32x512xf32> to vector<32x256xf32>
    %c1_i32_565 = arith.constant 1 : i32
    %1188 = vector.broadcast %c1_i32_565 : i32 to vector<1x256xi32>
    %1189 = arith.addi %18, %1188 : vector<1x256xi32>
    %c0_i32_566 = arith.constant 0 : i32
    %1190 = vector.broadcast %c0_i32_566 : i32 to vector<1x256xi32>
    %1191 = arith.cmpi sge, %1189, %1190 : vector<1x256xi32>
    %c1_i32_567 = arith.constant 1 : i32
    %1192 = vector.broadcast %c1_i32_567 : i32 to vector<1x256xi32>
    %1193 = arith.addi %18, %1192 : vector<1x256xi32>
    %c16_i32_568 = arith.constant 16 : i32
    %1194 = vector.broadcast %c16_i32_568 : i32 to vector<1x256xi32>
    %1195 = arith.cmpi slt, %1193, %1194 : vector<1x256xi32>
    %1196 = arith.andi %1191, %1195 : vector<1x256xi1>
    %cst_569 = arith.constant 0.000000e+00 : f32
    %1197 = vector.shape_cast %1196 : vector<1x256xi1> to vector<1x256xi1>
    %1198 = vector.broadcast %1197 : vector<1x256xi1> to vector<32x256xi1>
    %1199 = vector.broadcast %cst_569 : f32 to vector<32x256xf32>
    %1200 = arith.select %1198, %1187, %1199 : vector<32x256xi1>, vector<32x256xf32>
    %c416_570 = arith.constant 416 : index
    %c0_571 = arith.constant 0 : index
    %1201 = vector.load %arg11[%c416_570, %c0_571] : memref<800x256xf32, #tpu.memory_space<vmem>>, vector<32x256xf32>
    tpu.vector_store %arg11[%c416_570, %c0_571], %1200 {strides = array<i32>} : memref<800x256xf32, #tpu.memory_space<vmem>>, vector<32x256xf32>,
    %1202 = vector.extract_strided_slice %1030 {offsets = [0, 130], sizes = [32, 256], strides = [1, 1]} : vector<32x512xf32> to vector<32x256xf32>
    %c2_i32_572 = arith.constant 2 : i32
    %1203 = vector.broadcast %c2_i32_572 : i32 to vector<1x256xi32>
    %1204 = arith.addi %18, %1203 : vector<1x256xi32>
    %c0_i32_573 = arith.constant 0 : i32
    %1205 = vector.broadcast %c0_i32_573 : i32 to vector<1x256xi32>
    %1206 = arith.cmpi sge, %1204, %1205 : vector<1x256xi32>
    %c2_i32_574 = arith.constant 2 : i32
    %1207 = vector.broadcast %c2_i32_574 : i32 to vector<1x256xi32>
    %1208 = arith.addi %18, %1207 : vector<1x256xi32>
    %c16_i32_575 = arith.constant 16 : i32
    %1209 = vector.broadcast %c16_i32_575 : i32 to vector<1x256xi32>
    %1210 = arith.cmpi slt, %1208, %1209 : vector<1x256xi32>
    %1211 = arith.andi %1206, %1210 : vector<1x256xi1>
    %cst_576 = arith.constant 0.000000e+00 : f32
    %1212 = vector.shape_cast %1211 : vector<1x256xi1> to vector<1x256xi1>
    %1213 = vector.broadcast %1212 : vector<1x256xi1> to vector<32x256xi1>
    %1214 = vector.broadcast %cst_576 : f32 to vector<32x256xf32>
    %1215 = arith.select %1213, %1202, %1214 : vector<32x256xi1>, vector<32x256xf32>
    %c448_577 = arith.constant 448 : index
    %c0_578 = arith.constant 0 : index
    %1216 = vector.load %arg11[%c448_577, %c0_578] : memref<800x256xf32, #tpu.memory_space<vmem>>, vector<32x256xf32>
    tpu.vector_store %arg11[%c448_577, %c0_578], %1215 {strides = array<i32>} : memref<800x256xf32, #tpu.memory_space<vmem>>, vector<32x256xf32>,
    %1217 = vector.extract_strided_slice %1030 {offsets = [0, 142], sizes = [32, 256], strides = [1, 1]} : vector<32x512xf32> to vector<32x256xf32>
    %c-2_i32_579 = arith.constant -2 : i32
    %1218 = vector.broadcast %c-2_i32_579 : i32 to vector<1x256xi32>
    %1219 = arith.addi %18, %1218 : vector<1x256xi32>
    %c0_i32_580 = arith.constant 0 : i32
    %1220 = vector.broadcast %c0_i32_580 : i32 to vector<1x256xi32>
    %1221 = arith.cmpi sge, %1219, %1220 : vector<1x256xi32>
    %c-2_i32_581 = arith.constant -2 : i32
    %1222 = vector.broadcast %c-2_i32_581 : i32 to vector<1x256xi32>
    %1223 = arith.addi %18, %1222 : vector<1x256xi32>
    %c16_i32_582 = arith.constant 16 : i32
    %1224 = vector.broadcast %c16_i32_582 : i32 to vector<1x256xi32>
    %1225 = arith.cmpi slt, %1223, %1224 : vector<1x256xi32>
    %1226 = arith.andi %1221, %1225 : vector<1x256xi1>
    %cst_583 = arith.constant 0.000000e+00 : f32
    %1227 = vector.shape_cast %1226 : vector<1x256xi1> to vector<1x256xi1>
    %1228 = vector.broadcast %1227 : vector<1x256xi1> to vector<32x256xi1>
    %1229 = vector.broadcast %cst_583 : f32 to vector<32x256xf32>
    %1230 = arith.select %1228, %1217, %1229 : vector<32x256xi1>, vector<32x256xf32>
    %c480_584 = arith.constant 480 : index
    %c0_585 = arith.constant 0 : index
    %1231 = vector.load %arg11[%c480_584, %c0_585] : memref<800x256xf32, #tpu.memory_space<vmem>>, vector<32x256xf32>
    tpu.vector_store %arg11[%c480_584, %c0_585], %1230 {strides = array<i32>} : memref<800x256xf32, #tpu.memory_space<vmem>>, vector<32x256xf32>,
    %1232 = vector.extract_strided_slice %1030 {offsets = [0, 143], sizes = [32, 256], strides = [1, 1]} : vector<32x512xf32> to vector<32x256xf32>
    %c-1_i32_586 = arith.constant -1 : i32
    %1233 = vector.broadcast %c-1_i32_586 : i32 to vector<1x256xi32>
    %1234 = arith.addi %18, %1233 : vector<1x256xi32>
    %c0_i32_587 = arith.constant 0 : i32
    %1235 = vector.broadcast %c0_i32_587 : i32 to vector<1x256xi32>
    %1236 = arith.cmpi sge, %1234, %1235 : vector<1x256xi32>
    %c-1_i32_588 = arith.constant -1 : i32
    %1237 = vector.broadcast %c-1_i32_588 : i32 to vector<1x256xi32>
    %1238 = arith.addi %18, %1237 : vector<1x256xi32>
    %c16_i32_589 = arith.constant 16 : i32
    %1239 = vector.broadcast %c16_i32_589 : i32 to vector<1x256xi32>
    %1240 = arith.cmpi slt, %1238, %1239 : vector<1x256xi32>
    %1241 = arith.andi %1236, %1240 : vector<1x256xi1>
    %cst_590 = arith.constant 0.000000e+00 : f32
    %1242 = vector.shape_cast %1241 : vector<1x256xi1> to vector<1x256xi1>
    %1243 = vector.broadcast %1242 : vector<1x256xi1> to vector<32x256xi1>
    %1244 = vector.broadcast %cst_590 : f32 to vector<32x256xf32>
    %1245 = arith.select %1243, %1232, %1244 : vector<32x256xi1>, vector<32x256xf32>
    %c512_591 = arith.constant 512 : index
    %c0_592 = arith.constant 0 : index
    %1246 = vector.load %arg11[%c512_591, %c0_592] : memref<800x256xf32, #tpu.memory_space<vmem>>, vector<32x256xf32>
    tpu.vector_store %arg11[%c512_591, %c0_592], %1245 {strides = array<i32>} : memref<800x256xf32, #tpu.memory_space<vmem>>, vector<32x256xf32>,
    %1247 = vector.extract_strided_slice %1030 {offsets = [0, 144], sizes = [32, 256], strides = [1, 1]} : vector<32x512xf32> to vector<32x256xf32>
    %c544_593 = arith.constant 544 : index
    %c0_594 = arith.constant 0 : index
    %1248 = vector.load %arg11[%c544_593, %c0_594] : memref<800x256xf32, #tpu.memory_space<vmem>>, vector<32x256xf32>
    tpu.vector_store %arg11[%c544_593, %c0_594], %1247 {strides = array<i32>} : memref<800x256xf32, #tpu.memory_space<vmem>>, vector<32x256xf32>,
    %1249 = vector.extract_strided_slice %1030 {offsets = [0, 145], sizes = [32, 256], strides = [1, 1]} : vector<32x512xf32> to vector<32x256xf32>
    %c1_i32_595 = arith.constant 1 : i32
    %1250 = vector.broadcast %c1_i32_595 : i32 to vector<1x256xi32>
    %1251 = arith.addi %18, %1250 : vector<1x256xi32>
    %c0_i32_596 = arith.constant 0 : i32
    %1252 = vector.broadcast %c0_i32_596 : i32 to vector<1x256xi32>
    %1253 = arith.cmpi sge, %1251, %1252 : vector<1x256xi32>
    %c1_i32_597 = arith.constant 1 : i32
    %1254 = vector.broadcast %c1_i32_597 : i32 to vector<1x256xi32>
    %1255 = arith.addi %18, %1254 : vector<1x256xi32>
    %c16_i32_598 = arith.constant 16 : i32
    %1256 = vector.broadcast %c16_i32_598 : i32 to vector<1x256xi32>
    %1257 = arith.cmpi slt, %1255, %1256 : vector<1x256xi32>
    %1258 = arith.andi %1253, %1257 : vector<1x256xi1>
    %cst_599 = arith.constant 0.000000e+00 : f32
    %1259 = vector.shape_cast %1258 : vector<1x256xi1> to vector<1x256xi1>
    %1260 = vector.broadcast %1259 : vector<1x256xi1> to vector<32x256xi1>
    %1261 = vector.broadcast %cst_599 : f32 to vector<32x256xf32>
    %1262 = arith.select %1260, %1249, %1261 : vector<32x256xi1>, vector<32x256xf32>
    %c576_600 = arith.constant 576 : index
    %c0_601 = arith.constant 0 : index
    %1263 = vector.load %arg11[%c576_600, %c0_601] : memref<800x256xf32, #tpu.memory_space<vmem>>, vector<32x256xf32>
    tpu.vector_store %arg11[%c576_600, %c0_601], %1262 {strides = array<i32>} : memref<800x256xf32, #tpu.memory_space<vmem>>, vector<32x256xf32>,
    %1264 = vector.extract_strided_slice %1030 {offsets = [0, 146], sizes = [32, 256], strides = [1, 1]} : vector<32x512xf32> to vector<32x256xf32>
    %c2_i32_602 = arith.constant 2 : i32
    %1265 = vector.broadcast %c2_i32_602 : i32 to vector<1x256xi32>
    %1266 = arith.addi %18, %1265 : vector<1x256xi32>
    %c0_i32_603 = arith.constant 0 : i32
    %1267 = vector.broadcast %c0_i32_603 : i32 to vector<1x256xi32>
    %1268 = arith.cmpi sge, %1266, %1267 : vector<1x256xi32>
    %c2_i32_604 = arith.constant 2 : i32
    %1269 = vector.broadcast %c2_i32_604 : i32 to vector<1x256xi32>
    %1270 = arith.addi %18, %1269 : vector<1x256xi32>
    %c16_i32_605 = arith.constant 16 : i32
    %1271 = vector.broadcast %c16_i32_605 : i32 to vector<1x256xi32>
    %1272 = arith.cmpi slt, %1270, %1271 : vector<1x256xi32>
    %1273 = arith.andi %1268, %1272 : vector<1x256xi1>
    %cst_606 = arith.constant 0.000000e+00 : f32
    %1274 = vector.shape_cast %1273 : vector<1x256xi1> to vector<1x256xi1>
    %1275 = vector.broadcast %1274 : vector<1x256xi1> to vector<32x256xi1>
    %1276 = vector.broadcast %cst_606 : f32 to vector<32x256xf32>
    %1277 = arith.select %1275, %1264, %1276 : vector<32x256xi1>, vector<32x256xf32>
    %c608_607 = arith.constant 608 : index
    %c0_608 = arith.constant 0 : index
    %1278 = vector.load %arg11[%c608_607, %c0_608] : memref<800x256xf32, #tpu.memory_space<vmem>>, vector<32x256xf32>
    tpu.vector_store %arg11[%c608_607, %c0_608], %1277 {strides = array<i32>} : memref<800x256xf32, #tpu.memory_space<vmem>>, vector<32x256xf32>,
    %1279 = vector.extract_strided_slice %1030 {offsets = [0, 158], sizes = [32, 256], strides = [1, 1]} : vector<32x512xf32> to vector<32x256xf32>
    %c-2_i32_609 = arith.constant -2 : i32
    %1280 = vector.broadcast %c-2_i32_609 : i32 to vector<1x256xi32>
    %1281 = arith.addi %18, %1280 : vector<1x256xi32>
    %c0_i32_610 = arith.constant 0 : i32
    %1282 = vector.broadcast %c0_i32_610 : i32 to vector<1x256xi32>
    %1283 = arith.cmpi sge, %1281, %1282 : vector<1x256xi32>
    %c-2_i32_611 = arith.constant -2 : i32
    %1284 = vector.broadcast %c-2_i32_611 : i32 to vector<1x256xi32>
    %1285 = arith.addi %18, %1284 : vector<1x256xi32>
    %c16_i32_612 = arith.constant 16 : i32
    %1286 = vector.broadcast %c16_i32_612 : i32 to vector<1x256xi32>
    %1287 = arith.cmpi slt, %1285, %1286 : vector<1x256xi32>
    %1288 = arith.andi %1283, %1287 : vector<1x256xi1>
    %cst_613 = arith.constant 0.000000e+00 : f32
    %1289 = vector.shape_cast %1288 : vector<1x256xi1> to vector<1x256xi1>
    %1290 = vector.broadcast %1289 : vector<1x256xi1> to vector<32x256xi1>
    %1291 = vector.broadcast %cst_613 : f32 to vector<32x256xf32>
    %1292 = arith.select %1290, %1279, %1291 : vector<32x256xi1>, vector<32x256xf32>
    %c640_614 = arith.constant 640 : index
    %c0_615 = arith.constant 0 : index
    %1293 = vector.load %arg11[%c640_614, %c0_615] : memref<800x256xf32, #tpu.memory_space<vmem>>, vector<32x256xf32>
    tpu.vector_store %arg11[%c640_614, %c0_615], %1292 {strides = array<i32>} : memref<800x256xf32, #tpu.memory_space<vmem>>, vector<32x256xf32>,
    %1294 = vector.extract_strided_slice %1030 {offsets = [0, 159], sizes = [32, 256], strides = [1, 1]} : vector<32x512xf32> to vector<32x256xf32>
    %c-1_i32_616 = arith.constant -1 : i32
    %1295 = vector.broadcast %c-1_i32_616 : i32 to vector<1x256xi32>
    %1296 = arith.addi %18, %1295 : vector<1x256xi32>
    %c0_i32_617 = arith.constant 0 : i32
    %1297 = vector.broadcast %c0_i32_617 : i32 to vector<1x256xi32>
    %1298 = arith.cmpi sge, %1296, %1297 : vector<1x256xi32>
    %c-1_i32_618 = arith.constant -1 : i32
    %1299 = vector.broadcast %c-1_i32_618 : i32 to vector<1x256xi32>
    %1300 = arith.addi %18, %1299 : vector<1x256xi32>
    %c16_i32_619 = arith.constant 16 : i32
    %1301 = vector.broadcast %c16_i32_619 : i32 to vector<1x256xi32>
    %1302 = arith.cmpi slt, %1300, %1301 : vector<1x256xi32>
    %1303 = arith.andi %1298, %1302 : vector<1x256xi1>
    %cst_620 = arith.constant 0.000000e+00 : f32
    %1304 = vector.shape_cast %1303 : vector<1x256xi1> to vector<1x256xi1>
    %1305 = vector.broadcast %1304 : vector<1x256xi1> to vector<32x256xi1>
    %1306 = vector.broadcast %cst_620 : f32 to vector<32x256xf32>
    %1307 = arith.select %1305, %1294, %1306 : vector<32x256xi1>, vector<32x256xf32>
    %c672_621 = arith.constant 672 : index
    %c0_622 = arith.constant 0 : index
    %1308 = vector.load %arg11[%c672_621, %c0_622] : memref<800x256xf32, #tpu.memory_space<vmem>>, vector<32x256xf32>
    tpu.vector_store %arg11[%c672_621, %c0_622], %1307 {strides = array<i32>} : memref<800x256xf32, #tpu.memory_space<vmem>>, vector<32x256xf32>,
    %1309 = vector.extract_strided_slice %1030 {offsets = [0, 160], sizes = [32, 256], strides = [1, 1]} : vector<32x512xf32> to vector<32x256xf32>
    %c704_623 = arith.constant 704 : index
    %c0_624 = arith.constant 0 : index
    %1310 = vector.load %arg11[%c704_623, %c0_624] : memref<800x256xf32, #tpu.memory_space<vmem>>, vector<32x256xf32>
    tpu.vector_store %arg11[%c704_623, %c0_624], %1309 {strides = array<i32>} : memref<800x256xf32, #tpu.memory_space<vmem>>, vector<32x256xf32>,
    %1311 = vector.extract_strided_slice %1030 {offsets = [0, 161], sizes = [32, 256], strides = [1, 1]} : vector<32x512xf32> to vector<32x256xf32>
    %c1_i32_625 = arith.constant 1 : i32
    %1312 = vector.broadcast %c1_i32_625 : i32 to vector<1x256xi32>
    %1313 = arith.addi %18, %1312 : vector<1x256xi32>
    %c0_i32_626 = arith.constant 0 : i32
    %1314 = vector.broadcast %c0_i32_626 : i32 to vector<1x256xi32>
    %1315 = arith.cmpi sge, %1313, %1314 : vector<1x256xi32>
    %c1_i32_627 = arith.constant 1 : i32
    %1316 = vector.broadcast %c1_i32_627 : i32 to vector<1x256xi32>
    %1317 = arith.addi %18, %1316 : vector<1x256xi32>
    %c16_i32_628 = arith.constant 16 : i32
    %1318 = vector.broadcast %c16_i32_628 : i32 to vector<1x256xi32>
    %1319 = arith.cmpi slt, %1317, %1318 : vector<1x256xi32>
    %1320 = arith.andi %1315, %1319 : vector<1x256xi1>
    %cst_629 = arith.constant 0.000000e+00 : f32
    %1321 = vector.shape_cast %1320 : vector<1x256xi1> to vector<1x256xi1>
    %1322 = vector.broadcast %1321 : vector<1x256xi1> to vector<32x256xi1>
    %1323 = vector.broadcast %cst_629 : f32 to vector<32x256xf32>
    %1324 = arith.select %1322, %1311, %1323 : vector<32x256xi1>, vector<32x256xf32>
    %c736_630 = arith.constant 736 : index
    %c0_631 = arith.constant 0 : index
    %1325 = vector.load %arg11[%c736_630, %c0_631] : memref<800x256xf32, #tpu.memory_space<vmem>>, vector<32x256xf32>
    tpu.vector_store %arg11[%c736_630, %c0_631], %1324 {strides = array<i32>} : memref<800x256xf32, #tpu.memory_space<vmem>>, vector<32x256xf32>,
    %1326 = vector.extract_strided_slice %1030 {offsets = [0, 162], sizes = [32, 256], strides = [1, 1]} : vector<32x512xf32> to vector<32x256xf32>
    %c2_i32_632 = arith.constant 2 : i32
    %1327 = vector.broadcast %c2_i32_632 : i32 to vector<1x256xi32>
    %1328 = arith.addi %18, %1327 : vector<1x256xi32>
    %c0_i32_633 = arith.constant 0 : i32
    %1329 = vector.broadcast %c0_i32_633 : i32 to vector<1x256xi32>
    %1330 = arith.cmpi sge, %1328, %1329 : vector<1x256xi32>
    %c2_i32_634 = arith.constant 2 : i32
    %1331 = vector.broadcast %c2_i32_634 : i32 to vector<1x256xi32>
    %1332 = arith.addi %18, %1331 : vector<1x256xi32>
    %c16_i32_635 = arith.constant 16 : i32
    %1333 = vector.broadcast %c16_i32_635 : i32 to vector<1x256xi32>
    %1334 = arith.cmpi slt, %1332, %1333 : vector<1x256xi32>
    %1335 = arith.andi %1330, %1334 : vector<1x256xi1>
    %cst_636 = arith.constant 0.000000e+00 : f32
    %1336 = vector.shape_cast %1335 : vector<1x256xi1> to vector<1x256xi1>
    %1337 = vector.broadcast %1336 : vector<1x256xi1> to vector<32x256xi1>
    %1338 = vector.broadcast %cst_636 : f32 to vector<32x256xf32>
    %1339 = arith.select %1337, %1326, %1338 : vector<32x256xi1>, vector<32x256xf32>
    %c768_637 = arith.constant 768 : index
    %c0_638 = arith.constant 0 : index
    %1340 = vector.load %arg11[%c768_637, %c0_638] : memref<800x256xf32, #tpu.memory_space<vmem>>, vector<32x256xf32>
    tpu.vector_store %arg11[%c768_637, %c0_638], %1339 {strides = array<i32>} : memref<800x256xf32, #tpu.memory_space<vmem>>, vector<32x256xf32>,
    %c0_639 = arith.constant 0 : index
    %c0_640 = arith.constant 0 : index
    %1341 = vector.load %arg11[%c0_639, %c0_640] : memref<800x256xf32, #tpu.memory_space<vmem>>, vector<800x256xf32>
    %cst_641 = arith.constant dense<0.000000e+00> : vector<32x256xf32>
    %1342 = tpu.matmul %711, %1341, %cst_641 {dimension_numbers = #tpu.dot_dimension_numbers<[1], [0], [0], [1], [0, 0, 1, 1], [], []>} : vector<32x800xf32>, vector<800x256xf32>, vector<32x256xf32> -> vector<32x256xf32>
    %1343 = vector.broadcast %712 : vector<32x1xf32> to vector<32x256xf32>
    %1344 = arith.addf %1342, %1343 : vector<32x256xf32>
    %cst_642 = arith.constant dense<0.000000e+00> : vector<32xf32>
    %1345 = vector.multi_reduction <add>, %1028, %cst_642 [1] : vector<32x256xf32> to vector<32xf32>
    %1346 = vector.shape_cast %1345 : vector<32xf32> to vector<32x1xf32>
    %cst_643 = arith.constant 0.000000e+00 : f32
    %1347 = vector.broadcast %cst_643 : f32 to vector<32x1xf32>
    %1348 = arith.addf %1347, %1346 : vector<32x1xf32>
    %cst_644 = arith.constant dense<0.000000e+00> : vector<32xf32>
    %1349 = vector.multi_reduction <add>, %1344, %cst_644 [1] : vector<32x256xf32> to vector<32xf32>
    %1350 = vector.shape_cast %1349 : vector<32xf32> to vector<32x1xf32>
    %1351 = arith.addf %1348, %1350 : vector<32x1xf32>
    %1352 = arith.mulf %1028, %1028 : vector<32x256xf32>
    %cst_645 = arith.constant dense<0.000000e+00> : vector<32xf32>
    %1353 = vector.multi_reduction <add>, %1352, %cst_645 [1] : vector<32x256xf32> to vector<32xf32>
    %1354 = vector.shape_cast %1353 : vector<32xf32> to vector<32x1xf32>
    %cst_646 = arith.constant 0.000000e+00 : f32
    %1355 = vector.broadcast %cst_646 : f32 to vector<32x1xf32>
    %1356 = arith.addf %1355, %1354 : vector<32x1xf32>
    %1357 = arith.mulf %1344, %1344 : vector<32x256xf32>
    %cst_647 = arith.constant dense<0.000000e+00> : vector<32xf32>
    %1358 = vector.multi_reduction <add>, %1357, %cst_647 [1] : vector<32x256xf32> to vector<32xf32>
    %1359 = vector.shape_cast %1358 : vector<32xf32> to vector<32x1xf32>
    %1360 = arith.addf %1356, %1359 : vector<32x1xf32>
    %cst_648 = arith.constant 0.001953125 : f32
    %1361 = vector.broadcast %cst_648 : f32 to vector<32x1xf32>
    %1362 = arith.mulf %1351, %1361 : vector<32x1xf32>
    %cst_649 = arith.constant 0.001953125 : f32
    %1363 = vector.broadcast %cst_649 : f32 to vector<32x1xf32>
    %1364 = arith.mulf %1360, %1363 : vector<32x1xf32>
    %1365 = arith.mulf %1362, %1362 : vector<32x1xf32>
    %1366 = arith.subf %1364, %1365 : vector<32x1xf32>
    %c0_650 = arith.constant 0 : index
    %c0_651 = arith.constant 0 : index
    %1367 = vector.load %arg7[%c0_650, %c0_651] : memref<32x1xf32, #tpu.memory_space<vmem>>, vector<32x1xf32>
    %cst_652 = arith.constant 9.99999974E-6 : f32
    %1368 = vector.broadcast %cst_652 : f32 to vector<32x1xf32>
    %1369 = arith.addf %1366, %1368 : vector<32x1xf32>
    %1370 = math.rsqrt %1369 : vector<32x1xf32>
    %1371 = arith.mulf %1367, %1370 : vector<32x1xf32>
    %c0_653 = arith.constant 0 : index
    %c0_654 = arith.constant 0 : index
    %1372 = vector.load %arg8[%c0_653, %c0_654] : memref<32x1xf32, #tpu.memory_space<vmem>>, vector<32x1xf32>
    %1373 = arith.mulf %1362, %1371 : vector<32x1xf32>
    %1374 = arith.subf %1372, %1373 : vector<32x1xf32>
    %1375 = vector.broadcast %1371 : vector<32x1xf32> to vector<32x256xf32>
    %1376 = arith.mulf %1028, %1375 : vector<32x256xf32>
    %1377 = vector.broadcast %1374 : vector<32x1xf32> to vector<32x256xf32>
    %1378 = arith.addf %1376, %1377 : vector<32x256xf32>
    %1379 = vector.broadcast %1371 : vector<32x1xf32> to vector<32x256xf32>
    %1380 = arith.mulf %1344, %1379 : vector<32x256xf32>
    %1381 = vector.broadcast %1374 : vector<32x1xf32> to vector<32x256xf32>
    %1382 = arith.addf %1380, %1381 : vector<32x256xf32>
    %1383 = arith.addf %1378, %20 : vector<32x256xf32>
    %cst_655 = arith.constant 0.000000e+00 : f32
    %1384 = vector.broadcast %cst_655 : f32 to vector<32x256xf32>
    %1385 = arith.maximumf %1383, %1384 : vector<32x256xf32>
    %c0_656 = arith.constant 0 : index
    %c0_657 = arith.constant 0 : index
    %c0_658 = arith.constant 0 : index
    %1386 = vector.load %arg9[%c0_656, %c0_657, %c0_658] : memref<2x32x256xf32, #tpu.memory_space<vmem>>, vector<1x32x256xf32>
    %1387 = vector.shape_cast %1386 : vector<1x32x256xf32> to vector<32x256xf32>
    %1388 = vector.shape_cast %1385 : vector<32x256xf32> to vector<1x32x256xf32>
    tpu.vector_store %arg9[%c0_656, %c0_657, %c0_658], %1388 {strides = array<i32>} : memref<2x32x256xf32, #tpu.memory_space<vmem>>, vector<1x32x256xf32>,
    %1389 = arith.addf %1382, %22 : vector<32x256xf32>
    %cst_659 = arith.constant 0.000000e+00 : f32
    %1390 = vector.broadcast %cst_659 : f32 to vector<32x256xf32>
    %1391 = arith.maximumf %1389, %1390 : vector<32x256xf32>
    %c1_660 = arith.constant 1 : index
    %c0_661 = arith.constant 0 : index
    %c0_662 = arith.constant 0 : index
    %1392 = vector.load %arg9[%c1_660, %c0_661, %c0_662] : memref<2x32x256xf32, #tpu.memory_space<vmem>>, vector<1x32x256xf32>
    %1393 = vector.shape_cast %1392 : vector<1x32x256xf32> to vector<32x256xf32>
    %1394 = vector.shape_cast %1391 : vector<32x256xf32> to vector<1x32x256xf32>
    tpu.vector_store %arg9[%c1_660, %c0_661, %c0_662], %1394 {strides = array<i32>} : memref<2x32x256xf32, #tpu.memory_space<vmem>>, vector<1x32x256xf32>,
    return
  }
}

</mosaic_0001>

<llo_original>
// kernel: resblock_forward.1
$region0: #{resblock_forward.1}
  #allocation0 [shape = 'u32[]', space=smem, size = 0x4, offset = 0x4, fixed_abs, tag = 'smem constant byte address 0x4 - core index']
  #allocation1 [shape = 'u32[144,128]{1,0:T(1,128)}', space=vmem, size = 0x12000, scoped, tag = 'internal scratch']
  #allocation2 [shape = 'f32[2,32,512]{2,1,0:T(8,128)}', space=vmem, size = 0x20000, scoped, tag = 'scratch operand']
  #allocation3 [shape = 'f32[800,256]{1,0:T(8,128)}', space=vmem, size = 0xc8000, scoped, tag = 'scratch operand']
  %s0 = inlined_call_operand.vmem [shape: f32[2,32,256], index: 0, kind: input, shape index: {}]
  %s1 = inlined_call_operand.vmem [shape: f32[32,800], index: 1, kind: input, shape index: {}]
  %s2 = inlined_call_operand.vmem [shape: f32[32,1], index: 2, kind: input, shape index: {}]
  %s3 = inlined_call_operand.vmem [shape: f32[32,1], index: 3, kind: input, shape index: {}]
  %s4 = inlined_call_operand.vmem [shape: f32[32,1], index: 4, kind: input, shape index: {}]
  %s5 = inlined_call_operand.vmem [shape: f32[32,800], index: 5, kind: input, shape index: {}]
  %s6 = inlined_call_operand.vmem [shape: f32[32,1], index: 6, kind: input, shape index: {}]
  %s7 = inlined_call_operand.vmem [shape: f32[32,1], index: 7, kind: input, shape index: {}]
  %s8 = inlined_call_operand.vmem [shape: f32[32,1], index: 8, kind: input, shape index: {}]
  %s9 = inlined_call_operand.vmem [shape: f32[2,32,256], index: 9, kind: output, shape index: {}]
  %s10 = sld [smem:[#allocation0]]
  $region46: #{resblock_forward.1} parent=0
    _
  %s12 = ssub.s32 1, %s10
  %s13 = scalar_select 0, %s12, %s10
  // Predicated region
  $region2: #{resblock_forward.1} parent=0 // pred_check
    _
  $region3: #{resblock_forward.1} parent=0 // pred_check_branch
    %15 = sbr.rel (0) target = $region5
  $region4: #{resblock_forward.1} parent=0 // pred_region
    _
  $region5: #{resblock_forward.1} parent=0 // pred_fallthru
    _
  // Predicated region
  $region6: #{resblock_forward.1} parent=0 // pred_check
    _
  $region7: #{resblock_forward.1} parent=0 // pred_check_branch
    %17 = sbr.rel (0) target = $region9
  $region8: #{resblock_forward.1} parent=0 // pred_region
    _
  $region9: #{resblock_forward.1} parent=0 // pred_fallthru
    _
  // Predicated region
  $region10: #{resblock_forward.1} parent=0 // pred_check
    _
  $region11: #{resblock_forward.1} parent=0 // pred_check_branch
    %19 = sbr.rel (0) target = $region13
  $region12: #{resblock_forward.1} parent=0 // pred_region
    _
  $region13: #{resblock_forward.1} parent=0 // pred_fallthru
    _
  // Predicated region
  $region14: #{resblock_forward.1} parent=0 // pred_check
    _
  $region15: #{resblock_forward.1} parent=0 // pred_check_branch
    %21 = sbr.rel (0) target = $region17
  $region16: #{resblock_forward.1} parent=0 // pred_region
    _
  $region17: #{resblock_forward.1} parent=0 // pred_fallthru
    _
  // Predicated region
  $region18: #{resblock_forward.1} parent=0 // pred_check
    _
  $region19: #{resblock_forward.1} parent=0 // pred_check_branch
    %23 = sbr.rel (0) target = $region21
  $region20: #{resblock_forward.1} parent=0 // pred_region
    _
  $region21: #{resblock_forward.1} parent=0 // pred_fallthru
    _
  // Predicated region
  $region22: #{resblock_forward.1} parent=0 // pred_check
    _
  $region23: #{resblock_forward.1} parent=0 // pred_check_branch
    %25 = sbr.rel (0) target = $region25
  $region24: #{resblock_forward.1} parent=0 // pred_region
    _
  $region25: #{resblock_forward.1} parent=0 // pred_fallthru
    _
  // Predicated region
  $region26: #{resblock_forward.1} parent=0 // pred_check
    _
  $region27: #{resblock_forward.1} parent=0 // pred_check_branch
    %27 = sbr.rel (0) target = $region29
  $region28: #{resblock_forward.1} parent=0 // pred_region
    _
  $region29: #{resblock_forward.1} parent=0 // pred_fallthru
    _
  // Predicated region
  $region30: #{resblock_forward.1} parent=0 // pred_check
    _
  $region31: #{resblock_forward.1} parent=0 // pred_check_branch
    %29 = sbr.rel (0) target = $region33
  $region32: #{resblock_forward.1} parent=0 // pred_region
    _
  $region33: #{resblock_forward.1} parent=0 // pred_fallthru
    _
  // Predicated region
  $region34: #{resblock_forward.1} parent=0 // pred_check
    _
  $region35: #{resblock_forward.1} parent=0 // pred_check_branch
    %31 = sbr.rel (0) target = $region37
  $region36: #{resblock_forward.1} parent=0 // pred_region
    _
  $region37: #{resblock_forward.1} parent=0 // pred_fallthru
    _
  %32 = vst [vmem:[#allocation2] sm:$0xff] 0.0
  %33 = vst [vmem:[#allocation2 + $0x8] sm:$0xff] 0.0
  %34 = vst [vmem:[#allocation2 + $0x10] sm:$0xff] 0.0
  %35 = vst [vmem:[#allocation2 + $0x18] sm:$0xff] 0.0
  %36 = vst [vmem:[#allocation2 + $0x20] sm:$0xff] 0.0
  %37 = vst [vmem:[#allocation2 + $0x28] sm:$0xff] 0.0
  %38 = vst [vmem:[#allocation2 + $0x30] sm:$0xff] 0.0
  %39 = vst [vmem:[#allocation2 + $0x38] sm:$0xff] 0.0
  %40 = vst [vmem:[#allocation2 + $0x40] sm:$0xff] 0.0
  %41 = vst [vmem:[#allocation2 + $0x48] sm:$0xff] 0.0
  %42 = vst [vmem:[#allocation2 + $0x50] sm:$0xff] 0.0
  %43 = vst [vmem:[#allocation2 + $0x58] sm:$0xff] 0.0
  %44 = vst [vmem:[#allocation2 + $0x60] sm:$0xff] 0.0
  %45 = vst [vmem:[#allocation2 + $0x68] sm:$0xff] 0.0
  %46 = vst [vmem:[#allocation2 + $0x70] sm:$0xff] 0.0
  %47 = vst [vmem:[#allocation2 + $0x78] sm:$0xff] 0.0
  %48 = vst [vmem:[#allocation2 + $0x80] sm:$0xff] 0.0
  %49 = vst [vmem:[#allocation2 + $0x88] sm:$0xff] 0.0
  %50 = vst [vmem:[#allocation2 + $0x90] sm:$0xff] 0.0
  %51 = vst [vmem:[#allocation2 + $0x98] sm:$0xff] 0.0
  %52 = vst [vmem:[#allocation2 + $0xa0] sm:$0xff] 0.0
  %53 = vst [vmem:[#allocation2 + $0xa8] sm:$0xff] 0.0
  %54 = vst [vmem:[#allocation2 + $0xb0] sm:$0xff] 0.0
  %55 = vst [vmem:[#allocation2 + $0xb8] sm:$0xff] 0.0
  %56 = vst [vmem:[#allocation2 + $0xc0] sm:$0xff] 0.0
  %57 = vst [vmem:[#allocation2 + $0xc8] sm:$0xff] 0.0
  %58 = vst [vmem:[#allocation2 + $0xd0] sm:$0xff] 0.0
  %59 = vst [vmem:[#allocation2 + $0xd8] sm:$0xff] 0.0
  %60 = vst [vmem:[#allocation2 + $0xe0] sm:$0xff] 0.0
  %61 = vst [vmem:[#allocation2 + $0xe8] sm:$0xff] 0.0
  %62 = vst [vmem:[#allocation2 + $0xf0] sm:$0xff] 0.0
  %63 = vst [vmem:[#allocation2 + $0xf8] sm:$0xff] 0.0
  %v64 = vlaneseq
  %v65 = vand.u32 %v64, 127
  %v66 = vadd.s32 %v65, 128
  %vm67 = vcmp.lt.s32.totalorder %v65, 0
  %v68 = vsub.s32 0, %v65
  %v69 = vsel %vm67, %v68, %v65
  %v70 = vshrl.u32 %v69, 4
  %v71 = vand.u32 %v69, 15
  %v72 = vsub.s32 0, %v71
  %v73 = vsel %vm67, %v72, %v71
  %vm74 = vcmp.lt.s32.totalorder %v66, 0
  %v75 = vsub.s32 0, %v66
  %v76 = vsel %vm74, %v75, %v66
  %v77 = vshrl.u32 %v76, 4
  %v78 = vand.u32 %v76, 15
  %v79 = vsub.s32 0, %v78
  %v80 = vsel %vm74, %v79, %v78
  %vm81 = vcmp.ne.s32.totalorder %v73, 0
  %vm82 = vcmp.ne.s32.totalorder %v80, 0
  %vm83 = vcmp.lt.s32.totalorder %v73, 0
  %vm84 = vcmp.lt.s32.totalorder %v80, 0
  %vm85 = vmand %vm83, %vm81
  %vm86 = vmand %vm84, %vm82
  %v87 = vadd.s32 %v73, 16
  %v88 = vadd.s32 %v80, 16
  %v89 = vsel %vm85, %v87, %v73
  %v90 = vsel %vm86, %v88, %v80
  %v91 = vld [vmem:[%s0] sm:$0xff]
  %v92 = vld [vmem:[%s0 + $0x8] sm:$0xff]
  %v93 = vld [vmem:[%s0 + $0x10] sm:$0xff]
  %v94 = vld [vmem:[%s0 + $0x18] sm:$0xff]
  %v95 = vld [vmem:[%s0 + $0x20] sm:$0xff]
  %v96 = vld [vmem:[%s0 + $0x28] sm:$0xff]
  %v97 = vld [vmem:[%s0 + $0x30] sm:$0xff]
  %v98 = vld [vmem:[%s0 + $0x38] sm:$0xff]
  %s99 = scalar_lea.vmem %s0, 64
  %v100 = vld [vmem:[%s99] sm:$0xff]
  %v101 = vld [vmem:[%s99 + $0x8] sm:$0xff]
  %v102 = vld [vmem:[%s99 + $0x10] sm:$0xff]
  %v103 = vld [vmem:[%s99 + $0x18] sm:$0xff]
  %v104 = vld [vmem:[%s99 + $0x20] sm:$0xff]
  %v105 = vld [vmem:[%s99 + $0x28] sm:$0xff]
  %v106 = vld [vmem:[%s99 + $0x30] sm:$0xff]
  %v107 = vld [vmem:[%s99 + $0x38] sm:$0xff]
  %108 = vst [vmem:[#allocation2 + $0x8] sm:$0xff] %v91
  %109 = vst [vmem:[#allocation2 + $0x10] sm:$0xff] %v92
  %110 = vst [vmem:[#allocation2 + $0x28] sm:$0xff] %v93
  %111 = vst [vmem:[#allocation2 + $0x30] sm:$0xff] %v94
  %112 = vst [vmem:[#allocation2 + $0x48] sm:$0xff] %v95
  %113 = vst [vmem:[#allocation2 + $0x50] sm:$0xff] %v96
  %114 = vst [vmem:[#allocation2 + $0x68] sm:$0xff] %v97
  %115 = vst [vmem:[#allocation2 + $0x70] sm:$0xff] %v98
  %s116 = scalar_lea.vmem [#allocation2], 128
  %117 = vst [vmem:[%s116 + $0x8] sm:$0xff] %v100
  %118 = vst [vmem:[%s116 + $0x10] sm:$0xff] %v101
  %119 = vst [vmem:[%s116 + $0x28] sm:$0xff] %v102
  %120 = vst [vmem:[%s116 + $0x30] sm:$0xff] %v103
  %121 = vst [vmem:[%s116 + $0x48] sm:$0xff] %v104
  %122 = vst [vmem:[%s116 + $0x50] sm:$0xff] %v105
  %123 = vst [vmem:[%s116 + $0x68] sm:$0xff] %v106
  %124 = vst [vmem:[%s116 + $0x70] sm:$0xff] %v107
  %v125 = vld [vmem:[%s1] sm:$0xff]
  %v126 = vld [vmem:[%s1 + $0x8] sm:$0xff]
  %v127 = vld [vmem:[%s1 + $0x10] sm:$0xff]
  %v128 = vld [vmem:[%s1 + $0x18] sm:$0xff]
  %v129 = vld [vmem:[%s1 + $0x20] sm:$0xff]
  %v130 = vld [vmem:[%s1 + $0x28] sm:$0xff]
  %v131 = vld [vmem:[%s1 + $0x30] sm:$0xff]
  %v132 = vld [vmem:[%s1 + $0x38] sm:$0xff]
  %v133 = vld [vmem:[%s1 + $0x40] sm:$0xff]
  %v134 = vld [vmem:[%s1 + $0x48] sm:$0xff]
  %v135 = vld [vmem:[%s1 + $0x50] sm:$0xff]
  %v136 = vld [vmem:[%s1 + $0x58] sm:$0xff]
  %v137 = vld [vmem:[%s1 + $0x60] sm:$0xff]
  %v138 = vld [vmem:[%s1 + $0x68] sm:$0xff]
  %v139 = vld [vmem:[%s1 + $0x70] sm:$0xff]
  %v140 = vld [vmem:[%s1 + $0x78] sm:$0xff]
  %v141 = vld [vmem:[%s1 + $0x80] sm:$0xff]
  %v142 = vld [vmem:[%s1 + $0x88] sm:$0xff]
  %v143 = vld [vmem:[%s1 + $0x90] sm:$0xff]
  %v144 = vld [vmem:[%s1 + $0x98] sm:$0xff]
  %v145 = vld [vmem:[%s1 + $0xa0] sm:$0xff]
  %v146 = vld [vmem:[%s1 + $0xa8] sm:$0xff]
  %v147 = vld [vmem:[%s1 + $0xb0] sm:$0xff]
  %v148 = vld [vmem:[%s1 + $0xb8] sm:$0xff]
  %v149 = vld [vmem:[%s1 + $0xc0] sm:$0xff]
  %v150 = vld [vmem:[%s1 + $0xc8] sm:$0xff]
  %v151 = vld [vmem:[%s1 + $0xd0] sm:$0xff]
  %v152 = vld [vmem:[%s1 + $0xd8] sm:$0xff]
  %v153 = vld [vmem:[%s2] sm:$0xff]
  %v154 = vld [vmem:[%s2 + $0x8] sm:$0xff]
  %v155 = vld [vmem:[%s2 + $0x10] sm:$0xff]
  %v156 = vld [vmem:[%s2 + $0x18] sm:$0xff]
  %v157 = vld [vmem:[#allocation2] sm:$0xff]
  %v158 = vld [vmem:[#allocation2 + $0x8] sm:$0xff]
  %v159 = vld [vmem:[#allocation2 + $0x10] sm:$0xff]
  %v160 = vld [vmem:[#allocation2 + $0x18] sm:$0xff]
  %v161 = vld [vmem:[#allocation2 + $0x20] sm:$0xff]
  %v162 = vld [vmem:[#allocation2 + $0x28] sm:$0xff]
  %v163 = vld [vmem:[#allocation2 + $0x30] sm:$0xff]
  %v164 = vld [vmem:[#allocation2 + $0x38] sm:$0xff]
  %v165 = vld [vmem:[#allocation2 + $0x40] sm:$0xff]
  %v166 = vld [vmem:[#allocation2 + $0x48] sm:$0xff]
  %v167 = vld [vmem:[#allocation2 + $0x50] sm:$0xff]
  %v168 = vld [vmem:[#allocation2 + $0x58] sm:$0xff]
  %v169 = vld [vmem:[#allocation2 + $0x60] sm:$0xff]
  %v170 = vld [vmem:[#allocation2 + $0x68] sm:$0xff]
  %v171 = vld [vmem:[#allocation2 + $0x70] sm:$0xff]
  %v172 = vld [vmem:[#allocation2 + $0x78] sm:$0xff]
  %v173 = vadd.s32 %v89, 4294967294
  %v174 = vadd.s32 %v90, 4294967294
  %vm175 = vcmp.ge.s32.totalorder %v173, 0
  %vm176 = vcmp.ge.s32.totalorder %v174, 0
  %vm177 = vcmp.lt.s32.totalorder %v173, 16
  %vm178 = vcmp.lt.s32.totalorder %v174, 16
  %vm179 = vmand %vm175, %vm177
  %vm180 = vmand %vm176, %vm178
  %v181 = vsel %vm179, 1, 0
  %v182 = vsel %vm180, 1, 0
  %vm183 = vcmp.eq.s32.totalorder %v181, 1
  %vm184 = vcmp.eq.s32.totalorder %v182, 1
  %197 = vrot.lane.b32.xlu0 %v157, 34
  %v198 = vpop.permute.xlu0 %197
  %199 = vrot.lane.b32.xlu0 %v158, 34
  %v200 = vpop.permute.xlu0 %199
  %201 = vrot.lane.b32.xlu0 %v159, 34
  %v202 = vpop.permute.xlu0 %201
  %203 = vrot.lane.b32.xlu0 %v161, 34
  %v204 = vpop.permute.xlu0 %203
  %205 = vrot.lane.b32.xlu0 %v162, 34
  %v206 = vpop.permute.xlu0 %205
  %207 = vrot.lane.b32.xlu0 %v163, 34
  %v208 = vpop.permute.xlu0 %207
  %209 = vrot.lane.b32.xlu0 %v165, 34
  %v210 = vpop.permute.xlu0 %209
  %211 = vrot.lane.b32.xlu0 %v166, 34
  %v212 = vpop.permute.xlu0 %211
  %213 = vrot.lane.b32.xlu0 %v167, 34
  %v214 = vpop.permute.xlu0 %213
  %215 = vrot.lane.b32.xlu0 %v169, 34
  %v216 = vpop.permute.xlu0 %215
  %217 = vrot.lane.b32.xlu0 %v170, 34
  %v218 = vpop.permute.xlu0 %217
  %219 = vrot.lane.b32.xlu0 %v171, 34
  %v220 = vpop.permute.xlu0 %219
  %vm221 = vcmask 277504
  %v222 = vsel %vm221, %v198, %v200
  %v223 = vsel %vm221, %v200, %v202
  %v224 = vsel %vm221, %v204, %v206
  %v225 = vsel %vm221, %v206, %v208
  %v226 = vsel %vm221, %v210, %v212
  %v227 = vsel %vm221, %v212, %v214
  %v228 = vsel %vm221, %v216, %v218
  %v229 = vsel %vm221, %v218, %v220
  %v238 = vsel %vm183, %v222, 0.0
  %v239 = vsel %vm184, %v223, 0.0
  %v240 = vsel %vm183, %v224, 0.0
  %v241 = vsel %vm184, %v225, 0.0
  %v242 = vsel %vm183, %v226, 0.0
  %v243 = vsel %vm184, %v227, 0.0
  %v244 = vsel %vm183, %v228, 0.0
  %v245 = vsel %vm184, %v229, 0.0
  %246 = vst [vmem:[#allocation3] sm:$0xff] %v238
  %247 = vst [vmem:[#allocation3 + $0x8] sm:$0xff] %v239
  %248 = vst [vmem:[#allocation3 + $0x10] sm:$0xff] %v240
  %249 = vst [vmem:[#allocation3 + $0x18] sm:$0xff] %v241
  %250 = vst [vmem:[#allocation3 + $0x20] sm:$0xff] %v242
  %251 = vst [vmem:[#allocation3 + $0x28] sm:$0xff] %v243
  %252 = vst [vmem:[#allocation3 + $0x30] sm:$0xff] %v244
  %253 = vst [vmem:[#allocation3 + $0x38] sm:$0xff] %v245
  %v254 = vadd.s32 %v89, 4294967295
  %v255 = vadd.s32 %v90, 4294967295
  %vm256 = vcmp.ge.s32.totalorder %v254, 0
  %vm257 = vcmp.ge.s32.totalorder %v255, 0
  %vm258 = vcmp.lt.s32.totalorder %v254, 16
  %vm259 = vcmp.lt.s32.totalorder %v255, 16
  %vm260 = vmand %vm256, %vm258
  %vm261 = vmand %vm257, %vm259
  %v262 = vsel %vm260, 1, 0
  %v263 = vsel %vm261, 1, 0
  %vm264 = vcmp.eq.s32.totalorder %v262, 1
  %vm265 = vcmp.eq.s32.totalorder %v263, 1
  %266 = vrot.lane.b32.xlu0 %v157, 33
  %v267 = vpop.permute.xlu0 %266
  %268 = vrot.lane.b32.xlu0 %v158, 33
  %v269 = vpop.permute.xlu0 %268
  %270 = vrot.lane.b32.xlu0 %v159, 33
  %v271 = vpop.permute.xlu0 %270
  %272 = vrot.lane.b32.xlu0 %v161, 33
  %v273 = vpop.permute.xlu0 %272
  %274 = vrot.lane.b32.xlu0 %v162, 33
  %v275 = vpop.permute.xlu0 %274
  %276 = vrot.lane.b32.xlu0 %v163, 33
  %v277 = vpop.permute.xlu0 %276
  %278 = vrot.lane.b32.xlu0 %v165, 33
  %v279 = vpop.permute.xlu0 %278
  %280 = vrot.lane.b32.xlu0 %v166, 33
  %v281 = vpop.permute.xlu0 %280
  %282 = vrot.lane.b32.xlu0 %v167, 33
  %v283 = vpop.permute.xlu0 %282
  %284 = vrot.lane.b32.xlu0 %v169, 33
  %v285 = vpop.permute.xlu0 %284
  %286 = vrot.lane.b32.xlu0 %v170, 33
  %v287 = vpop.permute.xlu0 %286
  %288 = vrot.lane.b32.xlu0 %v171, 33
  %v289 = vpop.permute.xlu0 %288
  %vm290 = vcmask 269312
  %v291 = vsel %vm290, %v267, %v269
  %v292 = vsel %vm290, %v269, %v271
  %v293 = vsel %vm290, %v273, %v275
  %v294 = vsel %vm290, %v275, %v277
  %v295 = vsel %vm290, %v279, %v281
  %v296 = vsel %vm290, %v281, %v283
  %v297 = vsel %vm290, %v285, %v287
  %v298 = vsel %vm290, %v287, %v289
  %v307 = vsel %vm264, %v291, 0.0
  %v308 = vsel %vm265, %v292, 0.0
  %v309 = vsel %vm264, %v293, 0.0
  %v310 = vsel %vm265, %v294, 0.0
  %v311 = vsel %vm264, %v295, 0.0
  %v312 = vsel %vm265, %v296, 0.0
  %v313 = vsel %vm264, %v297, 0.0
  %v314 = vsel %vm265, %v298, 0.0
  %315 = vst [vmem:[#allocation3 + $0x40] sm:$0xff] %v307
  %316 = vst [vmem:[#allocation3 + $0x48] sm:$0xff] %v308
  %317 = vst [vmem:[#allocation3 + $0x50] sm:$0xff] %v309
  %318 = vst [vmem:[#allocation3 + $0x58] sm:$0xff] %v310
  %319 = vst [vmem:[#allocation3 + $0x60] sm:$0xff] %v311
  %320 = vst [vmem:[#allocation3 + $0x68] sm:$0xff] %v312
  %321 = vst [vmem:[#allocation3 + $0x70] sm:$0xff] %v313
  %322 = vst [vmem:[#allocation3 + $0x78] sm:$0xff] %v314
  %323 = vrot.lane.b32.xlu0 %v157, 32
  %v324 = vpop.permute.xlu0 %323
  %325 = vrot.lane.b32.xlu0 %v158, 32
  %v326 = vpop.permute.xlu0 %325
  %327 = vrot.lane.b32.xlu0 %v159, 32
  %v328 = vpop.permute.xlu0 %327
  %329 = vrot.lane.b32.xlu0 %v161, 32
  %v330 = vpop.permute.xlu0 %329
  %331 = vrot.lane.b32.xlu0 %v162, 32
  %v332 = vpop.permute.xlu0 %331
  %333 = vrot.lane.b32.xlu0 %v163, 32
  %v334 = vpop.permute.xlu0 %333
  %335 = vrot.lane.b32.xlu0 %v165, 32
  %v336 = vpop.permute.xlu0 %335
  %337 = vrot.lane.b32.xlu0 %v166, 32
  %v338 = vpop.permute.xlu0 %337
  %339 = vrot.lane.b32.xlu0 %v167, 32
  %v340 = vpop.permute.xlu0 %339
  %341 = vrot.lane.b32.xlu0 %v169, 32
  %v342 = vpop.permute.xlu0 %341
  %343 = vrot.lane.b32.xlu0 %v170, 32
  %v344 = vpop.permute.xlu0 %343
  %345 = vrot.lane.b32.xlu0 %v171, 32
  %v346 = vpop.permute.xlu0 %345
  %vm347 = vcmask 261120
  %v348 = vsel %vm347, %v324, %v326
  %v349 = vsel %vm347, %v326, %v328
  %v350 = vsel %vm347, %v330, %v332
  %v351 = vsel %vm347, %v332, %v334
  %v352 = vsel %vm347, %v336, %v338
  %v353 = vsel %vm347, %v338, %v340
  %v354 = vsel %vm347, %v342, %v344
  %v355 = vsel %vm347, %v344, %v346
  %364 = vst [vmem:[#allocation3 + $0x80] sm:$0xff] %v348
  %365 = vst [vmem:[#allocation3 + $0x88] sm:$0xff] %v349
  %366 = vst [vmem:[#allocation3 + $0x90] sm:$0xff] %v350
  %367 = vst [vmem:[#allocation3 + $0x98] sm:$0xff] %v351
  %368 = vst [vmem:[#allocation3 + $0xa0] sm:$0xff] %v352
  %369 = vst [vmem:[#allocation3 + $0xa8] sm:$0xff] %v353
  %370 = vst [vmem:[#allocation3 + $0xb0] sm:$0xff] %v354
  %371 = vst [vmem:[#allocation3 + $0xb8] sm:$0xff] %v355
  %v372 = vadd.s32 %v89, 1
  %v373 = vadd.s32 %v90, 1
  %vm374 = vcmp.ge.s32.totalorder %v372, 0
  %vm375 = vcmp.ge.s32.totalorder %v373, 0
  %vm376 = vcmp.lt.s32.totalorder %v372, 16
  %vm377 = vcmp.lt.s32.totalorder %v373, 16
  %vm378 = vmand %vm374, %vm376
  %vm379 = vmand %vm375, %vm377
  %v380 = vsel %vm378, 1, 0
  %v381 = vsel %vm379, 1, 0
  %vm382 = vcmp.eq.s32.totalorder %v380, 1
  %vm383 = vcmp.eq.s32.totalorder %v381, 1
  %384 = vrot.lane.b32.xlu0 %v157, 31
  %v385 = vpop.permute.xlu0 %384
  %386 = vrot.lane.b32.xlu0 %v158, 31
  %v387 = vpop.permute.xlu0 %386
  %388 = vrot.lane.b32.xlu0 %v159, 31
  %v389 = vpop.permute.xlu0 %388
  %390 = vrot.lane.b32.xlu0 %v161, 31
  %v391 = vpop.permute.xlu0 %390
  %392 = vrot.lane.b32.xlu0 %v162, 31
  %v393 = vpop.permute.xlu0 %392
  %394 = vrot.lane.b32.xlu0 %v163, 31
  %v395 = vpop.permute.xlu0 %394
  %396 = vrot.lane.b32.xlu0 %v165, 31
  %v397 = vpop.permute.xlu0 %396
  %398 = vrot.lane.b32.xlu0 %v166, 31
  %v399 = vpop.permute.xlu0 %398
  %400 = vrot.lane.b32.xlu0 %v167, 31
  %v401 = vpop.permute.xlu0 %400
  %402 = vrot.lane.b32.xlu0 %v169, 31
  %v403 = vpop.permute.xlu0 %402
  %404 = vrot.lane.b32.xlu0 %v170, 31
  %v405 = vpop.permute.xlu0 %404
  %406 = vrot.lane.b32.xlu0 %v171, 31
  %v407 = vpop.permute.xlu0 %406
  %vm408 = vcmask 252928
  %v409 = vsel %vm408, %v385, %v387
  %v410 = vsel %vm408, %v387, %v389
  %v411 = vsel %vm408, %v391, %v393
  %v412 = vsel %vm408, %v393, %v395
  %v413 = vsel %vm408, %v397, %v399
  %v414 = vsel %vm408, %v399, %v401
  %v415 = vsel %vm408, %v403, %v405
  %v416 = vsel %vm408, %v405, %v407
  %v425 = vsel %vm382, %v409, 0.0
  %v426 = vsel %vm383, %v410, 0.0
  %v427 = vsel %vm382, %v411, 0.0
  %v428 = vsel %vm383, %v412, 0.0
  %v429 = vsel %vm382, %v413, 0.0
  %v430 = vsel %vm383, %v414, 0.0
  %v431 = vsel %vm382, %v415, 0.0
  %v432 = vsel %vm383, %v416, 0.0
  %433 = vst [vmem:[#allocation3 + $0xc0] sm:$0xff] %v425
  %434 = vst [vmem:[#allocation3 + $0xc8] sm:$0xff] %v426
  %435 = vst [vmem:[#allocation3 + $0xd0] sm:$0xff] %v427
  %436 = vst [vmem:[#allocation3 + $0xd8] sm:$0xff] %v428
  %437 = vst [vmem:[#allocation3 + $0xe0] sm:$0xff] %v429
  %438 = vst [vmem:[#allocation3 + $0xe8] sm:$0xff] %v430
  %439 = vst [vmem:[#allocation3 + $0xf0] sm:$0xff] %v431
  %440 = vst [vmem:[#allocation3 + $0xf8] sm:$0xff] %v432
  %v441 = vadd.s32 %v89, 2
  %v442 = vadd.s32 %v90, 2
  %vm443 = vcmp.ge.s32.totalorder %v441, 0
  %vm444 = vcmp.ge.s32.totalorder %v442, 0
  %vm445 = vcmp.lt.s32.totalorder %v441, 16
  %vm446 = vcmp.lt.s32.totalorder %v442, 16
  %vm447 = vmand %vm443, %vm445
  %vm448 = vmand %vm444, %vm446
  %v449 = vsel %vm447, 1, 0
  %v450 = vsel %vm448, 1, 0
  %vm451 = vcmp.eq.s32.totalorder %v449, 1
  %vm452 = vcmp.eq.s32.totalorder %v450, 1
  %453 = vrot.lane.b32.xlu0 %v157, 30
  %v454 = vpop.permute.xlu0 %453
  %455 = vrot.lane.b32.xlu0 %v158, 30
  %v456 = vpop.permute.xlu0 %455
  %457 = vrot.lane.b32.xlu0 %v159, 30
  %v458 = vpop.permute.xlu0 %457
  %459 = vrot.lane.b32.xlu0 %v161, 30
  %v460 = vpop.permute.xlu0 %459
  %461 = vrot.lane.b32.xlu0 %v162, 30
  %v462 = vpop.permute.xlu0 %461
  %463 = vrot.lane.b32.xlu0 %v163, 30
  %v464 = vpop.permute.xlu0 %463
  %465 = vrot.lane.b32.xlu0 %v165, 30
  %v466 = vpop.permute.xlu0 %465
  %467 = vrot.lane.b32.xlu0 %v166, 30
  %v468 = vpop.permute.xlu0 %467
  %469 = vrot.lane.b32.xlu0 %v167, 30
  %v470 = vpop.permute.xlu0 %469
  %471 = vrot.lane.b32.xlu0 %v169, 30
  %v472 = vpop.permute.xlu0 %471
  %473 = vrot.lane.b32.xlu0 %v170, 30
  %v474 = vpop.permute.xlu0 %473
  %475 = vrot.lane.b32.xlu0 %v171, 30
  %v476 = vpop.permute.xlu0 %475
  %vm477 = vcmask 244736
  %v478 = vsel %vm477, %v454, %v456
  %v479 = vsel %vm477, %v456, %v458
  %v480 = vsel %vm477, %v460, %v462
  %v481 = vsel %vm477, %v462, %v464
  %v482 = vsel %vm477, %v466, %v468
  %v483 = vsel %vm477, %v468, %v470
  %v484 = vsel %vm477, %v472, %v474
  %v485 = vsel %vm477, %v474, %v476
  %v494 = vsel %vm451, %v478, 0.0
  %v495 = vsel %vm452, %v479, 0.0
  %v496 = vsel %vm451, %v480, 0.0
  %v497 = vsel %vm452, %v481, 0.0
  %v498 = vsel %vm451, %v482, 0.0
  %v499 = vsel %vm452, %v483, 0.0
  %v500 = vsel %vm451, %v484, 0.0
  %v501 = vsel %vm452, %v485, 0.0
  %502 = vst [vmem:[#allocation3 + $0x100] sm:$0xff] %v494
  %503 = vst [vmem:[#allocation3 + $0x108] sm:$0xff] %v495
  %504 = vst [vmem:[#allocation3 + $0x110] sm:$0xff] %v496
  %505 = vst [vmem:[#allocation3 + $0x118] sm:$0xff] %v497
  %506 = vst [vmem:[#allocation3 + $0x120] sm:$0xff] %v498
  %507 = vst [vmem:[#allocation3 + $0x128] sm:$0xff] %v499
  %508 = vst [vmem:[#allocation3 + $0x130] sm:$0xff] %v500
  %509 = vst [vmem:[#allocation3 + $0x138] sm:$0xff] %v501
  %510 = vrot.lane.b32.xlu0 %v157, 18
  %v511 = vpop.permute.xlu0 %510
  %512 = vrot.lane.b32.xlu0 %v158, 18
  %v513 = vpop.permute.xlu0 %512
  %514 = vrot.lane.b32.xlu0 %v159, 18
  %v515 = vpop.permute.xlu0 %514
  %516 = vrot.lane.b32.xlu0 %v161, 18
  %v517 = vpop.permute.xlu0 %516
  %518 = vrot.lane.b32.xlu0 %v162, 18
  %v519 = vpop.permute.xlu0 %518
  %520 = vrot.lane.b32.xlu0 %v163, 18
  %v521 = vpop.permute.xlu0 %520
  %522 = vrot.lane.b32.xlu0 %v165, 18
  %v523 = vpop.permute.xlu0 %522
  %524 = vrot.lane.b32.xlu0 %v166, 18
  %v525 = vpop.permute.xlu0 %524
  %526 = vrot.lane.b32.xlu0 %v167, 18
  %v527 = vpop.permute.xlu0 %526
  %528 = vrot.lane.b32.xlu0 %v169, 18
  %v529 = vpop.permute.xlu0 %528
  %530 = vrot.lane.b32.xlu0 %v170, 18
  %v531 = vpop.permute.xlu0 %530
  %532 = vrot.lane.b32.xlu0 %v171, 18
  %v533 = vpop.permute.xlu0 %532
  %vm534 = vcmask 146432
  %v535 = vsel %vm534, %v511, %v513
  %v536 = vsel %vm534, %v513, %v515
  %v537 = vsel %vm534, %v517, %v519
  %v538 = vsel %vm534, %v519, %v521
  %v539 = vsel %vm534, %v523, %v525
  %v540 = vsel %vm534, %v525, %v527
  %v541 = vsel %vm534, %v529, %v531
  %v542 = vsel %vm534, %v531, %v533
  %v551 = vsel %vm183, %v535, 0.0
  %v552 = vsel %vm184, %v536, 0.0
  %v553 = vsel %vm183, %v537, 0.0
  %v554 = vsel %vm184, %v538, 0.0
  %v555 = vsel %vm183, %v539, 0.0
  %v556 = vsel %vm184, %v540, 0.0
  %v557 = vsel %vm183, %v541, 0.0
  %v558 = vsel %vm184, %v542, 0.0
  %559 = vst [vmem:[#allocation3 + $0x140] sm:$0xff] %v551
  %560 = vst [vmem:[#allocation3 + $0x148] sm:$0xff] %v552
  %561 = vst [vmem:[#allocation3 + $0x150] sm:$0xff] %v553
  %562 = vst [vmem:[#allocation3 + $0x158] sm:$0xff] %v554
  %563 = vst [vmem:[#allocation3 + $0x160] sm:$0xff] %v555
  %564 = vst [vmem:[#allocation3 + $0x168] sm:$0xff] %v556
  %565 = vst [vmem:[#allocation3 + $0x170] sm:$0xff] %v557
  %566 = vst [vmem:[#allocation3 + $0x178] sm:$0xff] %v558
  %567 = vrot.lane.b32.xlu0 %v157, 17
  %v568 = vpop.permute.xlu0 %567
  %569 = vrot.lane.b32.xlu0 %v158, 17
  %v570 = vpop.permute.xlu0 %569
  %571 = vrot.lane.b32.xlu0 %v159, 17
  %v572 = vpop.permute.xlu0 %571
  %573 = vrot.lane.b32.xlu0 %v161, 17
  %v574 = vpop.permute.xlu0 %573
  %575 = vrot.lane.b32.xlu0 %v162, 17
  %v576 = vpop.permute.xlu0 %575
  %577 = vrot.lane.b32.xlu0 %v163, 17
  %v578 = vpop.permute.xlu0 %577
  %579 = vrot.lane.b32.xlu0 %v165, 17
  %v580 = vpop.permute.xlu0 %579
  %581 = vrot.lane.b32.xlu0 %v166, 17
  %v582 = vpop.permute.xlu0 %581
  %583 = vrot.lane.b32.xlu0 %v167, 17
  %v584 = vpop.permute.xlu0 %583
  %585 = vrot.lane.b32.xlu0 %v169, 17
  %v586 = vpop.permute.xlu0 %585
  %587 = vrot.lane.b32.xlu0 %v170, 17
  %v588 = vpop.permute.xlu0 %587
  %589 = vrot.lane.b32.xlu0 %v171, 17
  %v590 = vpop.permute.xlu0 %589
  %vm591 = vcmask 138240
  %v592 = vsel %vm591, %v568, %v570
  %v593 = vsel %vm591, %v570, %v572
  %v594 = vsel %vm591, %v574, %v576
  %v595 = vsel %vm591, %v576, %v578
  %v596 = vsel %vm591, %v580, %v582
  %v597 = vsel %vm591, %v582, %v584
  %v598 = vsel %vm591, %v586, %v588
  %v599 = vsel %vm591, %v588, %v590
  %v608 = vsel %vm264, %v592, 0.0
  %v609 = vsel %vm265, %v593, 0.0
  %v610 = vsel %vm264, %v594, 0.0
  %v611 = vsel %vm265, %v595, 0.0
  %v612 = vsel %vm264, %v596, 0.0
  %v613 = vsel %vm265, %v597, 0.0
  %v614 = vsel %vm264, %v598, 0.0
  %v615 = vsel %vm265, %v599, 0.0
  %616 = vst [vmem:[#allocation3 + $0x180] sm:$0xff] %v608
  %617 = vst [vmem:[#allocation3 + $0x188] sm:$0xff] %v609
  %618 = vst [vmem:[#allocation3 + $0x190] sm:$0xff] %v610
  %619 = vst [vmem:[#allocation3 + $0x198] sm:$0xff] %v611
  %620 = vst [vmem:[#allocation3 + $0x1a0] sm:$0xff] %v612
  %621 = vst [vmem:[#allocation3 + $0x1a8] sm:$0xff] %v613
  %622 = vst [vmem:[#allocation3 + $0x1b0] sm:$0xff] %v614
  %623 = vst [vmem:[#allocation3 + $0x1b8] sm:$0xff] %v615
  %624 = vrot.lane.b32.xlu0 %v157, 16
  %v625 = vpop.permute.xlu0 %624
  %626 = vrot.lane.b32.xlu0 %v158, 16
  %v627 = vpop.permute.xlu0 %626
  %628 = vrot.lane.b32.xlu0 %v159, 16
  %v629 = vpop.permute.xlu0 %628
  %630 = vrot.lane.b32.xlu0 %v161, 16
  %v631 = vpop.permute.xlu0 %630
  %632 = vrot.lane.b32.xlu0 %v162, 16
  %v633 = vpop.permute.xlu0 %632
  %634 = vrot.lane.b32.xlu0 %v163, 16
  %v635 = vpop.permute.xlu0 %634
  %636 = vrot.lane.b32.xlu0 %v165, 16
  %v637 = vpop.permute.xlu0 %636
  %638 = vrot.lane.b32.xlu0 %v166, 16
  %v639 = vpop.permute.xlu0 %638
  %640 = vrot.lane.b32.xlu0 %v167, 16
  %v641 = vpop.permute.xlu0 %640
  %642 = vrot.lane.b32.xlu0 %v169, 16
  %v643 = vpop.permute.xlu0 %642
  %644 = vrot.lane.b32.xlu0 %v170, 16
  %v645 = vpop.permute.xlu0 %644
  %646 = vrot.lane.b32.xlu0 %v171, 16
  %v647 = vpop.permute.xlu0 %646
  %vm648 = vcmask 130048
  %v649 = vsel %vm648, %v625, %v627
  %v650 = vsel %vm648, %v627, %v629
  %v651 = vsel %vm648, %v631, %v633
  %v652 = vsel %vm648, %v633, %v635
  %v653 = vsel %vm648, %v637, %v639
  %v654 = vsel %vm648, %v639, %v641
  %v655 = vsel %vm648, %v643, %v645
  %v656 = vsel %vm648, %v645, %v647
  %665 = vst [vmem:[#allocation3 + $0x1c0] sm:$0xff] %v649
  %666 = vst [vmem:[#allocation3 + $0x1c8] sm:$0xff] %v650
  %667 = vst [vmem:[#allocation3 + $0x1d0] sm:$0xff] %v651
  %668 = vst [vmem:[#allocation3 + $0x1d8] sm:$0xff] %v652
  %669 = vst [vmem:[#allocation3 + $0x1e0] sm:$0xff] %v653
  %670 = vst [vmem:[#allocation3 + $0x1e8] sm:$0xff] %v654
  %671 = vst [vmem:[#allocation3 + $0x1f0] sm:$0xff] %v655
  %672 = vst [vmem:[#allocation3 + $0x1f8] sm:$0xff] %v656
  %673 = vrot.lane.b32.xlu0 %v157, 15
  %v674 = vpop.permute.xlu0 %673
  %675 = vrot.lane.b32.xlu0 %v158, 15
  %v676 = vpop.permute.xlu0 %675
  %677 = vrot.lane.b32.xlu0 %v159, 15
  %v678 = vpop.permute.xlu0 %677
  %679 = vrot.lane.b32.xlu0 %v161, 15
  %v680 = vpop.permute.xlu0 %679
  %681 = vrot.lane.b32.xlu0 %v162, 15
  %v682 = vpop.permute.xlu0 %681
  %683 = vrot.lane.b32.xlu0 %v163, 15
  %v684 = vpop.permute.xlu0 %683
  %685 = vrot.lane.b32.xlu0 %v165, 15
  %v686 = vpop.permute.xlu0 %685
  %687 = vrot.lane.b32.xlu0 %v166, 15
  %v688 = vpop.permute.xlu0 %687
  %689 = vrot.lane.b32.xlu0 %v167, 15
  %v690 = vpop.permute.xlu0 %689
  %691 = vrot.lane.b32.xlu0 %v169, 15
  %v692 = vpop.permute.xlu0 %691
  %693 = vrot.lane.b32.xlu0 %v170, 15
  %v694 = vpop.permute.xlu0 %693
  %695 = vrot.lane.b32.xlu0 %v171, 15
  %v696 = vpop.permute.xlu0 %695
  %vm697 = vcmask 121856
  %v698 = vsel %vm697, %v674, %v676
  %v699 = vsel %vm697, %v676, %v678
  %v700 = vsel %vm697, %v680, %v682
  %v701 = vsel %vm697, %v682, %v684
  %v702 = vsel %vm697, %v686, %v688
  %v703 = vsel %vm697, %v688, %v690
  %v704 = vsel %vm697, %v692, %v694
  %v705 = vsel %vm697, %v694, %v696
  %v714 = vsel %vm382, %v698, 0.0
  %v715 = vsel %vm383, %v699, 0.0
  %v716 = vsel %vm382, %v700, 0.0
  %v717 = vsel %vm383, %v701, 0.0
  %v718 = vsel %vm382, %v702, 0.0
  %v719 = vsel %vm383, %v703, 0.0
  %v720 = vsel %vm382, %v704, 0.0
  %v721 = vsel %vm383, %v705, 0.0
  %722 = vst [vmem:[#allocation3 + $0x200] sm:$0xff] %v714
  %723 = vst [vmem:[#allocation3 + $0x208] sm:$0xff] %v715
  %724 = vst [vmem:[#allocation3 + $0x210] sm:$0xff] %v716
  %725 = vst [vmem:[#allocation3 + $0x218] sm:$0xff] %v717
  %726 = vst [vmem:[#allocation3 + $0x220] sm:$0xff] %v718
  %727 = vst [vmem:[#allocation3 + $0x228] sm:$0xff] %v719
  %728 = vst [vmem:[#allocation3 + $0x230] sm:$0xff] %v720
  %729 = vst [vmem:[#allocation3 + $0x238] sm:$0xff] %v721
  %730 = vrot.lane.b32.xlu0 %v157, 14
  %v731 = vpop.permute.xlu0 %730
  %732 = vrot.lane.b32.xlu0 %v158, 14
  %v733 = vpop.permute.xlu0 %732
  %734 = vrot.lane.b32.xlu0 %v159, 14
  %v735 = vpop.permute.xlu0 %734
  %736 = vrot.lane.b32.xlu0 %v161, 14
  %v737 = vpop.permute.xlu0 %736
  %738 = vrot.lane.b32.xlu0 %v162, 14
  %v739 = vpop.permute.xlu0 %738
  %740 = vrot.lane.b32.xlu0 %v163, 14
  %v741 = vpop.permute.xlu0 %740
  %742 = vrot.lane.b32.xlu0 %v165, 14
  %v743 = vpop.permute.xlu0 %742
  %744 = vrot.lane.b32.xlu0 %v166, 14
  %v745 = vpop.permute.xlu0 %744
  %746 = vrot.lane.b32.xlu0 %v167, 14
  %v747 = vpop.permute.xlu0 %746
  %748 = vrot.lane.b32.xlu0 %v169, 14
  %v749 = vpop.permute.xlu0 %748
  %750 = vrot.lane.b32.xlu0 %v170, 14
  %v751 = vpop.permute.xlu0 %750
  %752 = vrot.lane.b32.xlu0 %v171, 14
  %v753 = vpop.permute.xlu0 %752
  %vm754 = vcmask 113664
  %v755 = vsel %vm754, %v731, %v733
  %v756 = vsel %vm754, %v733, %v735
  %v757 = vsel %vm754, %v737, %v739
  %v758 = vsel %vm754, %v739, %v741
  %v759 = vsel %vm754, %v743, %v745
  %v760 = vsel %vm754, %v745, %v747
  %v761 = vsel %vm754, %v749, %v751
  %v762 = vsel %vm754, %v751, %v753
  %v771 = vsel %vm451, %v755, 0.0
  %v772 = vsel %vm452, %v756, 0.0
  %v773 = vsel %vm451, %v757, 0.0
  %v774 = vsel %vm452, %v758, 0.0
  %v775 = vsel %vm451, %v759, 0.0
  %v776 = vsel %vm452, %v760, 0.0
  %v777 = vsel %vm451, %v761, 0.0
  %v778 = vsel %vm452, %v762, 0.0
  %779 = vst [vmem:[#allocation3 + $0x240] sm:$0xff] %v771
  %780 = vst [vmem:[#allocation3 + $0x248] sm:$0xff] %v772
  %781 = vst [vmem:[#allocation3 + $0x250] sm:$0xff] %v773
  %782 = vst [vmem:[#allocation3 + $0x258] sm:$0xff] %v774
  %783 = vst [vmem:[#allocation3 + $0x260] sm:$0xff] %v775
  %784 = vst [vmem:[#allocation3 + $0x268] sm:$0xff] %v776
  %785 = vst [vmem:[#allocation3 + $0x270] sm:$0xff] %v777
  %786 = vst [vmem:[#allocation3 + $0x278] sm:$0xff] %v778
  %787 = vrot.lane.b32.xlu0 %v157, 2
  %v788 = vpop.permute.xlu0 %787
  %789 = vrot.lane.b32.xlu0 %v158, 2
  %v790 = vpop.permute.xlu0 %789
  %791 = vrot.lane.b32.xlu0 %v159, 2
  %v792 = vpop.permute.xlu0 %791
  %793 = vrot.lane.b32.xlu0 %v161, 2
  %v794 = vpop.permute.xlu0 %793
  %795 = vrot.lane.b32.xlu0 %v162, 2
  %v796 = vpop.permute.xlu0 %795
  %797 = vrot.lane.b32.xlu0 %v163, 2
  %v798 = vpop.permute.xlu0 %797
  %799 = vrot.lane.b32.xlu0 %v165, 2
  %v800 = vpop.permute.xlu0 %799
  %801 = vrot.lane.b32.xlu0 %v166, 2
  %v802 = vpop.permute.xlu0 %801
  %803 = vrot.lane.b32.xlu0 %v167, 2
  %v804 = vpop.permute.xlu0 %803
  %805 = vrot.lane.b32.xlu0 %v169, 2
  %v806 = vpop.permute.xlu0 %805
  %807 = vrot.lane.b32.xlu0 %v170, 2
  %v808 = vpop.permute.xlu0 %807
  %809 = vrot.lane.b32.xlu0 %v171, 2
  %v810 = vpop.permute.xlu0 %809
  %vm811 = vcmask 15360
  %v812 = vsel %vm811, %v788, %v790
  %v813 = vsel %vm811, %v790, %v792
  %v814 = vsel %vm811, %v794, %v796
  %v815 = vsel %vm811, %v796, %v798
  %v816 = vsel %vm811, %v800, %v802
  %v817 = vsel %vm811, %v802, %v804
  %v818 = vsel %vm811, %v806, %v808
  %v819 = vsel %vm811, %v808, %v810
  %v828 = vsel %vm183, %v812, 0.0
  %v829 = vsel %vm184, %v813, 0.0
  %v830 = vsel %vm183, %v814, 0.0
  %v831 = vsel %vm184, %v815, 0.0
  %v832 = vsel %vm183, %v816, 0.0
  %v833 = vsel %vm184, %v817, 0.0
  %v834 = vsel %vm183, %v818, 0.0
  %v835 = vsel %vm184, %v819, 0.0
  %836 = vst [vmem:[#allocation3 + $0x280] sm:$0xff] %v828
  %837 = vst [vmem:[#allocation3 + $0x288] sm:$0xff] %v829
  %838 = vst [vmem:[#allocation3 + $0x290] sm:$0xff] %v830
  %839 = vst [vmem:[#allocation3 + $0x298] sm:$0xff] %v831
  %840 = vst [vmem:[#allocation3 + $0x2a0] sm:$0xff] %v832
  %841 = vst [vmem:[#allocation3 + $0x2a8] sm:$0xff] %v833
  %842 = vst [vmem:[#allocation3 + $0x2b0] sm:$0xff] %v834
  %843 = vst [vmem:[#allocation3 + $0x2b8] sm:$0xff] %v835
  %844 = vrot.lane.b32.xlu0 %v157, 1
  %v845 = vpop.permute.xlu0 %844
  %846 = vrot.lane.b32.xlu0 %v158, 1
  %v847 = vpop.permute.xlu0 %846
  %848 = vrot.lane.b32.xlu0 %v159, 1
  %v849 = vpop.permute.xlu0 %848
  %850 = vrot.lane.b32.xlu0 %v161, 1
  %v851 = vpop.permute.xlu0 %850
  %852 = vrot.lane.b32.xlu0 %v162, 1
  %v853 = vpop.permute.xlu0 %852
  %854 = vrot.lane.b32.xlu0 %v163, 1
  %v855 = vpop.permute.xlu0 %854
  %856 = vrot.lane.b32.xlu0 %v165, 1
  %v857 = vpop.permute.xlu0 %856
  %858 = vrot.lane.b32.xlu0 %v166, 1
  %v859 = vpop.permute.xlu0 %858
  %860 = vrot.lane.b32.xlu0 %v167, 1
  %v861 = vpop.permute.xlu0 %860
  %862 = vrot.lane.b32.xlu0 %v169, 1
  %v863 = vpop.permute.xlu0 %862
  %864 = vrot.lane.b32.xlu0 %v170, 1
  %v865 = vpop.permute.xlu0 %864
  %866 = vrot.lane.b32.xlu0 %v171, 1
  %v867 = vpop.permute.xlu0 %866
  %vm868 = vcmask 7168
  %v869 = vsel %vm868, %v845, %v847
  %v870 = vsel %vm868, %v847, %v849
  %v871 = vsel %vm868, %v851, %v853
  %v872 = vsel %vm868, %v853, %v855
  %v873 = vsel %vm868, %v857, %v859
  %v874 = vsel %vm868, %v859, %v861
  %v875 = vsel %vm868, %v863, %v865
  %v876 = vsel %vm868, %v865, %v867
  %v885 = vsel %vm264, %v869, 0.0
  %v886 = vsel %vm265, %v870, 0.0
  %v887 = vsel %vm264, %v871, 0.0
  %v888 = vsel %vm265, %v872, 0.0
  %v889 = vsel %vm264, %v873, 0.0
  %v890 = vsel %vm265, %v874, 0.0
  %v891 = vsel %vm264, %v875, 0.0
  %v892 = vsel %vm265, %v876, 0.0
  %893 = vst [vmem:[#allocation3 + $0x2c0] sm:$0xff] %v885
  %894 = vst [vmem:[#allocation3 + $0x2c8] sm:$0xff] %v886
  %895 = vst [vmem:[#allocation3 + $0x2d0] sm:$0xff] %v887
  %896 = vst [vmem:[#allocation3 + $0x2d8] sm:$0xff] %v888
  %897 = vst [vmem:[#allocation3 + $0x2e0] sm:$0xff] %v889
  %898 = vst [vmem:[#allocation3 + $0x2e8] sm:$0xff] %v890
  %899 = vst [vmem:[#allocation3 + $0x2f0] sm:$0xff] %v891
  %900 = vst [vmem:[#allocation3 + $0x2f8] sm:$0xff] %v892
  %901 = vst [vmem:[#allocation3 + $0x300] sm:$0xff] %v158
  %902 = vst [vmem:[#allocation3 + $0x308] sm:$0xff] %v159
  %903 = vst [vmem:[#allocation3 + $0x310] sm:$0xff] %v162
  %904 = vst [vmem:[#allocation3 + $0x318] sm:$0xff] %v163
  %905 = vst [vmem:[#allocation3 + $0x320] sm:$0xff] %v166
  %906 = vst [vmem:[#allocation3 + $0x328] sm:$0xff] %v167
  %907 = vst [vmem:[#allocation3 + $0x330] sm:$0xff] %v170
  %908 = vst [vmem:[#allocation3 + $0x338] sm:$0xff] %v171
  %913 = vrot.lane.b32.xlu0 %v158, 127
  %v914 = vpop.permute.xlu0 %913
  %915 = vrot.lane.b32.xlu0 %v159, 127
  %v916 = vpop.permute.xlu0 %915
  %917 = vrot.lane.b32.xlu0 %v160, 127
  %v918 = vpop.permute.xlu0 %917
  %919 = vrot.lane.b32.xlu0 %v162, 127
  %v920 = vpop.permute.xlu0 %919
  %921 = vrot.lane.b32.xlu0 %v163, 127
  %v922 = vpop.permute.xlu0 %921
  %923 = vrot.lane.b32.xlu0 %v164, 127
  %v924 = vpop.permute.xlu0 %923
  %925 = vrot.lane.b32.xlu0 %v166, 127
  %v926 = vpop.permute.xlu0 %925
  %927 = vrot.lane.b32.xlu0 %v167, 127
  %v928 = vpop.permute.xlu0 %927
  %929 = vrot.lane.b32.xlu0 %v168, 127
  %v930 = vpop.permute.xlu0 %929
  %931 = vrot.lane.b32.xlu0 %v170, 127
  %v932 = vpop.permute.xlu0 %931
  %933 = vrot.lane.b32.xlu0 %v171, 127
  %v934 = vpop.permute.xlu0 %933
  %935 = vrot.lane.b32.xlu0 %v172, 127
  %v936 = vpop.permute.xlu0 %935
  %vm937 = vcmask 1039360
  %v938 = vsel %vm937, %v914, %v916
  %v939 = vsel %vm937, %v916, %v918
  %v940 = vsel %vm937, %v920, %v922
  %v941 = vsel %vm937, %v922, %v924
  %v942 = vsel %vm937, %v926, %v928
  %v943 = vsel %vm937, %v928, %v930
  %v944 = vsel %vm937, %v932, %v934
  %v945 = vsel %vm937, %v934, %v936
  %v954 = vsel %vm382, %v938, 0.0
  %v955 = vsel %vm383, %v939, 0.0
  %v956 = vsel %vm382, %v940, 0.0
  %v957 = vsel %vm383, %v941, 0.0
  %v958 = vsel %vm382, %v942, 0.0
  %v959 = vsel %vm383, %v943, 0.0
  %v960 = vsel %vm382, %v944, 0.0
  %v961 = vsel %vm383, %v945, 0.0
  %962 = vst [vmem:[#allocation3 + $0x340] sm:$0xff] %v954
  %963 = vst [vmem:[#allocation3 + $0x348] sm:$0xff] %v955
  %964 = vst [vmem:[#allocation3 + $0x350] sm:$0xff] %v956
  %965 = vst [vmem:[#allocation3 + $0x358] sm:$0xff] %v957
  %966 = vst [vmem:[#allocation3 + $0x360] sm:$0xff] %v958
  %967 = vst [vmem:[#allocation3 + $0x368] sm:$0xff] %v959
  %968 = vst [vmem:[#allocation3 + $0x370] sm:$0xff] %v960
  %969 = vst [vmem:[#allocation3 + $0x378] sm:$0xff] %v961
  %970 = vrot.lane.b32.xlu0 %v158, 126
  %v971 = vpop.permute.xlu0 %970
  %972 = vrot.lane.b32.xlu0 %v159, 126
  %v973 = vpop.permute.xlu0 %972
  %974 = vrot.lane.b32.xlu0 %v160, 126
  %v975 = vpop.permute.xlu0 %974
  %976 = vrot.lane.b32.xlu0 %v162, 126
  %v977 = vpop.permute.xlu0 %976
  %978 = vrot.lane.b32.xlu0 %v163, 126
  %v979 = vpop.permute.xlu0 %978
  %980 = vrot.lane.b32.xlu0 %v164, 126
  %v981 = vpop.permute.xlu0 %980
  %982 = vrot.lane.b32.xlu0 %v166, 126
  %v983 = vpop.permute.xlu0 %982
  %984 = vrot.lane.b32.xlu0 %v167, 126
  %v985 = vpop.permute.xlu0 %984
  %986 = vrot.lane.b32.xlu0 %v168, 126
  %v987 = vpop.permute.xlu0 %986
  %988 = vrot.lane.b32.xlu0 %v170, 126
  %v989 = vpop.permute.xlu0 %988
  %990 = vrot.lane.b32.xlu0 %v171, 126
  %v991 = vpop.permute.xlu0 %990
  %992 = vrot.lane.b32.xlu0 %v172, 126
  %v993 = vpop.permute.xlu0 %992
  %vm994 = vcmask 1031168
  %v995 = vsel %vm994, %v971, %v973
  %v996 = vsel %vm994, %v973, %v975
  %v997 = vsel %vm994, %v977, %v979
  %v998 = vsel %vm994, %v979, %v981
  %v999 = vsel %vm994, %v983, %v985
  %v1000 = vsel %vm994, %v985, %v987
  %v1001 = vsel %vm994, %v989, %v991
  %v1002 = vsel %vm994, %v991, %v993
  %v1011 = vsel %vm451, %v995, 0.0
  %v1012 = vsel %vm452, %v996, 0.0
  %v1013 = vsel %vm451, %v997, 0.0
  %v1014 = vsel %vm452, %v998, 0.0
  %v1015 = vsel %vm451, %v999, 0.0
  %v1016 = vsel %vm452, %v1000, 0.0
  %v1017 = vsel %vm451, %v1001, 0.0
  %v1018 = vsel %vm452, %v1002, 0.0
  %1019 = vst [vmem:[#allocation3 + $0x380] sm:$0xff] %v1011
  %1020 = vst [vmem:[#allocation3 + $0x388] sm:$0xff] %v1012
  %1021 = vst [vmem:[#allocation3 + $0x390] sm:$0xff] %v1013
  %1022 = vst [vmem:[#allocation3 + $0x398] sm:$0xff] %v1014
  %1023 = vst [vmem:[#allocation3 + $0x3a0] sm:$0xff] %v1015
  %1024 = vst [vmem:[#allocation3 + $0x3a8] sm:$0xff] %v1016
  %1025 = vst [vmem:[#allocation3 + $0x3b0] sm:$0xff] %v1017
  %1026 = vst [vmem:[#allocation3 + $0x3b8] sm:$0xff] %v1018
  %1027 = vrot.lane.b32.xlu0 %v158, 114
  %v1028 = vpop.permute.xlu0 %1027
  %1029 = vrot.lane.b32.xlu0 %v159, 114
  %v1030 = vpop.permute.xlu0 %1029
  %1031 = vrot.lane.b32.xlu0 %v160, 114
  %v1032 = vpop.permute.xlu0 %1031
  %1033 = vrot.lane.b32.xlu0 %v162, 114
  %v1034 = vpop.permute.xlu0 %1033
  %1035 = vrot.lane.b32.xlu0 %v163, 114
  %v1036 = vpop.permute.xlu0 %1035
  %1037 = vrot.lane.b32.xlu0 %v164, 114
  %v1038 = vpop.permute.xlu0 %1037
  %1039 = vrot.lane.b32.xlu0 %v166, 114
  %v1040 = vpop.permute.xlu0 %1039
  %1041 = vrot.lane.b32.xlu0 %v167, 114
  %v1042 = vpop.permute.xlu0 %1041
  %1043 = vrot.lane.b32.xlu0 %v168, 114
  %v1044 = vpop.permute.xlu0 %1043
  %1045 = vrot.lane.b32.xlu0 %v170, 114
  %v1046 = vpop.permute.xlu0 %1045
  %1047 = vrot.lane.b32.xlu0 %v171, 114
  %v1048 = vpop.permute.xlu0 %1047
  %1049 = vrot.lane.b32.xlu0 %v172, 114
  %v1050 = vpop.permute.xlu0 %1049
  %vm1051 = vcmask 932864
  %v1052 = vsel %vm1051, %v1028, %v1030
  %v1053 = vsel %vm1051, %v1030, %v1032
  %v1054 = vsel %vm1051, %v1034, %v1036
  %v1055 = vsel %vm1051, %v1036, %v1038
  %v1056 = vsel %vm1051, %v1040, %v1042
  %v1057 = vsel %vm1051, %v1042, %v1044
  %v1058 = vsel %vm1051, %v1046, %v1048
  %v1059 = vsel %vm1051, %v1048, %v1050
  %v1068 = vsel %vm183, %v1052, 0.0
  %v1069 = vsel %vm184, %v1053, 0.0
  %v1070 = vsel %vm183, %v1054, 0.0
  %v1071 = vsel %vm184, %v1055, 0.0
  %v1072 = vsel %vm183, %v1056, 0.0
  %v1073 = vsel %vm184, %v1057, 0.0
  %v1074 = vsel %vm183, %v1058, 0.0
  %v1075 = vsel %vm184, %v1059, 0.0
  %1076 = vst [vmem:[#allocation3 + $0x3c0] sm:$0xff] %v1068
  %1077 = vst [vmem:[#allocation3 + $0x3c8] sm:$0xff] %v1069
  %1078 = vst [vmem:[#allocation3 + $0x3d0] sm:$0xff] %v1070
  %1079 = vst [vmem:[#allocation3 + $0x3d8] sm:$0xff] %v1071
  %1080 = vst [vmem:[#allocation3 + $0x3e0] sm:$0xff] %v1072
  %1081 = vst [vmem:[#allocation3 + $0x3e8] sm:$0xff] %v1073
  %1082 = vst [vmem:[#allocation3 + $0x3f0] sm:$0xff] %v1074
  %1083 = vst [vmem:[#allocation3 + $0x3f8] sm:$0xff] %v1075
  %1084 = vrot.lane.b32.xlu0 %v158, 113
  %v1085 = vpop.permute.xlu0 %1084
  %1086 = vrot.lane.b32.xlu0 %v159, 113
  %v1087 = vpop.permute.xlu0 %1086
  %1088 = vrot.lane.b32.xlu0 %v160, 113
  %v1089 = vpop.permute.xlu0 %1088
  %1090 = vrot.lane.b32.xlu0 %v162, 113
  %v1091 = vpop.permute.xlu0 %1090
  %1092 = vrot.lane.b32.xlu0 %v163, 113
  %v1093 = vpop.permute.xlu0 %1092
  %1094 = vrot.lane.b32.xlu0 %v164, 113
  %v1095 = vpop.permute.xlu0 %1094
  %1096 = vrot.lane.b32.xlu0 %v166, 113
  %v1097 = vpop.permute.xlu0 %1096
  %1098 = vrot.lane.b32.xlu0 %v167, 113
  %v1099 = vpop.permute.xlu0 %1098
  %1100 = vrot.lane.b32.xlu0 %v168, 113
  %v1101 = vpop.permute.xlu0 %1100
  %1102 = vrot.lane.b32.xlu0 %v170, 113
  %v1103 = vpop.permute.xlu0 %1102
  %1104 = vrot.lane.b32.xlu0 %v171, 113
  %v1105 = vpop.permute.xlu0 %1104
  %1106 = vrot.lane.b32.xlu0 %v172, 113
  %v1107 = vpop.permute.xlu0 %1106
  %vm1108 = vcmask 924672
  %v1109 = vsel %vm1108, %v1085, %v1087
  %v1110 = vsel %vm1108, %v1087, %v1089
  %v1111 = vsel %vm1108, %v1091, %v1093
  %v1112 = vsel %vm1108, %v1093, %v1095
  %v1113 = vsel %vm1108, %v1097, %v1099
  %v1114 = vsel %vm1108, %v1099, %v1101
  %v1115 = vsel %vm1108, %v1103, %v1105
  %v1116 = vsel %vm1108, %v1105, %v1107
  %v1125 = vsel %vm264, %v1109, 0.0
  %v1126 = vsel %vm265, %v1110, 0.0
  %v1127 = vsel %vm264, %v1111, 0.0
  %v1128 = vsel %vm265, %v1112, 0.0
  %v1129 = vsel %vm264, %v1113, 0.0
  %v1130 = vsel %vm265, %v1114, 0.0
  %v1131 = vsel %vm264, %v1115, 0.0
  %v1132 = vsel %vm265, %v1116, 0.0
  %1133 = vst [vmem:[#allocation3 + $0x400] sm:$0xff] %v1125
  %1134 = vst [vmem:[#allocation3 + $0x408] sm:$0xff] %v1126
  %1135 = vst [vmem:[#allocation3 + $0x410] sm:$0xff] %v1127
  %1136 = vst [vmem:[#allocation3 + $0x418] sm:$0xff] %v1128
  %1137 = vst [vmem:[#allocation3 + $0x420] sm:$0xff] %v1129
  %1138 = vst [vmem:[#allocation3 + $0x428] sm:$0xff] %v1130
  %1139 = vst [vmem:[#allocation3 + $0x430] sm:$0xff] %v1131
  %1140 = vst [vmem:[#allocation3 + $0x438] sm:$0xff] %v1132
  %1141 = vrot.lane.b32.xlu0 %v158, 112
  %v1142 = vpop.permute.xlu0 %1141
  %1143 = vrot.lane.b32.xlu0 %v159, 112
  %v1144 = vpop.permute.xlu0 %1143
  %1145 = vrot.lane.b32.xlu0 %v160, 112
  %v1146 = vpop.permute.xlu0 %1145
  %1147 = vrot.lane.b32.xlu0 %v162, 112
  %v1148 = vpop.permute.xlu0 %1147
  %1149 = vrot.lane.b32.xlu0 %v163, 112
  %v1150 = vpop.permute.xlu0 %1149
  %1151 = vrot.lane.b32.xlu0 %v164, 112
  %v1152 = vpop.permute.xlu0 %1151
  %1153 = vrot.lane.b32.xlu0 %v166, 112
  %v1154 = vpop.permute.xlu0 %1153
  %1155 = vrot.lane.b32.xlu0 %v167, 112
  %v1156 = vpop.permute.xlu0 %1155
  %1157 = vrot.lane.b32.xlu0 %v168, 112
  %v1158 = vpop.permute.xlu0 %1157
  %1159 = vrot.lane.b32.xlu0 %v170, 112
  %v1160 = vpop.permute.xlu0 %1159
  %1161 = vrot.lane.b32.xlu0 %v171, 112
  %v1162 = vpop.permute.xlu0 %1161
  %1163 = vrot.lane.b32.xlu0 %v172, 112
  %v1164 = vpop.permute.xlu0 %1163
  %vm1165 = vcmask 916480
  %v1166 = vsel %vm1165, %v1142, %v1144
  %v1167 = vsel %vm1165, %v1144, %v1146
  %v1168 = vsel %vm1165, %v1148, %v1150
  %v1169 = vsel %vm1165, %v1150, %v1152
  %v1170 = vsel %vm1165, %v1154, %v1156
  %v1171 = vsel %vm1165, %v1156, %v1158
  %v1172 = vsel %vm1165, %v1160, %v1162
  %v1173 = vsel %vm1165, %v1162, %v1164
  %1182 = vst [vmem:[#allocation3 + $0x440] sm:$0xff] %v1166
  %1183 = vst [vmem:[#allocation3 + $0x448] sm:$0xff] %v1167
  %1184 = vst [vmem:[#allocation3 + $0x450] sm:$0xff] %v1168
  %1185 = vst [vmem:[#allocation3 + $0x458] sm:$0xff] %v1169
  %1186 = vst [vmem:[#allocation3 + $0x460] sm:$0xff] %v1170
  %1187 = vst [vmem:[#allocation3 + $0x468] sm:$0xff] %v1171
  %1188 = vst [vmem:[#allocation3 + $0x470] sm:$0xff] %v1172
  %1189 = vst [vmem:[#allocation3 + $0x478] sm:$0xff] %v1173
  %1190 = vrot.lane.b32.xlu0 %v158, 111
  %v1191 = vpop.permute.xlu0 %1190
  %1192 = vrot.lane.b32.xlu0 %v159, 111
  %v1193 = vpop.permute.xlu0 %1192
  %1194 = vrot.lane.b32.xlu0 %v160, 111
  %v1195 = vpop.permute.xlu0 %1194
  %1196 = vrot.lane.b32.xlu0 %v162, 111
  %v1197 = vpop.permute.xlu0 %1196
  %1198 = vrot.lane.b32.xlu0 %v163, 111
  %v1199 = vpop.permute.xlu0 %1198
  %1200 = vrot.lane.b32.xlu0 %v164, 111
  %v1201 = vpop.permute.xlu0 %1200
  %1202 = vrot.lane.b32.xlu0 %v166, 111
  %v1203 = vpop.permute.xlu0 %1202
  %1204 = vrot.lane.b32.xlu0 %v167, 111
  %v1205 = vpop.permute.xlu0 %1204
  %1206 = vrot.lane.b32.xlu0 %v168, 111
  %v1207 = vpop.permute.xlu0 %1206
  %1208 = vrot.lane.b32.xlu0 %v170, 111
  %v1209 = vpop.permute.xlu0 %1208
  %1210 = vrot.lane.b32.xlu0 %v171, 111
  %v1211 = vpop.permute.xlu0 %1210
  %1212 = vrot.lane.b32.xlu0 %v172, 111
  %v1213 = vpop.permute.xlu0 %1212
  %vm1214 = vcmask 908288
  %v1215 = vsel %vm1214, %v1191, %v1193
  %v1216 = vsel %vm1214, %v1193, %v1195
  %v1217 = vsel %vm1214, %v1197, %v1199
  %v1218 = vsel %vm1214, %v1199, %v1201
  %v1219 = vsel %vm1214, %v1203, %v1205
  %v1220 = vsel %vm1214, %v1205, %v1207
  %v1221 = vsel %vm1214, %v1209, %v1211
  %v1222 = vsel %vm1214, %v1211, %v1213
  %v1231 = vsel %vm382, %v1215, 0.0
  %v1232 = vsel %vm383, %v1216, 0.0
  %v1233 = vsel %vm382, %v1217, 0.0
  %v1234 = vsel %vm383, %v1218, 0.0
  %v1235 = vsel %vm382, %v1219, 0.0
  %v1236 = vsel %vm383, %v1220, 0.0
  %v1237 = vsel %vm382, %v1221, 0.0
  %v1238 = vsel %vm383, %v1222, 0.0
  %1239 = vst [vmem:[#allocation3 + $0x480] sm:$0xff] %v1231
  %1240 = vst [vmem:[#allocation3 + $0x488] sm:$0xff] %v1232
  %1241 = vst [vmem:[#allocation3 + $0x490] sm:$0xff] %v1233
  %1242 = vst [vmem:[#allocation3 + $0x498] sm:$0xff] %v1234
  %1243 = vst [vmem:[#allocation3 + $0x4a0] sm:$0xff] %v1235
  %1244 = vst [vmem:[#allocation3 + $0x4a8] sm:$0xff] %v1236
  %1245 = vst [vmem:[#allocation3 + $0x4b0] sm:$0xff] %v1237
  %1246 = vst [vmem:[#allocation3 + $0x4b8] sm:$0xff] %v1238
  %1247 = vrot.lane.b32.xlu0 %v158, 110
  %v1248 = vpop.permute.xlu0 %1247
  %1249 = vrot.lane.b32.xlu0 %v159, 110
  %v1250 = vpop.permute.xlu0 %1249
  %1251 = vrot.lane.b32.xlu0 %v160, 110
  %v1252 = vpop.permute.xlu0 %1251
  %1253 = vrot.lane.b32.xlu0 %v162, 110
  %v1254 = vpop.permute.xlu0 %1253
  %1255 = vrot.lane.b32.xlu0 %v163, 110
  %v1256 = vpop.permute.xlu0 %1255
  %1257 = vrot.lane.b32.xlu0 %v164, 110
  %v1258 = vpop.permute.xlu0 %1257
  %1259 = vrot.lane.b32.xlu0 %v166, 110
  %v1260 = vpop.permute.xlu0 %1259
  %1261 = vrot.lane.b32.xlu0 %v167, 110
  %v1262 = vpop.permute.xlu0 %1261
  %1263 = vrot.lane.b32.xlu0 %v168, 110
  %v1264 = vpop.permute.xlu0 %1263
  %1265 = vrot.lane.b32.xlu0 %v170, 110
  %v1266 = vpop.permute.xlu0 %1265
  %1267 = vrot.lane.b32.xlu0 %v171, 110
  %v1268 = vpop.permute.xlu0 %1267
  %1269 = vrot.lane.b32.xlu0 %v172, 110
  %v1270 = vpop.permute.xlu0 %1269
  %vm1271 = vcmask 900096
  %v1272 = vsel %vm1271, %v1248, %v1250
  %v1273 = vsel %vm1271, %v1250, %v1252
  %v1274 = vsel %vm1271, %v1254, %v1256
  %v1275 = vsel %vm1271, %v1256, %v1258
  %v1276 = vsel %vm1271, %v1260, %v1262
  %v1277 = vsel %vm1271, %v1262, %v1264
  %v1278 = vsel %vm1271, %v1266, %v1268
  %v1279 = vsel %vm1271, %v1268, %v1270
  %v1288 = vsel %vm451, %v1272, 0.0
  %v1289 = vsel %vm452, %v1273, 0.0
  %v1290 = vsel %vm451, %v1274, 0.0
  %v1291 = vsel %vm452, %v1275, 0.0
  %v1292 = vsel %vm451, %v1276, 0.0
  %v1293 = vsel %vm452, %v1277, 0.0
  %v1294 = vsel %vm451, %v1278, 0.0
  %v1295 = vsel %vm452, %v1279, 0.0
  %1296 = vst [vmem:[#allocation3 + $0x4c0] sm:$0xff] %v1288
  %1297 = vst [vmem:[#allocation3 + $0x4c8] sm:$0xff] %v1289
  %1298 = vst [vmem:[#allocation3 + $0x4d0] sm:$0xff] %v1290
  %1299 = vst [vmem:[#allocation3 + $0x4d8] sm:$0xff] %v1291
  %1300 = vst [vmem:[#allocation3 + $0x4e0] sm:$0xff] %v1292
  %1301 = vst [vmem:[#allocation3 + $0x4e8] sm:$0xff] %v1293
  %1302 = vst [vmem:[#allocation3 + $0x4f0] sm:$0xff] %v1294
  %1303 = vst [vmem:[#allocation3 + $0x4f8] sm:$0xff] %v1295
  %1304 = vrot.lane.b32.xlu0 %v158, 98
  %v1305 = vpop.permute.xlu0 %1304
  %1306 = vrot.lane.b32.xlu0 %v159, 98
  %v1307 = vpop.permute.xlu0 %1306
  %1308 = vrot.lane.b32.xlu0 %v160, 98
  %v1309 = vpop.permute.xlu0 %1308
  %1310 = vrot.lane.b32.xlu0 %v162, 98
  %v1311 = vpop.permute.xlu0 %1310
  %1312 = vrot.lane.b32.xlu0 %v163, 98
  %v1313 = vpop.permute.xlu0 %1312
  %1314 = vrot.lane.b32.xlu0 %v164, 98
  %v1315 = vpop.permute.xlu0 %1314
  %1316 = vrot.lane.b32.xlu0 %v166, 98
  %v1317 = vpop.permute.xlu0 %1316
  %1318 = vrot.lane.b32.xlu0 %v167, 98
  %v1319 = vpop.permute.xlu0 %1318
  %1320 = vrot.lane.b32.xlu0 %v168, 98
  %v1321 = vpop.permute.xlu0 %1320
  %1322 = vrot.lane.b32.xlu0 %v170, 98
  %v1323 = vpop.permute.xlu0 %1322
  %1324 = vrot.lane.b32.xlu0 %v171, 98
  %v1325 = vpop.permute.xlu0 %1324
  %1326 = vrot.lane.b32.xlu0 %v172, 98
  %v1327 = vpop.permute.xlu0 %1326
  %vm1328 = vcmask 801792
  %v1329 = vsel %vm1328, %v1305, %v1307
  %v1330 = vsel %vm1328, %v1307, %v1309
  %v1331 = vsel %vm1328, %v1311, %v1313
  %v1332 = vsel %vm1328, %v1313, %v1315
  %v1333 = vsel %vm1328, %v1317, %v1319
  %v1334 = vsel %vm1328, %v1319, %v1321
  %v1335 = vsel %vm1328, %v1323, %v1325
  %v1336 = vsel %vm1328, %v1325, %v1327
  %v1345 = vsel %vm183, %v1329, 0.0
  %v1346 = vsel %vm184, %v1330, 0.0
  %v1347 = vsel %vm183, %v1331, 0.0
  %v1348 = vsel %vm184, %v1332, 0.0
  %v1349 = vsel %vm183, %v1333, 0.0
  %v1350 = vsel %vm184, %v1334, 0.0
  %v1351 = vsel %vm183, %v1335, 0.0
  %v1352 = vsel %vm184, %v1336, 0.0
  %1353 = vst [vmem:[#allocation3 + $0x500] sm:$0xff] %v1345
  %1354 = vst [vmem:[#allocation3 + $0x508] sm:$0xff] %v1346
  %1355 = vst [vmem:[#allocation3 + $0x510] sm:$0xff] %v1347
  %1356 = vst [vmem:[#allocation3 + $0x518] sm:$0xff] %v1348
  %1357 = vst [vmem:[#allocation3 + $0x520] sm:$0xff] %v1349
  %1358 = vst [vmem:[#allocation3 + $0x528] sm:$0xff] %v1350
  %1359 = vst [vmem:[#allocation3 + $0x530] sm:$0xff] %v1351
  %1360 = vst [vmem:[#allocation3 + $0x538] sm:$0xff] %v1352
  %1361 = vrot.lane.b32.xlu0 %v158, 97
  %v1362 = vpop.permute.xlu0 %1361
  %1363 = vrot.lane.b32.xlu0 %v159, 97
  %v1364 = vpop.permute.xlu0 %1363
  %1365 = vrot.lane.b32.xlu0 %v160, 97
  %v1366 = vpop.permute.xlu0 %1365
  %1367 = vrot.lane.b32.xlu0 %v162, 97
  %v1368 = vpop.permute.xlu0 %1367
  %1369 = vrot.lane.b32.xlu0 %v163, 97
  %v1370 = vpop.permute.xlu0 %1369
  %1371 = vrot.lane.b32.xlu0 %v164, 97
  %v1372 = vpop.permute.xlu0 %1371
  %1373 = vrot.lane.b32.xlu0 %v166, 97
  %v1374 = vpop.permute.xlu0 %1373
  %1375 = vrot.lane.b32.xlu0 %v167, 97
  %v1376 = vpop.permute.xlu0 %1375
  %1377 = vrot.lane.b32.xlu0 %v168, 97
  %v1378 = vpop.permute.xlu0 %1377
  %1379 = vrot.lane.b32.xlu0 %v170, 97
  %v1380 = vpop.permute.xlu0 %1379
  %1381 = vrot.lane.b32.xlu0 %v171, 97
  %v1382 = vpop.permute.xlu0 %1381
  %1383 = vrot.lane.b32.xlu0 %v172, 97
  %v1384 = vpop.permute.xlu0 %1383
  %vm1385 = vcmask 793600
  %v1386 = vsel %vm1385, %v1362, %v1364
  %v1387 = vsel %vm1385, %v1364, %v1366
  %v1388 = vsel %vm1385, %v1368, %v1370
  %v1389 = vsel %vm1385, %v1370, %v1372
  %v1390 = vsel %vm1385, %v1374, %v1376
  %v1391 = vsel %vm1385, %v1376, %v1378
  %v1392 = vsel %vm1385, %v1380, %v1382
  %v1393 = vsel %vm1385, %v1382, %v1384
  %v1402 = vsel %vm264, %v1386, 0.0
  %v1403 = vsel %vm265, %v1387, 0.0
  %v1404 = vsel %vm264, %v1388, 0.0
  %v1405 = vsel %vm265, %v1389, 0.0
  %v1406 = vsel %vm264, %v1390, 0.0
  %v1407 = vsel %vm265, %v1391, 0.0
  %v1408 = vsel %vm264, %v1392, 0.0
  %v1409 = vsel %vm265, %v1393, 0.0
  %1410 = vst [vmem:[#allocation3 + $0x540] sm:$0xff] %v1402
  %1411 = vst [vmem:[#allocation3 + $0x548] sm:$0xff] %v1403
  %1412 = vst [vmem:[#allocation3 + $0x550] sm:$0xff] %v1404
  %1413 = vst [vmem:[#allocation3 + $0x558] sm:$0xff] %v1405
  %1414 = vst [vmem:[#allocation3 + $0x560] sm:$0xff] %v1406
  %1415 = vst [vmem:[#allocation3 + $0x568] sm:$0xff] %v1407
  %1416 = vst [vmem:[#allocation3 + $0x570] sm:$0xff] %v1408
  %1417 = vst [vmem:[#allocation3 + $0x578] sm:$0xff] %v1409
  %1418 = vrot.lane.b32.xlu0 %v158, 96
  %v1419 = vpop.permute.xlu0 %1418
  %1420 = vrot.lane.b32.xlu0 %v159, 96
  %v1421 = vpop.permute.xlu0 %1420
  %1422 = vrot.lane.b32.xlu0 %v160, 96
  %v1423 = vpop.permute.xlu0 %1422
  %1424 = vrot.lane.b32.xlu0 %v162, 96
  %v1425 = vpop.permute.xlu0 %1424
  %1426 = vrot.lane.b32.xlu0 %v163, 96
  %v1427 = vpop.permute.xlu0 %1426
  %1428 = vrot.lane.b32.xlu0 %v164, 96
  %v1429 = vpop.permute.xlu0 %1428
  %1430 = vrot.lane.b32.xlu0 %v166, 96
  %v1431 = vpop.permute.xlu0 %1430
  %1432 = vrot.lane.b32.xlu0 %v167, 96
  %v1433 = vpop.permute.xlu0 %1432
  %1434 = vrot.lane.b32.xlu0 %v168, 96
  %v1435 = vpop.permute.xlu0 %1434
  %1436 = vrot.lane.b32.xlu0 %v170, 96
  %v1437 = vpop.permute.xlu0 %1436
  %1438 = vrot.lane.b32.xlu0 %v171, 96
  %v1439 = vpop.permute.xlu0 %1438
  %1440 = vrot.lane.b32.xlu0 %v172, 96
  %v1441 = vpop.permute.xlu0 %1440
  %vm1442 = vcmask 785408
  %v1443 = vsel %vm1442, %v1419, %v1421
  %v1444 = vsel %vm1442, %v1421, %v1423
  %v1445 = vsel %vm1442, %v1425, %v1427
  %v1446 = vsel %vm1442, %v1427, %v1429
  %v1447 = vsel %vm1442, %v1431, %v1433
  %v1448 = vsel %vm1442, %v1433, %v1435
  %v1449 = vsel %vm1442, %v1437, %v1439
  %v1450 = vsel %vm1442, %v1439, %v1441
  %1459 = vst [vmem:[#allocation3 + $0x580] sm:$0xff] %v1443
  %1460 = vst [vmem:[#allocation3 + $0x588] sm:$0xff] %v1444
  %1461 = vst [vmem:[#allocation3 + $0x590] sm:$0xff] %v1445
  %1462 = vst [vmem:[#allocation3 + $0x598] sm:$0xff] %v1446
  %1463 = vst [vmem:[#allocation3 + $0x5a0] sm:$0xff] %v1447
  %1464 = vst [vmem:[#allocation3 + $0x5a8] sm:$0xff] %v1448
  %1465 = vst [vmem:[#allocation3 + $0x5b0] sm:$0xff] %v1449
  %1466 = vst [vmem:[#allocation3 + $0x5b8] sm:$0xff] %v1450
  %1467 = vrot.lane.b32.xlu0 %v158, 95
  %v1468 = vpop.permute.xlu0 %1467
  %1469 = vrot.lane.b32.xlu0 %v159, 95
  %v1470 = vpop.permute.xlu0 %1469
  %1471 = vrot.lane.b32.xlu0 %v160, 95
  %v1472 = vpop.permute.xlu0 %1471
  %1473 = vrot.lane.b32.xlu0 %v162, 95
  %v1474 = vpop.permute.xlu0 %1473
  %1475 = vrot.lane.b32.xlu0 %v163, 95
  %v1476 = vpop.permute.xlu0 %1475
  %1477 = vrot.lane.b32.xlu0 %v164, 95
  %v1478 = vpop.permute.xlu0 %1477
  %1479 = vrot.lane.b32.xlu0 %v166, 95
  %v1480 = vpop.permute.xlu0 %1479
  %1481 = vrot.lane.b32.xlu0 %v167, 95
  %v1482 = vpop.permute.xlu0 %1481
  %1483 = vrot.lane.b32.xlu0 %v168, 95
  %v1484 = vpop.permute.xlu0 %1483
  %1485 = vrot.lane.b32.xlu0 %v170, 95
  %v1486 = vpop.permute.xlu0 %1485
  %1487 = vrot.lane.b32.xlu0 %v171, 95
  %v1488 = vpop.permute.xlu0 %1487
  %1489 = vrot.lane.b32.xlu0 %v172, 95
  %v1490 = vpop.permute.xlu0 %1489
  %vm1491 = vcmask 777216
  %v1492 = vsel %vm1491, %v1468, %v1470
  %v1493 = vsel %vm1491, %v1470, %v1472
  %v1494 = vsel %vm1491, %v1474, %v1476
  %v1495 = vsel %vm1491, %v1476, %v1478
  %v1496 = vsel %vm1491, %v1480, %v1482
  %v1497 = vsel %vm1491, %v1482, %v1484
  %v1498 = vsel %vm1491, %v1486, %v1488
  %v1499 = vsel %vm1491, %v1488, %v1490
  %v1508 = vsel %vm382, %v1492, 0.0
  %v1509 = vsel %vm383, %v1493, 0.0
  %v1510 = vsel %vm382, %v1494, 0.0
  %v1511 = vsel %vm383, %v1495, 0.0
  %v1512 = vsel %vm382, %v1496, 0.0
  %v1513 = vsel %vm383, %v1497, 0.0
  %v1514 = vsel %vm382, %v1498, 0.0
  %v1515 = vsel %vm383, %v1499, 0.0
  %1516 = vst [vmem:[#allocation3 + $0x5c0] sm:$0xff] %v1508
  %1517 = vst [vmem:[#allocation3 + $0x5c8] sm:$0xff] %v1509
  %1518 = vst [vmem:[#allocation3 + $0x5d0] sm:$0xff] %v1510
  %1519 = vst [vmem:[#allocation3 + $0x5d8] sm:$0xff] %v1511
  %1520 = vst [vmem:[#allocation3 + $0x5e0] sm:$0xff] %v1512
  %1521 = vst [vmem:[#allocation3 + $0x5e8] sm:$0xff] %v1513
  %1522 = vst [vmem:[#allocation3 + $0x5f0] sm:$0xff] %v1514
  %1523 = vst [vmem:[#allocation3 + $0x5f8] sm:$0xff] %v1515
  %1524 = vrot.lane.b32.xlu0 %v158, 94
  %v1525 = vpop.permute.xlu0 %1524
  %1526 = vrot.lane.b32.xlu0 %v159, 94
  %v1527 = vpop.permute.xlu0 %1526
  %1528 = vrot.lane.b32.xlu0 %v160, 94
  %v1529 = vpop.permute.xlu0 %1528
  %1530 = vrot.lane.b32.xlu0 %v162, 94
  %v1531 = vpop.permute.xlu0 %1530
  %1532 = vrot.lane.b32.xlu0 %v163, 94
  %v1533 = vpop.permute.xlu0 %1532
  %1534 = vrot.lane.b32.xlu0 %v164, 94
  %v1535 = vpop.permute.xlu0 %1534
  %1536 = vrot.lane.b32.xlu0 %v166, 94
  %v1537 = vpop.permute.xlu0 %1536
  %1538 = vrot.lane.b32.xlu0 %v167, 94
  %v1539 = vpop.permute.xlu0 %1538
  %1540 = vrot.lane.b32.xlu0 %v168, 94
  %v1541 = vpop.permute.xlu0 %1540
  %1542 = vrot.lane.b32.xlu0 %v170, 94
  %v1543 = vpop.permute.xlu0 %1542
  %1544 = vrot.lane.b32.xlu0 %v171, 94
  %v1545 = vpop.permute.xlu0 %1544
  %1546 = vrot.lane.b32.xlu0 %v172, 94
  %v1547 = vpop.permute.xlu0 %1546
  %vm1548 = vcmask 769024
  %v1549 = vsel %vm1548, %v1525, %v1527
  %v1550 = vsel %vm1548, %v1527, %v1529
  %v1551 = vsel %vm1548, %v1531, %v1533
  %v1552 = vsel %vm1548, %v1533, %v1535
  %v1553 = vsel %vm1548, %v1537, %v1539
  %v1554 = vsel %vm1548, %v1539, %v1541
  %v1555 = vsel %vm1548, %v1543, %v1545
  %v1556 = vsel %vm1548, %v1545, %v1547
  %v1565 = vsel %vm451, %v1549, 0.0
  %v1566 = vsel %vm452, %v1550, 0.0
  %v1567 = vsel %vm451, %v1551, 0.0
  %v1568 = vsel %vm452, %v1552, 0.0
  %v1569 = vsel %vm451, %v1553, 0.0
  %v1570 = vsel %vm452, %v1554, 0.0
  %v1571 = vsel %vm451, %v1555, 0.0
  %v1572 = vsel %vm452, %v1556, 0.0
  %1573 = vst [vmem:[#allocation3 + $0x600] sm:$0xff] %v1565
  %1574 = vst [vmem:[#allocation3 + $0x608] sm:$0xff] %v1566
  %1575 = vst [vmem:[#allocation3 + $0x610] sm:$0xff] %v1567
  %1576 = vst [vmem:[#allocation3 + $0x618] sm:$0xff] %v1568
  %1577 = vst [vmem:[#allocation3 + $0x620] sm:$0xff] %v1569
  %1578 = vst [vmem:[#allocation3 + $0x628] sm:$0xff] %v1570
  %1579 = vst [vmem:[#allocation3 + $0x630] sm:$0xff] %v1571
  %1580 = vst [vmem:[#allocation3 + $0x638] sm:$0xff] %v1572
  %v1581 = vld [vmem:[#allocation3] sm:$0xff]
  %v1582 = vld [vmem:[#allocation3 + $0x8] sm:$0xff]
  %v1583 = vld [vmem:[#allocation3 + $0x10] sm:$0xff]
  %v1584 = vld [vmem:[#allocation3 + $0x18] sm:$0xff]
  %v1585 = vld [vmem:[#allocation3 + $0x20] sm:$0xff]
  %v1586 = vld [vmem:[#allocation3 + $0x28] sm:$0xff]
  %v1587 = vld [vmem:[#allocation3 + $0x30] sm:$0xff]
  %v1588 = vld [vmem:[#allocation3 + $0x38] sm:$0xff]
  %v1589 = vld [vmem:[#allocation3 + $0x40] sm:$0xff]
  %v1590 = vld [vmem:[#allocation3 + $0x48] sm:$0xff]
  %v1591 = vld [vmem:[#allocation3 + $0x50] sm:$0xff]
  %v1592 = vld [vmem:[#allocation3 + $0x58] sm:$0xff]
  %v1593 = vld [vmem:[#allocation3 + $0x60] sm:$0xff]
  %v1594 = vld [vmem:[#allocation3 + $0x68] sm:$0xff]
  %v1595 = vld [vmem:[#allocation3 + $0x70] sm:$0xff]
  %v1596 = vld [vmem:[#allocation3 + $0x78] sm:$0xff]
  %v1597 = vld [vmem:[#allocation3 + $0x80] sm:$0xff]
  %v1598 = vld [vmem:[#allocation3 + $0x88] sm:$0xff]
  %v1599 = vld [vmem:[#allocation3 + $0x90] sm:$0xff]
  %v1600 = vld [vmem:[#allocation3 + $0x98] sm:$0xff]
  %v1601 = vld [vmem:[#allocation3 + $0xa0] sm:$0xff]
  %v1602 = vld [vmem:[#allocation3 + $0xa8] sm:$0xff]
  %v1603 = vld [vmem:[#allocation3 + $0xb0] sm:$0xff]
  %v1604 = vld [vmem:[#allocation3 + $0xb8] sm:$0xff]
  %v1605 = vld [vmem:[#allocation3 + $0xc0] sm:$0xff]
  %v1606 = vld [vmem:[#allocation3 + $0xc8] sm:$0xff]
  %v1607 = vld [vmem:[#allocation3 + $0xd0] sm:$0xff]
  %v1608 = vld [vmem:[#allocation3 + $0xd8] sm:$0xff]
  %v1609 = vld [vmem:[#allocation3 + $0xe0] sm:$0xff]
  %v1610 = vld [vmem:[#allocation3 + $0xe8] sm:$0xff]
  %v1611 = vld [vmem:[#allocation3 + $0xf0] sm:$0xff]
  %v1612 = vld [vmem:[#allocation3 + $0xf8] sm:$0xff]
  %v1613 = vld [vmem:[#allocation3 + $0x100] sm:$0xff]
  %v1614 = vld [vmem:[#allocation3 + $0x108] sm:$0xff]
  %v1615 = vld [vmem:[#allocation3 + $0x110] sm:$0xff]
  %v1616 = vld [vmem:[#allocation3 + $0x118] sm:$0xff]
  %v1617 = vld [vmem:[#allocation3 + $0x120] sm:$0xff]
  %v1618 = vld [vmem:[#allocation3 + $0x128] sm:$0xff]
  %v1619 = vld [vmem:[#allocation3 + $0x130] sm:$0xff]
  %v1620 = vld [vmem:[#allocation3 + $0x138] sm:$0xff]
  %v1621 = vld [vmem:[#allocation3 + $0x140] sm:$0xff]
  %v1622 = vld [vmem:[#allocation3 + $0x148] sm:$0xff]
  %v1623 = vld [vmem:[#allocation3 + $0x150] sm:$0xff]
  %v1624 = vld [vmem:[#allocation3 + $0x158] sm:$0xff]
  %v1625 = vld [vmem:[#allocation3 + $0x160] sm:$0xff]
  %v1626 = vld [vmem:[#allocation3 + $0x168] sm:$0xff]
  %v1627 = vld [vmem:[#allocation3 + $0x170] sm:$0xff]
  %v1628 = vld [vmem:[#allocation3 + $0x178] sm:$0xff]
  %v1629 = vld [vmem:[#allocation3 + $0x180] sm:$0xff]
  %v1630 = vld [vmem:[#allocation3 + $0x188] sm:$0xff]
  %v1631 = vld [vmem:[#allocation3 + $0x190] sm:$0xff]
  %v1632 = vld [vmem:[#allocation3 + $0x198] sm:$0xff]
  %v1633 = vld [vmem:[#allocation3 + $0x1a0] sm:$0xff]
  %v1634 = vld [vmem:[#allocation3 + $0x1a8] sm:$0xff]
  %v1635 = vld [vmem:[#allocation3 + $0x1b0] sm:$0xff]
  %v1636 = vld [vmem:[#allocation3 + $0x1b8] sm:$0xff]
  %v1637 = vld [vmem:[#allocation3 + $0x1c0] sm:$0xff]
  %v1638 = vld [vmem:[#allocation3 + $0x1c8] sm:$0xff]
  %v1639 = vld [vmem:[#allocation3 + $0x1d0] sm:$0xff]
  %v1640 = vld [vmem:[#allocation3 + $0x1d8] sm:$0xff]
  %v1641 = vld [vmem:[#allocation3 + $0x1e0] sm:$0xff]
  %v1642 = vld [vmem:[#allocation3 + $0x1e8] sm:$0xff]
  %v1643 = vld [vmem:[#allocation3 + $0x1f0] sm:$0xff]
  %v1644 = vld [vmem:[#allocation3 + $0x1f8] sm:$0xff]
  %v1645 = vld [vmem:[#allocation3 + $0x200] sm:$0xff]
  %v1646 = vld [vmem:[#allocation3 + $0x208] sm:$0xff]
  %v1647 = vld [vmem:[#allocation3 + $0x210] sm:$0xff]
  %v1648 = vld [vmem:[#allocation3 + $0x218] sm:$0xff]
  %v1649 = vld [vmem:[#allocation3 + $0x220] sm:$0xff]
  %v1650 = vld [vmem:[#allocation3 + $0x228] sm:$0xff]
  %v1651 = vld [vmem:[#allocation3 + $0x230] sm:$0xff]
  %v1652 = vld [vmem:[#allocation3 + $0x238] sm:$0xff]
  %v1653 = vld [vmem:[#allocation3 + $0x240] sm:$0xff]
  %v1654 = vld [vmem:[#allocation3 + $0x248] sm:$0xff]
  %v1655 = vld [vmem:[#allocation3 + $0x250] sm:$0xff]
  %v1656 = vld [vmem:[#allocation3 + $0x258] sm:$0xff]
  %v1657 = vld [vmem:[#allocation3 + $0x260] sm:$0xff]
  %v1658 = vld [vmem:[#allocation3 + $0x268] sm:$0xff]
  %v1659 = vld [vmem:[#allocation3 + $0x270] sm:$0xff]
  %v1660 = vld [vmem:[#allocation3 + $0x278] sm:$0xff]
  %v1661 = vld [vmem:[#allocation3 + $0x280] sm:$0xff]
  %v1662 = vld [vmem:[#allocation3 + $0x288] sm:$0xff]
  %v1663 = vld [vmem:[#allocation3 + $0x290] sm:$0xff]
  %v1664 = vld [vmem:[#allocation3 + $0x298] sm:$0xff]
  %v1665 = vld [vmem:[#allocation3 + $0x2a0] sm:$0xff]
  %v1666 = vld [vmem:[#allocation3 + $0x2a8] sm:$0xff]
  %v1667 = vld [vmem:[#allocation3 + $0x2b0] sm:$0xff]
  %v1668 = vld [vmem:[#allocation3 + $0x2b8] sm:$0xff]
  %v1669 = vld [vmem:[#allocation3 + $0x2c0] sm:$0xff]
  %v1670 = vld [vmem:[#allocation3 + $0x2c8] sm:$0xff]
  %v1671 = vld [vmem:[#allocation3 + $0x2d0] sm:$0xff]
  %v1672 = vld [vmem:[#allocation3 + $0x2d8] sm:$0xff]
  %v1673 = vld [vmem:[#allocation3 + $0x2e0] sm:$0xff]
  %v1674 = vld [vmem:[#allocation3 + $0x2e8] sm:$0xff]
  %v1675 = vld [vmem:[#allocation3 + $0x2f0] sm:$0xff]
  %v1676 = vld [vmem:[#allocation3 + $0x2f8] sm:$0xff]
  %v1677 = vld [vmem:[#allocation3 + $0x300] sm:$0xff]
  %v1678 = vld [vmem:[#allocation3 + $0x308] sm:$0xff]
  %v1679 = vld [vmem:[#allocation3 + $0x310] sm:$0xff]
  %v1680 = vld [vmem:[#allocation3 + $0x318] sm:$0xff]
  %v1681 = vld [vmem:[#allocation3 + $0x320] sm:$0xff]
  %v1682 = vld [vmem:[#allocation3 + $0x328] sm:$0xff]
  %v1683 = vld [vmem:[#allocation3 + $0x330] sm:$0xff]
  %v1684 = vld [vmem:[#allocation3 + $0x338] sm:$0xff]
  %v1685 = vld [vmem:[#allocation3 + $0x340] sm:$0xff]
  %v1686 = vld [vmem:[#allocation3 + $0x348] sm:$0xff]
  %v1687 = vld [vmem:[#allocation3 + $0x350] sm:$0xff]
  %v1688 = vld [vmem:[#allocation3 + $0x358] sm:$0xff]
  %v1689 = vld [vmem:[#allocation3 + $0x360] sm:$0xff]
  %v1690 = vld [vmem:[#allocation3 + $0x368] sm:$0xff]
  %v1691 = vld [vmem:[#allocation3 + $0x370] sm:$0xff]
  %v1692 = vld [vmem:[#allocation3 + $0x378] sm:$0xff]
  %v1693 = vld [vmem:[#allocation3 + $0x380] sm:$0xff]
  %v1694 = vld [vmem:[#allocation3 + $0x388] sm:$0xff]
  %v1695 = vld [vmem:[#allocation3 + $0x390] sm:$0xff]
  %v1696 = vld [vmem:[#allocation3 + $0x398] sm:$0xff]
  %v1697 = vld [vmem:[#allocation3 + $0x3a0] sm:$0xff]
  %v1698 = vld [vmem:[#allocation3 + $0x3a8] sm:$0xff]
  %v1699 = vld [vmem:[#allocation3 + $0x3b0] sm:$0xff]
  %v1700 = vld [vmem:[#allocation3 + $0x3b8] sm:$0xff]
  %v1701 = vld [vmem:[#allocation3 + $0x3c0] sm:$0xff]
  %v1702 = vld [vmem:[#allocation3 + $0x3c8] sm:$0xff]
  %v1703 = vld [vmem:[#allocation3 + $0x3d0] sm:$0xff]
  %v1704 = vld [vmem:[#allocation3 + $0x3d8] sm:$0xff]
  %v1705 = vld [vmem:[#allocation3 + $0x3e0] sm:$0xff]
  %v1706 = vld [vmem:[#allocation3 + $0x3e8] sm:$0xff]
  %v1707 = vld [vmem:[#allocation3 + $0x3f0] sm:$0xff]
  %v1708 = vld [vmem:[#allocation3 + $0x3f8] sm:$0xff]
  %v1709 = vld [vmem:[#allocation3 + $0x400] sm:$0xff]
  %v1710 = vld [vmem:[#allocation3 + $0x408] sm:$0xff]
  %v1711 = vld [vmem:[#allocation3 + $0x410] sm:$0xff]
  %v1712 = vld [vmem:[#allocation3 + $0x418] sm:$0xff]
  %v1713 = vld [vmem:[#allocation3 + $0x420] sm:$0xff]
  %v1714 = vld [vmem:[#allocation3 + $0x428] sm:$0xff]
  %v1715 = vld [vmem:[#allocation3 + $0x430] sm:$0xff]
  %v1716 = vld [vmem:[#allocation3 + $0x438] sm:$0xff]
  %v1717 = vld [vmem:[#allocation3 + $0x440] sm:$0xff]
  %v1718 = vld [vmem:[#allocation3 + $0x448] sm:$0xff]
  %v1719 = vld [vmem:[#allocation3 + $0x450] sm:$0xff]
  %v1720 = vld [vmem:[#allocation3 + $0x458] sm:$0xff]
  %v1721 = vld [vmem:[#allocation3 + $0x460] sm:$0xff]
  %v1722 = vld [vmem:[#allocation3 + $0x468] sm:$0xff]
  %v1723 = vld [vmem:[#allocation3 + $0x470] sm:$0xff]
  %v1724 = vld [vmem:[#allocation3 + $0x478] sm:$0xff]
  %v1725 = vld [vmem:[#allocation3 + $0x480] sm:$0xff]
  %v1726 = vld [vmem:[#allocation3 + $0x488] sm:$0xff]
  %v1727 = vld [vmem:[#allocation3 + $0x490] sm:$0xff]
  %v1728 = vld [vmem:[#allocation3 + $0x498] sm:$0xff]
  %v1729 = vld [vmem:[#allocation3 + $0x4a0] sm:$0xff]
  %v1730 = vld [vmem:[#allocation3 + $0x4a8] sm:$0xff]
  %v1731 = vld [vmem:[#allocation3 + $0x4b0] sm:$0xff]
  %v1732 = vld [vmem:[#allocation3 + $0x4b8] sm:$0xff]
  %v1733 = vld [vmem:[#allocation3 + $0x4c0] sm:$0xff]
  %v1734 = vld [vmem:[#allocation3 + $0x4c8] sm:$0xff]
  %v1735 = vld [vmem:[#allocation3 + $0x4d0] sm:$0xff]
  %v1736 = vld [vmem:[#allocation3 + $0x4d8] sm:$0xff]
  %v1737 = vld [vmem:[#allocation3 + $0x4e0] sm:$0xff]
  %v1738 = vld [vmem:[#allocation3 + $0x4e8] sm:$0xff]
  %v1739 = vld [vmem:[#allocation3 + $0x4f0] sm:$0xff]
  %v1740 = vld [vmem:[#allocation3 + $0x4f8] sm:$0xff]
  %v1741 = vld [vmem:[#allocation3 + $0x500] sm:$0xff]
  %v1742 = vld [vmem:[#allocation3 + $0x508] sm:$0xff]
  %v1743 = vld [vmem:[#allocation3 + $0x510] sm:$0xff]
  %v1744 = vld [vmem:[#allocation3 + $0x518] sm:$0xff]
  %v1745 = vld [vmem:[#allocation3 + $0x520] sm:$0xff]
  %v1746 = vld [vmem:[#allocation3 + $0x528] sm:$0xff]
  %v1747 = vld [vmem:[#allocation3 + $0x530] sm:$0xff]
  %v1748 = vld [vmem:[#allocation3 + $0x538] sm:$0xff]
  %v1749 = vld [vmem:[#allocation3 + $0x540] sm:$0xff]
  %v1750 = vld [vmem:[#allocation3 + $0x548] sm:$0xff]
  %v1751 = vld [vmem:[#allocation3 + $0x550] sm:$0xff]
  %v1752 = vld [vmem:[#allocation3 + $0x558] sm:$0xff]
  %v1753 = vld [vmem:[#allocation3 + $0x560] sm:$0xff]
  %v1754 = vld [vmem:[#allocation3 + $0x568] sm:$0xff]
  %v1755 = vld [vmem:[#allocation3 + $0x570] sm:$0xff]
  %v1756 = vld [vmem:[#allocation3 + $0x578] sm:$0xff]
  %v1757 = vld [vmem:[#allocation3 + $0x580] sm:$0xff]
  %v1758 = vld [vmem:[#allocation3 + $0x588] sm:$0xff]
  %v1759 = vld [vmem:[#allocation3 + $0x590] sm:$0xff]
  %v1760 = vld [vmem:[#allocation3 + $0x598] sm:$0xff]
  %v1761 = vld [vmem:[#allocation3 + $0x5a0] sm:$0xff]
  %v1762 = vld [vmem:[#allocation3 + $0x5a8] sm:$0xff]
  %v1763 = vld [vmem:[#allocation3 + $0x5b0] sm:$0xff]
  %v1764 = vld [vmem:[#allocation3 + $0x5b8] sm:$0xff]
  %v1765 = vld [vmem:[#allocation3 + $0x5c0] sm:$0xff]
  %v1766 = vld [vmem:[#allocation3 + $0x5c8] sm:$0xff]
  %v1767 = vld [vmem:[#allocation3 + $0x5d0] sm:$0xff]
  %v1768 = vld [vmem:[#allocation3 + $0x5d8] sm:$0xff]
  %v1769 = vld [vmem:[#allocation3 + $0x5e0] sm:$0xff]
  %v1770 = vld [vmem:[#allocation3 + $0x5e8] sm:$0xff]
  %v1771 = vld [vmem:[#allocation3 + $0x5f0] sm:$0xff]
  %v1772 = vld [vmem:[#allocation3 + $0x5f8] sm:$0xff]
  %v1773 = vld [vmem:[#allocation3 + $0x600] sm:$0xff]
  %v1774 = vld [vmem:[#allocation3 + $0x608] sm:$0xff]
  %v1775 = vld [vmem:[#allocation3 + $0x610] sm:$0xff]
  %v1776 = vld [vmem:[#allocation3 + $0x618] sm:$0xff]
  %v1777 = vld [vmem:[#allocation3 + $0x620] sm:$0xff]
  %v1778 = vld [vmem:[#allocation3 + $0x628] sm:$0xff]
  %v1779 = vld [vmem:[#allocation3 + $0x630] sm:$0xff]
  %v1780 = vld [vmem:[#allocation3 + $0x638] sm:$0xff]
  %1782 = vset.pattern.permute.xlu0 0
  %1783 = vperm.xlu0 %1782, %v153
  %v1784 = vpop.permute.xlu0 %1783
  %1787 = vset.pattern.permute.xlu0 0
  %1788 = vperm.xlu0 %1787, %v154
  %v1789 = vpop.permute.xlu0 %1788
  %1792 = vset.pattern.permute.xlu0 0
  %1793 = vperm.xlu0 %1792, %v155
  %v1794 = vpop.permute.xlu0 %1793
  %1797 = vset.pattern.permute.xlu0 0
  %1798 = vperm.xlu0 %1797, %v156
  %v1799 = vpop.permute.xlu0 %1798
  %v1802 = vsel %vm347, %v131, 0
  %v1805 = vsel %vm347, %v138, 0
  %v1808 = vsel %vm347, %v145, 0
  %v1811 = vsel %vm347, %v152, 0
  %1813 = vmatprep.subr.mxu0 %v1612
  %1814 = vmatpush1.msra.mxu0 %v1611
  %1815 = vmatprep.subr.mxu0 %v1610
  %1816 = vmatpush1.msra.mxu0 %v1609
  %1817 = vmatprep.subr.mxu0 %v1608
  %1818 = vmatpush1.msra.mxu0 %v1607
  %1819 = vmatprep.subr.mxu0 %v1606
  %1820 = vmatpush1.msra.mxu0 %v1605
  %1821 = vmatprep.subr.mxu0 %v1604
  %1822 = vmatpush1.msra.mxu0 %v1603
  %1823 = vmatprep.subr.mxu0 %v1602
  %1824 = vmatpush1.msra.mxu0 %v1601
  %1825 = vmatprep.subr.mxu0 %v1600
  %1826 = vmatpush1.msra.mxu0 %v1599
  %1827 = vmatprep.subr.mxu0 %v1598
  %1828 = vmatpush1.msra.mxu0 %v1597
  %1829 = vmatprep.subr.mxu0 %v1596
  %1830 = vmatpush1.msra.mxu0 %v1595
  %1831 = vmatprep.subr.mxu0 %v1594
  %1832 = vmatpush1.msra.mxu0 %v1593
  %1833 = vmatprep.subr.mxu0 %v1592
  %1834 = vmatpush1.msra.mxu0 %v1591
  %1835 = vmatprep.subr.mxu0 %v1590
  %1836 = vmatpush1.msra.mxu0 %v1589
  %1837 = vmatprep.subr.mxu0 %v1588
  %1838 = vmatpush1.msra.mxu0 %v1587
  %1839 = vmatprep.subr.mxu0 %v1586
  %1840 = vmatpush1.msra.mxu0 %v1585
  %1841 = vmatprep.subr.mxu0 %v1584
  %1842 = vmatpush1.msra.mxu0 %v1583
  %1843 = vmatprep.subr.mxu0 %v1582
  %1844 = vmatpush1.msra.mxu0 %v1581
  %1845 = vmatprep.subr.mxu0 %v1644
  %1846 = vmatpush2.msra.mxu0 %v1643
  %1847 = vmatprep.subr.mxu0 %v1642
  %1848 = vmatpush2.msra.mxu0 %v1641
  %1849 = vmatprep.subr.mxu0 %v1640
  %1850 = vmatpush2.msra.mxu0 %v1639
  %1851 = vmatprep.subr.mxu0 %v1638
  %1852 = vmatpush2.msra.mxu0 %v1637
  %1853 = vmatprep.subr.mxu0 %v1636
  %1854 = vmatpush2.msra.mxu0 %v1635
  %1855 = vmatprep.subr.mxu0 %v1634
  %1856 = vmatpush2.msra.mxu0 %v1633
  %1857 = vmatprep.subr.mxu0 %v1632
  %1858 = vmatpush2.msra.mxu0 %v1631
  %1859 = vmatprep.subr.mxu0 %v1630
  %1860 = vmatpush2.msra.mxu0 %v1629
  %1861 = vmatprep.subr.mxu0 %v1628
  %1862 = vmatpush2.msra.mxu0 %v1627
  %1863 = vmatprep.subr.mxu0 %v1626
  %1864 = vmatpush2.msra.mxu0 %v1625
  %1865 = vmatprep.subr.mxu0 %v1624
  %1866 = vmatpush2.msra.mxu0 %v1623
  %1867 = vmatprep.subr.mxu0 %v1622
  %1868 = vmatpush2.msra.mxu0 %v1621
  %1869 = vmatprep.subr.mxu0 %v1620
  %1870 = vmatpush2.msra.mxu0 %v1619
  %1871 = vmatprep.subr.mxu0 %v1618
  %1872 = vmatpush2.msra.mxu0 %v1617
  %1873 = vmatprep.subr.mxu0 %v1616
  %1874 = vmatpush2.msra.mxu0 %v1615
  %1875 = vmatprep.subr.mxu0 %v1614
  %1876 = vmatpush2.msra.mxu0 %v1613
  %1877 = vmatprep.mubr.f32.mxu0 %v126
  %1878 = vmatmul.mubr.f32.gmra.mxu0 %v125
  %v1879 = vpop.f32.mrf.mxu0
  %v1880 = vadd.f32 %v1784, %v1879
  %v1881 = vpop.f32.mrf.mxu0
  %v1882 = vadd.f32 %v1784, %v1881
  %1883 = vmatprep.mubr.f32.mxu0 %v133
  %1884 = vmatmul.mubr.f32.gmra.mxu0 %v132
  %v1885 = vpop.f32.mrf.mxu0
  %v1886 = vadd.f32 %v1789, %v1885
  %v1887 = vpop.f32.mrf.mxu0
  %v1888 = vadd.f32 %v1789, %v1887
  %1889 = vmatprep.mubr.f32.mxu0 %v140
  %1890 = vmatmul.mubr.f32.gmra.mxu0 %v139
  %v1891 = vpop.f32.mrf.mxu0
  %v1892 = vadd.f32 %v1794, %v1891
  %v1893 = vpop.f32.mrf.mxu0
  %v1894 = vadd.f32 %v1794, %v1893
  %1895 = vmatprep.mubr.f32.mxu0 %v147
  %1896 = vmatmul.mubr.f32.gmra.mxu0 %v146
  %v1897 = vpop.f32.mrf.mxu0
  %v1898 = vadd.f32 %v1799, %v1897
  %v1899 = vpop.f32.mrf.mxu0
  %v1900 = vadd.f32 %v1799, %v1899
  %1901 = vdwg.mxu0
  %1902 = vmatprep.subr.mxu0 %v1676
  %1903 = vmatpush1.msra.mxu0 %v1675
  %1904 = vmatprep.subr.mxu0 %v1674
  %1905 = vmatpush1.msra.mxu0 %v1673
  %1906 = vmatprep.subr.mxu0 %v1672
  %1907 = vmatpush1.msra.mxu0 %v1671
  %1908 = vmatprep.subr.mxu0 %v1670
  %1909 = vmatpush1.msra.mxu0 %v1669
  %1910 = vmatprep.subr.mxu0 %v1668
  %1911 = vmatpush1.msra.mxu0 %v1667
  %1912 = vmatprep.subr.mxu0 %v1666
  %1913 = vmatpush1.msra.mxu0 %v1665
  %1914 = vmatprep.subr.mxu0 %v1664
  %1915 = vmatpush1.msra.mxu0 %v1663
  %1916 = vmatprep.subr.mxu0 %v1662
  %1917 = vmatpush1.msra.mxu0 %v1661
  %1918 = vmatprep.subr.mxu0 %v1660
  %1919 = vmatpush1.msra.mxu0 %v1659
  %1920 = vmatprep.subr.mxu0 %v1658
  %1921 = vmatpush1.msra.mxu0 %v1657
  %1922 = vmatprep.subr.mxu0 %v1656
  %1923 = vmatpush1.msra.mxu0 %v1655
  %1924 = vmatprep.subr.mxu0 %v1654
  %1925 = vmatpush1.msra.mxu0 %v1653
  %1926 = vmatprep.subr.mxu0 %v1652
  %1927 = vmatpush1.msra.mxu0 %v1651
  %1928 = vmatprep.subr.mxu0 %v1650
  %1929 = vmatpush1.msra.mxu0 %v1649
  %1930 = vmatprep.subr.mxu0 %v1648
  %1931 = vmatpush1.msra.mxu0 %v1647
  %1932 = vmatprep.subr.mxu0 %v1646
  %1933 = vmatpush1.msra.mxu0 %v1645
  %1934 = vmatprep.subr.mxu0 %v1708
  %1935 = vmatpush2.msra.mxu0 %v1707
  %1936 = vmatprep.subr.mxu0 %v1706
  %1937 = vmatpush2.msra.mxu0 %v1705
  %1938 = vmatprep.subr.mxu0 %v1704
  %1939 = vmatpush2.msra.mxu0 %v1703
  %1940 = vmatprep.subr.mxu0 %v1702
  %1941 = vmatpush2.msra.mxu0 %v1701
  %1942 = vmatprep.subr.mxu0 %v1700
  %1943 = vmatpush2.msra.mxu0 %v1699
  %1944 = vmatprep.subr.mxu0 %v1698
  %1945 = vmatpush2.msra.mxu0 %v1697
  %1946 = vmatprep.subr.mxu0 %v1696
  %1947 = vmatpush2.msra.mxu0 %v1695
  %1948 = vmatprep.subr.mxu0 %v1694
  %1949 = vmatpush2.msra.mxu0 %v1693
  %1950 = vmatprep.subr.mxu0 %v1692
  %1951 = vmatpush2.msra.mxu0 %v1691
  %1952 = vmatprep.subr.mxu0 %v1690
  %1953 = vmatpush2.msra.mxu0 %v1689
  %1954 = vmatprep.subr.mxu0 %v1688
  %1955 = vmatpush2.msra.mxu0 %v1687
  %1956 = vmatprep.subr.mxu0 %v1686
  %1957 = vmatpush2.msra.mxu0 %v1685
  %1958 = vmatprep.subr.mxu0 %v1684
  %1959 = vmatpush2.msra.mxu0 %v1683
  %1960 = vmatprep.subr.mxu0 %v1682
  %1961 = vmatpush2.msra.mxu0 %v1681
  %1962 = vmatprep.subr.mxu0 %v1680
  %1963 = vmatpush2.msra.mxu0 %v1679
  %1964 = vmatprep.subr.mxu0 %v1678
  %1965 = vmatpush2.msra.mxu0 %v1677
  %1966 = vmatprep.mubr.f32.mxu0 %v128
  %1967 = vmatmul.mubr.f32.gmra.mxu0 %v127
  %v1968 = vpop.f32.mrf.mxu0
  %v1969 = vadd.f32 %v1880, %v1968
  %v1970 = vpop.f32.mrf.mxu0
  %v1971 = vadd.f32 %v1882, %v1970
  %1972 = vmatprep.mubr.f32.mxu0 %v135
  %1973 = vmatmul.mubr.f32.gmra.mxu0 %v134
  %v1974 = vpop.f32.mrf.mxu0
  %v1975 = vadd.f32 %v1886, %v1974
  %v1976 = vpop.f32.mrf.mxu0
  %v1977 = vadd.f32 %v1888, %v1976
  %1978 = vmatprep.mubr.f32.mxu0 %v142
  %1979 = vmatmul.mubr.f32.gmra.mxu0 %v141
  %v1980 = vpop.f32.mrf.mxu0
  %v1981 = vadd.f32 %v1892, %v1980
  %v1982 = vpop.f32.mrf.mxu0
  %v1983 = vadd.f32 %v1894, %v1982
  %1984 = vmatprep.mubr.f32.mxu0 %v149
  %1985 = vmatmul.mubr.f32.gmra.mxu0 %v148
  %v1986 = vpop.f32.mrf.mxu0
  %v1987 = vadd.f32 %v1898, %v1986
  %v1988 = vpop.f32.mrf.mxu0
  %v1989 = vadd.f32 %v1900, %v1988
  %1990 = vdwg.mxu0
  %1991 = vmatprep.subr.mxu0 %v1740
  %1992 = vmatpush1.msra.mxu0 %v1739
  %1993 = vmatprep.subr.mxu0 %v1738
  %1994 = vmatpush1.msra.mxu0 %v1737
  %1995 = vmatprep.subr.mxu0 %v1736
  %1996 = vmatpush1.msra.mxu0 %v1735
  %1997 = vmatprep.subr.mxu0 %v1734
  %1998 = vmatpush1.msra.mxu0 %v1733
  %1999 = vmatprep.subr.mxu0 %v1732
  %2000 = vmatpush1.msra.mxu0 %v1731
  %2001 = vmatprep.subr.mxu0 %v1730
  %2002 = vmatpush1.msra.mxu0 %v1729
  %2003 = vmatprep.subr.mxu0 %v1728
  %2004 = vmatpush1.msra.mxu0 %v1727
  %2005 = vmatprep.subr.mxu0 %v1726
  %2006 = vmatpush1.msra.mxu0 %v1725
  %2007 = vmatprep.subr.mxu0 %v1724
  %2008 = vmatpush1.msra.mxu0 %v1723
  %2009 = vmatprep.subr.mxu0 %v1722
  %2010 = vmatpush1.msra.mxu0 %v1721
  %2011 = vmatprep.subr.mxu0 %v1720
  %2012 = vmatpush1.msra.mxu0 %v1719
  %2013 = vmatprep.subr.mxu0 %v1718
  %2014 = vmatpush1.msra.mxu0 %v1717
  %2015 = vmatprep.subr.mxu0 %v1716
  %2016 = vmatpush1.msra.mxu0 %v1715
  %2017 = vmatprep.subr.mxu0 %v1714
  %2018 = vmatpush1.msra.mxu0 %v1713
  %2019 = vmatprep.subr.mxu0 %v1712
  %2020 = vmatpush1.msra.mxu0 %v1711
  %2021 = vmatprep.subr.mxu0 %v1710
  %2022 = vmatpush1.msra.mxu0 %v1709
  %2023 = vmatprep.subr.mxu0 %v1772
  %2024 = vmatpush2.msra.mxu0 %v1771
  %2025 = vmatprep.subr.mxu0 %v1770
  %2026 = vmatpush2.msra.mxu0 %v1769
  %2027 = vmatprep.subr.mxu0 %v1768
  %2028 = vmatpush2.msra.mxu0 %v1767
  %2029 = vmatprep.subr.mxu0 %v1766
  %2030 = vmatpush2.msra.mxu0 %v1765
  %2031 = vmatprep.subr.mxu0 %v1764
  %2032 = vmatpush2.msra.mxu0 %v1763
  %2033 = vmatprep.subr.mxu0 %v1762
  %2034 = vmatpush2.msra.mxu0 %v1761
  %2035 = vmatprep.subr.mxu0 %v1760
  %2036 = vmatpush2.msra.mxu0 %v1759
  %2037 = vmatprep.subr.mxu0 %v1758
  %2038 = vmatpush2.msra.mxu0 %v1757
  %2039 = vmatprep.subr.mxu0 %v1756
  %2040 = vmatpush2.msra.mxu0 %v1755
  %2041 = vmatprep.subr.mxu0 %v1754
  %2042 = vmatpush2.msra.mxu0 %v1753
  %2043 = vmatprep.subr.mxu0 %v1752
  %2044 = vmatpush2.msra.mxu0 %v1751
  %2045 = vmatprep.subr.mxu0 %v1750
  %2046 = vmatpush2.msra.mxu0 %v1749
  %2047 = vmatprep.subr.mxu0 %v1748
  %2048 = vmatpush2.msra.mxu0 %v1747
  %2049 = vmatprep.subr.mxu0 %v1746
  %2050 = vmatpush2.msra.mxu0 %v1745
  %2051 = vmatprep.subr.mxu0 %v1744
  %2052 = vmatpush2.msra.mxu0 %v1743
  %2053 = vmatprep.subr.mxu0 %v1742
  %2054 = vmatpush2.msra.mxu0 %v1741
  %2055 = vmatprep.mubr.f32.mxu0 %v130
  %2056 = vmatmul.mubr.f32.gmra.mxu0 %v129
  %v2057 = vpop.f32.mrf.mxu0
  %v2058 = vadd.f32 %v1969, %v2057
  %v2059 = vpop.f32.mrf.mxu0
  %v2060 = vadd.f32 %v1971, %v2059
  %2061 = vmatprep.mubr.f32.mxu0 %v137
  %2062 = vmatmul.mubr.f32.gmra.mxu0 %v136
  %v2063 = vpop.f32.mrf.mxu0
  %v2064 = vadd.f32 %v1975, %v2063
  %v2065 = vpop.f32.mrf.mxu0
  %v2066 = vadd.f32 %v1977, %v2065
  %2067 = vmatprep.mubr.f32.mxu0 %v144
  %2068 = vmatmul.mubr.f32.gmra.mxu0 %v143
  %v2069 = vpop.f32.mrf.mxu0
  %v2070 = vadd.f32 %v1981, %v2069
  %v2071 = vpop.f32.mrf.mxu0
  %v2072 = vadd.f32 %v1983, %v2071
  %2073 = vmatprep.mubr.f32.mxu0 %v151
  %2074 = vmatmul.mubr.f32.gmra.mxu0 %v150
  %v2075 = vpop.f32.mrf.mxu0
  %v2076 = vadd.f32 %v1987, %v2075
  %v2077 = vpop.f32.mrf.mxu0
  %v2078 = vadd.f32 %v1989, %v2077
  %2079 = vdwg.mxu0
  %2080 = vmatprep.subr.mxu0 0.0
  %2081 = vmatpush1.msra.mxu0 0.0
  %2082 = vmatprep.subr.mxu0 0.0
  %2083 = vmatpush1.msra.mxu0 0.0
  %2084 = vmatprep.subr.mxu0 0.0
  %2085 = vmatpush1.msra.mxu0 0.0
  %2086 = vmatprep.subr.mxu0 0.0
  %2087 = vmatpush1.msra.mxu0 0.0
  %2088 = vmatprep.subr.mxu0 0.0
  %2089 = vmatpush1.msra.mxu0 0.0
  %2090 = vmatprep.subr.mxu0 0.0
  %2091 = vmatpush1.msra.mxu0 0.0
  %2092 = vmatprep.subr.mxu0 0.0
  %2093 = vmatpush1.msra.mxu0 0.0
  %2094 = vmatprep.subr.mxu0 0.0
  %2095 = vmatpush1.msra.mxu0 0.0
  %2096 = vmatprep.subr.mxu0 0.0
  %2097 = vmatpush1.msra.mxu0 0.0
  %2098 = vmatprep.subr.mxu0 0.0
  %2099 = vmatpush1.msra.mxu0 0.0
  %2100 = vmatprep.subr.mxu0 0.0
  %2101 = vmatpush1.msra.mxu0 0.0
  %2102 = vmatprep.subr.mxu0 0.0
  %2103 = vmatpush1.msra.mxu0 0.0
  %2104 = vmatprep.subr.mxu0 %v1780
  %2105 = vmatpush1.msra.mxu0 %v1779
  %2106 = vmatprep.subr.mxu0 %v1778
  %2107 = vmatpush1.msra.mxu0 %v1777
  %2108 = vmatprep.subr.mxu0 %v1776
  %2109 = vmatpush1.msra.mxu0 %v1775
  %2110 = vmatprep.subr.mxu0 %v1774
  %2111 = vmatpush1.msra.mxu0 %v1773
  %2112 = vmatprep.subr.mxu0 0.0
  %2113 = vmatpush2.msra.mxu0 0.0
  %2114 = vmatprep.subr.mxu0 0.0
  %2115 = vmatpush2.msra.mxu0 0.0
  %2116 = vmatprep.subr.mxu0 0.0
  %2117 = vmatpush2.msra.mxu0 0.0
  %2118 = vmatprep.subr.mxu0 0.0
  %2119 = vmatpush2.msra.mxu0 0.0
  %2120 = vmatprep.subr.mxu0 0.0
  %2121 = vmatpush2.msra.mxu0 0.0
  %2122 = vmatprep.subr.mxu0 0.0
  %2123 = vmatpush2.msra.mxu0 0.0
  %2124 = vmatprep.subr.mxu0 0.0
  %2125 = vmatpush2.msra.mxu0 0.0
  %2126 = vmatprep.subr.mxu0 0.0
  %2127 = vmatpush2.msra.mxu0 0.0
  %2128 = vmatprep.subr.mxu0 0.0
  %2129 = vmatpush2.msra.mxu0 0.0
  %2130 = vmatprep.subr.mxu0 0.0
  %2131 = vmatpush2.msra.mxu0 0.0
  %2132 = vmatprep.subr.mxu0 0.0
  %2133 = vmatpush2.msra.mxu0 0.0
  %2134 = vmatprep.subr.mxu0 0.0
  %2135 = vmatpush2.msra.mxu0 0.0
  %2136 = vmatprep.subr.mxu0 0.0
  %2137 = vmatpush2.msra.mxu0 0.0
  %2138 = vmatprep.subr.mxu0 0.0
  %2139 = vmatpush2.msra.mxu0 0.0
  %2140 = vmatprep.subr.mxu0 0.0
  %2141 = vmatpush2.msra.mxu0 0.0
  %2142 = vmatprep.subr.mxu0 0.0
  %2143 = vmatpush2.msra.mxu0 0.0
  %2144 = vmatprep.mubr.f32.mxu0 0.0
  %2145 = vmatmul.mubr.f32.gmra.mxu0 %v1802
  %v2146 = vpop.f32.mrf.mxu0
  %v2147 = vadd.f32 %v2058, %v2146
  %v2148 = vpop.f32.mrf.mxu0
  %v2149 = vadd.f32 %v2060, %v2148
  %2150 = vmatprep.mubr.f32.mxu0 0.0
  %2151 = vmatmul.mubr.f32.gmra.mxu0 %v1805
  %v2152 = vpop.f32.mrf.mxu0
  %v2153 = vadd.f32 %v2064, %v2152
  %v2154 = vpop.f32.mrf.mxu0
  %v2155 = vadd.f32 %v2066, %v2154
  %2156 = vmatprep.mubr.f32.mxu0 0.0
  %2157 = vmatmul.mubr.f32.gmra.mxu0 %v1808
  %v2158 = vpop.f32.mrf.mxu0
  %v2159 = vadd.f32 %v2070, %v2158
  %v2160 = vpop.f32.mrf.mxu0
  %v2161 = vadd.f32 %v2072, %v2160
  %2162 = vmatprep.mubr.f32.mxu0 0.0
  %2163 = vmatmul.mubr.f32.gmra.mxu0 %v1811
  %v2164 = vpop.f32.mrf.mxu0
  %v2165 = vadd.f32 %v2076, %v2164
  %v2166 = vpop.f32.mrf.mxu0
  %v2167 = vadd.f32 %v2078, %v2166
  %2168 = vdwg.mxu0
  %v2169 = vld [vmem:[%s116] sm:$0xff]
  %v2170 = vld [vmem:[%s116 + $0x8] sm:$0xff]
  %v2171 = vld [vmem:[%s116 + $0x10] sm:$0xff]
  %v2172 = vld [vmem:[%s116 + $0x18] sm:$0xff]
  %v2173 = vld [vmem:[%s116 + $0x20] sm:$0xff]
  %v2174 = vld [vmem:[%s116 + $0x28] sm:$0xff]
  %v2175 = vld [vmem:[%s116 + $0x30] sm:$0xff]
  %v2176 = vld [vmem:[%s116 + $0x38] sm:$0xff]
  %v2177 = vld [vmem:[%s116 + $0x40] sm:$0xff]
  %v2178 = vld [vmem:[%s116 + $0x48] sm:$0xff]
  %v2179 = vld [vmem:[%s116 + $0x50] sm:$0xff]
  %v2180 = vld [vmem:[%s116 + $0x58] sm:$0xff]
  %v2181 = vld [vmem:[%s116 + $0x60] sm:$0xff]
  %v2182 = vld [vmem:[%s116 + $0x68] sm:$0xff]
  %v2183 = vld [vmem:[%s116 + $0x70] sm:$0xff]
  %v2184 = vld [vmem:[%s116 + $0x78] sm:$0xff]
  %2197 = vrot.lane.b32.xlu0 %v2169, 34
  %v2198 = vpop.permute.xlu0 %2197
  %2199 = vrot.lane.b32.xlu0 %v2170, 34
  %v2200 = vpop.permute.xlu0 %2199
  %2201 = vrot.lane.b32.xlu0 %v2171, 34
  %v2202 = vpop.permute.xlu0 %2201
  %2203 = vrot.lane.b32.xlu0 %v2173, 34
  %v2204 = vpop.permute.xlu0 %2203
  %2205 = vrot.lane.b32.xlu0 %v2174, 34
  %v2206 = vpop.permute.xlu0 %2205
  %2207 = vrot.lane.b32.xlu0 %v2175, 34
  %v2208 = vpop.permute.xlu0 %2207
  %2209 = vrot.lane.b32.xlu0 %v2177, 34
  %v2210 = vpop.permute.xlu0 %2209
  %2211 = vrot.lane.b32.xlu0 %v2178, 34
  %v2212 = vpop.permute.xlu0 %2211
  %2213 = vrot.lane.b32.xlu0 %v2179, 34
  %v2214 = vpop.permute.xlu0 %2213
  %2215 = vrot.lane.b32.xlu0 %v2181, 34
  %v2216 = vpop.permute.xlu0 %2215
  %2217 = vrot.lane.b32.xlu0 %v2182, 34
  %v2218 = vpop.permute.xlu0 %2217
  %2219 = vrot.lane.b32.xlu0 %v2183, 34
  %v2220 = vpop.permute.xlu0 %2219
  %v2221 = vsel %vm221, %v2198, %v2200
  %v2222 = vsel %vm221, %v2200, %v2202
  %v2223 = vsel %vm221, %v2204, %v2206
  %v2224 = vsel %vm221, %v2206, %v2208
  %v2225 = vsel %vm221, %v2210, %v2212
  %v2226 = vsel %vm221, %v2212, %v2214
  %v2227 = vsel %vm221, %v2216, %v2218
  %v2228 = vsel %vm221, %v2218, %v2220
  %v2237 = vsel %vm183, %v2221, 0.0
  %v2238 = vsel %vm184, %v2222, 0.0
  %v2239 = vsel %vm183, %v2223, 0.0
  %v2240 = vsel %vm184, %v2224, 0.0
  %v2241 = vsel %vm183, %v2225, 0.0
  %v2242 = vsel %vm184, %v2226, 0.0
  %v2243 = vsel %vm183, %v2227, 0.0
  %v2244 = vsel %vm184, %v2228, 0.0
  %2245 = vst [vmem:[#allocation3] sm:$0xff] %v2237
  %2246 = vst [vmem:[#allocation3 + $0x8] sm:$0xff] %v2238
  %2247 = vst [vmem:[#allocation3 + $0x10] sm:$0xff] %v2239
  %2248 = vst [vmem:[#allocation3 + $0x18] sm:$0xff] %v2240
  %2249 = vst [vmem:[#allocation3 + $0x20] sm:$0xff] %v2241
  %2250 = vst [vmem:[#allocation3 + $0x28] sm:$0xff] %v2242
  %2251 = vst [vmem:[#allocation3 + $0x30] sm:$0xff] %v2243
  %2252 = vst [vmem:[#allocation3 + $0x38] sm:$0xff] %v2244
  %2253 = vrot.lane.b32.xlu0 %v2169, 33
  %v2254 = vpop.permute.xlu0 %2253
  %2255 = vrot.lane.b32.xlu0 %v2170, 33
  %v2256 = vpop.permute.xlu0 %2255
  %2257 = vrot.lane.b32.xlu0 %v2171, 33
  %v2258 = vpop.permute.xlu0 %2257
  %2259 = vrot.lane.b32.xlu0 %v2173, 33
  %v2260 = vpop.permute.xlu0 %2259
  %2261 = vrot.lane.b32.xlu0 %v2174, 33
  %v2262 = vpop.permute.xlu0 %2261
  %2263 = vrot.lane.b32.xlu0 %v2175, 33
  %v2264 = vpop.permute.xlu0 %2263
  %2265 = vrot.lane.b32.xlu0 %v2177, 33
  %v2266 = vpop.permute.xlu0 %2265
  %2267 = vrot.lane.b32.xlu0 %v2178, 33
  %v2268 = vpop.permute.xlu0 %2267
  %2269 = vrot.lane.b32.xlu0 %v2179, 33
  %v2270 = vpop.permute.xlu0 %2269
  %2271 = vrot.lane.b32.xlu0 %v2181, 33
  %v2272 = vpop.permute.xlu0 %2271
  %2273 = vrot.lane.b32.xlu0 %v2182, 33
  %v2274 = vpop.permute.xlu0 %2273
  %2275 = vrot.lane.b32.xlu0 %v2183, 33
  %v2276 = vpop.permute.xlu0 %2275
  %v2277 = vsel %vm290, %v2254, %v2256
  %v2278 = vsel %vm290, %v2256, %v2258
  %v2279 = vsel %vm290, %v2260, %v2262
  %v2280 = vsel %vm290, %v2262, %v2264
  %v2281 = vsel %vm290, %v2266, %v2268
  %v2282 = vsel %vm290, %v2268, %v2270
  %v2283 = vsel %vm290, %v2272, %v2274
  %v2284 = vsel %vm290, %v2274, %v2276
  %v2293 = vsel %vm264, %v2277, 0.0
  %v2294 = vsel %vm265, %v2278, 0.0
  %v2295 = vsel %vm264, %v2279, 0.0
  %v2296 = vsel %vm265, %v2280, 0.0
  %v2297 = vsel %vm264, %v2281, 0.0
  %v2298 = vsel %vm265, %v2282, 0.0
  %v2299 = vsel %vm264, %v2283, 0.0
  %v2300 = vsel %vm265, %v2284, 0.0
  %2301 = vst [vmem:[#allocation3 + $0x40] sm:$0xff] %v2293
  %2302 = vst [vmem:[#allocation3 + $0x48] sm:$0xff] %v2294
  %2303 = vst [vmem:[#allocation3 + $0x50] sm:$0xff] %v2295
  %2304 = vst [vmem:[#allocation3 + $0x58] sm:$0xff] %v2296
  %2305 = vst [vmem:[#allocation3 + $0x60] sm:$0xff] %v2297
  %2306 = vst [vmem:[#allocation3 + $0x68] sm:$0xff] %v2298
  %2307 = vst [vmem:[#allocation3 + $0x70] sm:$0xff] %v2299
  %2308 = vst [vmem:[#allocation3 + $0x78] sm:$0xff] %v2300
  %2309 = vrot.lane.b32.xlu0 %v2169, 32
  %v2310 = vpop.permute.xlu0 %2309
  %2311 = vrot.lane.b32.xlu0 %v2170, 32
  %v2312 = vpop.permute.xlu0 %2311
  %2313 = vrot.lane.b32.xlu0 %v2171, 32
  %v2314 = vpop.permute.xlu0 %2313
  %2315 = vrot.lane.b32.xlu0 %v2173, 32
  %v2316 = vpop.permute.xlu0 %2315
  %2317 = vrot.lane.b32.xlu0 %v2174, 32
  %v2318 = vpop.permute.xlu0 %2317
  %2319 = vrot.lane.b32.xlu0 %v2175, 32
  %v2320 = vpop.permute.xlu0 %2319
  %2321 = vrot.lane.b32.xlu0 %v2177, 32
  %v2322 = vpop.permute.xlu0 %2321
  %2323 = vrot.lane.b32.xlu0 %v2178, 32
  %v2324 = vpop.permute.xlu0 %2323
  %2325 = vrot.lane.b32.xlu0 %v2179, 32
  %v2326 = vpop.permute.xlu0 %2325
  %2327 = vrot.lane.b32.xlu0 %v2181, 32
  %v2328 = vpop.permute.xlu0 %2327
  %2329 = vrot.lane.b32.xlu0 %v2182, 32
  %v2330 = vpop.permute.xlu0 %2329
  %2331 = vrot.lane.b32.xlu0 %v2183, 32
  %v2332 = vpop.permute.xlu0 %2331
  %v2333 = vsel %vm347, %v2310, %v2312
  %v2334 = vsel %vm347, %v2312, %v2314
  %v2335 = vsel %vm347, %v2316, %v2318
  %v2336 = vsel %vm347, %v2318, %v2320
  %v2337 = vsel %vm347, %v2322, %v2324
  %v2338 = vsel %vm347, %v2324, %v2326
  %v2339 = vsel %vm347, %v2328, %v2330
  %v2340 = vsel %vm347, %v2330, %v2332
  %2349 = vst [vmem:[#allocation3 + $0x80] sm:$0xff] %v2333
  %2350 = vst [vmem:[#allocation3 + $0x88] sm:$0xff] %v2334
  %2351 = vst [vmem:[#allocation3 + $0x90] sm:$0xff] %v2335
  %2352 = vst [vmem:[#allocation3 + $0x98] sm:$0xff] %v2336
  %2353 = vst [vmem:[#allocation3 + $0xa0] sm:$0xff] %v2337
  %2354 = vst [vmem:[#allocation3 + $0xa8] sm:$0xff] %v2338
  %2355 = vst [vmem:[#allocation3 + $0xb0] sm:$0xff] %v2339
  %2356 = vst [vmem:[#allocation3 + $0xb8] sm:$0xff] %v2340
  %2357 = vrot.lane.b32.xlu0 %v2169, 31
  %v2358 = vpop.permute.xlu0 %2357
  %2359 = vrot.lane.b32.xlu0 %v2170, 31
  %v2360 = vpop.permute.xlu0 %2359
  %2361 = vrot.lane.b32.xlu0 %v2171, 31
  %v2362 = vpop.permute.xlu0 %2361
  %2363 = vrot.lane.b32.xlu0 %v2173, 31
  %v2364 = vpop.permute.xlu0 %2363
  %2365 = vrot.lane.b32.xlu0 %v2174, 31
  %v2366 = vpop.permute.xlu0 %2365
  %2367 = vrot.lane.b32.xlu0 %v2175, 31
  %v2368 = vpop.permute.xlu0 %2367
  %2369 = vrot.lane.b32.xlu0 %v2177, 31
  %v2370 = vpop.permute.xlu0 %2369
  %2371 = vrot.lane.b32.xlu0 %v2178, 31
  %v2372 = vpop.permute.xlu0 %2371
  %2373 = vrot.lane.b32.xlu0 %v2179, 31
  %v2374 = vpop.permute.xlu0 %2373
  %2375 = vrot.lane.b32.xlu0 %v2181, 31
  %v2376 = vpop.permute.xlu0 %2375
  %2377 = vrot.lane.b32.xlu0 %v2182, 31
  %v2378 = vpop.permute.xlu0 %2377
  %2379 = vrot.lane.b32.xlu0 %v2183, 31
  %v2380 = vpop.permute.xlu0 %2379
  %v2381 = vsel %vm408, %v2358, %v2360
  %v2382 = vsel %vm408, %v2360, %v2362
  %v2383 = vsel %vm408, %v2364, %v2366
  %v2384 = vsel %vm408, %v2366, %v2368
  %v2385 = vsel %vm408, %v2370, %v2372
  %v2386 = vsel %vm408, %v2372, %v2374
  %v2387 = vsel %vm408, %v2376, %v2378
  %v2388 = vsel %vm408, %v2378, %v2380
  %v2397 = vsel %vm382, %v2381, 0.0
  %v2398 = vsel %vm383, %v2382, 0.0
  %v2399 = vsel %vm382, %v2383, 0.0
  %v2400 = vsel %vm383, %v2384, 0.0
  %v2401 = vsel %vm382, %v2385, 0.0
  %v2402 = vsel %vm383, %v2386, 0.0
  %v2403 = vsel %vm382, %v2387, 0.0
  %v2404 = vsel %vm383, %v2388, 0.0
  %2405 = vst [vmem:[#allocation3 + $0xc0] sm:$0xff] %v2397
  %2406 = vst [vmem:[#allocation3 + $0xc8] sm:$0xff] %v2398
  %2407 = vst [vmem:[#allocation3 + $0xd0] sm:$0xff] %v2399
  %2408 = vst [vmem:[#allocation3 + $0xd8] sm:$0xff] %v2400
  %2409 = vst [vmem:[#allocation3 + $0xe0] sm:$0xff] %v2401
  %2410 = vst [vmem:[#allocation3 + $0xe8] sm:$0xff] %v2402
  %2411 = vst [vmem:[#allocation3 + $0xf0] sm:$0xff] %v2403
  %2412 = vst [vmem:[#allocation3 + $0xf8] sm:$0xff] %v2404
  %2413 = vrot.lane.b32.xlu0 %v2169, 30
  %v2414 = vpop.permute.xlu0 %2413
  %2415 = vrot.lane.b32.xlu0 %v2170, 30
  %v2416 = vpop.permute.xlu0 %2415
  %2417 = vrot.lane.b32.xlu0 %v2171, 30
  %v2418 = vpop.permute.xlu0 %2417
  %2419 = vrot.lane.b32.xlu0 %v2173, 30
  %v2420 = vpop.permute.xlu0 %2419
  %2421 = vrot.lane.b32.xlu0 %v2174, 30
  %v2422 = vpop.permute.xlu0 %2421
  %2423 = vrot.lane.b32.xlu0 %v2175, 30
  %v2424 = vpop.permute.xlu0 %2423
  %2425 = vrot.lane.b32.xlu0 %v2177, 30
  %v2426 = vpop.permute.xlu0 %2425
  %2427 = vrot.lane.b32.xlu0 %v2178, 30
  %v2428 = vpop.permute.xlu0 %2427
  %2429 = vrot.lane.b32.xlu0 %v2179, 30
  %v2430 = vpop.permute.xlu0 %2429
  %2431 = vrot.lane.b32.xlu0 %v2181, 30
  %v2432 = vpop.permute.xlu0 %2431
  %2433 = vrot.lane.b32.xlu0 %v2182, 30
  %v2434 = vpop.permute.xlu0 %2433
  %2435 = vrot.lane.b32.xlu0 %v2183, 30
  %v2436 = vpop.permute.xlu0 %2435
  %v2437 = vsel %vm477, %v2414, %v2416
  %v2438 = vsel %vm477, %v2416, %v2418
  %v2439 = vsel %vm477, %v2420, %v2422
  %v2440 = vsel %vm477, %v2422, %v2424
  %v2441 = vsel %vm477, %v2426, %v2428
  %v2442 = vsel %vm477, %v2428, %v2430
  %v2443 = vsel %vm477, %v2432, %v2434
  %v2444 = vsel %vm477, %v2434, %v2436
  %v2453 = vsel %vm451, %v2437, 0.0
  %v2454 = vsel %vm452, %v2438, 0.0
  %v2455 = vsel %vm451, %v2439, 0.0
  %v2456 = vsel %vm452, %v2440, 0.0
  %v2457 = vsel %vm451, %v2441, 0.0
  %v2458 = vsel %vm452, %v2442, 0.0
  %v2459 = vsel %vm451, %v2443, 0.0
  %v2460 = vsel %vm452, %v2444, 0.0
  %2461 = vst [vmem:[#allocation3 + $0x100] sm:$0xff] %v2453
  %2462 = vst [vmem:[#allocation3 + $0x108] sm:$0xff] %v2454
  %2463 = vst [vmem:[#allocation3 + $0x110] sm:$0xff] %v2455
  %2464 = vst [vmem:[#allocation3 + $0x118] sm:$0xff] %v2456
  %2465 = vst [vmem:[#allocation3 + $0x120] sm:$0xff] %v2457
  %2466 = vst [vmem:[#allocation3 + $0x128] sm:$0xff] %v2458
  %2467 = vst [vmem:[#allocation3 + $0x130] sm:$0xff] %v2459
  %2468 = vst [vmem:[#allocation3 + $0x138] sm:$0xff] %v2460
  %2469 = vrot.lane.b32.xlu0 %v2169, 18
  %v2470 = vpop.permute.xlu0 %2469
  %2471 = vrot.lane.b32.xlu0 %v2170, 18
  %v2472 = vpop.permute.xlu0 %2471
  %2473 = vrot.lane.b32.xlu0 %v2171, 18
  %v2474 = vpop.permute.xlu0 %2473
  %2475 = vrot.lane.b32.xlu0 %v2173, 18
  %v2476 = vpop.permute.xlu0 %2475
  %2477 = vrot.lane.b32.xlu0 %v2174, 18
  %v2478 = vpop.permute.xlu0 %2477
  %2479 = vrot.lane.b32.xlu0 %v2175, 18
  %v2480 = vpop.permute.xlu0 %2479
  %2481 = vrot.lane.b32.xlu0 %v2177, 18
  %v2482 = vpop.permute.xlu0 %2481
  %2483 = vrot.lane.b32.xlu0 %v2178, 18
  %v2484 = vpop.permute.xlu0 %2483
  %2485 = vrot.lane.b32.xlu0 %v2179, 18
  %v2486 = vpop.permute.xlu0 %2485
  %2487 = vrot.lane.b32.xlu0 %v2181, 18
  %v2488 = vpop.permute.xlu0 %2487
  %2489 = vrot.lane.b32.xlu0 %v2182, 18
  %v2490 = vpop.permute.xlu0 %2489
  %2491 = vrot.lane.b32.xlu0 %v2183, 18
  %v2492 = vpop.permute.xlu0 %2491
  %v2493 = vsel %vm534, %v2470, %v2472
  %v2494 = vsel %vm534, %v2472, %v2474
  %v2495 = vsel %vm534, %v2476, %v2478
  %v2496 = vsel %vm534, %v2478, %v2480
  %v2497 = vsel %vm534, %v2482, %v2484
  %v2498 = vsel %vm534, %v2484, %v2486
  %v2499 = vsel %vm534, %v2488, %v2490
  %v2500 = vsel %vm534, %v2490, %v2492
  %v2509 = vsel %vm183, %v2493, 0.0
  %v2510 = vsel %vm184, %v2494, 0.0
  %v2511 = vsel %vm183, %v2495, 0.0
  %v2512 = vsel %vm184, %v2496, 0.0
  %v2513 = vsel %vm183, %v2497, 0.0
  %v2514 = vsel %vm184, %v2498, 0.0
  %v2515 = vsel %vm183, %v2499, 0.0
  %v2516 = vsel %vm184, %v2500, 0.0
  %2517 = vst [vmem:[#allocation3 + $0x140] sm:$0xff] %v2509
  %2518 = vst [vmem:[#allocation3 + $0x148] sm:$0xff] %v2510
  %2519 = vst [vmem:[#allocation3 + $0x150] sm:$0xff] %v2511
  %2520 = vst [vmem:[#allocation3 + $0x158] sm:$0xff] %v2512
  %2521 = vst [vmem:[#allocation3 + $0x160] sm:$0xff] %v2513
  %2522 = vst [vmem:[#allocation3 + $0x168] sm:$0xff] %v2514
  %2523 = vst [vmem:[#allocation3 + $0x170] sm:$0xff] %v2515
  %2524 = vst [vmem:[#allocation3 + $0x178] sm:$0xff] %v2516
  %2525 = vrot.lane.b32.xlu0 %v2169, 17
  %v2526 = vpop.permute.xlu0 %2525
  %2527 = vrot.lane.b32.xlu0 %v2170, 17
  %v2528 = vpop.permute.xlu0 %2527
  %2529 = vrot.lane.b32.xlu0 %v2171, 17
  %v2530 = vpop.permute.xlu0 %2529
  %2531 = vrot.lane.b32.xlu0 %v2173, 17
  %v2532 = vpop.permute.xlu0 %2531
  %2533 = vrot.lane.b32.xlu0 %v2174, 17
  %v2534 = vpop.permute.xlu0 %2533
  %2535 = vrot.lane.b32.xlu0 %v2175, 17
  %v2536 = vpop.permute.xlu0 %2535
  %2537 = vrot.lane.b32.xlu0 %v2177, 17
  %v2538 = vpop.permute.xlu0 %2537
  %2539 = vrot.lane.b32.xlu0 %v2178, 17
  %v2540 = vpop.permute.xlu0 %2539
  %2541 = vrot.lane.b32.xlu0 %v2179, 17
  %v2542 = vpop.permute.xlu0 %2541
  %2543 = vrot.lane.b32.xlu0 %v2181, 17
  %v2544 = vpop.permute.xlu0 %2543
  %2545 = vrot.lane.b32.xlu0 %v2182, 17
  %v2546 = vpop.permute.xlu0 %2545
  %2547 = vrot.lane.b32.xlu0 %v2183, 17
  %v2548 = vpop.permute.xlu0 %2547
  %v2549 = vsel %vm591, %v2526, %v2528
  %v2550 = vsel %vm591, %v2528, %v2530
  %v2551 = vsel %vm591, %v2532, %v2534
  %v2552 = vsel %vm591, %v2534, %v2536
  %v2553 = vsel %vm591, %v2538, %v2540
  %v2554 = vsel %vm591, %v2540, %v2542
  %v2555 = vsel %vm591, %v2544, %v2546
  %v2556 = vsel %vm591, %v2546, %v2548
  %v2565 = vsel %vm264, %v2549, 0.0
  %v2566 = vsel %vm265, %v2550, 0.0
  %v2567 = vsel %vm264, %v2551, 0.0
  %v2568 = vsel %vm265, %v2552, 0.0
  %v2569 = vsel %vm264, %v2553, 0.0
  %v2570 = vsel %vm265, %v2554, 0.0
  %v2571 = vsel %vm264, %v2555, 0.0
  %v2572 = vsel %vm265, %v2556, 0.0
  %2573 = vst [vmem:[#allocation3 + $0x180] sm:$0xff] %v2565
  %2574 = vst [vmem:[#allocation3 + $0x188] sm:$0xff] %v2566
  %2575 = vst [vmem:[#allocation3 + $0x190] sm:$0xff] %v2567
  %2576 = vst [vmem:[#allocation3 + $0x198] sm:$0xff] %v2568
  %2577 = vst [vmem:[#allocation3 + $0x1a0] sm:$0xff] %v2569
  %2578 = vst [vmem:[#allocation3 + $0x1a8] sm:$0xff] %v2570
  %2579 = vst [vmem:[#allocation3 + $0x1b0] sm:$0xff] %v2571
  %2580 = vst [vmem:[#allocation3 + $0x1b8] sm:$0xff] %v2572
  %2581 = vrot.lane.b32.xlu0 %v2169, 16
  %v2582 = vpop.permute.xlu0 %2581
  %2583 = vrot.lane.b32.xlu0 %v2170, 16
  %v2584 = vpop.permute.xlu0 %2583
  %2585 = vrot.lane.b32.xlu0 %v2171, 16
  %v2586 = vpop.permute.xlu0 %2585
  %2587 = vrot.lane.b32.xlu0 %v2173, 16
  %v2588 = vpop.permute.xlu0 %2587
  %2589 = vrot.lane.b32.xlu0 %v2174, 16
  %v2590 = vpop.permute.xlu0 %2589
  %2591 = vrot.lane.b32.xlu0 %v2175, 16
  %v2592 = vpop.permute.xlu0 %2591
  %2593 = vrot.lane.b32.xlu0 %v2177, 16
  %v2594 = vpop.permute.xlu0 %2593
  %2595 = vrot.lane.b32.xlu0 %v2178, 16
  %v2596 = vpop.permute.xlu0 %2595
  %2597 = vrot.lane.b32.xlu0 %v2179, 16
  %v2598 = vpop.permute.xlu0 %2597
  %2599 = vrot.lane.b32.xlu0 %v2181, 16
  %v2600 = vpop.permute.xlu0 %2599
  %2601 = vrot.lane.b32.xlu0 %v2182, 16
  %v2602 = vpop.permute.xlu0 %2601
  %2603 = vrot.lane.b32.xlu0 %v2183, 16
  %v2604 = vpop.permute.xlu0 %2603
  %v2605 = vsel %vm648, %v2582, %v2584
  %v2606 = vsel %vm648, %v2584, %v2586
  %v2607 = vsel %vm648, %v2588, %v2590
  %v2608 = vsel %vm648, %v2590, %v2592
  %v2609 = vsel %vm648, %v2594, %v2596
  %v2610 = vsel %vm648, %v2596, %v2598
  %v2611 = vsel %vm648, %v2600, %v2602
  %v2612 = vsel %vm648, %v2602, %v2604
  %2621 = vst [vmem:[#allocation3 + $0x1c0] sm:$0xff] %v2605
  %2622 = vst [vmem:[#allocation3 + $0x1c8] sm:$0xff] %v2606
  %2623 = vst [vmem:[#allocation3 + $0x1d0] sm:$0xff] %v2607
  %2624 = vst [vmem:[#allocation3 + $0x1d8] sm:$0xff] %v2608
  %2625 = vst [vmem:[#allocation3 + $0x1e0] sm:$0xff] %v2609
  %2626 = vst [vmem:[#allocation3 + $0x1e8] sm:$0xff] %v2610
  %2627 = vst [vmem:[#allocation3 + $0x1f0] sm:$0xff] %v2611
  %2628 = vst [vmem:[#allocation3 + $0x1f8] sm:$0xff] %v2612
  %2629 = vrot.lane.b32.xlu0 %v2169, 15
  %v2630 = vpop.permute.xlu0 %2629
  %2631 = vrot.lane.b32.xlu0 %v2170, 15
  %v2632 = vpop.permute.xlu0 %2631
  %2633 = vrot.lane.b32.xlu0 %v2171, 15
  %v2634 = vpop.permute.xlu0 %2633
  %2635 = vrot.lane.b32.xlu0 %v2173, 15
  %v2636 = vpop.permute.xlu0 %2635
  %2637 = vrot.lane.b32.xlu0 %v2174, 15
  %v2638 = vpop.permute.xlu0 %2637
  %2639 = vrot.lane.b32.xlu0 %v2175, 15
  %v2640 = vpop.permute.xlu0 %2639
  %2641 = vrot.lane.b32.xlu0 %v2177, 15
  %v2642 = vpop.permute.xlu0 %2641
  %2643 = vrot.lane.b32.xlu0 %v2178, 15
  %v2644 = vpop.permute.xlu0 %2643
  %2645 = vrot.lane.b32.xlu0 %v2179, 15
  %v2646 = vpop.permute.xlu0 %2645
  %2647 = vrot.lane.b32.xlu0 %v2181, 15
  %v2648 = vpop.permute.xlu0 %2647
  %2649 = vrot.lane.b32.xlu0 %v2182, 15
  %v2650 = vpop.permute.xlu0 %2649
  %2651 = vrot.lane.b32.xlu0 %v2183, 15
  %v2652 = vpop.permute.xlu0 %2651
  %v2653 = vsel %vm697, %v2630, %v2632
  %v2654 = vsel %vm697, %v2632, %v2634
  %v2655 = vsel %vm697, %v2636, %v2638
  %v2656 = vsel %vm697, %v2638, %v2640
  %v2657 = vsel %vm697, %v2642, %v2644
  %v2658 = vsel %vm697, %v2644, %v2646
  %v2659 = vsel %vm697, %v2648, %v2650
  %v2660 = vsel %vm697, %v2650, %v2652
  %v2669 = vsel %vm382, %v2653, 0.0
  %v2670 = vsel %vm383, %v2654, 0.0
  %v2671 = vsel %vm382, %v2655, 0.0
  %v2672 = vsel %vm383, %v2656, 0.0
  %v2673 = vsel %vm382, %v2657, 0.0
  %v2674 = vsel %vm383, %v2658, 0.0
  %v2675 = vsel %vm382, %v2659, 0.0
  %v2676 = vsel %vm383, %v2660, 0.0
  %2677 = vst [vmem:[#allocation3 + $0x200] sm:$0xff] %v2669
  %2678 = vst [vmem:[#allocation3 + $0x208] sm:$0xff] %v2670
  %2679 = vst [vmem:[#allocation3 + $0x210] sm:$0xff] %v2671
  %2680 = vst [vmem:[#allocation3 + $0x218] sm:$0xff] %v2672
  %2681 = vst [vmem:[#allocation3 + $0x220] sm:$0xff] %v2673
  %2682 = vst [vmem:[#allocation3 + $0x228] sm:$0xff] %v2674
  %2683 = vst [vmem:[#allocation3 + $0x230] sm:$0xff] %v2675
  %2684 = vst [vmem:[#allocation3 + $0x238] sm:$0xff] %v2676
  %2685 = vrot.lane.b32.xlu0 %v2169, 14
  %v2686 = vpop.permute.xlu0 %2685
  %2687 = vrot.lane.b32.xlu0 %v2170, 14
  %v2688 = vpop.permute.xlu0 %2687
  %2689 = vrot.lane.b32.xlu0 %v2171, 14
  %v2690 = vpop.permute.xlu0 %2689
  %2691 = vrot.lane.b32.xlu0 %v2173, 14
  %v2692 = vpop.permute.xlu0 %2691
  %2693 = vrot.lane.b32.xlu0 %v2174, 14
  %v2694 = vpop.permute.xlu0 %2693
  %2695 = vrot.lane.b32.xlu0 %v2175, 14
  %v2696 = vpop.permute.xlu0 %2695
  %2697 = vrot.lane.b32.xlu0 %v2177, 14
  %v2698 = vpop.permute.xlu0 %2697
  %2699 = vrot.lane.b32.xlu0 %v2178, 14
  %v2700 = vpop.permute.xlu0 %2699
  %2701 = vrot.lane.b32.xlu0 %v2179, 14
  %v2702 = vpop.permute.xlu0 %2701
  %2703 = vrot.lane.b32.xlu0 %v2181, 14
  %v2704 = vpop.permute.xlu0 %2703
  %2705 = vrot.lane.b32.xlu0 %v2182, 14
  %v2706 = vpop.permute.xlu0 %2705
  %2707 = vrot.lane.b32.xlu0 %v2183, 14
  %v2708 = vpop.permute.xlu0 %2707
  %v2709 = vsel %vm754, %v2686, %v2688
  %v2710 = vsel %vm754, %v2688, %v2690
  %v2711 = vsel %vm754, %v2692, %v2694
  %v2712 = vsel %vm754, %v2694, %v2696
  %v2713 = vsel %vm754, %v2698, %v2700
  %v2714 = vsel %vm754, %v2700, %v2702
  %v2715 = vsel %vm754, %v2704, %v2706
  %v2716 = vsel %vm754, %v2706, %v2708
  %v2725 = vsel %vm451, %v2709, 0.0
  %v2726 = vsel %vm452, %v2710, 0.0
  %v2727 = vsel %vm451, %v2711, 0.0
  %v2728 = vsel %vm452, %v2712, 0.0
  %v2729 = vsel %vm451, %v2713, 0.0
  %v2730 = vsel %vm452, %v2714, 0.0
  %v2731 = vsel %vm451, %v2715, 0.0
  %v2732 = vsel %vm452, %v2716, 0.0
  %2733 = vst [vmem:[#allocation3 + $0x240] sm:$0xff] %v2725
  %2734 = vst [vmem:[#allocation3 + $0x248] sm:$0xff] %v2726
  %2735 = vst [vmem:[#allocation3 + $0x250] sm:$0xff] %v2727
  %2736 = vst [vmem:[#allocation3 + $0x258] sm:$0xff] %v2728
  %2737 = vst [vmem:[#allocation3 + $0x260] sm:$0xff] %v2729
  %2738 = vst [vmem:[#allocation3 + $0x268] sm:$0xff] %v2730
  %2739 = vst [vmem:[#allocation3 + $0x270] sm:$0xff] %v2731
  %2740 = vst [vmem:[#allocation3 + $0x278] sm:$0xff] %v2732
  %2741 = vrot.lane.b32.xlu0 %v2169, 2
  %v2742 = vpop.permute.xlu0 %2741
  %2743 = vrot.lane.b32.xlu0 %v2170, 2
  %v2744 = vpop.permute.xlu0 %2743
  %2745 = vrot.lane.b32.xlu0 %v2171, 2
  %v2746 = vpop.permute.xlu0 %2745
  %2747 = vrot.lane.b32.xlu0 %v2173, 2
  %v2748 = vpop.permute.xlu0 %2747
  %2749 = vrot.lane.b32.xlu0 %v2174, 2
  %v2750 = vpop.permute.xlu0 %2749
  %2751 = vrot.lane.b32.xlu0 %v2175, 2
  %v2752 = vpop.permute.xlu0 %2751
  %2753 = vrot.lane.b32.xlu0 %v2177, 2
  %v2754 = vpop.permute.xlu0 %2753
  %2755 = vrot.lane.b32.xlu0 %v2178, 2
  %v2756 = vpop.permute.xlu0 %2755
  %2757 = vrot.lane.b32.xlu0 %v2179, 2
  %v2758 = vpop.permute.xlu0 %2757
  %2759 = vrot.lane.b32.xlu0 %v2181, 2
  %v2760 = vpop.permute.xlu0 %2759
  %2761 = vrot.lane.b32.xlu0 %v2182, 2
  %v2762 = vpop.permute.xlu0 %2761
  %2763 = vrot.lane.b32.xlu0 %v2183, 2
  %v2764 = vpop.permute.xlu0 %2763
  %v2765 = vsel %vm811, %v2742, %v2744
  %v2766 = vsel %vm811, %v2744, %v2746
  %v2767 = vsel %vm811, %v2748, %v2750
  %v2768 = vsel %vm811, %v2750, %v2752
  %v2769 = vsel %vm811, %v2754, %v2756
  %v2770 = vsel %vm811, %v2756, %v2758
  %v2771 = vsel %vm811, %v2760, %v2762
  %v2772 = vsel %vm811, %v2762, %v2764
  %v2781 = vsel %vm183, %v2765, 0.0
  %v2782 = vsel %vm184, %v2766, 0.0
  %v2783 = vsel %vm183, %v2767, 0.0
  %v2784 = vsel %vm184, %v2768, 0.0
  %v2785 = vsel %vm183, %v2769, 0.0
  %v2786 = vsel %vm184, %v2770, 0.0
  %v2787 = vsel %vm183, %v2771, 0.0
  %v2788 = vsel %vm184, %v2772, 0.0
  %2789 = vst [vmem:[#allocation3 + $0x280] sm:$0xff] %v2781
  %2790 = vst [vmem:[#allocation3 + $0x288] sm:$0xff] %v2782
  %2791 = vst [vmem:[#allocation3 + $0x290] sm:$0xff] %v2783
  %2792 = vst [vmem:[#allocation3 + $0x298] sm:$0xff] %v2784
  %2793 = vst [vmem:[#allocation3 + $0x2a0] sm:$0xff] %v2785
  %2794 = vst [vmem:[#allocation3 + $0x2a8] sm:$0xff] %v2786
  %2795 = vst [vmem:[#allocation3 + $0x2b0] sm:$0xff] %v2787
  %2796 = vst [vmem:[#allocation3 + $0x2b8] sm:$0xff] %v2788
  %2797 = vrot.lane.b32.xlu0 %v2169, 1
  %v2798 = vpop.permute.xlu0 %2797
  %2799 = vrot.lane.b32.xlu0 %v2170, 1
  %v2800 = vpop.permute.xlu0 %2799
  %2801 = vrot.lane.b32.xlu0 %v2171, 1
  %v2802 = vpop.permute.xlu0 %2801
  %2803 = vrot.lane.b32.xlu0 %v2173, 1
  %v2804 = vpop.permute.xlu0 %2803
  %2805 = vrot.lane.b32.xlu0 %v2174, 1
  %v2806 = vpop.permute.xlu0 %2805
  %2807 = vrot.lane.b32.xlu0 %v2175, 1
  %v2808 = vpop.permute.xlu0 %2807
  %2809 = vrot.lane.b32.xlu0 %v2177, 1
  %v2810 = vpop.permute.xlu0 %2809
  %2811 = vrot.lane.b32.xlu0 %v2178, 1
  %v2812 = vpop.permute.xlu0 %2811
  %2813 = vrot.lane.b32.xlu0 %v2179, 1
  %v2814 = vpop.permute.xlu0 %2813
  %2815 = vrot.lane.b32.xlu0 %v2181, 1
  %v2816 = vpop.permute.xlu0 %2815
  %2817 = vrot.lane.b32.xlu0 %v2182, 1
  %v2818 = vpop.permute.xlu0 %2817
  %2819 = vrot.lane.b32.xlu0 %v2183, 1
  %v2820 = vpop.permute.xlu0 %2819
  %v2821 = vsel %vm868, %v2798, %v2800
  %v2822 = vsel %vm868, %v2800, %v2802
  %v2823 = vsel %vm868, %v2804, %v2806
  %v2824 = vsel %vm868, %v2806, %v2808
  %v2825 = vsel %vm868, %v2810, %v2812
  %v2826 = vsel %vm868, %v2812, %v2814
  %v2827 = vsel %vm868, %v2816, %v2818
  %v2828 = vsel %vm868, %v2818, %v2820
  %v2837 = vsel %vm264, %v2821, 0.0
  %v2838 = vsel %vm265, %v2822, 0.0
  %v2839 = vsel %vm264, %v2823, 0.0
  %v2840 = vsel %vm265, %v2824, 0.0
  %v2841 = vsel %vm264, %v2825, 0.0
  %v2842 = vsel %vm265, %v2826, 0.0
  %v2843 = vsel %vm264, %v2827, 0.0
  %v2844 = vsel %vm265, %v2828, 0.0
  %2845 = vst [vmem:[#allocation3 + $0x2c0] sm:$0xff] %v2837
  %2846 = vst [vmem:[#allocation3 + $0x2c8] sm:$0xff] %v2838
  %2847 = vst [vmem:[#allocation3 + $0x2d0] sm:$0xff] %v2839
  %2848 = vst [vmem:[#allocation3 + $0x2d8] sm:$0xff] %v2840
  %2849 = vst [vmem:[#allocation3 + $0x2e0] sm:$0xff] %v2841
  %2850 = vst [vmem:[#allocation3 + $0x2e8] sm:$0xff] %v2842
  %2851 = vst [vmem:[#allocation3 + $0x2f0] sm:$0xff] %v2843
  %2852 = vst [vmem:[#allocation3 + $0x2f8] sm:$0xff] %v2844
  %2853 = vst [vmem:[#allocation3 + $0x300] sm:$0xff] %v2170
  %2854 = vst [vmem:[#allocation3 + $0x308] sm:$0xff] %v2171
  %2855 = vst [vmem:[#allocation3 + $0x310] sm:$0xff] %v2174
  %2856 = vst [vmem:[#allocation3 + $0x318] sm:$0xff] %v2175
  %2857 = vst [vmem:[#allocation3 + $0x320] sm:$0xff] %v2178
  %2858 = vst [vmem:[#allocation3 + $0x328] sm:$0xff] %v2179
  %2859 = vst [vmem:[#allocation3 + $0x330] sm:$0xff] %v2182
  %2860 = vst [vmem:[#allocation3 + $0x338] sm:$0xff] %v2183
  %2865 = vrot.lane.b32.xlu0 %v2170, 127
  %v2866 = vpop.permute.xlu0 %2865
  %2867 = vrot.lane.b32.xlu0 %v2171, 127
  %v2868 = vpop.permute.xlu0 %2867
  %2869 = vrot.lane.b32.xlu0 %v2172, 127
  %v2870 = vpop.permute.xlu0 %2869
  %2871 = vrot.lane.b32.xlu0 %v2174, 127
  %v2872 = vpop.permute.xlu0 %2871
  %2873 = vrot.lane.b32.xlu0 %v2175, 127
  %v2874 = vpop.permute.xlu0 %2873
  %2875 = vrot.lane.b32.xlu0 %v2176, 127
  %v2876 = vpop.permute.xlu0 %2875
  %2877 = vrot.lane.b32.xlu0 %v2178, 127
  %v2878 = vpop.permute.xlu0 %2877
  %2879 = vrot.lane.b32.xlu0 %v2179, 127
  %v2880 = vpop.permute.xlu0 %2879
  %2881 = vrot.lane.b32.xlu0 %v2180, 127
  %v2882 = vpop.permute.xlu0 %2881
  %2883 = vrot.lane.b32.xlu0 %v2182, 127
  %v2884 = vpop.permute.xlu0 %2883
  %2885 = vrot.lane.b32.xlu0 %v2183, 127
  %v2886 = vpop.permute.xlu0 %2885
  %2887 = vrot.lane.b32.xlu0 %v2184, 127
  %v2888 = vpop.permute.xlu0 %2887
  %v2889 = vsel %vm937, %v2866, %v2868
  %v2890 = vsel %vm937, %v2868, %v2870
  %v2891 = vsel %vm937, %v2872, %v2874
  %v2892 = vsel %vm937, %v2874, %v2876
  %v2893 = vsel %vm937, %v2878, %v2880
  %v2894 = vsel %vm937, %v2880, %v2882
  %v2895 = vsel %vm937, %v2884, %v2886
  %v2896 = vsel %vm937, %v2886, %v2888
  %v2905 = vsel %vm382, %v2889, 0.0
  %v2906 = vsel %vm383, %v2890, 0.0
  %v2907 = vsel %vm382, %v2891, 0.0
  %v2908 = vsel %vm383, %v2892, 0.0
  %v2909 = vsel %vm382, %v2893, 0.0
  %v2910 = vsel %vm383, %v2894, 0.0
  %v2911 = vsel %vm382, %v2895, 0.0
  %v2912 = vsel %vm383, %v2896, 0.0
  %2913 = vst [vmem:[#allocation3 + $0x340] sm:$0xff] %v2905
  %2914 = vst [vmem:[#allocation3 + $0x348] sm:$0xff] %v2906
  %2915 = vst [vmem:[#allocation3 + $0x350] sm:$0xff] %v2907
  %2916 = vst [vmem:[#allocation3 + $0x358] sm:$0xff] %v2908
  %2917 = vst [vmem:[#allocation3 + $0x360] sm:$0xff] %v2909
  %2918 = vst [vmem:[#allocation3 + $0x368] sm:$0xff] %v2910
  %2919 = vst [vmem:[#allocation3 + $0x370] sm:$0xff] %v2911
  %2920 = vst [vmem:[#allocation3 + $0x378] sm:$0xff] %v2912
  %2921 = vrot.lane.b32.xlu0 %v2170, 126
  %v2922 = vpop.permute.xlu0 %2921
  %2923 = vrot.lane.b32.xlu0 %v2171, 126
  %v2924 = vpop.permute.xlu0 %2923
  %2925 = vrot.lane.b32.xlu0 %v2172, 126
  %v2926 = vpop.permute.xlu0 %2925
  %2927 = vrot.lane.b32.xlu0 %v2174, 126
  %v2928 = vpop.permute.xlu0 %2927
  %2929 = vrot.lane.b32.xlu0 %v2175, 126
  %v2930 = vpop.permute.xlu0 %2929
  %2931 = vrot.lane.b32.xlu0 %v2176, 126
  %v2932 = vpop.permute.xlu0 %2931
  %2933 = vrot.lane.b32.xlu0 %v2178, 126
  %v2934 = vpop.permute.xlu0 %2933
  %2935 = vrot.lane.b32.xlu0 %v2179, 126
  %v2936 = vpop.permute.xlu0 %2935
  %2937 = vrot.lane.b32.xlu0 %v2180, 126
  %v2938 = vpop.permute.xlu0 %2937
  %2939 = vrot.lane.b32.xlu0 %v2182, 126
  %v2940 = vpop.permute.xlu0 %2939
  %2941 = vrot.lane.b32.xlu0 %v2183, 126
  %v2942 = vpop.permute.xlu0 %2941
  %2943 = vrot.lane.b32.xlu0 %v2184, 126
  %v2944 = vpop.permute.xlu0 %2943
  %v2945 = vsel %vm994, %v2922, %v2924
  %v2946 = vsel %vm994, %v2924, %v2926
  %v2947 = vsel %vm994, %v2928, %v2930
  %v2948 = vsel %vm994, %v2930, %v2932
  %v2949 = vsel %vm994, %v2934, %v2936
  %v2950 = vsel %vm994, %v2936, %v2938
  %v2951 = vsel %vm994, %v2940, %v2942
  %v2952 = vsel %vm994, %v2942, %v2944
  %v2961 = vsel %vm451, %v2945, 0.0
  %v2962 = vsel %vm452, %v2946, 0.0
  %v2963 = vsel %vm451, %v2947, 0.0
  %v2964 = vsel %vm452, %v2948, 0.0
  %v2965 = vsel %vm451, %v2949, 0.0
  %v2966 = vsel %vm452, %v2950, 0.0
  %v2967 = vsel %vm451, %v2951, 0.0
  %v2968 = vsel %vm452, %v2952, 0.0
  %2969 = vst [vmem:[#allocation3 + $0x380] sm:$0xff] %v2961
  %2970 = vst [vmem:[#allocation3 + $0x388] sm:$0xff] %v2962
  %2971 = vst [vmem:[#allocation3 + $0x390] sm:$0xff] %v2963
  %2972 = vst [vmem:[#allocation3 + $0x398] sm:$0xff] %v2964
  %2973 = vst [vmem:[#allocation3 + $0x3a0] sm:$0xff] %v2965
  %2974 = vst [vmem:[#allocation3 + $0x3a8] sm:$0xff] %v2966
  %2975 = vst [vmem:[#allocation3 + $0x3b0] sm:$0xff] %v2967
  %2976 = vst [vmem:[#allocation3 + $0x3b8] sm:$0xff] %v2968
  %2977 = vrot.lane.b32.xlu0 %v2170, 114
  %v2978 = vpop.permute.xlu0 %2977
  %2979 = vrot.lane.b32.xlu0 %v2171, 114
  %v2980 = vpop.permute.xlu0 %2979
  %2981 = vrot.lane.b32.xlu0 %v2172, 114
  %v2982 = vpop.permute.xlu0 %2981
  %2983 = vrot.lane.b32.xlu0 %v2174, 114
  %v2984 = vpop.permute.xlu0 %2983
  %2985 = vrot.lane.b32.xlu0 %v2175, 114
  %v2986 = vpop.permute.xlu0 %2985
  %2987 = vrot.lane.b32.xlu0 %v2176, 114
  %v2988 = vpop.permute.xlu0 %2987
  %2989 = vrot.lane.b32.xlu0 %v2178, 114
  %v2990 = vpop.permute.xlu0 %2989
  %2991 = vrot.lane.b32.xlu0 %v2179, 114
  %v2992 = vpop.permute.xlu0 %2991
  %2993 = vrot.lane.b32.xlu0 %v2180, 114
  %v2994 = vpop.permute.xlu0 %2993
  %2995 = vrot.lane.b32.xlu0 %v2182, 114
  %v2996 = vpop.permute.xlu0 %2995
  %2997 = vrot.lane.b32.xlu0 %v2183, 114
  %v2998 = vpop.permute.xlu0 %2997
  %2999 = vrot.lane.b32.xlu0 %v2184, 114
  %v3000 = vpop.permute.xlu0 %2999
  %v3001 = vsel %vm1051, %v2978, %v2980
  %v3002 = vsel %vm1051, %v2980, %v2982
  %v3003 = vsel %vm1051, %v2984, %v2986
  %v3004 = vsel %vm1051, %v2986, %v2988
  %v3005 = vsel %vm1051, %v2990, %v2992
  %v3006 = vsel %vm1051, %v2992, %v2994
  %v3007 = vsel %vm1051, %v2996, %v2998
  %v3008 = vsel %vm1051, %v2998, %v3000
  %v3017 = vsel %vm183, %v3001, 0.0
  %v3018 = vsel %vm184, %v3002, 0.0
  %v3019 = vsel %vm183, %v3003, 0.0
  %v3020 = vsel %vm184, %v3004, 0.0
  %v3021 = vsel %vm183, %v3005, 0.0
  %v3022 = vsel %vm184, %v3006, 0.0
  %v3023 = vsel %vm183, %v3007, 0.0
  %v3024 = vsel %vm184, %v3008, 0.0
  %3025 = vst [vmem:[#allocation3 + $0x3c0] sm:$0xff] %v3017
  %3026 = vst [vmem:[#allocation3 + $0x3c8] sm:$0xff] %v3018
  %3027 = vst [vmem:[#allocation3 + $0x3d0] sm:$0xff] %v3019
  %3028 = vst [vmem:[#allocation3 + $0x3d8] sm:$0xff] %v3020
  %3029 = vst [vmem:[#allocation3 + $0x3e0] sm:$0xff] %v3021
  %3030 = vst [vmem:[#allocation3 + $0x3e8] sm:$0xff] %v3022
  %3031 = vst [vmem:[#allocation3 + $0x3f0] sm:$0xff] %v3023
  %3032 = vst [vmem:[#allocation3 + $0x3f8] sm:$0xff] %v3024
  %3033 = vrot.lane.b32.xlu0 %v2170, 113
  %v3034 = vpop.permute.xlu0 %3033
  %3035 = vrot.lane.b32.xlu0 %v2171, 113
  %v3036 = vpop.permute.xlu0 %3035
  %3037 = vrot.lane.b32.xlu0 %v2172, 113
  %v3038 = vpop.permute.xlu0 %3037
  %3039 = vrot.lane.b32.xlu0 %v2174, 113
  %v3040 = vpop.permute.xlu0 %3039
  %3041 = vrot.lane.b32.xlu0 %v2175, 113
  %v3042 = vpop.permute.xlu0 %3041
  %3043 = vrot.lane.b32.xlu0 %v2176, 113
  %v3044 = vpop.permute.xlu0 %3043
  %3045 = vrot.lane.b32.xlu0 %v2178, 113
  %v3046 = vpop.permute.xlu0 %3045
  %3047 = vrot.lane.b32.xlu0 %v2179, 113
  %v3048 = vpop.permute.xlu0 %3047
  %3049 = vrot.lane.b32.xlu0 %v2180, 113
  %v3050 = vpop.permute.xlu0 %3049
  %3051 = vrot.lane.b32.xlu0 %v2182, 113
  %v3052 = vpop.permute.xlu0 %3051
  %3053 = vrot.lane.b32.xlu0 %v2183, 113
  %v3054 = vpop.permute.xlu0 %3053
  %3055 = vrot.lane.b32.xlu0 %v2184, 113
  %v3056 = vpop.permute.xlu0 %3055
  %v3057 = vsel %vm1108, %v3034, %v3036
  %v3058 = vsel %vm1108, %v3036, %v3038
  %v3059 = vsel %vm1108, %v3040, %v3042
  %v3060 = vsel %vm1108, %v3042, %v3044
  %v3061 = vsel %vm1108, %v3046, %v3048
  %v3062 = vsel %vm1108, %v3048, %v3050
  %v3063 = vsel %vm1108, %v3052, %v3054
  %v3064 = vsel %vm1108, %v3054, %v3056
  %v3073 = vsel %vm264, %v3057, 0.0
  %v3074 = vsel %vm265, %v3058, 0.0
  %v3075 = vsel %vm264, %v3059, 0.0
  %v3076 = vsel %vm265, %v3060, 0.0
  %v3077 = vsel %vm264, %v3061, 0.0
  %v3078 = vsel %vm265, %v3062, 0.0
  %v3079 = vsel %vm264, %v3063, 0.0
  %v3080 = vsel %vm265, %v3064, 0.0
  %3081 = vst [vmem:[#allocation3 + $0x400] sm:$0xff] %v3073
  %3082 = vst [vmem:[#allocation3 + $0x408] sm:$0xff] %v3074
  %3083 = vst [vmem:[#allocation3 + $0x410] sm:$0xff] %v3075
  %3084 = vst [vmem:[#allocation3 + $0x418] sm:$0xff] %v3076
  %3085 = vst [vmem:[#allocation3 + $0x420] sm:$0xff] %v3077
  %3086 = vst [vmem:[#allocation3 + $0x428] sm:$0xff] %v3078
  %3087 = vst [vmem:[#allocation3 + $0x430] sm:$0xff] %v3079
  %3088 = vst [vmem:[#allocation3 + $0x438] sm:$0xff] %v3080
  %3089 = vrot.lane.b32.xlu0 %v2170, 112
  %v3090 = vpop.permute.xlu0 %3089
  %3091 = vrot.lane.b32.xlu0 %v2171, 112
  %v3092 = vpop.permute.xlu0 %3091
  %3093 = vrot.lane.b32.xlu0 %v2172, 112
  %v3094 = vpop.permute.xlu0 %3093
  %3095 = vrot.lane.b32.xlu0 %v2174, 112
  %v3096 = vpop.permute.xlu0 %3095
  %3097 = vrot.lane.b32.xlu0 %v2175, 112
  %v3098 = vpop.permute.xlu0 %3097
  %3099 = vrot.lane.b32.xlu0 %v2176, 112
  %v3100 = vpop.permute.xlu0 %3099
  %3101 = vrot.lane.b32.xlu0 %v2178, 112
  %v3102 = vpop.permute.xlu0 %3101
  %3103 = vrot.lane.b32.xlu0 %v2179, 112
  %v3104 = vpop.permute.xlu0 %3103
  %3105 = vrot.lane.b32.xlu0 %v2180, 112
  %v3106 = vpop.permute.xlu0 %3105
  %3107 = vrot.lane.b32.xlu0 %v2182, 112
  %v3108 = vpop.permute.xlu0 %3107
  %3109 = vrot.lane.b32.xlu0 %v2183, 112
  %v3110 = vpop.permute.xlu0 %3109
  %3111 = vrot.lane.b32.xlu0 %v2184, 112
  %v3112 = vpop.permute.xlu0 %3111
  %v3113 = vsel %vm1165, %v3090, %v3092
  %v3114 = vsel %vm1165, %v3092, %v3094
  %v3115 = vsel %vm1165, %v3096, %v3098
  %v3116 = vsel %vm1165, %v3098, %v3100
  %v3117 = vsel %vm1165, %v3102, %v3104
  %v3118 = vsel %vm1165, %v3104, %v3106
  %v3119 = vsel %vm1165, %v3108, %v3110
  %v3120 = vsel %vm1165, %v3110, %v3112
  %3129 = vst [vmem:[#allocation3 + $0x440] sm:$0xff] %v3113
  %3130 = vst [vmem:[#allocation3 + $0x448] sm:$0xff] %v3114
  %3131 = vst [vmem:[#allocation3 + $0x450] sm:$0xff] %v3115
  %3132 = vst [vmem:[#allocation3 + $0x458] sm:$0xff] %v3116
  %3133 = vst [vmem:[#allocation3 + $0x460] sm:$0xff] %v3117
  %3134 = vst [vmem:[#allocation3 + $0x468] sm:$0xff] %v3118
  %3135 = vst [vmem:[#allocation3 + $0x470] sm:$0xff] %v3119
  %3136 = vst [vmem:[#allocation3 + $0x478] sm:$0xff] %v3120
  %3137 = vrot.lane.b32.xlu0 %v2170, 111
  %v3138 = vpop.permute.xlu0 %3137
  %3139 = vrot.lane.b32.xlu0 %v2171, 111
  %v3140 = vpop.permute.xlu0 %3139
  %3141 = vrot.lane.b32.xlu0 %v2172, 111
  %v3142 = vpop.permute.xlu0 %3141
  %3143 = vrot.lane.b32.xlu0 %v2174, 111
  %v3144 = vpop.permute.xlu0 %3143
  %3145 = vrot.lane.b32.xlu0 %v2175, 111
  %v3146 = vpop.permute.xlu0 %3145
  %3147 = vrot.lane.b32.xlu0 %v2176, 111
  %v3148 = vpop.permute.xlu0 %3147
  %3149 = vrot.lane.b32.xlu0 %v2178, 111
  %v3150 = vpop.permute.xlu0 %3149
  %3151 = vrot.lane.b32.xlu0 %v2179, 111
  %v3152 = vpop.permute.xlu0 %3151
  %3153 = vrot.lane.b32.xlu0 %v2180, 111
  %v3154 = vpop.permute.xlu0 %3153
  %3155 = vrot.lane.b32.xlu0 %v2182, 111
  %v3156 = vpop.permute.xlu0 %3155
  %3157 = vrot.lane.b32.xlu0 %v2183, 111
  %v3158 = vpop.permute.xlu0 %3157
  %3159 = vrot.lane.b32.xlu0 %v2184, 111
  %v3160 = vpop.permute.xlu0 %3159
  %v3161 = vsel %vm1214, %v3138, %v3140
  %v3162 = vsel %vm1214, %v3140, %v3142
  %v3163 = vsel %vm1214, %v3144, %v3146
  %v3164 = vsel %vm1214, %v3146, %v3148
  %v3165 = vsel %vm1214, %v3150, %v3152
  %v3166 = vsel %vm1214, %v3152, %v3154
  %v3167 = vsel %vm1214, %v3156, %v3158
  %v3168 = vsel %vm1214, %v3158, %v3160
  %v3177 = vsel %vm382, %v3161, 0.0
  %v3178 = vsel %vm383, %v3162, 0.0
  %v3179 = vsel %vm382, %v3163, 0.0
  %v3180 = vsel %vm383, %v3164, 0.0
  %v3181 = vsel %vm382, %v3165, 0.0
  %v3182 = vsel %vm383, %v3166, 0.0
  %v3183 = vsel %vm382, %v3167, 0.0
  %v3184 = vsel %vm383, %v3168, 0.0
  %3185 = vst [vmem:[#allocation3 + $0x480] sm:$0xff] %v3177
  %3186 = vst [vmem:[#allocation3 + $0x488] sm:$0xff] %v3178
  %3187 = vst [vmem:[#allocation3 + $0x490] sm:$0xff] %v3179
  %3188 = vst [vmem:[#allocation3 + $0x498] sm:$0xff] %v3180
  %3189 = vst [vmem:[#allocation3 + $0x4a0] sm:$0xff] %v3181
  %3190 = vst [vmem:[#allocation3 + $0x4a8] sm:$0xff] %v3182
  %3191 = vst [vmem:[#allocation3 + $0x4b0] sm:$0xff] %v3183
  %3192 = vst [vmem:[#allocation3 + $0x4b8] sm:$0xff] %v3184
  %3193 = vrot.lane.b32.xlu0 %v2170, 110
  %v3194 = vpop.permute.xlu0 %3193
  %3195 = vrot.lane.b32.xlu0 %v2171, 110
  %v3196 = vpop.permute.xlu0 %3195
  %3197 = vrot.lane.b32.xlu0 %v2172, 110
  %v3198 = vpop.permute.xlu0 %3197
  %3199 = vrot.lane.b32.xlu0 %v2174, 110
  %v3200 = vpop.permute.xlu0 %3199
  %3201 = vrot.lane.b32.xlu0 %v2175, 110
  %v3202 = vpop.permute.xlu0 %3201
  %3203 = vrot.lane.b32.xlu0 %v2176, 110
  %v3204 = vpop.permute.xlu0 %3203
  %3205 = vrot.lane.b32.xlu0 %v2178, 110
  %v3206 = vpop.permute.xlu0 %3205
  %3207 = vrot.lane.b32.xlu0 %v2179, 110
  %v3208 = vpop.permute.xlu0 %3207
  %3209 = vrot.lane.b32.xlu0 %v2180, 110
  %v3210 = vpop.permute.xlu0 %3209
  %3211 = vrot.lane.b32.xlu0 %v2182, 110
  %v3212 = vpop.permute.xlu0 %3211
  %3213 = vrot.lane.b32.xlu0 %v2183, 110
  %v3214 = vpop.permute.xlu0 %3213
  %3215 = vrot.lane.b32.xlu0 %v2184, 110
  %v3216 = vpop.permute.xlu0 %3215
  %v3217 = vsel %vm1271, %v3194, %v3196
  %v3218 = vsel %vm1271, %v3196, %v3198
  %v3219 = vsel %vm1271, %v3200, %v3202
  %v3220 = vsel %vm1271, %v3202, %v3204
  %v3221 = vsel %vm1271, %v3206, %v3208
  %v3222 = vsel %vm1271, %v3208, %v3210
  %v3223 = vsel %vm1271, %v3212, %v3214
  %v3224 = vsel %vm1271, %v3214, %v3216
  %v3233 = vsel %vm451, %v3217, 0.0
  %v3234 = vsel %vm452, %v3218, 0.0
  %v3235 = vsel %vm451, %v3219, 0.0
  %v3236 = vsel %vm452, %v3220, 0.0
  %v3237 = vsel %vm451, %v3221, 0.0
  %v3238 = vsel %vm452, %v3222, 0.0
  %v3239 = vsel %vm451, %v3223, 0.0
  %v3240 = vsel %vm452, %v3224, 0.0
  %3241 = vst [vmem:[#allocation3 + $0x4c0] sm:$0xff] %v3233
  %3242 = vst [vmem:[#allocation3 + $0x4c8] sm:$0xff] %v3234
  %3243 = vst [vmem:[#allocation3 + $0x4d0] sm:$0xff] %v3235
  %3244 = vst [vmem:[#allocation3 + $0x4d8] sm:$0xff] %v3236
  %3245 = vst [vmem:[#allocation3 + $0x4e0] sm:$0xff] %v3237
  %3246 = vst [vmem:[#allocation3 + $0x4e8] sm:$0xff] %v3238
  %3247 = vst [vmem:[#allocation3 + $0x4f0] sm:$0xff] %v3239
  %3248 = vst [vmem:[#allocation3 + $0x4f8] sm:$0xff] %v3240
  %3249 = vrot.lane.b32.xlu0 %v2170, 98
  %v3250 = vpop.permute.xlu0 %3249
  %3251 = vrot.lane.b32.xlu0 %v2171, 98
  %v3252 = vpop.permute.xlu0 %3251
  %3253 = vrot.lane.b32.xlu0 %v2172, 98
  %v3254 = vpop.permute.xlu0 %3253
  %3255 = vrot.lane.b32.xlu0 %v2174, 98
  %v3256 = vpop.permute.xlu0 %3255
  %3257 = vrot.lane.b32.xlu0 %v2175, 98
  %v3258 = vpop.permute.xlu0 %3257
  %3259 = vrot.lane.b32.xlu0 %v2176, 98
  %v3260 = vpop.permute.xlu0 %3259
  %3261 = vrot.lane.b32.xlu0 %v2178, 98
  %v3262 = vpop.permute.xlu0 %3261
  %3263 = vrot.lane.b32.xlu0 %v2179, 98
  %v3264 = vpop.permute.xlu0 %3263
  %3265 = vrot.lane.b32.xlu0 %v2180, 98
  %v3266 = vpop.permute.xlu0 %3265
  %3267 = vrot.lane.b32.xlu0 %v2182, 98
  %v3268 = vpop.permute.xlu0 %3267
  %3269 = vrot.lane.b32.xlu0 %v2183, 98
  %v3270 = vpop.permute.xlu0 %3269
  %3271 = vrot.lane.b32.xlu0 %v2184, 98
  %v3272 = vpop.permute.xlu0 %3271
  %v3273 = vsel %vm1328, %v3250, %v3252
  %v3274 = vsel %vm1328, %v3252, %v3254
  %v3275 = vsel %vm1328, %v3256, %v3258
  %v3276 = vsel %vm1328, %v3258, %v3260
  %v3277 = vsel %vm1328, %v3262, %v3264
  %v3278 = vsel %vm1328, %v3264, %v3266
  %v3279 = vsel %vm1328, %v3268, %v3270
  %v3280 = vsel %vm1328, %v3270, %v3272
  %v3289 = vsel %vm183, %v3273, 0.0
  %v3290 = vsel %vm184, %v3274, 0.0
  %v3291 = vsel %vm183, %v3275, 0.0
  %v3292 = vsel %vm184, %v3276, 0.0
  %v3293 = vsel %vm183, %v3277, 0.0
  %v3294 = vsel %vm184, %v3278, 0.0
  %v3295 = vsel %vm183, %v3279, 0.0
  %v3296 = vsel %vm184, %v3280, 0.0
  %3297 = vst [vmem:[#allocation3 + $0x500] sm:$0xff] %v3289
  %3298 = vst [vmem:[#allocation3 + $0x508] sm:$0xff] %v3290
  %3299 = vst [vmem:[#allocation3 + $0x510] sm:$0xff] %v3291
  %3300 = vst [vmem:[#allocation3 + $0x518] sm:$0xff] %v3292
  %3301 = vst [vmem:[#allocation3 + $0x520] sm:$0xff] %v3293
  %3302 = vst [vmem:[#allocation3 + $0x528] sm:$0xff] %v3294
  %3303 = vst [vmem:[#allocation3 + $0x530] sm:$0xff] %v3295
  %3304 = vst [vmem:[#allocation3 + $0x538] sm:$0xff] %v3296
  %3305 = vrot.lane.b32.xlu0 %v2170, 97
  %v3306 = vpop.permute.xlu0 %3305
  %3307 = vrot.lane.b32.xlu0 %v2171, 97
  %v3308 = vpop.permute.xlu0 %3307
  %3309 = vrot.lane.b32.xlu0 %v2172, 97
  %v3310 = vpop.permute.xlu0 %3309
  %3311 = vrot.lane.b32.xlu0 %v2174, 97
  %v3312 = vpop.permute.xlu0 %3311
  %3313 = vrot.lane.b32.xlu0 %v2175, 97
  %v3314 = vpop.permute.xlu0 %3313
  %3315 = vrot.lane.b32.xlu0 %v2176, 97
  %v3316 = vpop.permute.xlu0 %3315
  %3317 = vrot.lane.b32.xlu0 %v2178, 97
  %v3318 = vpop.permute.xlu0 %3317
  %3319 = vrot.lane.b32.xlu0 %v2179, 97
  %v3320 = vpop.permute.xlu0 %3319
  %3321 = vrot.lane.b32.xlu0 %v2180, 97
  %v3322 = vpop.permute.xlu0 %3321
  %3323 = vrot.lane.b32.xlu0 %v2182, 97
  %v3324 = vpop.permute.xlu0 %3323
  %3325 = vrot.lane.b32.xlu0 %v2183, 97
  %v3326 = vpop.permute.xlu0 %3325
  %3327 = vrot.lane.b32.xlu0 %v2184, 97
  %v3328 = vpop.permute.xlu0 %3327
  %v3329 = vsel %vm1385, %v3306, %v3308
  %v3330 = vsel %vm1385, %v3308, %v3310
  %v3331 = vsel %vm1385, %v3312, %v3314
  %v3332 = vsel %vm1385, %v3314, %v3316
  %v3333 = vsel %vm1385, %v3318, %v3320
  %v3334 = vsel %vm1385, %v3320, %v3322
  %v3335 = vsel %vm1385, %v3324, %v3326
  %v3336 = vsel %vm1385, %v3326, %v3328
  %v3345 = vsel %vm264, %v3329, 0.0
  %v3346 = vsel %vm265, %v3330, 0.0
  %v3347 = vsel %vm264, %v3331, 0.0
  %v3348 = vsel %vm265, %v3332, 0.0
  %v3349 = vsel %vm264, %v3333, 0.0
  %v3350 = vsel %vm265, %v3334, 0.0
  %v3351 = vsel %vm264, %v3335, 0.0
  %v3352 = vsel %vm265, %v3336, 0.0
  %3353 = vst [vmem:[#allocation3 + $0x540] sm:$0xff] %v3345
  %3354 = vst [vmem:[#allocation3 + $0x548] sm:$0xff] %v3346
  %3355 = vst [vmem:[#allocation3 + $0x550] sm:$0xff] %v3347
  %3356 = vst [vmem:[#allocation3 + $0x558] sm:$0xff] %v3348
  %3357 = vst [vmem:[#allocation3 + $0x560] sm:$0xff] %v3349
  %3358 = vst [vmem:[#allocation3 + $0x568] sm:$0xff] %v3350
  %3359 = vst [vmem:[#allocation3 + $0x570] sm:$0xff] %v3351
  %3360 = vst [vmem:[#allocation3 + $0x578] sm:$0xff] %v3352
  %3361 = vrot.lane.b32.xlu0 %v2170, 96
  %v3362 = vpop.permute.xlu0 %3361
  %3363 = vrot.lane.b32.xlu0 %v2171, 96
  %v3364 = vpop.permute.xlu0 %3363
  %3365 = vrot.lane.b32.xlu0 %v2172, 96
  %v3366 = vpop.permute.xlu0 %3365
  %3367 = vrot.lane.b32.xlu0 %v2174, 96
  %v3368 = vpop.permute.xlu0 %3367
  %3369 = vrot.lane.b32.xlu0 %v2175, 96
  %v3370 = vpop.permute.xlu0 %3369
  %3371 = vrot.lane.b32.xlu0 %v2176, 96
  %v3372 = vpop.permute.xlu0 %3371
  %3373 = vrot.lane.b32.xlu0 %v2178, 96
  %v3374 = vpop.permute.xlu0 %3373
  %3375 = vrot.lane.b32.xlu0 %v2179, 96
  %v3376 = vpop.permute.xlu0 %3375
  %3377 = vrot.lane.b32.xlu0 %v2180, 96
  %v3378 = vpop.permute.xlu0 %3377
  %3379 = vrot.lane.b32.xlu0 %v2182, 96
  %v3380 = vpop.permute.xlu0 %3379
  %3381 = vrot.lane.b32.xlu0 %v2183, 96
  %v3382 = vpop.permute.xlu0 %3381
  %3383 = vrot.lane.b32.xlu0 %v2184, 96
  %v3384 = vpop.permute.xlu0 %3383
  %v3385 = vsel %vm1442, %v3362, %v3364
  %v3386 = vsel %vm1442, %v3364, %v3366
  %v3387 = vsel %vm1442, %v3368, %v3370
  %v3388 = vsel %vm1442, %v3370, %v3372
  %v3389 = vsel %vm1442, %v3374, %v3376
  %v3390 = vsel %vm1442, %v3376, %v3378
  %v3391 = vsel %vm1442, %v3380, %v3382
  %v3392 = vsel %vm1442, %v3382, %v3384
  %3401 = vst [vmem:[#allocation3 + $0x580] sm:$0xff] %v3385
  %3402 = vst [vmem:[#allocation3 + $0x588] sm:$0xff] %v3386
  %3403 = vst [vmem:[#allocation3 + $0x590] sm:$0xff] %v3387
  %3404 = vst [vmem:[#allocation3 + $0x598] sm:$0xff] %v3388
  %3405 = vst [vmem:[#allocation3 + $0x5a0] sm:$0xff] %v3389
  %3406 = vst [vmem:[#allocation3 + $0x5a8] sm:$0xff] %v3390
  %3407 = vst [vmem:[#allocation3 + $0x5b0] sm:$0xff] %v3391
  %3408 = vst [vmem:[#allocation3 + $0x5b8] sm:$0xff] %v3392
  %3409 = vrot.lane.b32.xlu0 %v2170, 95
  %v3410 = vpop.permute.xlu0 %3409
  %3411 = vrot.lane.b32.xlu0 %v2171, 95
  %v3412 = vpop.permute.xlu0 %3411
  %3413 = vrot.lane.b32.xlu0 %v2172, 95
  %v3414 = vpop.permute.xlu0 %3413
  %3415 = vrot.lane.b32.xlu0 %v2174, 95
  %v3416 = vpop.permute.xlu0 %3415
  %3417 = vrot.lane.b32.xlu0 %v2175, 95
  %v3418 = vpop.permute.xlu0 %3417
  %3419 = vrot.lane.b32.xlu0 %v2176, 95
  %v3420 = vpop.permute.xlu0 %3419
  %3421 = vrot.lane.b32.xlu0 %v2178, 95
  %v3422 = vpop.permute.xlu0 %3421
  %3423 = vrot.lane.b32.xlu0 %v2179, 95
  %v3424 = vpop.permute.xlu0 %3423
  %3425 = vrot.lane.b32.xlu0 %v2180, 95
  %v3426 = vpop.permute.xlu0 %3425
  %3427 = vrot.lane.b32.xlu0 %v2182, 95
  %v3428 = vpop.permute.xlu0 %3427
  %3429 = vrot.lane.b32.xlu0 %v2183, 95
  %v3430 = vpop.permute.xlu0 %3429
  %3431 = vrot.lane.b32.xlu0 %v2184, 95
  %v3432 = vpop.permute.xlu0 %3431
  %v3433 = vsel %vm1491, %v3410, %v3412
  %v3434 = vsel %vm1491, %v3412, %v3414
  %v3435 = vsel %vm1491, %v3416, %v3418
  %v3436 = vsel %vm1491, %v3418, %v3420
  %v3437 = vsel %vm1491, %v3422, %v3424
  %v3438 = vsel %vm1491, %v3424, %v3426
  %v3439 = vsel %vm1491, %v3428, %v3430
  %v3440 = vsel %vm1491, %v3430, %v3432
  %v3449 = vsel %vm382, %v3433, 0.0
  %v3450 = vsel %vm383, %v3434, 0.0
  %v3451 = vsel %vm382, %v3435, 0.0
  %v3452 = vsel %vm383, %v3436, 0.0
  %v3453 = vsel %vm382, %v3437, 0.0
  %v3454 = vsel %vm383, %v3438, 0.0
  %v3455 = vsel %vm382, %v3439, 0.0
  %v3456 = vsel %vm383, %v3440, 0.0
  %3457 = vst [vmem:[#allocation3 + $0x5c0] sm:$0xff] %v3449
  %3458 = vst [vmem:[#allocation3 + $0x5c8] sm:$0xff] %v3450
  %3459 = vst [vmem:[#allocation3 + $0x5d0] sm:$0xff] %v3451
  %3460 = vst [vmem:[#allocation3 + $0x5d8] sm:$0xff] %v3452
  %3461 = vst [vmem:[#allocation3 + $0x5e0] sm:$0xff] %v3453
  %3462 = vst [vmem:[#allocation3 + $0x5e8] sm:$0xff] %v3454
  %3463 = vst [vmem:[#allocation3 + $0x5f0] sm:$0xff] %v3455
  %3464 = vst [vmem:[#allocation3 + $0x5f8] sm:$0xff] %v3456
  %3465 = vrot.lane.b32.xlu0 %v2170, 94
  %v3466 = vpop.permute.xlu0 %3465
  %3467 = vrot.lane.b32.xlu0 %v2171, 94
  %v3468 = vpop.permute.xlu0 %3467
  %3469 = vrot.lane.b32.xlu0 %v2172, 94
  %v3470 = vpop.permute.xlu0 %3469
  %3471 = vrot.lane.b32.xlu0 %v2174, 94
  %v3472 = vpop.permute.xlu0 %3471
  %3473 = vrot.lane.b32.xlu0 %v2175, 94
  %v3474 = vpop.permute.xlu0 %3473
  %3475 = vrot.lane.b32.xlu0 %v2176, 94
  %v3476 = vpop.permute.xlu0 %3475
  %3477 = vrot.lane.b32.xlu0 %v2178, 94
  %v3478 = vpop.permute.xlu0 %3477
  %3479 = vrot.lane.b32.xlu0 %v2179, 94
  %v3480 = vpop.permute.xlu0 %3479
  %3481 = vrot.lane.b32.xlu0 %v2180, 94
  %v3482 = vpop.permute.xlu0 %3481
  %3483 = vrot.lane.b32.xlu0 %v2182, 94
  %v3484 = vpop.permute.xlu0 %3483
  %3485 = vrot.lane.b32.xlu0 %v2183, 94
  %v3486 = vpop.permute.xlu0 %3485
  %3487 = vrot.lane.b32.xlu0 %v2184, 94
  %v3488 = vpop.permute.xlu0 %3487
  %v3489 = vsel %vm1548, %v3466, %v3468
  %v3490 = vsel %vm1548, %v3468, %v3470
  %v3491 = vsel %vm1548, %v3472, %v3474
  %v3492 = vsel %vm1548, %v3474, %v3476
  %v3493 = vsel %vm1548, %v3478, %v3480
  %v3494 = vsel %vm1548, %v3480, %v3482
  %v3495 = vsel %vm1548, %v3484, %v3486
  %v3496 = vsel %vm1548, %v3486, %v3488
  %v3505 = vsel %vm451, %v3489, 0.0
  %v3506 = vsel %vm452, %v3490, 0.0
  %v3507 = vsel %vm451, %v3491, 0.0
  %v3508 = vsel %vm452, %v3492, 0.0
  %v3509 = vsel %vm451, %v3493, 0.0
  %v3510 = vsel %vm452, %v3494, 0.0
  %v3511 = vsel %vm451, %v3495, 0.0
  %v3512 = vsel %vm452, %v3496, 0.0
  %3513 = vst [vmem:[#allocation3 + $0x600] sm:$0xff] %v3505
  %3514 = vst [vmem:[#allocation3 + $0x608] sm:$0xff] %v3506
  %3515 = vst [vmem:[#allocation3 + $0x610] sm:$0xff] %v3507
  %3516 = vst [vmem:[#allocation3 + $0x618] sm:$0xff] %v3508
  %3517 = vst [vmem:[#allocation3 + $0x620] sm:$0xff] %v3509
  %3518 = vst [vmem:[#allocation3 + $0x628] sm:$0xff] %v3510
  %3519 = vst [vmem:[#allocation3 + $0x630] sm:$0xff] %v3511
  %3520 = vst [vmem:[#allocation3 + $0x638] sm:$0xff] %v3512
  %v3521 = vld [vmem:[#allocation3] sm:$0xff]
  %v3522 = vld [vmem:[#allocation3 + $0x8] sm:$0xff]
  %v3523 = vld [vmem:[#allocation3 + $0x10] sm:$0xff]
  %v3524 = vld [vmem:[#allocation3 + $0x18] sm:$0xff]
  %v3525 = vld [vmem:[#allocation3 + $0x20] sm:$0xff]
  %v3526 = vld [vmem:[#allocation3 + $0x28] sm:$0xff]
  %v3527 = vld [vmem:[#allocation3 + $0x30] sm:$0xff]
  %v3528 = vld [vmem:[#allocation3 + $0x38] sm:$0xff]
  %v3529 = vld [vmem:[#allocation3 + $0x40] sm:$0xff]
  %v3530 = vld [vmem:[#allocation3 + $0x48] sm:$0xff]
  %v3531 = vld [vmem:[#allocation3 + $0x50] sm:$0xff]
  %v3532 = vld [vmem:[#allocation3 + $0x58] sm:$0xff]
  %v3533 = vld [vmem:[#allocation3 + $0x60] sm:$0xff]
  %v3534 = vld [vmem:[#allocation3 + $0x68] sm:$0xff]
  %v3535 = vld [vmem:[#allocation3 + $0x70] sm:$0xff]
  %v3536 = vld [vmem:[#allocation3 + $0x78] sm:$0xff]
  %v3537 = vld [vmem:[#allocation3 + $0x80] sm:$0xff]
  %v3538 = vld [vmem:[#allocation3 + $0x88] sm:$0xff]
  %v3539 = vld [vmem:[#allocation3 + $0x90] sm:$0xff]
  %v3540 = vld [vmem:[#allocation3 + $0x98] sm:$0xff]
  %v3541 = vld [vmem:[#allocation3 + $0xa0] sm:$0xff]
  %v3542 = vld [vmem:[#allocation3 + $0xa8] sm:$0xff]
  %v3543 = vld [vmem:[#allocation3 + $0xb0] sm:$0xff]
  %v3544 = vld [vmem:[#allocation3 + $0xb8] sm:$0xff]
  %v3545 = vld [vmem:[#allocation3 + $0xc0] sm:$0xff]
  %v3546 = vld [vmem:[#allocation3 + $0xc8] sm:$0xff]
  %v3547 = vld [vmem:[#allocation3 + $0xd0] sm:$0xff]
  %v3548 = vld [vmem:[#allocation3 + $0xd8] sm:$0xff]
  %v3549 = vld [vmem:[#allocation3 + $0xe0] sm:$0xff]
  %v3550 = vld [vmem:[#allocation3 + $0xe8] sm:$0xff]
  %v3551 = vld [vmem:[#allocation3 + $0xf0] sm:$0xff]
  %v3552 = vld [vmem:[#allocation3 + $0xf8] sm:$0xff]
  %v3553 = vld [vmem:[#allocation3 + $0x100] sm:$0xff]
  %v3554 = vld [vmem:[#allocation3 + $0x108] sm:$0xff]
  %v3555 = vld [vmem:[#allocation3 + $0x110] sm:$0xff]
  %v3556 = vld [vmem:[#allocation3 + $0x118] sm:$0xff]
  %v3557 = vld [vmem:[#allocation3 + $0x120] sm:$0xff]
  %v3558 = vld [vmem:[#allocation3 + $0x128] sm:$0xff]
  %v3559 = vld [vmem:[#allocation3 + $0x130] sm:$0xff]
  %v3560 = vld [vmem:[#allocation3 + $0x138] sm:$0xff]
  %v3561 = vld [vmem:[#allocation3 + $0x140] sm:$0xff]
  %v3562 = vld [vmem:[#allocation3 + $0x148] sm:$0xff]
  %v3563 = vld [vmem:[#allocation3 + $0x150] sm:$0xff]
  %v3564 = vld [vmem:[#allocation3 + $0x158] sm:$0xff]
  %v3565 = vld [vmem:[#allocation3 + $0x160] sm:$0xff]
  %v3566 = vld [vmem:[#allocation3 + $0x168] sm:$0xff]
  %v3567 = vld [vmem:[#allocation3 + $0x170] sm:$0xff]
  %v3568 = vld [vmem:[#allocation3 + $0x178] sm:$0xff]
  %v3569 = vld [vmem:[#allocation3 + $0x180] sm:$0xff]
  %v3570 = vld [vmem:[#allocation3 + $0x188] sm:$0xff]
  %v3571 = vld [vmem:[#allocation3 + $0x190] sm:$0xff]
  %v3572 = vld [vmem:[#allocation3 + $0x198] sm:$0xff]
  %v3573 = vld [vmem:[#allocation3 + $0x1a0] sm:$0xff]
  %v3574 = vld [vmem:[#allocation3 + $0x1a8] sm:$0xff]
  %v3575 = vld [vmem:[#allocation3 + $0x1b0] sm:$0xff]
  %v3576 = vld [vmem:[#allocation3 + $0x1b8] sm:$0xff]
  %v3577 = vld [vmem:[#allocation3 + $0x1c0] sm:$0xff]
  %v3578 = vld [vmem:[#allocation3 + $0x1c8] sm:$0xff]
  %v3579 = vld [vmem:[#allocation3 + $0x1d0] sm:$0xff]
  %v3580 = vld [vmem:[#allocation3 + $0x1d8] sm:$0xff]
  %v3581 = vld [vmem:[#allocation3 + $0x1e0] sm:$0xff]
  %v3582 = vld [vmem:[#allocation3 + $0x1e8] sm:$0xff]
  %v3583 = vld [vmem:[#allocation3 + $0x1f0] sm:$0xff]
  %v3584 = vld [vmem:[#allocation3 + $0x1f8] sm:$0xff]
  %v3585 = vld [vmem:[#allocation3 + $0x200] sm:$0xff]
  %v3586 = vld [vmem:[#allocation3 + $0x208] sm:$0xff]
  %v3587 = vld [vmem:[#allocation3 + $0x210] sm:$0xff]
  %v3588 = vld [vmem:[#allocation3 + $0x218] sm:$0xff]
  %v3589 = vld [vmem:[#allocation3 + $0x220] sm:$0xff]
  %v3590 = vld [vmem:[#allocation3 + $0x228] sm:$0xff]
  %v3591 = vld [vmem:[#allocation3 + $0x230] sm:$0xff]
  %v3592 = vld [vmem:[#allocation3 + $0x238] sm:$0xff]
  %v3593 = vld [vmem:[#allocation3 + $0x240] sm:$0xff]
  %v3594 = vld [vmem:[#allocation3 + $0x248] sm:$0xff]
  %v3595 = vld [vmem:[#allocation3 + $0x250] sm:$0xff]
  %v3596 = vld [vmem:[#allocation3 + $0x258] sm:$0xff]
  %v3597 = vld [vmem:[#allocation3 + $0x260] sm:$0xff]
  %v3598 = vld [vmem:[#allocation3 + $0x268] sm:$0xff]
  %v3599 = vld [vmem:[#allocation3 + $0x270] sm:$0xff]
  %v3600 = vld [vmem:[#allocation3 + $0x278] sm:$0xff]
  %v3601 = vld [vmem:[#allocation3 + $0x280] sm:$0xff]
  %v3602 = vld [vmem:[#allocation3 + $0x288] sm:$0xff]
  %v3603 = vld [vmem:[#allocation3 + $0x290] sm:$0xff]
  %v3604 = vld [vmem:[#allocation3 + $0x298] sm:$0xff]
  %v3605 = vld [vmem:[#allocation3 + $0x2a0] sm:$0xff]
  %v3606 = vld [vmem:[#allocation3 + $0x2a8] sm:$0xff]
  %v3607 = vld [vmem:[#allocation3 + $0x2b0] sm:$0xff]
  %v3608 = vld [vmem:[#allocation3 + $0x2b8] sm:$0xff]
  %v3609 = vld [vmem:[#allocation3 + $0x2c0] sm:$0xff]
  %v3610 = vld [vmem:[#allocation3 + $0x2c8] sm:$0xff]
  %v3611 = vld [vmem:[#allocation3 + $0x2d0] sm:$0xff]
  %v3612 = vld [vmem:[#allocation3 + $0x2d8] sm:$0xff]
  %v3613 = vld [vmem:[#allocation3 + $0x2e0] sm:$0xff]
  %v3614 = vld [vmem:[#allocation3 + $0x2e8] sm:$0xff]
  %v3615 = vld [vmem:[#allocation3 + $0x2f0] sm:$0xff]
  %v3616 = vld [vmem:[#allocation3 + $0x2f8] sm:$0xff]
  %v3617 = vld [vmem:[#allocation3 + $0x300] sm:$0xff]
  %v3618 = vld [vmem:[#allocation3 + $0x308] sm:$0xff]
  %v3619 = vld [vmem:[#allocation3 + $0x310] sm:$0xff]
  %v3620 = vld [vmem:[#allocation3 + $0x318] sm:$0xff]
  %v3621 = vld [vmem:[#allocation3 + $0x320] sm:$0xff]
  %v3622 = vld [vmem:[#allocation3 + $0x328] sm:$0xff]
  %v3623 = vld [vmem:[#allocation3 + $0x330] sm:$0xff]
  %v3624 = vld [vmem:[#allocation3 + $0x338] sm:$0xff]
  %v3625 = vld [vmem:[#allocation3 + $0x340] sm:$0xff]
  %v3626 = vld [vmem:[#allocation3 + $0x348] sm:$0xff]
  %v3627 = vld [vmem:[#allocation3 + $0x350] sm:$0xff]
  %v3628 = vld [vmem:[#allocation3 + $0x358] sm:$0xff]
  %v3629 = vld [vmem:[#allocation3 + $0x360] sm:$0xff]
  %v3630 = vld [vmem:[#allocation3 + $0x368] sm:$0xff]
  %v3631 = vld [vmem:[#allocation3 + $0x370] sm:$0xff]
  %v3632 = vld [vmem:[#allocation3 + $0x378] sm:$0xff]
  %v3633 = vld [vmem:[#allocation3 + $0x380] sm:$0xff]
  %v3634 = vld [vmem:[#allocation3 + $0x388] sm:$0xff]
  %v3635 = vld [vmem:[#allocation3 + $0x390] sm:$0xff]
  %v3636 = vld [vmem:[#allocation3 + $0x398] sm:$0xff]
  %v3637 = vld [vmem:[#allocation3 + $0x3a0] sm:$0xff]
  %v3638 = vld [vmem:[#allocation3 + $0x3a8] sm:$0xff]
  %v3639 = vld [vmem:[#allocation3 + $0x3b0] sm:$0xff]
  %v3640 = vld [vmem:[#allocation3 + $0x3b8] sm:$0xff]
  %v3641 = vld [vmem:[#allocation3 + $0x3c0] sm:$0xff]
  %v3642 = vld [vmem:[#allocation3 + $0x3c8] sm:$0xff]
  %v3643 = vld [vmem:[#allocation3 + $0x3d0] sm:$0xff]
  %v3644 = vld [vmem:[#allocation3 + $0x3d8] sm:$0xff]
  %v3645 = vld [vmem:[#allocation3 + $0x3e0] sm:$0xff]
  %v3646 = vld [vmem:[#allocation3 + $0x3e8] sm:$0xff]
  %v3647 = vld [vmem:[#allocation3 + $0x3f0] sm:$0xff]
  %v3648 = vld [vmem:[#allocation3 + $0x3f8] sm:$0xff]
  %v3649 = vld [vmem:[#allocation3 + $0x400] sm:$0xff]
  %v3650 = vld [vmem:[#allocation3 + $0x408] sm:$0xff]
  %v3651 = vld [vmem:[#allocation3 + $0x410] sm:$0xff]
  %v3652 = vld [vmem:[#allocation3 + $0x418] sm:$0xff]
  %v3653 = vld [vmem:[#allocation3 + $0x420] sm:$0xff]
  %v3654 = vld [vmem:[#allocation3 + $0x428] sm:$0xff]
  %v3655 = vld [vmem:[#allocation3 + $0x430] sm:$0xff]
  %v3656 = vld [vmem:[#allocation3 + $0x438] sm:$0xff]
  %v3657 = vld [vmem:[#allocation3 + $0x440] sm:$0xff]
  %v3658 = vld [vmem:[#allocation3 + $0x448] sm:$0xff]
  %v3659 = vld [vmem:[#allocation3 + $0x450] sm:$0xff]
  %v3660 = vld [vmem:[#allocation3 + $0x458] sm:$0xff]
  %v3661 = vld [vmem:[#allocation3 + $0x460] sm:$0xff]
  %v3662 = vld [vmem:[#allocation3 + $0x468] sm:$0xff]
  %v3663 = vld [vmem:[#allocation3 + $0x470] sm:$0xff]
  %v3664 = vld [vmem:[#allocation3 + $0x478] sm:$0xff]
  %v3665 = vld [vmem:[#allocation3 + $0x480] sm:$0xff]
  %v3666 = vld [vmem:[#allocation3 + $0x488] sm:$0xff]
  %v3667 = vld [vmem:[#allocation3 + $0x490] sm:$0xff]
  %v3668 = vld [vmem:[#allocation3 + $0x498] sm:$0xff]
  %v3669 = vld [vmem:[#allocation3 + $0x4a0] sm:$0xff]
  %v3670 = vld [vmem:[#allocation3 + $0x4a8] sm:$0xff]
  %v3671 = vld [vmem:[#allocation3 + $0x4b0] sm:$0xff]
  %v3672 = vld [vmem:[#allocation3 + $0x4b8] sm:$0xff]
  %v3673 = vld [vmem:[#allocation3 + $0x4c0] sm:$0xff]
  %v3674 = vld [vmem:[#allocation3 + $0x4c8] sm:$0xff]
  %v3675 = vld [vmem:[#allocation3 + $0x4d0] sm:$0xff]
  %v3676 = vld [vmem:[#allocation3 + $0x4d8] sm:$0xff]
  %v3677 = vld [vmem:[#allocation3 + $0x4e0] sm:$0xff]
  %v3678 = vld [vmem:[#allocation3 + $0x4e8] sm:$0xff]
  %v3679 = vld [vmem:[#allocation3 + $0x4f0] sm:$0xff]
  %v3680 = vld [vmem:[#allocation3 + $0x4f8] sm:$0xff]
  %v3681 = vld [vmem:[#allocation3 + $0x500] sm:$0xff]
  %v3682 = vld [vmem:[#allocation3 + $0x508] sm:$0xff]
  %v3683 = vld [vmem:[#allocation3 + $0x510] sm:$0xff]
  %v3684 = vld [vmem:[#allocation3 + $0x518] sm:$0xff]
  %v3685 = vld [vmem:[#allocation3 + $0x520] sm:$0xff]
  %v3686 = vld [vmem:[#allocation3 + $0x528] sm:$0xff]
  %v3687 = vld [vmem:[#allocation3 + $0x530] sm:$0xff]
  %v3688 = vld [vmem:[#allocation3 + $0x538] sm:$0xff]
  %v3689 = vld [vmem:[#allocation3 + $0x540] sm:$0xff]
  %v3690 = vld [vmem:[#allocation3 + $0x548] sm:$0xff]
  %v3691 = vld [vmem:[#allocation3 + $0x550] sm:$0xff]
  %v3692 = vld [vmem:[#allocation3 + $0x558] sm:$0xff]
  %v3693 = vld [vmem:[#allocation3 + $0x560] sm:$0xff]
  %v3694 = vld [vmem:[#allocation3 + $0x568] sm:$0xff]
  %v3695 = vld [vmem:[#allocation3 + $0x570] sm:$0xff]
  %v3696 = vld [vmem:[#allocation3 + $0x578] sm:$0xff]
  %v3697 = vld [vmem:[#allocation3 + $0x580] sm:$0xff]
  %v3698 = vld [vmem:[#allocation3 + $0x588] sm:$0xff]
  %v3699 = vld [vmem:[#allocation3 + $0x590] sm:$0xff]
  %v3700 = vld [vmem:[#allocation3 + $0x598] sm:$0xff]
  %v3701 = vld [vmem:[#allocation3 + $0x5a0] sm:$0xff]
  %v3702 = vld [vmem:[#allocation3 + $0x5a8] sm:$0xff]
  %v3703 = vld [vmem:[#allocation3 + $0x5b0] sm:$0xff]
  %v3704 = vld [vmem:[#allocation3 + $0x5b8] sm:$0xff]
  %v3705 = vld [vmem:[#allocation3 + $0x5c0] sm:$0xff]
  %v3706 = vld [vmem:[#allocation3 + $0x5c8] sm:$0xff]
  %v3707 = vld [vmem:[#allocation3 + $0x5d0] sm:$0xff]
  %v3708 = vld [vmem:[#allocation3 + $0x5d8] sm:$0xff]
  %v3709 = vld [vmem:[#allocation3 + $0x5e0] sm:$0xff]
  %v3710 = vld [vmem:[#allocation3 + $0x5e8] sm:$0xff]
  %v3711 = vld [vmem:[#allocation3 + $0x5f0] sm:$0xff]
  %v3712 = vld [vmem:[#allocation3 + $0x5f8] sm:$0xff]
  %v3713 = vld [vmem:[#allocation3 + $0x600] sm:$0xff]
  %v3714 = vld [vmem:[#allocation3 + $0x608] sm:$0xff]
  %v3715 = vld [vmem:[#allocation3 + $0x610] sm:$0xff]
  %v3716 = vld [vmem:[#allocation3 + $0x618] sm:$0xff]
  %v3717 = vld [vmem:[#allocation3 + $0x620] sm:$0xff]
  %v3718 = vld [vmem:[#allocation3 + $0x628] sm:$0xff]
  %v3719 = vld [vmem:[#allocation3 + $0x630] sm:$0xff]
  %v3720 = vld [vmem:[#allocation3 + $0x638] sm:$0xff]
  %3721 = vmatprep.subr.mxu0 %v3552
  %3722 = vmatpush1.msra.mxu0 %v3551
  %3723 = vmatprep.subr.mxu0 %v3550
  %3724 = vmatpush1.msra.mxu0 %v3549
  %3725 = vmatprep.subr.mxu0 %v3548
  %3726 = vmatpush1.msra.mxu0 %v3547
  %3727 = vmatprep.subr.mxu0 %v3546
  %3728 = vmatpush1.msra.mxu0 %v3545
  %3729 = vmatprep.subr.mxu0 %v3544
  %3730 = vmatpush1.msra.mxu0 %v3543
  %3731 = vmatprep.subr.mxu0 %v3542
  %3732 = vmatpush1.msra.mxu0 %v3541
  %3733 = vmatprep.subr.mxu0 %v3540
  %3734 = vmatpush1.msra.mxu0 %v3539
  %3735 = vmatprep.subr.mxu0 %v3538
  %3736 = vmatpush1.msra.mxu0 %v3537
  %3737 = vmatprep.subr.mxu0 %v3536
  %3738 = vmatpush1.msra.mxu0 %v3535
  %3739 = vmatprep.subr.mxu0 %v3534
  %3740 = vmatpush1.msra.mxu0 %v3533
  %3741 = vmatprep.subr.mxu0 %v3532
  %3742 = vmatpush1.msra.mxu0 %v3531
  %3743 = vmatprep.subr.mxu0 %v3530
  %3744 = vmatpush1.msra.mxu0 %v3529
  %3745 = vmatprep.subr.mxu0 %v3528
  %3746 = vmatpush1.msra.mxu0 %v3527
  %3747 = vmatprep.subr.mxu0 %v3526
  %3748 = vmatpush1.msra.mxu0 %v3525
  %3749 = vmatprep.subr.mxu0 %v3524
  %3750 = vmatpush1.msra.mxu0 %v3523
  %3751 = vmatprep.subr.mxu0 %v3522
  %3752 = vmatpush1.msra.mxu0 %v3521
  %3753 = vmatprep.subr.mxu0 %v3584
  %3754 = vmatpush2.msra.mxu0 %v3583
  %3755 = vmatprep.subr.mxu0 %v3582
  %3756 = vmatpush2.msra.mxu0 %v3581
  %3757 = vmatprep.subr.mxu0 %v3580
  %3758 = vmatpush2.msra.mxu0 %v3579
  %3759 = vmatprep.subr.mxu0 %v3578
  %3760 = vmatpush2.msra.mxu0 %v3577
  %3761 = vmatprep.subr.mxu0 %v3576
  %3762 = vmatpush2.msra.mxu0 %v3575
  %3763 = vmatprep.subr.mxu0 %v3574
  %3764 = vmatpush2.msra.mxu0 %v3573
  %3765 = vmatprep.subr.mxu0 %v3572
  %3766 = vmatpush2.msra.mxu0 %v3571
  %3767 = vmatprep.subr.mxu0 %v3570
  %3768 = vmatpush2.msra.mxu0 %v3569
  %3769 = vmatprep.subr.mxu0 %v3568
  %3770 = vmatpush2.msra.mxu0 %v3567
  %3771 = vmatprep.subr.mxu0 %v3566
  %3772 = vmatpush2.msra.mxu0 %v3565
  %3773 = vmatprep.subr.mxu0 %v3564
  %3774 = vmatpush2.msra.mxu0 %v3563
  %3775 = vmatprep.subr.mxu0 %v3562
  %3776 = vmatpush2.msra.mxu0 %v3561
  %3777 = vmatprep.subr.mxu0 %v3560
  %3778 = vmatpush2.msra.mxu0 %v3559
  %3779 = vmatprep.subr.mxu0 %v3558
  %3780 = vmatpush2.msra.mxu0 %v3557
  %3781 = vmatprep.subr.mxu0 %v3556
  %3782 = vmatpush2.msra.mxu0 %v3555
  %3783 = vmatprep.subr.mxu0 %v3554
  %3784 = vmatpush2.msra.mxu0 %v3553
  %3785 = vmatprep.mubr.f32.mxu0 %v126
  %3786 = vmatmul.mubr.f32.gmra.mxu0 %v125
  %v3787 = vpop.f32.mrf.mxu0
  %v3788 = vadd.f32 %v1784, %v3787
  %v3789 = vpop.f32.mrf.mxu0
  %v3790 = vadd.f32 %v1784, %v3789
  %3791 = vmatprep.mubr.f32.mxu0 %v133
  %3792 = vmatmul.mubr.f32.gmra.mxu0 %v132
  %v3793 = vpop.f32.mrf.mxu0
  %v3794 = vadd.f32 %v1789, %v3793
  %v3795 = vpop.f32.mrf.mxu0
  %v3796 = vadd.f32 %v1789, %v3795
  %3797 = vmatprep.mubr.f32.mxu0 %v140
  %3798 = vmatmul.mubr.f32.gmra.mxu0 %v139
  %v3799 = vpop.f32.mrf.mxu0
  %v3800 = vadd.f32 %v1794, %v3799
  %v3801 = vpop.f32.mrf.mxu0
  %v3802 = vadd.f32 %v1794, %v3801
  %3803 = vmatprep.mubr.f32.mxu0 %v147
  %3804 = vmatmul.mubr.f32.gmra.mxu0 %v146
  %v3805 = vpop.f32.mrf.mxu0
  %v3806 = vadd.f32 %v1799, %v3805
  %v3807 = vpop.f32.mrf.mxu0
  %v3808 = vadd.f32 %v1799, %v3807
  %3809 = vdwg.mxu0
  %3810 = vmatprep.subr.mxu0 %v3616
  %3811 = vmatpush1.msra.mxu0 %v3615
  %3812 = vmatprep.subr.mxu0 %v3614
  %3813 = vmatpush1.msra.mxu0 %v3613
  %3814 = vmatprep.subr.mxu0 %v3612
  %3815 = vmatpush1.msra.mxu0 %v3611
  %3816 = vmatprep.subr.mxu0 %v3610
  %3817 = vmatpush1.msra.mxu0 %v3609
  %3818 = vmatprep.subr.mxu0 %v3608
  %3819 = vmatpush1.msra.mxu0 %v3607
  %3820 = vmatprep.subr.mxu0 %v3606
  %3821 = vmatpush1.msra.mxu0 %v3605
  %3822 = vmatprep.subr.mxu0 %v3604
  %3823 = vmatpush1.msra.mxu0 %v3603
  %3824 = vmatprep.subr.mxu0 %v3602
  %3825 = vmatpush1.msra.mxu0 %v3601
  %3826 = vmatprep.subr.mxu0 %v3600
  %3827 = vmatpush1.msra.mxu0 %v3599
  %3828 = vmatprep.subr.mxu0 %v3598
  %3829 = vmatpush1.msra.mxu0 %v3597
  %3830 = vmatprep.subr.mxu0 %v3596
  %3831 = vmatpush1.msra.mxu0 %v3595
  %3832 = vmatprep.subr.mxu0 %v3594
  %3833 = vmatpush1.msra.mxu0 %v3593
  %3834 = vmatprep.subr.mxu0 %v3592
  %3835 = vmatpush1.msra.mxu0 %v3591
  %3836 = vmatprep.subr.mxu0 %v3590
  %3837 = vmatpush1.msra.mxu0 %v3589
  %3838 = vmatprep.subr.mxu0 %v3588
  %3839 = vmatpush1.msra.mxu0 %v3587
  %3840 = vmatprep.subr.mxu0 %v3586
  %3841 = vmatpush1.msra.mxu0 %v3585
  %3842 = vmatprep.subr.mxu0 %v3648
  %3843 = vmatpush2.msra.mxu0 %v3647
  %3844 = vmatprep.subr.mxu0 %v3646
  %3845 = vmatpush2.msra.mxu0 %v3645
  %3846 = vmatprep.subr.mxu0 %v3644
  %3847 = vmatpush2.msra.mxu0 %v3643
  %3848 = vmatprep.subr.mxu0 %v3642
  %3849 = vmatpush2.msra.mxu0 %v3641
  %3850 = vmatprep.subr.mxu0 %v3640
  %3851 = vmatpush2.msra.mxu0 %v3639
  %3852 = vmatprep.subr.mxu0 %v3638
  %3853 = vmatpush2.msra.mxu0 %v3637
  %3854 = vmatprep.subr.mxu0 %v3636
  %3855 = vmatpush2.msra.mxu0 %v3635
  %3856 = vmatprep.subr.mxu0 %v3634
  %3857 = vmatpush2.msra.mxu0 %v3633
  %3858 = vmatprep.subr.mxu0 %v3632
  %3859 = vmatpush2.msra.mxu0 %v3631
  %3860 = vmatprep.subr.mxu0 %v3630
  %3861 = vmatpush2.msra.mxu0 %v3629
  %3862 = vmatprep.subr.mxu0 %v3628
  %3863 = vmatpush2.msra.mxu0 %v3627
  %3864 = vmatprep.subr.mxu0 %v3626
  %3865 = vmatpush2.msra.mxu0 %v3625
  %3866 = vmatprep.subr.mxu0 %v3624
  %3867 = vmatpush2.msra.mxu0 %v3623
  %3868 = vmatprep.subr.mxu0 %v3622
  %3869 = vmatpush2.msra.mxu0 %v3621
  %3870 = vmatprep.subr.mxu0 %v3620
  %3871 = vmatpush2.msra.mxu0 %v3619
  %3872 = vmatprep.subr.mxu0 %v3618
  %3873 = vmatpush2.msra.mxu0 %v3617
  %3874 = vmatprep.mubr.f32.mxu0 %v128
  %3875 = vmatmul.mubr.f32.gmra.mxu0 %v127
  %v3876 = vpop.f32.mrf.mxu0
  %v3877 = vadd.f32 %v3788, %v3876
  %v3878 = vpop.f32.mrf.mxu0
  %v3879 = vadd.f32 %v3790, %v3878
  %3880 = vmatprep.mubr.f32.mxu0 %v135
  %3881 = vmatmul.mubr.f32.gmra.mxu0 %v134
  %v3882 = vpop.f32.mrf.mxu0
  %v3883 = vadd.f32 %v3794, %v3882
  %v3884 = vpop.f32.mrf.mxu0
  %v3885 = vadd.f32 %v3796, %v3884
  %3886 = vmatprep.mubr.f32.mxu0 %v142
  %3887 = vmatmul.mubr.f32.gmra.mxu0 %v141
  %v3888 = vpop.f32.mrf.mxu0
  %v3889 = vadd.f32 %v3800, %v3888
  %v3890 = vpop.f32.mrf.mxu0
  %v3891 = vadd.f32 %v3802, %v3890
  %3892 = vmatprep.mubr.f32.mxu0 %v149
  %3893 = vmatmul.mubr.f32.gmra.mxu0 %v148
  %v3894 = vpop.f32.mrf.mxu0
  %v3895 = vadd.f32 %v3806, %v3894
  %v3896 = vpop.f32.mrf.mxu0
  %v3897 = vadd.f32 %v3808, %v3896
  %3898 = vdwg.mxu0
  %3899 = vmatprep.subr.mxu0 %v3680
  %3900 = vmatpush1.msra.mxu0 %v3679
  %3901 = vmatprep.subr.mxu0 %v3678
  %3902 = vmatpush1.msra.mxu0 %v3677
  %3903 = vmatprep.subr.mxu0 %v3676
  %3904 = vmatpush1.msra.mxu0 %v3675
  %3905 = vmatprep.subr.mxu0 %v3674
  %3906 = vmatpush1.msra.mxu0 %v3673
  %3907 = vmatprep.subr.mxu0 %v3672
  %3908 = vmatpush1.msra.mxu0 %v3671
  %3909 = vmatprep.subr.mxu0 %v3670
  %3910 = vmatpush1.msra.mxu0 %v3669
  %3911 = vmatprep.subr.mxu0 %v3668
  %3912 = vmatpush1.msra.mxu0 %v3667
  %3913 = vmatprep.subr.mxu0 %v3666
  %3914 = vmatpush1.msra.mxu0 %v3665
  %3915 = vmatprep.subr.mxu0 %v3664
  %3916 = vmatpush1.msra.mxu0 %v3663
  %3917 = vmatprep.subr.mxu0 %v3662
  %3918 = vmatpush1.msra.mxu0 %v3661
  %3919 = vmatprep.subr.mxu0 %v3660
  %3920 = vmatpush1.msra.mxu0 %v3659
  %3921 = vmatprep.subr.mxu0 %v3658
  %3922 = vmatpush1.msra.mxu0 %v3657
  %3923 = vmatprep.subr.mxu0 %v3656
  %3924 = vmatpush1.msra.mxu0 %v3655
  %3925 = vmatprep.subr.mxu0 %v3654
  %3926 = vmatpush1.msra.mxu0 %v3653
  %3927 = vmatprep.subr.mxu0 %v3652
  %3928 = vmatpush1.msra.mxu0 %v3651
  %3929 = vmatprep.subr.mxu0 %v3650
  %3930 = vmatpush1.msra.mxu0 %v3649
  %3931 = vmatprep.subr.mxu0 %v3712
  %3932 = vmatpush2.msra.mxu0 %v3711
  %3933 = vmatprep.subr.mxu0 %v3710
  %3934 = vmatpush2.msra.mxu0 %v3709
  %3935 = vmatprep.subr.mxu0 %v3708
  %3936 = vmatpush2.msra.mxu0 %v3707
  %3937 = vmatprep.subr.mxu0 %v3706
  %3938 = vmatpush2.msra.mxu0 %v3705
  %3939 = vmatprep.subr.mxu0 %v3704
  %3940 = vmatpush2.msra.mxu0 %v3703
  %3941 = vmatprep.subr.mxu0 %v3702
  %3942 = vmatpush2.msra.mxu0 %v3701
  %3943 = vmatprep.subr.mxu0 %v3700
  %3944 = vmatpush2.msra.mxu0 %v3699
  %3945 = vmatprep.subr.mxu0 %v3698
  %3946 = vmatpush2.msra.mxu0 %v3697
  %3947 = vmatprep.subr.mxu0 %v3696
  %3948 = vmatpush2.msra.mxu0 %v3695
  %3949 = vmatprep.subr.mxu0 %v3694
  %3950 = vmatpush2.msra.mxu0 %v3693
  %3951 = vmatprep.subr.mxu0 %v3692
  %3952 = vmatpush2.msra.mxu0 %v3691
  %3953 = vmatprep.subr.mxu0 %v3690
  %3954 = vmatpush2.msra.mxu0 %v3689
  %3955 = vmatprep.subr.mxu0 %v3688
  %3956 = vmatpush2.msra.mxu0 %v3687
  %3957 = vmatprep.subr.mxu0 %v3686
  %3958 = vmatpush2.msra.mxu0 %v3685
  %3959 = vmatprep.subr.mxu0 %v3684
  %3960 = vmatpush2.msra.mxu0 %v3683
  %3961 = vmatprep.subr.mxu0 %v3682
  %3962 = vmatpush2.msra.mxu0 %v3681
  %3963 = vmatprep.mubr.f32.mxu0 %v130
  %3964 = vmatmul.mubr.f32.gmra.mxu0 %v129
  %v3965 = vpop.f32.mrf.mxu0
  %v3966 = vadd.f32 %v3877, %v3965
  %v3967 = vpop.f32.mrf.mxu0
  %v3968 = vadd.f32 %v3879, %v3967
  %3969 = vmatprep.mubr.f32.mxu0 %v137
  %3970 = vmatmul.mubr.f32.gmra.mxu0 %v136
  %v3971 = vpop.f32.mrf.mxu0
  %v3972 = vadd.f32 %v3883, %v3971
  %v3973 = vpop.f32.mrf.mxu0
  %v3974 = vadd.f32 %v3885, %v3973
  %3975 = vmatprep.mubr.f32.mxu0 %v144
  %3976 = vmatmul.mubr.f32.gmra.mxu0 %v143
  %v3977 = vpop.f32.mrf.mxu0
  %v3978 = vadd.f32 %v3889, %v3977
  %v3979 = vpop.f32.mrf.mxu0
  %v3980 = vadd.f32 %v3891, %v3979
  %3981 = vmatprep.mubr.f32.mxu0 %v151
  %3982 = vmatmul.mubr.f32.gmra.mxu0 %v150
  %v3983 = vpop.f32.mrf.mxu0
  %v3984 = vadd.f32 %v3895, %v3983
  %v3985 = vpop.f32.mrf.mxu0
  %v3986 = vadd.f32 %v3897, %v3985
  %3987 = vdwg.mxu0
  %3988 = vmatprep.subr.mxu0 0.0
  %3989 = vmatpush1.msra.mxu0 0.0
  %3990 = vmatprep.subr.mxu0 0.0
  %3991 = vmatpush1.msra.mxu0 0.0
  %3992 = vmatprep.subr.mxu0 0.0
  %3993 = vmatpush1.msra.mxu0 0.0
  %3994 = vmatprep.subr.mxu0 0.0
  %3995 = vmatpush1.msra.mxu0 0.0
  %3996 = vmatprep.subr.mxu0 0.0
  %3997 = vmatpush1.msra.mxu0 0.0
  %3998 = vmatprep.subr.mxu0 0.0
  %3999 = vmatpush1.msra.mxu0 0.0
  %4000 = vmatprep.subr.mxu0 0.0
  %4001 = vmatpush1.msra.mxu0 0.0
  %4002 = vmatprep.subr.mxu0 0.0
  %4003 = vmatpush1.msra.mxu0 0.0
  %4004 = vmatprep.subr.mxu0 0.0
  %4005 = vmatpush1.msra.mxu0 0.0
  %4006 = vmatprep.subr.mxu0 0.0
  %4007 = vmatpush1.msra.mxu0 0.0
  %4008 = vmatprep.subr.mxu0 0.0
  %4009 = vmatpush1.msra.mxu0 0.0
  %4010 = vmatprep.subr.mxu0 0.0
  %4011 = vmatpush1.msra.mxu0 0.0
  %4012 = vmatprep.subr.mxu0 %v3720
  %4013 = vmatpush1.msra.mxu0 %v3719
  %4014 = vmatprep.subr.mxu0 %v3718
  %4015 = vmatpush1.msra.mxu0 %v3717
  %4016 = vmatprep.subr.mxu0 %v3716
  %4017 = vmatpush1.msra.mxu0 %v3715
  %4018 = vmatprep.subr.mxu0 %v3714
  %4019 = vmatpush1.msra.mxu0 %v3713
  %4020 = vmatprep.subr.mxu0 0.0
  %4021 = vmatpush2.msra.mxu0 0.0
  %4022 = vmatprep.subr.mxu0 0.0
  %4023 = vmatpush2.msra.mxu0 0.0
  %4024 = vmatprep.subr.mxu0 0.0
  %4025 = vmatpush2.msra.mxu0 0.0
  %4026 = vmatprep.subr.mxu0 0.0
  %4027 = vmatpush2.msra.mxu0 0.0
  %4028 = vmatprep.subr.mxu0 0.0
  %4029 = vmatpush2.msra.mxu0 0.0
  %4030 = vmatprep.subr.mxu0 0.0
  %4031 = vmatpush2.msra.mxu0 0.0
  %4032 = vmatprep.subr.mxu0 0.0
  %4033 = vmatpush2.msra.mxu0 0.0
  %4034 = vmatprep.subr.mxu0 0.0
  %4035 = vmatpush2.msra.mxu0 0.0
  %4036 = vmatprep.subr.mxu0 0.0
  %4037 = vmatpush2.msra.mxu0 0.0
  %4038 = vmatprep.subr.mxu0 0.0
  %4039 = vmatpush2.msra.mxu0 0.0
  %4040 = vmatprep.subr.mxu0 0.0
  %4041 = vmatpush2.msra.mxu0 0.0
  %4042 = vmatprep.subr.mxu0 0.0
  %4043 = vmatpush2.msra.mxu0 0.0
  %4044 = vmatprep.subr.mxu0 0.0
  %4045 = vmatpush2.msra.mxu0 0.0
  %4046 = vmatprep.subr.mxu0 0.0
  %4047 = vmatpush2.msra.mxu0 0.0
  %4048 = vmatprep.subr.mxu0 0.0
  %4049 = vmatpush2.msra.mxu0 0.0
  %4050 = vmatprep.subr.mxu0 0.0
  %4051 = vmatpush2.msra.mxu0 0.0
  %4052 = vmatprep.mubr.f32.mxu0 0.0
  %4053 = vmatmul.mubr.f32.gmra.mxu0 %v1802
  %v4054 = vpop.f32.mrf.mxu0
  %v4055 = vadd.f32 %v3966, %v4054
  %v4056 = vpop.f32.mrf.mxu0
  %v4057 = vadd.f32 %v3968, %v4056
  %4058 = vmatprep.mubr.f32.mxu0 0.0
  %4059 = vmatmul.mubr.f32.gmra.mxu0 %v1805
  %v4060 = vpop.f32.mrf.mxu0
  %v4061 = vadd.f32 %v3972, %v4060
  %v4062 = vpop.f32.mrf.mxu0
  %v4063 = vadd.f32 %v3974, %v4062
  %4064 = vmatprep.mubr.f32.mxu0 0.0
  %4065 = vmatmul.mubr.f32.gmra.mxu0 %v1808
  %v4066 = vpop.f32.mrf.mxu0
  %v4067 = vadd.f32 %v3978, %v4066
  %v4068 = vpop.f32.mrf.mxu0
  %v4069 = vadd.f32 %v3980, %v4068
  %4070 = vmatprep.mubr.f32.mxu0 0.0
  %4071 = vmatmul.mubr.f32.gmra.mxu0 %v1811
  %v4072 = vpop.f32.mrf.mxu0
  %v4073 = vadd.f32 %v3984, %v4072
  %v4074 = vpop.f32.mrf.mxu0
  %v4075 = vadd.f32 %v3986, %v4074
  %4076 = vdwg.mxu0
  %v4077 = vadd.f32 %v2147, %v2149
  %4078 = vadd.xlane.f32.xlu0 %v4077
  %v4079 = vpop.xlane.xlu0 %4078
  %v4080 = vadd.f32 %v2153, %v2155
  %4081 = vadd.xlane.f32.xlu0 %v4080
  %v4082 = vpop.xlane.xlu0 %4081
  %v4083 = vadd.f32 %v2159, %v2161
  %4084 = vadd.xlane.f32.xlu0 %v4083
  %v4085 = vpop.xlane.xlu0 %4084
  %v4086 = vadd.f32 %v2165, %v2167
  %4087 = vadd.xlane.f32.xlu0 %v4086
  %v4088 = vpop.xlane.xlu0 %4087
  %v4089 = vadd.f32 %v4079, 0.0
  %v4090 = vadd.f32 %v4082, 0.0
  %v4091 = vadd.f32 %v4085, 0.0
  %v4092 = vadd.f32 %v4088, 0.0
  %v4093 = vadd.f32 %v4055, %v4057
  %4094 = vadd.xlane.f32.xlu0 %v4093
  %v4095 = vpop.xlane.xlu0 %4094
  %v4096 = vadd.f32 %v4061, %v4063
  %4097 = vadd.xlane.f32.xlu0 %v4096
  %v4098 = vpop.xlane.xlu0 %4097
  %v4099 = vadd.f32 %v4067, %v4069
  %4100 = vadd.xlane.f32.xlu0 %v4099
  %v4101 = vpop.xlane.xlu0 %4100
  %v4102 = vadd.f32 %v4073, %v4075
  %4103 = vadd.xlane.f32.xlu0 %v4102
  %v4104 = vpop.xlane.xlu0 %4103
  %v4105 = vadd.f32 %v4089, %v4095
  %v4106 = vadd.f32 %v4090, %v4098
  %v4107 = vadd.f32 %v4091, %v4101
  %v4108 = vadd.f32 %v4092, %v4104
  %v4109 = vmul.f32 %v2147, %v2147
  %v4110 = vmul.f32 %v2149, %v2149
  %v4111 = vmul.f32 %v2153, %v2153
  %v4112 = vmul.f32 %v2155, %v2155
  %v4113 = vmul.f32 %v2159, %v2159
  %v4114 = vmul.f32 %v2161, %v2161
  %v4115 = vmul.f32 %v2165, %v2165
  %v4116 = vmul.f32 %v2167, %v2167
  %v4117 = vadd.f32 %v4109, %v4110
  %4118 = vadd.xlane.f32.xlu0 %v4117
  %v4119 = vpop.xlane.xlu0 %4118
  %v4120 = vadd.f32 %v4111, %v4112
  %4121 = vadd.xlane.f32.xlu0 %v4120
  %v4122 = vpop.xlane.xlu0 %4121
  %v4123 = vadd.f32 %v4113, %v4114
  %4124 = vadd.xlane.f32.xlu0 %v4123
  %v4125 = vpop.xlane.xlu0 %4124
  %v4126 = vadd.f32 %v4115, %v4116
  %4127 = vadd.xlane.f32.xlu0 %v4126
  %v4128 = vpop.xlane.xlu0 %4127
  %v4129 = vadd.f32 %v4119, 0.0
  %v4130 = vadd.f32 %v4122, 0.0
  %v4131 = vadd.f32 %v4125, 0.0
  %v4132 = vadd.f32 %v4128, 0.0
  %v4133 = vmul.f32 %v4055, %v4055
  %v4134 = vmul.f32 %v4057, %v4057
  %v4135 = vmul.f32 %v4061, %v4061
  %v4136 = vmul.f32 %v4063, %v4063
  %v4137 = vmul.f32 %v4067, %v4067
  %v4138 = vmul.f32 %v4069, %v4069
  %v4139 = vmul.f32 %v4073, %v4073
  %v4140 = vmul.f32 %v4075, %v4075
  %v4141 = vadd.f32 %v4133, %v4134
  %4142 = vadd.xlane.f32.xlu0 %v4141
  %v4143 = vpop.xlane.xlu0 %4142
  %v4144 = vadd.f32 %v4135, %v4136
  %4145 = vadd.xlane.f32.xlu0 %v4144
  %v4146 = vpop.xlane.xlu0 %4145
  %v4147 = vadd.f32 %v4137, %v4138
  %4148 = vadd.xlane.f32.xlu0 %v4147
  %v4149 = vpop.xlane.xlu0 %4148
  %v4150 = vadd.f32 %v4139, %v4140
  %4151 = vadd.xlane.f32.xlu0 %v4150
  %v4152 = vpop.xlane.xlu0 %4151
  %v4153 = vadd.f32 %v4129, %v4143
  %v4154 = vadd.f32 %v4130, %v4146
  %v4155 = vadd.f32 %v4131, %v4149
  %v4156 = vadd.f32 %v4132, %v4152
  %v4157 = vmul.f32 %v4105, 0.001953125
  %v4158 = vmul.f32 %v4106, 0.001953125
  %v4159 = vmul.f32 %v4107, 0.001953125
  %v4160 = vmul.f32 %v4108, 0.001953125
  %v4161 = vmul.f32 %v4153, 0.001953125
  %v4162 = vmul.f32 %v4154, 0.001953125
  %v4163 = vmul.f32 %v4155, 0.001953125
  %v4164 = vmul.f32 %v4156, 0.001953125
  %v4165 = vmul.f32 %v4157, %v4157
  %v4166 = vmul.f32 %v4158, %v4158
  %v4167 = vmul.f32 %v4159, %v4159
  %v4168 = vmul.f32 %v4160, %v4160
  %v4169 = vsub.f32 %v4161, %v4165
  %v4170 = vsub.f32 %v4162, %v4166
  %v4171 = vsub.f32 %v4163, %v4167
  %v4172 = vsub.f32 %v4164, %v4168
  %v4173 = vld [vmem:[%s3] sm:$0xff]
  %v4174 = vld [vmem:[%s3 + $0x8] sm:$0xff]
  %v4175 = vld [vmem:[%s3 + $0x10] sm:$0xff]
  %v4176 = vld [vmem:[%s3 + $0x18] sm:$0xff]
  %v4177 = vadd.f32 %v4169, 1e-05
  %v4178 = vadd.f32 %v4170, 1e-05
  %v4179 = vadd.f32 %v4171, 1e-05
  %v4180 = vadd.f32 %v4172, 1e-05
  %v4181 = vrsqrt.pop %v4177
  %v4182 = vrsqrt.pop %v4178
  %v4183 = vrsqrt.pop %v4179
  %v4184 = vrsqrt.pop %v4180
  %v4185 = vmul.f32 %v4173, %v4181
  %v4186 = vmul.f32 %v4174, %v4182
  %v4187 = vmul.f32 %v4175, %v4183
  %v4188 = vmul.f32 %v4176, %v4184
  %v4189 = vld [vmem:[%s4] sm:$0xff]
  %v4190 = vld [vmem:[%s4 + $0x8] sm:$0xff]
  %v4191 = vld [vmem:[%s4 + $0x10] sm:$0xff]
  %v4192 = vld [vmem:[%s4 + $0x18] sm:$0xff]
  %v4193 = vmul.f32 %v4157, %v4185
  %v4194 = vmul.f32 %v4158, %v4186
  %v4195 = vmul.f32 %v4159, %v4187
  %v4196 = vmul.f32 %v4160, %v4188
  %v4197 = vsub.f32 %v4189, %v4193
  %v4198 = vsub.f32 %v4190, %v4194
  %v4199 = vsub.f32 %v4191, %v4195
  %v4200 = vsub.f32 %v4192, %v4196
  %4202 = vset.pattern.permute.xlu0 0
  %4203 = vperm.xlu0 %4202, %v4185
  %v4204 = vpop.permute.xlu0 %4203
  %4207 = vset.pattern.permute.xlu0 0
  %4208 = vperm.xlu0 %4207, %v4186
  %v4209 = vpop.permute.xlu0 %4208
  %4212 = vset.pattern.permute.xlu0 0
  %4213 = vperm.xlu0 %4212, %v4187
  %v4214 = vpop.permute.xlu0 %4213
  %4217 = vset.pattern.permute.xlu0 0
  %4218 = vperm.xlu0 %4217, %v4188
  %v4219 = vpop.permute.xlu0 %4218
  %v4221 = vmul.f32 %v2147, %v4204
  %v4222 = vmul.f32 %v2149, %v4204
  %v4223 = vmul.f32 %v2153, %v4209
  %v4224 = vmul.f32 %v2155, %v4209
  %v4225 = vmul.f32 %v2159, %v4214
  %v4226 = vmul.f32 %v2161, %v4214
  %v4227 = vmul.f32 %v2165, %v4219
  %v4228 = vmul.f32 %v2167, %v4219
  %4230 = vset.pattern.permute.xlu0 0
  %4231 = vperm.xlu0 %4230, %v4197
  %v4232 = vpop.permute.xlu0 %4231
  %4235 = vset.pattern.permute.xlu0 0
  %4236 = vperm.xlu0 %4235, %v4198
  %v4237 = vpop.permute.xlu0 %4236
  %4240 = vset.pattern.permute.xlu0 0
  %4241 = vperm.xlu0 %4240, %v4199
  %v4242 = vpop.permute.xlu0 %4241
  %4245 = vset.pattern.permute.xlu0 0
  %4246 = vperm.xlu0 %4245, %v4200
  %v4247 = vpop.permute.xlu0 %4246
  %v4249 = vadd.f32 %v4221, %v4232
  %v4250 = vadd.f32 %v4222, %v4232
  %v4251 = vadd.f32 %v4223, %v4237
  %v4252 = vadd.f32 %v4224, %v4237
  %v4253 = vadd.f32 %v4225, %v4242
  %v4254 = vadd.f32 %v4226, %v4242
  %v4255 = vadd.f32 %v4227, %v4247
  %v4256 = vadd.f32 %v4228, %v4247
  %v4257 = vmul.f32 %v4055, %v4204
  %v4258 = vmul.f32 %v4057, %v4204
  %v4259 = vmul.f32 %v4061, %v4209
  %v4260 = vmul.f32 %v4063, %v4209
  %v4261 = vmul.f32 %v4067, %v4214
  %v4262 = vmul.f32 %v4069, %v4214
  %v4263 = vmul.f32 %v4073, %v4219
  %v4264 = vmul.f32 %v4075, %v4219
  %v4265 = vadd.f32 %v4257, %v4232
  %v4266 = vadd.f32 %v4258, %v4232
  %v4267 = vadd.f32 %v4259, %v4237
  %v4268 = vadd.f32 %v4260, %v4237
  %v4269 = vadd.f32 %v4261, %v4242
  %v4270 = vadd.f32 %v4262, %v4242
  %v4271 = vadd.f32 %v4263, %v4247
  %v4272 = vadd.f32 %v4264, %v4247
  %v4273 = vmax.f32 %v4249, 0.0
  %v4274 = vmax.f32 %v4250, 0.0
  %v4275 = vmax.f32 %v4251, 0.0
  %v4276 = vmax.f32 %v4252, 0.0
  %v4277 = vmax.f32 %v4253, 0.0
  %v4278 = vmax.f32 %v4254, 0.0
  %v4279 = vmax.f32 %v4255, 0.0
  %v4280 = vmax.f32 %v4256, 0.0
  %v4281 = vmax.f32 %v4265, 0.0
  %v4282 = vmax.f32 %v4266, 0.0
  %v4283 = vmax.f32 %v4267, 0.0
  %v4284 = vmax.f32 %v4268, 0.0
  %v4285 = vmax.f32 %v4269, 0.0
  %v4286 = vmax.f32 %v4270, 0.0
  %v4287 = vmax.f32 %v4271, 0.0
  %v4288 = vmax.f32 %v4272, 0.0
  %4289 = vst [vmem:[#allocation2 + $0x8] sm:$0xff] %v4273
  %4290 = vst [vmem:[#allocation2 + $0x10] sm:$0xff] %v4274
  %4291 = vst [vmem:[#allocation2 + $0x28] sm:$0xff] %v4275
  %4292 = vst [vmem:[#allocation2 + $0x30] sm:$0xff] %v4276
  %4293 = vst [vmem:[#allocation2 + $0x48] sm:$0xff] %v4277
  %4294 = vst [vmem:[#allocation2 + $0x50] sm:$0xff] %v4278
  %4295 = vst [vmem:[#allocation2 + $0x68] sm:$0xff] %v4279
  %4296 = vst [vmem:[#allocation2 + $0x70] sm:$0xff] %v4280
  %4297 = vst [vmem:[%s116 + $0x8] sm:$0xff] %v4281
  %4298 = vst [vmem:[%s116 + $0x10] sm:$0xff] %v4282
  %4299 = vst [vmem:[%s116 + $0x28] sm:$0xff] %v4283
  %4300 = vst [vmem:[%s116 + $0x30] sm:$0xff] %v4284
  %4301 = vst [vmem:[%s116 + $0x48] sm:$0xff] %v4285
  %4302 = vst [vmem:[%s116 + $0x50] sm:$0xff] %v4286
  %4303 = vst [vmem:[%s116 + $0x68] sm:$0xff] %v4287
  %4304 = vst [vmem:[%s116 + $0x70] sm:$0xff] %v4288
  %v4305 = vld [vmem:[%s5] sm:$0xff]
  %v4306 = vld [vmem:[%s5 + $0x8] sm:$0xff]
  %v4307 = vld [vmem:[%s5 + $0x10] sm:$0xff]
  %v4308 = vld [vmem:[%s5 + $0x18] sm:$0xff]
  %v4309 = vld [vmem:[%s5 + $0x20] sm:$0xff]
  %v4310 = vld [vmem:[%s5 + $0x28] sm:$0xff]
  %v4311 = vld [vmem:[%s5 + $0x30] sm:$0xff]
  %v4312 = vld [vmem:[%s5 + $0x38] sm:$0xff]
  %v4313 = vld [vmem:[%s5 + $0x40] sm:$0xff]
  %v4314 = vld [vmem:[%s5 + $0x48] sm:$0xff]
  %v4315 = vld [vmem:[%s5 + $0x50] sm:$0xff]
  %v4316 = vld [vmem:[%s5 + $0x58] sm:$0xff]
  %v4317 = vld [vmem:[%s5 + $0x60] sm:$0xff]
  %v4318 = vld [vmem:[%s5 + $0x68] sm:$0xff]
  %v4319 = vld [vmem:[%s5 + $0x70] sm:$0xff]
  %v4320 = vld [vmem:[%s5 + $0x78] sm:$0xff]
  %v4321 = vld [vmem:[%s5 + $0x80] sm:$0xff]
  %v4322 = vld [vmem:[%s5 + $0x88] sm:$0xff]
  %v4323 = vld [vmem:[%s5 + $0x90] sm:$0xff]
  %v4324 = vld [vmem:[%s5 + $0x98] sm:$0xff]
  %v4325 = vld [vmem:[%s5 + $0xa0] sm:$0xff]
  %v4326 = vld [vmem:[%s5 + $0xa8] sm:$0xff]
  %v4327 = vld [vmem:[%s5 + $0xb0] sm:$0xff]
  %v4328 = vld [vmem:[%s5 + $0xb8] sm:$0xff]
  %v4329 = vld [vmem:[%s5 + $0xc0] sm:$0xff]
  %v4330 = vld [vmem:[%s5 + $0xc8] sm:$0xff]
  %v4331 = vld [vmem:[%s5 + $0xd0] sm:$0xff]
  %v4332 = vld [vmem:[%s5 + $0xd8] sm:$0xff]
  %v4333 = vld [vmem:[%s6] sm:$0xff]
  %v4334 = vld [vmem:[%s6 + $0x8] sm:$0xff]
  %v4335 = vld [vmem:[%s6 + $0x10] sm:$0xff]
  %v4336 = vld [vmem:[%s6 + $0x18] sm:$0xff]
  %v4337 = vld [vmem:[#allocation2] sm:$0xff]
  %v4338 = vld [vmem:[#allocation2 + $0x8] sm:$0xff]
  %v4339 = vld [vmem:[#allocation2 + $0x10] sm:$0xff]
  %v4340 = vld [vmem:[#allocation2 + $0x18] sm:$0xff]
  %v4341 = vld [vmem:[#allocation2 + $0x20] sm:$0xff]
  %v4342 = vld [vmem:[#allocation2 + $0x28] sm:$0xff]
  %v4343 = vld [vmem:[#allocation2 + $0x30] sm:$0xff]
  %v4344 = vld [vmem:[#allocation2 + $0x38] sm:$0xff]
  %v4345 = vld [vmem:[#allocation2 + $0x40] sm:$0xff]
  %v4346 = vld [vmem:[#allocation2 + $0x48] sm:$0xff]
  %v4347 = vld [vmem:[#allocation2 + $0x50] sm:$0xff]
  %v4348 = vld [vmem:[#allocation2 + $0x58] sm:$0xff]
  %v4349 = vld [vmem:[#allocation2 + $0x60] sm:$0xff]
  %v4350 = vld [vmem:[#allocation2 + $0x68] sm:$0xff]
  %v4351 = vld [vmem:[#allocation2 + $0x70] sm:$0xff]
  %v4352 = vld [vmem:[#allocation2 + $0x78] sm:$0xff]
  %4365 = vrot.lane.b32.xlu0 %v4337, 34
  %v4366 = vpop.permute.xlu0 %4365
  %4367 = vrot.lane.b32.xlu0 %v4338, 34
  %v4368 = vpop.permute.xlu0 %4367
  %4369 = vrot.lane.b32.xlu0 %v4339, 34
  %v4370 = vpop.permute.xlu0 %4369
  %4371 = vrot.lane.b32.xlu0 %v4341, 34
  %v4372 = vpop.permute.xlu0 %4371
  %4373 = vrot.lane.b32.xlu0 %v4342, 34
  %v4374 = vpop.permute.xlu0 %4373
  %4375 = vrot.lane.b32.xlu0 %v4343, 34
  %v4376 = vpop.permute.xlu0 %4375
  %4377 = vrot.lane.b32.xlu0 %v4345, 34
  %v4378 = vpop.permute.xlu0 %4377
  %4379 = vrot.lane.b32.xlu0 %v4346, 34
  %v4380 = vpop.permute.xlu0 %4379
  %4381 = vrot.lane.b32.xlu0 %v4347, 34
  %v4382 = vpop.permute.xlu0 %4381
  %4383 = vrot.lane.b32.xlu0 %v4349, 34
  %v4384 = vpop.permute.xlu0 %4383
  %4385 = vrot.lane.b32.xlu0 %v4350, 34
  %v4386 = vpop.permute.xlu0 %4385
  %4387 = vrot.lane.b32.xlu0 %v4351, 34
  %v4388 = vpop.permute.xlu0 %4387
  %v4389 = vsel %vm221, %v4366, %v4368
  %v4390 = vsel %vm221, %v4368, %v4370
  %v4391 = vsel %vm221, %v4372, %v4374
  %v4392 = vsel %vm221, %v4374, %v4376
  %v4393 = vsel %vm221, %v4378, %v4380
  %v4394 = vsel %vm221, %v4380, %v4382
  %v4395 = vsel %vm221, %v4384, %v4386
  %v4396 = vsel %vm221, %v4386, %v4388
  %v4405 = vsel %vm183, %v4389, 0.0
  %v4406 = vsel %vm184, %v4390, 0.0
  %v4407 = vsel %vm183, %v4391, 0.0
  %v4408 = vsel %vm184, %v4392, 0.0
  %v4409 = vsel %vm183, %v4393, 0.0
  %v4410 = vsel %vm184, %v4394, 0.0
  %v4411 = vsel %vm183, %v4395, 0.0
  %v4412 = vsel %vm184, %v4396, 0.0
  %4413 = vst [vmem:[#allocation3] sm:$0xff] %v4405
  %4414 = vst [vmem:[#allocation3 + $0x8] sm:$0xff] %v4406
  %4415 = vst [vmem:[#allocation3 + $0x10] sm:$0xff] %v4407
  %4416 = vst [vmem:[#allocation3 + $0x18] sm:$0xff] %v4408
  %4417 = vst [vmem:[#allocation3 + $0x20] sm:$0xff] %v4409
  %4418 = vst [vmem:[#allocation3 + $0x28] sm:$0xff] %v4410
  %4419 = vst [vmem:[#allocation3 + $0x30] sm:$0xff] %v4411
  %4420 = vst [vmem:[#allocation3 + $0x38] sm:$0xff] %v4412
  %4421 = vrot.lane.b32.xlu0 %v4337, 33
  %v4422 = vpop.permute.xlu0 %4421
  %4423 = vrot.lane.b32.xlu0 %v4338, 33
  %v4424 = vpop.permute.xlu0 %4423
  %4425 = vrot.lane.b32.xlu0 %v4339, 33
  %v4426 = vpop.permute.xlu0 %4425
  %4427 = vrot.lane.b32.xlu0 %v4341, 33
  %v4428 = vpop.permute.xlu0 %4427
  %4429 = vrot.lane.b32.xlu0 %v4342, 33
  %v4430 = vpop.permute.xlu0 %4429
  %4431 = vrot.lane.b32.xlu0 %v4343, 33
  %v4432 = vpop.permute.xlu0 %4431
  %4433 = vrot.lane.b32.xlu0 %v4345, 33
  %v4434 = vpop.permute.xlu0 %4433
  %4435 = vrot.lane.b32.xlu0 %v4346, 33
  %v4436 = vpop.permute.xlu0 %4435
  %4437 = vrot.lane.b32.xlu0 %v4347, 33
  %v4438 = vpop.permute.xlu0 %4437
  %4439 = vrot.lane.b32.xlu0 %v4349, 33
  %v4440 = vpop.permute.xlu0 %4439
  %4441 = vrot.lane.b32.xlu0 %v4350, 33
  %v4442 = vpop.permute.xlu0 %4441
  %4443 = vrot.lane.b32.xlu0 %v4351, 33
  %v4444 = vpop.permute.xlu0 %4443
  %v4445 = vsel %vm290, %v4422, %v4424
  %v4446 = vsel %vm290, %v4424, %v4426
  %v4447 = vsel %vm290, %v4428, %v4430
  %v4448 = vsel %vm290, %v4430, %v4432
  %v4449 = vsel %vm290, %v4434, %v4436
  %v4450 = vsel %vm290, %v4436, %v4438
  %v4451 = vsel %vm290, %v4440, %v4442
  %v4452 = vsel %vm290, %v4442, %v4444
  %v4461 = vsel %vm264, %v4445, 0.0
  %v4462 = vsel %vm265, %v4446, 0.0
  %v4463 = vsel %vm264, %v4447, 0.0
  %v4464 = vsel %vm265, %v4448, 0.0
  %v4465 = vsel %vm264, %v4449, 0.0
  %v4466 = vsel %vm265, %v4450, 0.0
  %v4467 = vsel %vm264, %v4451, 0.0
  %v4468 = vsel %vm265, %v4452, 0.0
  %4469 = vst [vmem:[#allocation3 + $0x40] sm:$0xff] %v4461
  %4470 = vst [vmem:[#allocation3 + $0x48] sm:$0xff] %v4462
  %4471 = vst [vmem:[#allocation3 + $0x50] sm:$0xff] %v4463
  %4472 = vst [vmem:[#allocation3 + $0x58] sm:$0xff] %v4464
  %4473 = vst [vmem:[#allocation3 + $0x60] sm:$0xff] %v4465
  %4474 = vst [vmem:[#allocation3 + $0x68] sm:$0xff] %v4466
  %4475 = vst [vmem:[#allocation3 + $0x70] sm:$0xff] %v4467
  %4476 = vst [vmem:[#allocation3 + $0x78] sm:$0xff] %v4468
  %4477 = vrot.lane.b32.xlu0 %v4337, 32
  %v4478 = vpop.permute.xlu0 %4477
  %4479 = vrot.lane.b32.xlu0 %v4338, 32
  %v4480 = vpop.permute.xlu0 %4479
  %4481 = vrot.lane.b32.xlu0 %v4339, 32
  %v4482 = vpop.permute.xlu0 %4481
  %4483 = vrot.lane.b32.xlu0 %v4341, 32
  %v4484 = vpop.permute.xlu0 %4483
  %4485 = vrot.lane.b32.xlu0 %v4342, 32
  %v4486 = vpop.permute.xlu0 %4485
  %4487 = vrot.lane.b32.xlu0 %v4343, 32
  %v4488 = vpop.permute.xlu0 %4487
  %4489 = vrot.lane.b32.xlu0 %v4345, 32
  %v4490 = vpop.permute.xlu0 %4489
  %4491 = vrot.lane.b32.xlu0 %v4346, 32
  %v4492 = vpop.permute.xlu0 %4491
  %4493 = vrot.lane.b32.xlu0 %v4347, 32
  %v4494 = vpop.permute.xlu0 %4493
  %4495 = vrot.lane.b32.xlu0 %v4349, 32
  %v4496 = vpop.permute.xlu0 %4495
  %4497 = vrot.lane.b32.xlu0 %v4350, 32
  %v4498 = vpop.permute.xlu0 %4497
  %4499 = vrot.lane.b32.xlu0 %v4351, 32
  %v4500 = vpop.permute.xlu0 %4499
  %v4501 = vsel %vm347, %v4478, %v4480
  %v4502 = vsel %vm347, %v4480, %v4482
  %v4503 = vsel %vm347, %v4484, %v4486
  %v4504 = vsel %vm347, %v4486, %v4488
  %v4505 = vsel %vm347, %v4490, %v4492
  %v4506 = vsel %vm347, %v4492, %v4494
  %v4507 = vsel %vm347, %v4496, %v4498
  %v4508 = vsel %vm347, %v4498, %v4500
  %4517 = vst [vmem:[#allocation3 + $0x80] sm:$0xff] %v4501
  %4518 = vst [vmem:[#allocation3 + $0x88] sm:$0xff] %v4502
  %4519 = vst [vmem:[#allocation3 + $0x90] sm:$0xff] %v4503
  %4520 = vst [vmem:[#allocation3 + $0x98] sm:$0xff] %v4504
  %4521 = vst [vmem:[#allocation3 + $0xa0] sm:$0xff] %v4505
  %4522 = vst [vmem:[#allocation3 + $0xa8] sm:$0xff] %v4506
  %4523 = vst [vmem:[#allocation3 + $0xb0] sm:$0xff] %v4507
  %4524 = vst [vmem:[#allocation3 + $0xb8] sm:$0xff] %v4508
  %4525 = vrot.lane.b32.xlu0 %v4337, 31
  %v4526 = vpop.permute.xlu0 %4525
  %4527 = vrot.lane.b32.xlu0 %v4338, 31
  %v4528 = vpop.permute.xlu0 %4527
  %4529 = vrot.lane.b32.xlu0 %v4339, 31
  %v4530 = vpop.permute.xlu0 %4529
  %4531 = vrot.lane.b32.xlu0 %v4341, 31
  %v4532 = vpop.permute.xlu0 %4531
  %4533 = vrot.lane.b32.xlu0 %v4342, 31
  %v4534 = vpop.permute.xlu0 %4533
  %4535 = vrot.lane.b32.xlu0 %v4343, 31
  %v4536 = vpop.permute.xlu0 %4535
  %4537 = vrot.lane.b32.xlu0 %v4345, 31
  %v4538 = vpop.permute.xlu0 %4537
  %4539 = vrot.lane.b32.xlu0 %v4346, 31
  %v4540 = vpop.permute.xlu0 %4539
  %4541 = vrot.lane.b32.xlu0 %v4347, 31
  %v4542 = vpop.permute.xlu0 %4541
  %4543 = vrot.lane.b32.xlu0 %v4349, 31
  %v4544 = vpop.permute.xlu0 %4543
  %4545 = vrot.lane.b32.xlu0 %v4350, 31
  %v4546 = vpop.permute.xlu0 %4545
  %4547 = vrot.lane.b32.xlu0 %v4351, 31
  %v4548 = vpop.permute.xlu0 %4547
  %v4549 = vsel %vm408, %v4526, %v4528
  %v4550 = vsel %vm408, %v4528, %v4530
  %v4551 = vsel %vm408, %v4532, %v4534
  %v4552 = vsel %vm408, %v4534, %v4536
  %v4553 = vsel %vm408, %v4538, %v4540
  %v4554 = vsel %vm408, %v4540, %v4542
  %v4555 = vsel %vm408, %v4544, %v4546
  %v4556 = vsel %vm408, %v4546, %v4548
  %v4565 = vsel %vm382, %v4549, 0.0
  %v4566 = vsel %vm383, %v4550, 0.0
  %v4567 = vsel %vm382, %v4551, 0.0
  %v4568 = vsel %vm383, %v4552, 0.0
  %v4569 = vsel %vm382, %v4553, 0.0
  %v4570 = vsel %vm383, %v4554, 0.0
  %v4571 = vsel %vm382, %v4555, 0.0
  %v4572 = vsel %vm383, %v4556, 0.0
  %4573 = vst [vmem:[#allocation3 + $0xc0] sm:$0xff] %v4565
  %4574 = vst [vmem:[#allocation3 + $0xc8] sm:$0xff] %v4566
  %4575 = vst [vmem:[#allocation3 + $0xd0] sm:$0xff] %v4567
  %4576 = vst [vmem:[#allocation3 + $0xd8] sm:$0xff] %v4568
  %4577 = vst [vmem:[#allocation3 + $0xe0] sm:$0xff] %v4569
  %4578 = vst [vmem:[#allocation3 + $0xe8] sm:$0xff] %v4570
  %4579 = vst [vmem:[#allocation3 + $0xf0] sm:$0xff] %v4571
  %4580 = vst [vmem:[#allocation3 + $0xf8] sm:$0xff] %v4572
  %4581 = vrot.lane.b32.xlu0 %v4337, 30
  %v4582 = vpop.permute.xlu0 %4581
  %4583 = vrot.lane.b32.xlu0 %v4338, 30
  %v4584 = vpop.permute.xlu0 %4583
  %4585 = vrot.lane.b32.xlu0 %v4339, 30
  %v4586 = vpop.permute.xlu0 %4585
  %4587 = vrot.lane.b32.xlu0 %v4341, 30
  %v4588 = vpop.permute.xlu0 %4587
  %4589 = vrot.lane.b32.xlu0 %v4342, 30
  %v4590 = vpop.permute.xlu0 %4589
  %4591 = vrot.lane.b32.xlu0 %v4343, 30
  %v4592 = vpop.permute.xlu0 %4591
  %4593 = vrot.lane.b32.xlu0 %v4345, 30
  %v4594 = vpop.permute.xlu0 %4593
  %4595 = vrot.lane.b32.xlu0 %v4346, 30
  %v4596 = vpop.permute.xlu0 %4595
  %4597 = vrot.lane.b32.xlu0 %v4347, 30
  %v4598 = vpop.permute.xlu0 %4597
  %4599 = vrot.lane.b32.xlu0 %v4349, 30
  %v4600 = vpop.permute.xlu0 %4599
  %4601 = vrot.lane.b32.xlu0 %v4350, 30
  %v4602 = vpop.permute.xlu0 %4601
  %4603 = vrot.lane.b32.xlu0 %v4351, 30
  %v4604 = vpop.permute.xlu0 %4603
  %v4605 = vsel %vm477, %v4582, %v4584
  %v4606 = vsel %vm477, %v4584, %v4586
  %v4607 = vsel %vm477, %v4588, %v4590
  %v4608 = vsel %vm477, %v4590, %v4592
  %v4609 = vsel %vm477, %v4594, %v4596
  %v4610 = vsel %vm477, %v4596, %v4598
  %v4611 = vsel %vm477, %v4600, %v4602
  %v4612 = vsel %vm477, %v4602, %v4604
  %v4621 = vsel %vm451, %v4605, 0.0
  %v4622 = vsel %vm452, %v4606, 0.0
  %v4623 = vsel %vm451, %v4607, 0.0
  %v4624 = vsel %vm452, %v4608, 0.0
  %v4625 = vsel %vm451, %v4609, 0.0
  %v4626 = vsel %vm452, %v4610, 0.0
  %v4627 = vsel %vm451, %v4611, 0.0
  %v4628 = vsel %vm452, %v4612, 0.0
  %4629 = vst [vmem:[#allocation3 + $0x100] sm:$0xff] %v4621
  %4630 = vst [vmem:[#allocation3 + $0x108] sm:$0xff] %v4622
  %4631 = vst [vmem:[#allocation3 + $0x110] sm:$0xff] %v4623
  %4632 = vst [vmem:[#allocation3 + $0x118] sm:$0xff] %v4624
  %4633 = vst [vmem:[#allocation3 + $0x120] sm:$0xff] %v4625
  %4634 = vst [vmem:[#allocation3 + $0x128] sm:$0xff] %v4626
  %4635 = vst [vmem:[#allocation3 + $0x130] sm:$0xff] %v4627
  %4636 = vst [vmem:[#allocation3 + $0x138] sm:$0xff] %v4628
  %4637 = vrot.lane.b32.xlu0 %v4337, 18
  %v4638 = vpop.permute.xlu0 %4637
  %4639 = vrot.lane.b32.xlu0 %v4338, 18
  %v4640 = vpop.permute.xlu0 %4639
  %4641 = vrot.lane.b32.xlu0 %v4339, 18
  %v4642 = vpop.permute.xlu0 %4641
  %4643 = vrot.lane.b32.xlu0 %v4341, 18
  %v4644 = vpop.permute.xlu0 %4643
  %4645 = vrot.lane.b32.xlu0 %v4342, 18
  %v4646 = vpop.permute.xlu0 %4645
  %4647 = vrot.lane.b32.xlu0 %v4343, 18
  %v4648 = vpop.permute.xlu0 %4647
  %4649 = vrot.lane.b32.xlu0 %v4345, 18
  %v4650 = vpop.permute.xlu0 %4649
  %4651 = vrot.lane.b32.xlu0 %v4346, 18
  %v4652 = vpop.permute.xlu0 %4651
  %4653 = vrot.lane.b32.xlu0 %v4347, 18
  %v4654 = vpop.permute.xlu0 %4653
  %4655 = vrot.lane.b32.xlu0 %v4349, 18
  %v4656 = vpop.permute.xlu0 %4655
  %4657 = vrot.lane.b32.xlu0 %v4350, 18
  %v4658 = vpop.permute.xlu0 %4657
  %4659 = vrot.lane.b32.xlu0 %v4351, 18
  %v4660 = vpop.permute.xlu0 %4659
  %v4661 = vsel %vm534, %v4638, %v4640
  %v4662 = vsel %vm534, %v4640, %v4642
  %v4663 = vsel %vm534, %v4644, %v4646
  %v4664 = vsel %vm534, %v4646, %v4648
  %v4665 = vsel %vm534, %v4650, %v4652
  %v4666 = vsel %vm534, %v4652, %v4654
  %v4667 = vsel %vm534, %v4656, %v4658
  %v4668 = vsel %vm534, %v4658, %v4660
  %v4677 = vsel %vm183, %v4661, 0.0
  %v4678 = vsel %vm184, %v4662, 0.0
  %v4679 = vsel %vm183, %v4663, 0.0
  %v4680 = vsel %vm184, %v4664, 0.0
  %v4681 = vsel %vm183, %v4665, 0.0
  %v4682 = vsel %vm184, %v4666, 0.0
  %v4683 = vsel %vm183, %v4667, 0.0
  %v4684 = vsel %vm184, %v4668, 0.0
  %4685 = vst [vmem:[#allocation3 + $0x140] sm:$0xff] %v4677
  %4686 = vst [vmem:[#allocation3 + $0x148] sm:$0xff] %v4678
  %4687 = vst [vmem:[#allocation3 + $0x150] sm:$0xff] %v4679
  %4688 = vst [vmem:[#allocation3 + $0x158] sm:$0xff] %v4680
  %4689 = vst [vmem:[#allocation3 + $0x160] sm:$0xff] %v4681
  %4690 = vst [vmem:[#allocation3 + $0x168] sm:$0xff] %v4682
  %4691 = vst [vmem:[#allocation3 + $0x170] sm:$0xff] %v4683
  %4692 = vst [vmem:[#allocation3 + $0x178] sm:$0xff] %v4684
  %4693 = vrot.lane.b32.xlu0 %v4337, 17
  %v4694 = vpop.permute.xlu0 %4693
  %4695 = vrot.lane.b32.xlu0 %v4338, 17
  %v4696 = vpop.permute.xlu0 %4695
  %4697 = vrot.lane.b32.xlu0 %v4339, 17
  %v4698 = vpop.permute.xlu0 %4697
  %4699 = vrot.lane.b32.xlu0 %v4341, 17
  %v4700 = vpop.permute.xlu0 %4699
  %4701 = vrot.lane.b32.xlu0 %v4342, 17
  %v4702 = vpop.permute.xlu0 %4701
  %4703 = vrot.lane.b32.xlu0 %v4343, 17
  %v4704 = vpop.permute.xlu0 %4703
  %4705 = vrot.lane.b32.xlu0 %v4345, 17
  %v4706 = vpop.permute.xlu0 %4705
  %4707 = vrot.lane.b32.xlu0 %v4346, 17
  %v4708 = vpop.permute.xlu0 %4707
  %4709 = vrot.lane.b32.xlu0 %v4347, 17
  %v4710 = vpop.permute.xlu0 %4709
  %4711 = vrot.lane.b32.xlu0 %v4349, 17
  %v4712 = vpop.permute.xlu0 %4711
  %4713 = vrot.lane.b32.xlu0 %v4350, 17
  %v4714 = vpop.permute.xlu0 %4713
  %4715 = vrot.lane.b32.xlu0 %v4351, 17
  %v4716 = vpop.permute.xlu0 %4715
  %v4717 = vsel %vm591, %v4694, %v4696
  %v4718 = vsel %vm591, %v4696, %v4698
  %v4719 = vsel %vm591, %v4700, %v4702
  %v4720 = vsel %vm591, %v4702, %v4704
  %v4721 = vsel %vm591, %v4706, %v4708
  %v4722 = vsel %vm591, %v4708, %v4710
  %v4723 = vsel %vm591, %v4712, %v4714
  %v4724 = vsel %vm591, %v4714, %v4716
  %v4733 = vsel %vm264, %v4717, 0.0
  %v4734 = vsel %vm265, %v4718, 0.0
  %v4735 = vsel %vm264, %v4719, 0.0
  %v4736 = vsel %vm265, %v4720, 0.0
  %v4737 = vsel %vm264, %v4721, 0.0
  %v4738 = vsel %vm265, %v4722, 0.0
  %v4739 = vsel %vm264, %v4723, 0.0
  %v4740 = vsel %vm265, %v4724, 0.0
  %4741 = vst [vmem:[#allocation3 + $0x180] sm:$0xff] %v4733
  %4742 = vst [vmem:[#allocation3 + $0x188] sm:$0xff] %v4734
  %4743 = vst [vmem:[#allocation3 + $0x190] sm:$0xff] %v4735
  %4744 = vst [vmem:[#allocation3 + $0x198] sm:$0xff] %v4736
  %4745 = vst [vmem:[#allocation3 + $0x1a0] sm:$0xff] %v4737
  %4746 = vst [vmem:[#allocation3 + $0x1a8] sm:$0xff] %v4738
  %4747 = vst [vmem:[#allocation3 + $0x1b0] sm:$0xff] %v4739
  %4748 = vst [vmem:[#allocation3 + $0x1b8] sm:$0xff] %v4740
  %4749 = vrot.lane.b32.xlu0 %v4337, 16
  %v4750 = vpop.permute.xlu0 %4749
  %4751 = vrot.lane.b32.xlu0 %v4338, 16
  %v4752 = vpop.permute.xlu0 %4751
  %4753 = vrot.lane.b32.xlu0 %v4339, 16
  %v4754 = vpop.permute.xlu0 %4753
  %4755 = vrot.lane.b32.xlu0 %v4341, 16
  %v4756 = vpop.permute.xlu0 %4755
  %4757 = vrot.lane.b32.xlu0 %v4342, 16
  %v4758 = vpop.permute.xlu0 %4757
  %4759 = vrot.lane.b32.xlu0 %v4343, 16
  %v4760 = vpop.permute.xlu0 %4759
  %4761 = vrot.lane.b32.xlu0 %v4345, 16
  %v4762 = vpop.permute.xlu0 %4761
  %4763 = vrot.lane.b32.xlu0 %v4346, 16
  %v4764 = vpop.permute.xlu0 %4763
  %4765 = vrot.lane.b32.xlu0 %v4347, 16
  %v4766 = vpop.permute.xlu0 %4765
  %4767 = vrot.lane.b32.xlu0 %v4349, 16
  %v4768 = vpop.permute.xlu0 %4767
  %4769 = vrot.lane.b32.xlu0 %v4350, 16
  %v4770 = vpop.permute.xlu0 %4769
  %4771 = vrot.lane.b32.xlu0 %v4351, 16
  %v4772 = vpop.permute.xlu0 %4771
  %v4773 = vsel %vm648, %v4750, %v4752
  %v4774 = vsel %vm648, %v4752, %v4754
  %v4775 = vsel %vm648, %v4756, %v4758
  %v4776 = vsel %vm648, %v4758, %v4760
  %v4777 = vsel %vm648, %v4762, %v4764
  %v4778 = vsel %vm648, %v4764, %v4766
  %v4779 = vsel %vm648, %v4768, %v4770
  %v4780 = vsel %vm648, %v4770, %v4772
  %4789 = vst [vmem:[#allocation3 + $0x1c0] sm:$0xff] %v4773
  %4790 = vst [vmem:[#allocation3 + $0x1c8] sm:$0xff] %v4774
  %4791 = vst [vmem:[#allocation3 + $0x1d0] sm:$0xff] %v4775
  %4792 = vst [vmem:[#allocation3 + $0x1d8] sm:$0xff] %v4776
  %4793 = vst [vmem:[#allocation3 + $0x1e0] sm:$0xff] %v4777
  %4794 = vst [vmem:[#allocation3 + $0x1e8] sm:$0xff] %v4778
  %4795 = vst [vmem:[#allocation3 + $0x1f0] sm:$0xff] %v4779
  %4796 = vst [vmem:[#allocation3 + $0x1f8] sm:$0xff] %v4780
  %4797 = vrot.lane.b32.xlu0 %v4337, 15
  %v4798 = vpop.permute.xlu0 %4797
  %4799 = vrot.lane.b32.xlu0 %v4338, 15
  %v4800 = vpop.permute.xlu0 %4799
  %4801 = vrot.lane.b32.xlu0 %v4339, 15
  %v4802 = vpop.permute.xlu0 %4801
  %4803 = vrot.lane.b32.xlu0 %v4341, 15
  %v4804 = vpop.permute.xlu0 %4803
  %4805 = vrot.lane.b32.xlu0 %v4342, 15
  %v4806 = vpop.permute.xlu0 %4805
  %4807 = vrot.lane.b32.xlu0 %v4343, 15
  %v4808 = vpop.permute.xlu0 %4807
  %4809 = vrot.lane.b32.xlu0 %v4345, 15
  %v4810 = vpop.permute.xlu0 %4809
  %4811 = vrot.lane.b32.xlu0 %v4346, 15
  %v4812 = vpop.permute.xlu0 %4811
  %4813 = vrot.lane.b32.xlu0 %v4347, 15
  %v4814 = vpop.permute.xlu0 %4813
  %4815 = vrot.lane.b32.xlu0 %v4349, 15
  %v4816 = vpop.permute.xlu0 %4815
  %4817 = vrot.lane.b32.xlu0 %v4350, 15
  %v4818 = vpop.permute.xlu0 %4817
  %4819 = vrot.lane.b32.xlu0 %v4351, 15
  %v4820 = vpop.permute.xlu0 %4819
  %v4821 = vsel %vm697, %v4798, %v4800
  %v4822 = vsel %vm697, %v4800, %v4802
  %v4823 = vsel %vm697, %v4804, %v4806
  %v4824 = vsel %vm697, %v4806, %v4808
  %v4825 = vsel %vm697, %v4810, %v4812
  %v4826 = vsel %vm697, %v4812, %v4814
  %v4827 = vsel %vm697, %v4816, %v4818
  %v4828 = vsel %vm697, %v4818, %v4820
  %v4837 = vsel %vm382, %v4821, 0.0
  %v4838 = vsel %vm383, %v4822, 0.0
  %v4839 = vsel %vm382, %v4823, 0.0
  %v4840 = vsel %vm383, %v4824, 0.0
  %v4841 = vsel %vm382, %v4825, 0.0
  %v4842 = vsel %vm383, %v4826, 0.0
  %v4843 = vsel %vm382, %v4827, 0.0
  %v4844 = vsel %vm383, %v4828, 0.0
  %4845 = vst [vmem:[#allocation3 + $0x200] sm:$0xff] %v4837
  %4846 = vst [vmem:[#allocation3 + $0x208] sm:$0xff] %v4838
  %4847 = vst [vmem:[#allocation3 + $0x210] sm:$0xff] %v4839
  %4848 = vst [vmem:[#allocation3 + $0x218] sm:$0xff] %v4840
  %4849 = vst [vmem:[#allocation3 + $0x220] sm:$0xff] %v4841
  %4850 = vst [vmem:[#allocation3 + $0x228] sm:$0xff] %v4842
  %4851 = vst [vmem:[#allocation3 + $0x230] sm:$0xff] %v4843
  %4852 = vst [vmem:[#allocation3 + $0x238] sm:$0xff] %v4844
  %4853 = vrot.lane.b32.xlu0 %v4337, 14
  %v4854 = vpop.permute.xlu0 %4853
  %4855 = vrot.lane.b32.xlu0 %v4338, 14
  %v4856 = vpop.permute.xlu0 %4855
  %4857 = vrot.lane.b32.xlu0 %v4339, 14
  %v4858 = vpop.permute.xlu0 %4857
  %4859 = vrot.lane.b32.xlu0 %v4341, 14
  %v4860 = vpop.permute.xlu0 %4859
  %4861 = vrot.lane.b32.xlu0 %v4342, 14
  %v4862 = vpop.permute.xlu0 %4861
  %4863 = vrot.lane.b32.xlu0 %v4343, 14
  %v4864 = vpop.permute.xlu0 %4863
  %4865 = vrot.lane.b32.xlu0 %v4345, 14
  %v4866 = vpop.permute.xlu0 %4865
  %4867 = vrot.lane.b32.xlu0 %v4346, 14
  %v4868 = vpop.permute.xlu0 %4867
  %4869 = vrot.lane.b32.xlu0 %v4347, 14
  %v4870 = vpop.permute.xlu0 %4869
  %4871 = vrot.lane.b32.xlu0 %v4349, 14
  %v4872 = vpop.permute.xlu0 %4871
  %4873 = vrot.lane.b32.xlu0 %v4350, 14
  %v4874 = vpop.permute.xlu0 %4873
  %4875 = vrot.lane.b32.xlu0 %v4351, 14
  %v4876 = vpop.permute.xlu0 %4875
  %v4877 = vsel %vm754, %v4854, %v4856
  %v4878 = vsel %vm754, %v4856, %v4858
  %v4879 = vsel %vm754, %v4860, %v4862
  %v4880 = vsel %vm754, %v4862, %v4864
  %v4881 = vsel %vm754, %v4866, %v4868
  %v4882 = vsel %vm754, %v4868, %v4870
  %v4883 = vsel %vm754, %v4872, %v4874
  %v4884 = vsel %vm754, %v4874, %v4876
  %v4893 = vsel %vm451, %v4877, 0.0
  %v4894 = vsel %vm452, %v4878, 0.0
  %v4895 = vsel %vm451, %v4879, 0.0
  %v4896 = vsel %vm452, %v4880, 0.0
  %v4897 = vsel %vm451, %v4881, 0.0
  %v4898 = vsel %vm452, %v4882, 0.0
  %v4899 = vsel %vm451, %v4883, 0.0
  %v4900 = vsel %vm452, %v4884, 0.0
  %4901 = vst [vmem:[#allocation3 + $0x240] sm:$0xff] %v4893
  %4902 = vst [vmem:[#allocation3 + $0x248] sm:$0xff] %v4894
  %4903 = vst [vmem:[#allocation3 + $0x250] sm:$0xff] %v4895
  %4904 = vst [vmem:[#allocation3 + $0x258] sm:$0xff] %v4896
  %4905 = vst [vmem:[#allocation3 + $0x260] sm:$0xff] %v4897
  %4906 = vst [vmem:[#allocation3 + $0x268] sm:$0xff] %v4898
  %4907 = vst [vmem:[#allocation3 + $0x270] sm:$0xff] %v4899
  %4908 = vst [vmem:[#allocation3 + $0x278] sm:$0xff] %v4900
  %4909 = vrot.lane.b32.xlu0 %v4337, 2
  %v4910 = vpop.permute.xlu0 %4909
  %4911 = vrot.lane.b32.xlu0 %v4338, 2
  %v4912 = vpop.permute.xlu0 %4911
  %4913 = vrot.lane.b32.xlu0 %v4339, 2
  %v4914 = vpop.permute.xlu0 %4913
  %4915 = vrot.lane.b32.xlu0 %v4341, 2
  %v4916 = vpop.permute.xlu0 %4915
  %4917 = vrot.lane.b32.xlu0 %v4342, 2
  %v4918 = vpop.permute.xlu0 %4917
  %4919 = vrot.lane.b32.xlu0 %v4343, 2
  %v4920 = vpop.permute.xlu0 %4919
  %4921 = vrot.lane.b32.xlu0 %v4345, 2
  %v4922 = vpop.permute.xlu0 %4921
  %4923 = vrot.lane.b32.xlu0 %v4346, 2
  %v4924 = vpop.permute.xlu0 %4923
  %4925 = vrot.lane.b32.xlu0 %v4347, 2
  %v4926 = vpop.permute.xlu0 %4925
  %4927 = vrot.lane.b32.xlu0 %v4349, 2
  %v4928 = vpop.permute.xlu0 %4927
  %4929 = vrot.lane.b32.xlu0 %v4350, 2
  %v4930 = vpop.permute.xlu0 %4929
  %4931 = vrot.lane.b32.xlu0 %v4351, 2
  %v4932 = vpop.permute.xlu0 %4931
  %v4933 = vsel %vm811, %v4910, %v4912
  %v4934 = vsel %vm811, %v4912, %v4914
  %v4935 = vsel %vm811, %v4916, %v4918
  %v4936 = vsel %vm811, %v4918, %v4920
  %v4937 = vsel %vm811, %v4922, %v4924
  %v4938 = vsel %vm811, %v4924, %v4926
  %v4939 = vsel %vm811, %v4928, %v4930
  %v4940 = vsel %vm811, %v4930, %v4932
  %v4949 = vsel %vm183, %v4933, 0.0
  %v4950 = vsel %vm184, %v4934, 0.0
  %v4951 = vsel %vm183, %v4935, 0.0
  %v4952 = vsel %vm184, %v4936, 0.0
  %v4953 = vsel %vm183, %v4937, 0.0
  %v4954 = vsel %vm184, %v4938, 0.0
  %v4955 = vsel %vm183, %v4939, 0.0
  %v4956 = vsel %vm184, %v4940, 0.0
  %4957 = vst [vmem:[#allocation3 + $0x280] sm:$0xff] %v4949
  %4958 = vst [vmem:[#allocation3 + $0x288] sm:$0xff] %v4950
  %4959 = vst [vmem:[#allocation3 + $0x290] sm:$0xff] %v4951
  %4960 = vst [vmem:[#allocation3 + $0x298] sm:$0xff] %v4952
  %4961 = vst [vmem:[#allocation3 + $0x2a0] sm:$0xff] %v4953
  %4962 = vst [vmem:[#allocation3 + $0x2a8] sm:$0xff] %v4954
  %4963 = vst [vmem:[#allocation3 + $0x2b0] sm:$0xff] %v4955
  %4964 = vst [vmem:[#allocation3 + $0x2b8] sm:$0xff] %v4956
  %4965 = vrot.lane.b32.xlu0 %v4337, 1
  %v4966 = vpop.permute.xlu0 %4965
  %4967 = vrot.lane.b32.xlu0 %v4338, 1
  %v4968 = vpop.permute.xlu0 %4967
  %4969 = vrot.lane.b32.xlu0 %v4339, 1
  %v4970 = vpop.permute.xlu0 %4969
  %4971 = vrot.lane.b32.xlu0 %v4341, 1
  %v4972 = vpop.permute.xlu0 %4971
  %4973 = vrot.lane.b32.xlu0 %v4342, 1
  %v4974 = vpop.permute.xlu0 %4973
  %4975 = vrot.lane.b32.xlu0 %v4343, 1
  %v4976 = vpop.permute.xlu0 %4975
  %4977 = vrot.lane.b32.xlu0 %v4345, 1
  %v4978 = vpop.permute.xlu0 %4977
  %4979 = vrot.lane.b32.xlu0 %v4346, 1
  %v4980 = vpop.permute.xlu0 %4979
  %4981 = vrot.lane.b32.xlu0 %v4347, 1
  %v4982 = vpop.permute.xlu0 %4981
  %4983 = vrot.lane.b32.xlu0 %v4349, 1
  %v4984 = vpop.permute.xlu0 %4983
  %4985 = vrot.lane.b32.xlu0 %v4350, 1
  %v4986 = vpop.permute.xlu0 %4985
  %4987 = vrot.lane.b32.xlu0 %v4351, 1
  %v4988 = vpop.permute.xlu0 %4987
  %v4989 = vsel %vm868, %v4966, %v4968
  %v4990 = vsel %vm868, %v4968, %v4970
  %v4991 = vsel %vm868, %v4972, %v4974
  %v4992 = vsel %vm868, %v4974, %v4976
  %v4993 = vsel %vm868, %v4978, %v4980
  %v4994 = vsel %vm868, %v4980, %v4982
  %v4995 = vsel %vm868, %v4984, %v4986
  %v4996 = vsel %vm868, %v4986, %v4988
  %v5005 = vsel %vm264, %v4989, 0.0
  %v5006 = vsel %vm265, %v4990, 0.0
  %v5007 = vsel %vm264, %v4991, 0.0
  %v5008 = vsel %vm265, %v4992, 0.0
  %v5009 = vsel %vm264, %v4993, 0.0
  %v5010 = vsel %vm265, %v4994, 0.0
  %v5011 = vsel %vm264, %v4995, 0.0
  %v5012 = vsel %vm265, %v4996, 0.0
  %5013 = vst [vmem:[#allocation3 + $0x2c0] sm:$0xff] %v5005
  %5014 = vst [vmem:[#allocation3 + $0x2c8] sm:$0xff] %v5006
  %5015 = vst [vmem:[#allocation3 + $0x2d0] sm:$0xff] %v5007
  %5016 = vst [vmem:[#allocation3 + $0x2d8] sm:$0xff] %v5008
  %5017 = vst [vmem:[#allocation3 + $0x2e0] sm:$0xff] %v5009
  %5018 = vst [vmem:[#allocation3 + $0x2e8] sm:$0xff] %v5010
  %5019 = vst [vmem:[#allocation3 + $0x2f0] sm:$0xff] %v5011
  %5020 = vst [vmem:[#allocation3 + $0x2f8] sm:$0xff] %v5012
  %5021 = vst [vmem:[#allocation3 + $0x300] sm:$0xff] %v4338
  %5022 = vst [vmem:[#allocation3 + $0x308] sm:$0xff] %v4339
  %5023 = vst [vmem:[#allocation3 + $0x310] sm:$0xff] %v4342
  %5024 = vst [vmem:[#allocation3 + $0x318] sm:$0xff] %v4343
  %5025 = vst [vmem:[#allocation3 + $0x320] sm:$0xff] %v4346
  %5026 = vst [vmem:[#allocation3 + $0x328] sm:$0xff] %v4347
  %5027 = vst [vmem:[#allocation3 + $0x330] sm:$0xff] %v4350
  %5028 = vst [vmem:[#allocation3 + $0x338] sm:$0xff] %v4351
  %5033 = vrot.lane.b32.xlu0 %v4338, 127
  %v5034 = vpop.permute.xlu0 %5033
  %5035 = vrot.lane.b32.xlu0 %v4339, 127
  %v5036 = vpop.permute.xlu0 %5035
  %5037 = vrot.lane.b32.xlu0 %v4340, 127
  %v5038 = vpop.permute.xlu0 %5037
  %5039 = vrot.lane.b32.xlu0 %v4342, 127
  %v5040 = vpop.permute.xlu0 %5039
  %5041 = vrot.lane.b32.xlu0 %v4343, 127
  %v5042 = vpop.permute.xlu0 %5041
  %5043 = vrot.lane.b32.xlu0 %v4344, 127
  %v5044 = vpop.permute.xlu0 %5043
  %5045 = vrot.lane.b32.xlu0 %v4346, 127
  %v5046 = vpop.permute.xlu0 %5045
  %5047 = vrot.lane.b32.xlu0 %v4347, 127
  %v5048 = vpop.permute.xlu0 %5047
  %5049 = vrot.lane.b32.xlu0 %v4348, 127
  %v5050 = vpop.permute.xlu0 %5049
  %5051 = vrot.lane.b32.xlu0 %v4350, 127
  %v5052 = vpop.permute.xlu0 %5051
  %5053 = vrot.lane.b32.xlu0 %v4351, 127
  %v5054 = vpop.permute.xlu0 %5053
  %5055 = vrot.lane.b32.xlu0 %v4352, 127
  %v5056 = vpop.permute.xlu0 %5055
  %v5057 = vsel %vm937, %v5034, %v5036
  %v5058 = vsel %vm937, %v5036, %v5038
  %v5059 = vsel %vm937, %v5040, %v5042
  %v5060 = vsel %vm937, %v5042, %v5044
  %v5061 = vsel %vm937, %v5046, %v5048
  %v5062 = vsel %vm937, %v5048, %v5050
  %v5063 = vsel %vm937, %v5052, %v5054
  %v5064 = vsel %vm937, %v5054, %v5056
  %v5073 = vsel %vm382, %v5057, 0.0
  %v5074 = vsel %vm383, %v5058, 0.0
  %v5075 = vsel %vm382, %v5059, 0.0
  %v5076 = vsel %vm383, %v5060, 0.0
  %v5077 = vsel %vm382, %v5061, 0.0
  %v5078 = vsel %vm383, %v5062, 0.0
  %v5079 = vsel %vm382, %v5063, 0.0
  %v5080 = vsel %vm383, %v5064, 0.0
  %5081 = vst [vmem:[#allocation3 + $0x340] sm:$0xff] %v5073
  %5082 = vst [vmem:[#allocation3 + $0x348] sm:$0xff] %v5074
  %5083 = vst [vmem:[#allocation3 + $0x350] sm:$0xff] %v5075
  %5084 = vst [vmem:[#allocation3 + $0x358] sm:$0xff] %v5076
  %5085 = vst [vmem:[#allocation3 + $0x360] sm:$0xff] %v5077
  %5086 = vst [vmem:[#allocation3 + $0x368] sm:$0xff] %v5078
  %5087 = vst [vmem:[#allocation3 + $0x370] sm:$0xff] %v5079
  %5088 = vst [vmem:[#allocation3 + $0x378] sm:$0xff] %v5080
  %5089 = vrot.lane.b32.xlu0 %v4338, 126
  %v5090 = vpop.permute.xlu0 %5089
  %5091 = vrot.lane.b32.xlu0 %v4339, 126
  %v5092 = vpop.permute.xlu0 %5091
  %5093 = vrot.lane.b32.xlu0 %v4340, 126
  %v5094 = vpop.permute.xlu0 %5093
  %5095 = vrot.lane.b32.xlu0 %v4342, 126
  %v5096 = vpop.permute.xlu0 %5095
  %5097 = vrot.lane.b32.xlu0 %v4343, 126
  %v5098 = vpop.permute.xlu0 %5097
  %5099 = vrot.lane.b32.xlu0 %v4344, 126
  %v5100 = vpop.permute.xlu0 %5099
  %5101 = vrot.lane.b32.xlu0 %v4346, 126
  %v5102 = vpop.permute.xlu0 %5101
  %5103 = vrot.lane.b32.xlu0 %v4347, 126
  %v5104 = vpop.permute.xlu0 %5103
  %5105 = vrot.lane.b32.xlu0 %v4348, 126
  %v5106 = vpop.permute.xlu0 %5105
  %5107 = vrot.lane.b32.xlu0 %v4350, 126
  %v5108 = vpop.permute.xlu0 %5107
  %5109 = vrot.lane.b32.xlu0 %v4351, 126
  %v5110 = vpop.permute.xlu0 %5109
  %5111 = vrot.lane.b32.xlu0 %v4352, 126
  %v5112 = vpop.permute.xlu0 %5111
  %v5113 = vsel %vm994, %v5090, %v5092
  %v5114 = vsel %vm994, %v5092, %v5094
  %v5115 = vsel %vm994, %v5096, %v5098
  %v5116 = vsel %vm994, %v5098, %v5100
  %v5117 = vsel %vm994, %v5102, %v5104
  %v5118 = vsel %vm994, %v5104, %v5106
  %v5119 = vsel %vm994, %v5108, %v5110
  %v5120 = vsel %vm994, %v5110, %v5112
  %v5129 = vsel %vm451, %v5113, 0.0
  %v5130 = vsel %vm452, %v5114, 0.0
  %v5131 = vsel %vm451, %v5115, 0.0
  %v5132 = vsel %vm452, %v5116, 0.0
  %v5133 = vsel %vm451, %v5117, 0.0
  %v5134 = vsel %vm452, %v5118, 0.0
  %v5135 = vsel %vm451, %v5119, 0.0
  %v5136 = vsel %vm452, %v5120, 0.0
  %5137 = vst [vmem:[#allocation3 + $0x380] sm:$0xff] %v5129
  %5138 = vst [vmem:[#allocation3 + $0x388] sm:$0xff] %v5130
  %5139 = vst [vmem:[#allocation3 + $0x390] sm:$0xff] %v5131
  %5140 = vst [vmem:[#allocation3 + $0x398] sm:$0xff] %v5132
  %5141 = vst [vmem:[#allocation3 + $0x3a0] sm:$0xff] %v5133
  %5142 = vst [vmem:[#allocation3 + $0x3a8] sm:$0xff] %v5134
  %5143 = vst [vmem:[#allocation3 + $0x3b0] sm:$0xff] %v5135
  %5144 = vst [vmem:[#allocation3 + $0x3b8] sm:$0xff] %v5136
  %5145 = vrot.lane.b32.xlu0 %v4338, 114
  %v5146 = vpop.permute.xlu0 %5145
  %5147 = vrot.lane.b32.xlu0 %v4339, 114
  %v5148 = vpop.permute.xlu0 %5147
  %5149 = vrot.lane.b32.xlu0 %v4340, 114
  %v5150 = vpop.permute.xlu0 %5149
  %5151 = vrot.lane.b32.xlu0 %v4342, 114
  %v5152 = vpop.permute.xlu0 %5151
  %5153 = vrot.lane.b32.xlu0 %v4343, 114
  %v5154 = vpop.permute.xlu0 %5153
  %5155 = vrot.lane.b32.xlu0 %v4344, 114
  %v5156 = vpop.permute.xlu0 %5155
  %5157 = vrot.lane.b32.xlu0 %v4346, 114
  %v5158 = vpop.permute.xlu0 %5157
  %5159 = vrot.lane.b32.xlu0 %v4347, 114
  %v5160 = vpop.permute.xlu0 %5159
  %5161 = vrot.lane.b32.xlu0 %v4348, 114
  %v5162 = vpop.permute.xlu0 %5161
  %5163 = vrot.lane.b32.xlu0 %v4350, 114
  %v5164 = vpop.permute.xlu0 %5163
  %5165 = vrot.lane.b32.xlu0 %v4351, 114
  %v5166 = vpop.permute.xlu0 %5165
  %5167 = vrot.lane.b32.xlu0 %v4352, 114
  %v5168 = vpop.permute.xlu0 %5167
  %v5169 = vsel %vm1051, %v5146, %v5148
  %v5170 = vsel %vm1051, %v5148, %v5150
  %v5171 = vsel %vm1051, %v5152, %v5154
  %v5172 = vsel %vm1051, %v5154, %v5156
  %v5173 = vsel %vm1051, %v5158, %v5160
  %v5174 = vsel %vm1051, %v5160, %v5162
  %v5175 = vsel %vm1051, %v5164, %v5166
  %v5176 = vsel %vm1051, %v5166, %v5168
  %v5185 = vsel %vm183, %v5169, 0.0
  %v5186 = vsel %vm184, %v5170, 0.0
  %v5187 = vsel %vm183, %v5171, 0.0
  %v5188 = vsel %vm184, %v5172, 0.0
  %v5189 = vsel %vm183, %v5173, 0.0
  %v5190 = vsel %vm184, %v5174, 0.0
  %v5191 = vsel %vm183, %v5175, 0.0
  %v5192 = vsel %vm184, %v5176, 0.0
  %5193 = vst [vmem:[#allocation3 + $0x3c0] sm:$0xff] %v5185
  %5194 = vst [vmem:[#allocation3 + $0x3c8] sm:$0xff] %v5186
  %5195 = vst [vmem:[#allocation3 + $0x3d0] sm:$0xff] %v5187
  %5196 = vst [vmem:[#allocation3 + $0x3d8] sm:$0xff] %v5188
  %5197 = vst [vmem:[#allocation3 + $0x3e0] sm:$0xff] %v5189
  %5198 = vst [vmem:[#allocation3 + $0x3e8] sm:$0xff] %v5190
  %5199 = vst [vmem:[#allocation3 + $0x3f0] sm:$0xff] %v5191
  %5200 = vst [vmem:[#allocation3 + $0x3f8] sm:$0xff] %v5192
  %5201 = vrot.lane.b32.xlu0 %v4338, 113
  %v5202 = vpop.permute.xlu0 %5201
  %5203 = vrot.lane.b32.xlu0 %v4339, 113
  %v5204 = vpop.permute.xlu0 %5203
  %5205 = vrot.lane.b32.xlu0 %v4340, 113
  %v5206 = vpop.permute.xlu0 %5205
  %5207 = vrot.lane.b32.xlu0 %v4342, 113
  %v5208 = vpop.permute.xlu0 %5207
  %5209 = vrot.lane.b32.xlu0 %v4343, 113
  %v5210 = vpop.permute.xlu0 %5209
  %5211 = vrot.lane.b32.xlu0 %v4344, 113
  %v5212 = vpop.permute.xlu0 %5211
  %5213 = vrot.lane.b32.xlu0 %v4346, 113
  %v5214 = vpop.permute.xlu0 %5213
  %5215 = vrot.lane.b32.xlu0 %v4347, 113
  %v5216 = vpop.permute.xlu0 %5215
  %5217 = vrot.lane.b32.xlu0 %v4348, 113
  %v5218 = vpop.permute.xlu0 %5217
  %5219 = vrot.lane.b32.xlu0 %v4350, 113
  %v5220 = vpop.permute.xlu0 %5219
  %5221 = vrot.lane.b32.xlu0 %v4351, 113
  %v5222 = vpop.permute.xlu0 %5221
  %5223 = vrot.lane.b32.xlu0 %v4352, 113
  %v5224 = vpop.permute.xlu0 %5223
  %v5225 = vsel %vm1108, %v5202, %v5204
  %v5226 = vsel %vm1108, %v5204, %v5206
  %v5227 = vsel %vm1108, %v5208, %v5210
  %v5228 = vsel %vm1108, %v5210, %v5212
  %v5229 = vsel %vm1108, %v5214, %v5216
  %v5230 = vsel %vm1108, %v5216, %v5218
  %v5231 = vsel %vm1108, %v5220, %v5222
  %v5232 = vsel %vm1108, %v5222, %v5224
  %v5241 = vsel %vm264, %v5225, 0.0
  %v5242 = vsel %vm265, %v5226, 0.0
  %v5243 = vsel %vm264, %v5227, 0.0
  %v5244 = vsel %vm265, %v5228, 0.0
  %v5245 = vsel %vm264, %v5229, 0.0
  %v5246 = vsel %vm265, %v5230, 0.0
  %v5247 = vsel %vm264, %v5231, 0.0
  %v5248 = vsel %vm265, %v5232, 0.0
  %5249 = vst [vmem:[#allocation3 + $0x400] sm:$0xff] %v5241
  %5250 = vst [vmem:[#allocation3 + $0x408] sm:$0xff] %v5242
  %5251 = vst [vmem:[#allocation3 + $0x410] sm:$0xff] %v5243
  %5252 = vst [vmem:[#allocation3 + $0x418] sm:$0xff] %v5244
  %5253 = vst [vmem:[#allocation3 + $0x420] sm:$0xff] %v5245
  %5254 = vst [vmem:[#allocation3 + $0x428] sm:$0xff] %v5246
  %5255 = vst [vmem:[#allocation3 + $0x430] sm:$0xff] %v5247
  %5256 = vst [vmem:[#allocation3 + $0x438] sm:$0xff] %v5248
  %5257 = vrot.lane.b32.xlu0 %v4338, 112
  %v5258 = vpop.permute.xlu0 %5257
  %5259 = vrot.lane.b32.xlu0 %v4339, 112
  %v5260 = vpop.permute.xlu0 %5259
  %5261 = vrot.lane.b32.xlu0 %v4340, 112
  %v5262 = vpop.permute.xlu0 %5261
  %5263 = vrot.lane.b32.xlu0 %v4342, 112
  %v5264 = vpop.permute.xlu0 %5263
  %5265 = vrot.lane.b32.xlu0 %v4343, 112
  %v5266 = vpop.permute.xlu0 %5265
  %5267 = vrot.lane.b32.xlu0 %v4344, 112
  %v5268 = vpop.permute.xlu0 %5267
  %5269 = vrot.lane.b32.xlu0 %v4346, 112
  %v5270 = vpop.permute.xlu0 %5269
  %5271 = vrot.lane.b32.xlu0 %v4347, 112
  %v5272 = vpop.permute.xlu0 %5271
  %5273 = vrot.lane.b32.xlu0 %v4348, 112
  %v5274 = vpop.permute.xlu0 %5273
  %5275 = vrot.lane.b32.xlu0 %v4350, 112
  %v5276 = vpop.permute.xlu0 %5275
  %5277 = vrot.lane.b32.xlu0 %v4351, 112
  %v5278 = vpop.permute.xlu0 %5277
  %5279 = vrot.lane.b32.xlu0 %v4352, 112
  %v5280 = vpop.permute.xlu0 %5279
  %v5281 = vsel %vm1165, %v5258, %v5260
  %v5282 = vsel %vm1165, %v5260, %v5262
  %v5283 = vsel %vm1165, %v5264, %v5266
  %v5284 = vsel %vm1165, %v5266, %v5268
  %v5285 = vsel %vm1165, %v5270, %v5272
  %v5286 = vsel %vm1165, %v5272, %v5274
  %v5287 = vsel %vm1165, %v5276, %v5278
  %v5288 = vsel %vm1165, %v5278, %v5280
  %5297 = vst [vmem:[#allocation3 + $0x440] sm:$0xff] %v5281
  %5298 = vst [vmem:[#allocation3 + $0x448] sm:$0xff] %v5282
  %5299 = vst [vmem:[#allocation3 + $0x450] sm:$0xff] %v5283
  %5300 = vst [vmem:[#allocation3 + $0x458] sm:$0xff] %v5284
  %5301 = vst [vmem:[#allocation3 + $0x460] sm:$0xff] %v5285
  %5302 = vst [vmem:[#allocation3 + $0x468] sm:$0xff] %v5286
  %5303 = vst [vmem:[#allocation3 + $0x470] sm:$0xff] %v5287
  %5304 = vst [vmem:[#allocation3 + $0x478] sm:$0xff] %v5288
  %5305 = vrot.lane.b32.xlu0 %v4338, 111
  %v5306 = vpop.permute.xlu0 %5305
  %5307 = vrot.lane.b32.xlu0 %v4339, 111
  %v5308 = vpop.permute.xlu0 %5307
  %5309 = vrot.lane.b32.xlu0 %v4340, 111
  %v5310 = vpop.permute.xlu0 %5309
  %5311 = vrot.lane.b32.xlu0 %v4342, 111
  %v5312 = vpop.permute.xlu0 %5311
  %5313 = vrot.lane.b32.xlu0 %v4343, 111
  %v5314 = vpop.permute.xlu0 %5313
  %5315 = vrot.lane.b32.xlu0 %v4344, 111
  %v5316 = vpop.permute.xlu0 %5315
  %5317 = vrot.lane.b32.xlu0 %v4346, 111
  %v5318 = vpop.permute.xlu0 %5317
  %5319 = vrot.lane.b32.xlu0 %v4347, 111
  %v5320 = vpop.permute.xlu0 %5319
  %5321 = vrot.lane.b32.xlu0 %v4348, 111
  %v5322 = vpop.permute.xlu0 %5321
  %5323 = vrot.lane.b32.xlu0 %v4350, 111
  %v5324 = vpop.permute.xlu0 %5323
  %5325 = vrot.lane.b32.xlu0 %v4351, 111
  %v5326 = vpop.permute.xlu0 %5325
  %5327 = vrot.lane.b32.xlu0 %v4352, 111
  %v5328 = vpop.permute.xlu0 %5327
  %v5329 = vsel %vm1214, %v5306, %v5308
  %v5330 = vsel %vm1214, %v5308, %v5310
  %v5331 = vsel %vm1214, %v5312, %v5314
  %v5332 = vsel %vm1214, %v5314, %v5316
  %v5333 = vsel %vm1214, %v5318, %v5320
  %v5334 = vsel %vm1214, %v5320, %v5322
  %v5335 = vsel %vm1214, %v5324, %v5326
  %v5336 = vsel %vm1214, %v5326, %v5328
  %v5345 = vsel %vm382, %v5329, 0.0
  %v5346 = vsel %vm383, %v5330, 0.0
  %v5347 = vsel %vm382, %v5331, 0.0
  %v5348 = vsel %vm383, %v5332, 0.0
  %v5349 = vsel %vm382, %v5333, 0.0
  %v5350 = vsel %vm383, %v5334, 0.0
  %v5351 = vsel %vm382, %v5335, 0.0
  %v5352 = vsel %vm383, %v5336, 0.0
  %5353 = vst [vmem:[#allocation3 + $0x480] sm:$0xff] %v5345
  %5354 = vst [vmem:[#allocation3 + $0x488] sm:$0xff] %v5346
  %5355 = vst [vmem:[#allocation3 + $0x490] sm:$0xff] %v5347
  %5356 = vst [vmem:[#allocation3 + $0x498] sm:$0xff] %v5348
  %5357 = vst [vmem:[#allocation3 + $0x4a0] sm:$0xff] %v5349
  %5358 = vst [vmem:[#allocation3 + $0x4a8] sm:$0xff] %v5350
  %5359 = vst [vmem:[#allocation3 + $0x4b0] sm:$0xff] %v5351
  %5360 = vst [vmem:[#allocation3 + $0x4b8] sm:$0xff] %v5352
  %5361 = vrot.lane.b32.xlu0 %v4338, 110
  %v5362 = vpop.permute.xlu0 %5361
  %5363 = vrot.lane.b32.xlu0 %v4339, 110
  %v5364 = vpop.permute.xlu0 %5363
  %5365 = vrot.lane.b32.xlu0 %v4340, 110
  %v5366 = vpop.permute.xlu0 %5365
  %5367 = vrot.lane.b32.xlu0 %v4342, 110
  %v5368 = vpop.permute.xlu0 %5367
  %5369 = vrot.lane.b32.xlu0 %v4343, 110
  %v5370 = vpop.permute.xlu0 %5369
  %5371 = vrot.lane.b32.xlu0 %v4344, 110
  %v5372 = vpop.permute.xlu0 %5371
  %5373 = vrot.lane.b32.xlu0 %v4346, 110
  %v5374 = vpop.permute.xlu0 %5373
  %5375 = vrot.lane.b32.xlu0 %v4347, 110
  %v5376 = vpop.permute.xlu0 %5375
  %5377 = vrot.lane.b32.xlu0 %v4348, 110
  %v5378 = vpop.permute.xlu0 %5377
  %5379 = vrot.lane.b32.xlu0 %v4350, 110
  %v5380 = vpop.permute.xlu0 %5379
  %5381 = vrot.lane.b32.xlu0 %v4351, 110
  %v5382 = vpop.permute.xlu0 %5381
  %5383 = vrot.lane.b32.xlu0 %v4352, 110
  %v5384 = vpop.permute.xlu0 %5383
  %v5385 = vsel %vm1271, %v5362, %v5364
  %v5386 = vsel %vm1271, %v5364, %v5366
  %v5387 = vsel %vm1271, %v5368, %v5370
  %v5388 = vsel %vm1271, %v5370, %v5372
  %v5389 = vsel %vm1271, %v5374, %v5376
  %v5390 = vsel %vm1271, %v5376, %v5378
  %v5391 = vsel %vm1271, %v5380, %v5382
  %v5392 = vsel %vm1271, %v5382, %v5384
  %v5401 = vsel %vm451, %v5385, 0.0
  %v5402 = vsel %vm452, %v5386, 0.0
  %v5403 = vsel %vm451, %v5387, 0.0
  %v5404 = vsel %vm452, %v5388, 0.0
  %v5405 = vsel %vm451, %v5389, 0.0
  %v5406 = vsel %vm452, %v5390, 0.0
  %v5407 = vsel %vm451, %v5391, 0.0
  %v5408 = vsel %vm452, %v5392, 0.0
  %5409 = vst [vmem:[#allocation3 + $0x4c0] sm:$0xff] %v5401
  %5410 = vst [vmem:[#allocation3 + $0x4c8] sm:$0xff] %v5402
  %5411 = vst [vmem:[#allocation3 + $0x4d0] sm:$0xff] %v5403
  %5412 = vst [vmem:[#allocation3 + $0x4d8] sm:$0xff] %v5404
  %5413 = vst [vmem:[#allocation3 + $0x4e0] sm:$0xff] %v5405
  %5414 = vst [vmem:[#allocation3 + $0x4e8] sm:$0xff] %v5406
  %5415 = vst [vmem:[#allocation3 + $0x4f0] sm:$0xff] %v5407
  %5416 = vst [vmem:[#allocation3 + $0x4f8] sm:$0xff] %v5408
  %5417 = vrot.lane.b32.xlu0 %v4338, 98
  %v5418 = vpop.permute.xlu0 %5417
  %5419 = vrot.lane.b32.xlu0 %v4339, 98
  %v5420 = vpop.permute.xlu0 %5419
  %5421 = vrot.lane.b32.xlu0 %v4340, 98
  %v5422 = vpop.permute.xlu0 %5421
  %5423 = vrot.lane.b32.xlu0 %v4342, 98
  %v5424 = vpop.permute.xlu0 %5423
  %5425 = vrot.lane.b32.xlu0 %v4343, 98
  %v5426 = vpop.permute.xlu0 %5425
  %5427 = vrot.lane.b32.xlu0 %v4344, 98
  %v5428 = vpop.permute.xlu0 %5427
  %5429 = vrot.lane.b32.xlu0 %v4346, 98
  %v5430 = vpop.permute.xlu0 %5429
  %5431 = vrot.lane.b32.xlu0 %v4347, 98
  %v5432 = vpop.permute.xlu0 %5431
  %5433 = vrot.lane.b32.xlu0 %v4348, 98
  %v5434 = vpop.permute.xlu0 %5433
  %5435 = vrot.lane.b32.xlu0 %v4350, 98
  %v5436 = vpop.permute.xlu0 %5435
  %5437 = vrot.lane.b32.xlu0 %v4351, 98
  %v5438 = vpop.permute.xlu0 %5437
  %5439 = vrot.lane.b32.xlu0 %v4352, 98
  %v5440 = vpop.permute.xlu0 %5439
  %v5441 = vsel %vm1328, %v5418, %v5420
  %v5442 = vsel %vm1328, %v5420, %v5422
  %v5443 = vsel %vm1328, %v5424, %v5426
  %v5444 = vsel %vm1328, %v5426, %v5428
  %v5445 = vsel %vm1328, %v5430, %v5432
  %v5446 = vsel %vm1328, %v5432, %v5434
  %v5447 = vsel %vm1328, %v5436, %v5438
  %v5448 = vsel %vm1328, %v5438, %v5440
  %v5457 = vsel %vm183, %v5441, 0.0
  %v5458 = vsel %vm184, %v5442, 0.0
  %v5459 = vsel %vm183, %v5443, 0.0
  %v5460 = vsel %vm184, %v5444, 0.0
  %v5461 = vsel %vm183, %v5445, 0.0
  %v5462 = vsel %vm184, %v5446, 0.0
  %v5463 = vsel %vm183, %v5447, 0.0
  %v5464 = vsel %vm184, %v5448, 0.0
  %5465 = vst [vmem:[#allocation3 + $0x500] sm:$0xff] %v5457
  %5466 = vst [vmem:[#allocation3 + $0x508] sm:$0xff] %v5458
  %5467 = vst [vmem:[#allocation3 + $0x510] sm:$0xff] %v5459
  %5468 = vst [vmem:[#allocation3 + $0x518] sm:$0xff] %v5460
  %5469 = vst [vmem:[#allocation3 + $0x520] sm:$0xff] %v5461
  %5470 = vst [vmem:[#allocation3 + $0x528] sm:$0xff] %v5462
  %5471 = vst [vmem:[#allocation3 + $0x530] sm:$0xff] %v5463
  %5472 = vst [vmem:[#allocation3 + $0x538] sm:$0xff] %v5464
  %5473 = vrot.lane.b32.xlu0 %v4338, 97
  %v5474 = vpop.permute.xlu0 %5473
  %5475 = vrot.lane.b32.xlu0 %v4339, 97
  %v5476 = vpop.permute.xlu0 %5475
  %5477 = vrot.lane.b32.xlu0 %v4340, 97
  %v5478 = vpop.permute.xlu0 %5477
  %5479 = vrot.lane.b32.xlu0 %v4342, 97
  %v5480 = vpop.permute.xlu0 %5479
  %5481 = vrot.lane.b32.xlu0 %v4343, 97
  %v5482 = vpop.permute.xlu0 %5481
  %5483 = vrot.lane.b32.xlu0 %v4344, 97
  %v5484 = vpop.permute.xlu0 %5483
  %5485 = vrot.lane.b32.xlu0 %v4346, 97
  %v5486 = vpop.permute.xlu0 %5485
  %5487 = vrot.lane.b32.xlu0 %v4347, 97
  %v5488 = vpop.permute.xlu0 %5487
  %5489 = vrot.lane.b32.xlu0 %v4348, 97
  %v5490 = vpop.permute.xlu0 %5489
  %5491 = vrot.lane.b32.xlu0 %v4350, 97
  %v5492 = vpop.permute.xlu0 %5491
  %5493 = vrot.lane.b32.xlu0 %v4351, 97
  %v5494 = vpop.permute.xlu0 %5493
  %5495 = vrot.lane.b32.xlu0 %v4352, 97
  %v5496 = vpop.permute.xlu0 %5495
  %v5497 = vsel %vm1385, %v5474, %v5476
  %v5498 = vsel %vm1385, %v5476, %v5478
  %v5499 = vsel %vm1385, %v5480, %v5482
  %v5500 = vsel %vm1385, %v5482, %v5484
  %v5501 = vsel %vm1385, %v5486, %v5488
  %v5502 = vsel %vm1385, %v5488, %v5490
  %v5503 = vsel %vm1385, %v5492, %v5494
  %v5504 = vsel %vm1385, %v5494, %v5496
  %v5513 = vsel %vm264, %v5497, 0.0
  %v5514 = vsel %vm265, %v5498, 0.0
  %v5515 = vsel %vm264, %v5499, 0.0
  %v5516 = vsel %vm265, %v5500, 0.0
  %v5517 = vsel %vm264, %v5501, 0.0
  %v5518 = vsel %vm265, %v5502, 0.0
  %v5519 = vsel %vm264, %v5503, 0.0
  %v5520 = vsel %vm265, %v5504, 0.0
  %5521 = vst [vmem:[#allocation3 + $0x540] sm:$0xff] %v5513
  %5522 = vst [vmem:[#allocation3 + $0x548] sm:$0xff] %v5514
  %5523 = vst [vmem:[#allocation3 + $0x550] sm:$0xff] %v5515
  %5524 = vst [vmem:[#allocation3 + $0x558] sm:$0xff] %v5516
  %5525 = vst [vmem:[#allocation3 + $0x560] sm:$0xff] %v5517
  %5526 = vst [vmem:[#allocation3 + $0x568] sm:$0xff] %v5518
  %5527 = vst [vmem:[#allocation3 + $0x570] sm:$0xff] %v5519
  %5528 = vst [vmem:[#allocation3 + $0x578] sm:$0xff] %v5520
  %5529 = vrot.lane.b32.xlu0 %v4338, 96
  %v5530 = vpop.permute.xlu0 %5529
  %5531 = vrot.lane.b32.xlu0 %v4339, 96
  %v5532 = vpop.permute.xlu0 %5531
  %5533 = vrot.lane.b32.xlu0 %v4340, 96
  %v5534 = vpop.permute.xlu0 %5533
  %5535 = vrot.lane.b32.xlu0 %v4342, 96
  %v5536 = vpop.permute.xlu0 %5535
  %5537 = vrot.lane.b32.xlu0 %v4343, 96
  %v5538 = vpop.permute.xlu0 %5537
  %5539 = vrot.lane.b32.xlu0 %v4344, 96
  %v5540 = vpop.permute.xlu0 %5539
  %5541 = vrot.lane.b32.xlu0 %v4346, 96
  %v5542 = vpop.permute.xlu0 %5541
  %5543 = vrot.lane.b32.xlu0 %v4347, 96
  %v5544 = vpop.permute.xlu0 %5543
  %5545 = vrot.lane.b32.xlu0 %v4348, 96
  %v5546 = vpop.permute.xlu0 %5545
  %5547 = vrot.lane.b32.xlu0 %v4350, 96
  %v5548 = vpop.permute.xlu0 %5547
  %5549 = vrot.lane.b32.xlu0 %v4351, 96
  %v5550 = vpop.permute.xlu0 %5549
  %5551 = vrot.lane.b32.xlu0 %v4352, 96
  %v5552 = vpop.permute.xlu0 %5551
  %v5553 = vsel %vm1442, %v5530, %v5532
  %v5554 = vsel %vm1442, %v5532, %v5534
  %v5555 = vsel %vm1442, %v5536, %v5538
  %v5556 = vsel %vm1442, %v5538, %v5540
  %v5557 = vsel %vm1442, %v5542, %v5544
  %v5558 = vsel %vm1442, %v5544, %v5546
  %v5559 = vsel %vm1442, %v5548, %v5550
  %v5560 = vsel %vm1442, %v5550, %v5552
  %5569 = vst [vmem:[#allocation3 + $0x580] sm:$0xff] %v5553
  %5570 = vst [vmem:[#allocation3 + $0x588] sm:$0xff] %v5554
  %5571 = vst [vmem:[#allocation3 + $0x590] sm:$0xff] %v5555
  %5572 = vst [vmem:[#allocation3 + $0x598] sm:$0xff] %v5556
  %5573 = vst [vmem:[#allocation3 + $0x5a0] sm:$0xff] %v5557
  %5574 = vst [vmem:[#allocation3 + $0x5a8] sm:$0xff] %v5558
  %5575 = vst [vmem:[#allocation3 + $0x5b0] sm:$0xff] %v5559
  %5576 = vst [vmem:[#allocation3 + $0x5b8] sm:$0xff] %v5560
  %5577 = vrot.lane.b32.xlu0 %v4338, 95
  %v5578 = vpop.permute.xlu0 %5577
  %5579 = vrot.lane.b32.xlu0 %v4339, 95
  %v5580 = vpop.permute.xlu0 %5579
  %5581 = vrot.lane.b32.xlu0 %v4340, 95
  %v5582 = vpop.permute.xlu0 %5581
  %5583 = vrot.lane.b32.xlu0 %v4342, 95
  %v5584 = vpop.permute.xlu0 %5583
  %5585 = vrot.lane.b32.xlu0 %v4343, 95
  %v5586 = vpop.permute.xlu0 %5585
  %5587 = vrot.lane.b32.xlu0 %v4344, 95
  %v5588 = vpop.permute.xlu0 %5587
  %5589 = vrot.lane.b32.xlu0 %v4346, 95
  %v5590 = vpop.permute.xlu0 %5589
  %5591 = vrot.lane.b32.xlu0 %v4347, 95
  %v5592 = vpop.permute.xlu0 %5591
  %5593 = vrot.lane.b32.xlu0 %v4348, 95
  %v5594 = vpop.permute.xlu0 %5593
  %5595 = vrot.lane.b32.xlu0 %v4350, 95
  %v5596 = vpop.permute.xlu0 %5595
  %5597 = vrot.lane.b32.xlu0 %v4351, 95
  %v5598 = vpop.permute.xlu0 %5597
  %5599 = vrot.lane.b32.xlu0 %v4352, 95
  %v5600 = vpop.permute.xlu0 %5599
  %v5601 = vsel %vm1491, %v5578, %v5580
  %v5602 = vsel %vm1491, %v5580, %v5582
  %v5603 = vsel %vm1491, %v5584, %v5586
  %v5604 = vsel %vm1491, %v5586, %v5588
  %v5605 = vsel %vm1491, %v5590, %v5592
  %v5606 = vsel %vm1491, %v5592, %v5594
  %v5607 = vsel %vm1491, %v5596, %v5598
  %v5608 = vsel %vm1491, %v5598, %v5600
  %v5617 = vsel %vm382, %v5601, 0.0
  %v5618 = vsel %vm383, %v5602, 0.0
  %v5619 = vsel %vm382, %v5603, 0.0
  %v5620 = vsel %vm383, %v5604, 0.0
  %v5621 = vsel %vm382, %v5605, 0.0
  %v5622 = vsel %vm383, %v5606, 0.0
  %v5623 = vsel %vm382, %v5607, 0.0
  %v5624 = vsel %vm383, %v5608, 0.0
  %5625 = vst [vmem:[#allocation3 + $0x5c0] sm:$0xff] %v5617
  %5626 = vst [vmem:[#allocation3 + $0x5c8] sm:$0xff] %v5618
  %5627 = vst [vmem:[#allocation3 + $0x5d0] sm:$0xff] %v5619
  %5628 = vst [vmem:[#allocation3 + $0x5d8] sm:$0xff] %v5620
  %5629 = vst [vmem:[#allocation3 + $0x5e0] sm:$0xff] %v5621
  %5630 = vst [vmem:[#allocation3 + $0x5e8] sm:$0xff] %v5622
  %5631 = vst [vmem:[#allocation3 + $0x5f0] sm:$0xff] %v5623
  %5632 = vst [vmem:[#allocation3 + $0x5f8] sm:$0xff] %v5624
  %5633 = vrot.lane.b32.xlu0 %v4338, 94
  %v5634 = vpop.permute.xlu0 %5633
  %5635 = vrot.lane.b32.xlu0 %v4339, 94
  %v5636 = vpop.permute.xlu0 %5635
  %5637 = vrot.lane.b32.xlu0 %v4340, 94
  %v5638 = vpop.permute.xlu0 %5637
  %5639 = vrot.lane.b32.xlu0 %v4342, 94
  %v5640 = vpop.permute.xlu0 %5639
  %5641 = vrot.lane.b32.xlu0 %v4343, 94
  %v5642 = vpop.permute.xlu0 %5641
  %5643 = vrot.lane.b32.xlu0 %v4344, 94
  %v5644 = vpop.permute.xlu0 %5643
  %5645 = vrot.lane.b32.xlu0 %v4346, 94
  %v5646 = vpop.permute.xlu0 %5645
  %5647 = vrot.lane.b32.xlu0 %v4347, 94
  %v5648 = vpop.permute.xlu0 %5647
  %5649 = vrot.lane.b32.xlu0 %v4348, 94
  %v5650 = vpop.permute.xlu0 %5649
  %5651 = vrot.lane.b32.xlu0 %v4350, 94
  %v5652 = vpop.permute.xlu0 %5651
  %5653 = vrot.lane.b32.xlu0 %v4351, 94
  %v5654 = vpop.permute.xlu0 %5653
  %5655 = vrot.lane.b32.xlu0 %v4352, 94
  %v5656 = vpop.permute.xlu0 %5655
  %v5657 = vsel %vm1548, %v5634, %v5636
  %v5658 = vsel %vm1548, %v5636, %v5638
  %v5659 = vsel %vm1548, %v5640, %v5642
  %v5660 = vsel %vm1548, %v5642, %v5644
  %v5661 = vsel %vm1548, %v5646, %v5648
  %v5662 = vsel %vm1548, %v5648, %v5650
  %v5663 = vsel %vm1548, %v5652, %v5654
  %v5664 = vsel %vm1548, %v5654, %v5656
  %v5673 = vsel %vm451, %v5657, 0.0
  %v5674 = vsel %vm452, %v5658, 0.0
  %v5675 = vsel %vm451, %v5659, 0.0
  %v5676 = vsel %vm452, %v5660, 0.0
  %v5677 = vsel %vm451, %v5661, 0.0
  %v5678 = vsel %vm452, %v5662, 0.0
  %v5679 = vsel %vm451, %v5663, 0.0
  %v5680 = vsel %vm452, %v5664, 0.0
  %5681 = vst [vmem:[#allocation3 + $0x600] sm:$0xff] %v5673
  %5682 = vst [vmem:[#allocation3 + $0x608] sm:$0xff] %v5674
  %5683 = vst [vmem:[#allocation3 + $0x610] sm:$0xff] %v5675
  %5684 = vst [vmem:[#allocation3 + $0x618] sm:$0xff] %v5676
  %5685 = vst [vmem:[#allocation3 + $0x620] sm:$0xff] %v5677
  %5686 = vst [vmem:[#allocation3 + $0x628] sm:$0xff] %v5678
  %5687 = vst [vmem:[#allocation3 + $0x630] sm:$0xff] %v5679
  %5688 = vst [vmem:[#allocation3 + $0x638] sm:$0xff] %v5680
  %v5689 = vld [vmem:[#allocation3] sm:$0xff]
  %v5690 = vld [vmem:[#allocation3 + $0x8] sm:$0xff]
  %v5691 = vld [vmem:[#allocation3 + $0x10] sm:$0xff]
  %v5692 = vld [vmem:[#allocation3 + $0x18] sm:$0xff]
  %v5693 = vld [vmem:[#allocation3 + $0x20] sm:$0xff]
  %v5694 = vld [vmem:[#allocation3 + $0x28] sm:$0xff]
  %v5695 = vld [vmem:[#allocation3 + $0x30] sm:$0xff]
  %v5696 = vld [vmem:[#allocation3 + $0x38] sm:$0xff]
  %v5697 = vld [vmem:[#allocation3 + $0x40] sm:$0xff]
  %v5698 = vld [vmem:[#allocation3 + $0x48] sm:$0xff]
  %v5699 = vld [vmem:[#allocation3 + $0x50] sm:$0xff]
  %v5700 = vld [vmem:[#allocation3 + $0x58] sm:$0xff]
  %v5701 = vld [vmem:[#allocation3 + $0x60] sm:$0xff]
  %v5702 = vld [vmem:[#allocation3 + $0x68] sm:$0xff]
  %v5703 = vld [vmem:[#allocation3 + $0x70] sm:$0xff]
  %v5704 = vld [vmem:[#allocation3 + $0x78] sm:$0xff]
  %v5705 = vld [vmem:[#allocation3 + $0x80] sm:$0xff]
  %v5706 = vld [vmem:[#allocation3 + $0x88] sm:$0xff]
  %v5707 = vld [vmem:[#allocation3 + $0x90] sm:$0xff]
  %v5708 = vld [vmem:[#allocation3 + $0x98] sm:$0xff]
  %v5709 = vld [vmem:[#allocation3 + $0xa0] sm:$0xff]
  %v5710 = vld [vmem:[#allocation3 + $0xa8] sm:$0xff]
  %v5711 = vld [vmem:[#allocation3 + $0xb0] sm:$0xff]
  %v5712 = vld [vmem:[#allocation3 + $0xb8] sm:$0xff]
  %v5713 = vld [vmem:[#allocation3 + $0xc0] sm:$0xff]
  %v5714 = vld [vmem:[#allocation3 + $0xc8] sm:$0xff]
  %v5715 = vld [vmem:[#allocation3 + $0xd0] sm:$0xff]
  %v5716 = vld [vmem:[#allocation3 + $0xd8] sm:$0xff]
  %v5717 = vld [vmem:[#allocation3 + $0xe0] sm:$0xff]
  %v5718 = vld [vmem:[#allocation3 + $0xe8] sm:$0xff]
  %v5719 = vld [vmem:[#allocation3 + $0xf0] sm:$0xff]
  %v5720 = vld [vmem:[#allocation3 + $0xf8] sm:$0xff]
  %v5721 = vld [vmem:[#allocation3 + $0x100] sm:$0xff]
  %v5722 = vld [vmem:[#allocation3 + $0x108] sm:$0xff]
  %v5723 = vld [vmem:[#allocation3 + $0x110] sm:$0xff]
  %v5724 = vld [vmem:[#allocation3 + $0x118] sm:$0xff]
  %v5725 = vld [vmem:[#allocation3 + $0x120] sm:$0xff]
  %v5726 = vld [vmem:[#allocation3 + $0x128] sm:$0xff]
  %v5727 = vld [vmem:[#allocation3 + $0x130] sm:$0xff]
  %v5728 = vld [vmem:[#allocation3 + $0x138] sm:$0xff]
  %v5729 = vld [vmem:[#allocation3 + $0x140] sm:$0xff]
  %v5730 = vld [vmem:[#allocation3 + $0x148] sm:$0xff]
  %v5731 = vld [vmem:[#allocation3 + $0x150] sm:$0xff]
  %v5732 = vld [vmem:[#allocation3 + $0x158] sm:$0xff]
  %v5733 = vld [vmem:[#allocation3 + $0x160] sm:$0xff]
  %v5734 = vld [vmem:[#allocation3 + $0x168] sm:$0xff]
  %v5735 = vld [vmem:[#allocation3 + $0x170] sm:$0xff]
  %v5736 = vld [vmem:[#allocation3 + $0x178] sm:$0xff]
  %v5737 = vld [vmem:[#allocation3 + $0x180] sm:$0xff]
  %v5738 = vld [vmem:[#allocation3 + $0x188] sm:$0xff]
  %v5739 = vld [vmem:[#allocation3 + $0x190] sm:$0xff]
  %v5740 = vld [vmem:[#allocation3 + $0x198] sm:$0xff]
  %v5741 = vld [vmem:[#allocation3 + $0x1a0] sm:$0xff]
  %v5742 = vld [vmem:[#allocation3 + $0x1a8] sm:$0xff]
  %v5743 = vld [vmem:[#allocation3 + $0x1b0] sm:$0xff]
  %v5744 = vld [vmem:[#allocation3 + $0x1b8] sm:$0xff]
  %v5745 = vld [vmem:[#allocation3 + $0x1c0] sm:$0xff]
  %v5746 = vld [vmem:[#allocation3 + $0x1c8] sm:$0xff]
  %v5747 = vld [vmem:[#allocation3 + $0x1d0] sm:$0xff]
  %v5748 = vld [vmem:[#allocation3 + $0x1d8] sm:$0xff]
  %v5749 = vld [vmem:[#allocation3 + $0x1e0] sm:$0xff]
  %v5750 = vld [vmem:[#allocation3 + $0x1e8] sm:$0xff]
  %v5751 = vld [vmem:[#allocation3 + $0x1f0] sm:$0xff]
  %v5752 = vld [vmem:[#allocation3 + $0x1f8] sm:$0xff]
  %v5753 = vld [vmem:[#allocation3 + $0x200] sm:$0xff]
  %v5754 = vld [vmem:[#allocation3 + $0x208] sm:$0xff]
  %v5755 = vld [vmem:[#allocation3 + $0x210] sm:$0xff]
  %v5756 = vld [vmem:[#allocation3 + $0x218] sm:$0xff]
  %v5757 = vld [vmem:[#allocation3 + $0x220] sm:$0xff]
  %v5758 = vld [vmem:[#allocation3 + $0x228] sm:$0xff]
  %v5759 = vld [vmem:[#allocation3 + $0x230] sm:$0xff]
  %v5760 = vld [vmem:[#allocation3 + $0x238] sm:$0xff]
  %v5761 = vld [vmem:[#allocation3 + $0x240] sm:$0xff]
  %v5762 = vld [vmem:[#allocation3 + $0x248] sm:$0xff]
  %v5763 = vld [vmem:[#allocation3 + $0x250] sm:$0xff]
  %v5764 = vld [vmem:[#allocation3 + $0x258] sm:$0xff]
  %v5765 = vld [vmem:[#allocation3 + $0x260] sm:$0xff]
  %v5766 = vld [vmem:[#allocation3 + $0x268] sm:$0xff]
  %v5767 = vld [vmem:[#allocation3 + $0x270] sm:$0xff]
  %v5768 = vld [vmem:[#allocation3 + $0x278] sm:$0xff]
  %v5769 = vld [vmem:[#allocation3 + $0x280] sm:$0xff]
  %v5770 = vld [vmem:[#allocation3 + $0x288] sm:$0xff]
  %v5771 = vld [vmem:[#allocation3 + $0x290] sm:$0xff]
  %v5772 = vld [vmem:[#allocation3 + $0x298] sm:$0xff]
  %v5773 = vld [vmem:[#allocation3 + $0x2a0] sm:$0xff]
  %v5774 = vld [vmem:[#allocation3 + $0x2a8] sm:$0xff]
  %v5775 = vld [vmem:[#allocation3 + $0x2b0] sm:$0xff]
  %v5776 = vld [vmem:[#allocation3 + $0x2b8] sm:$0xff]
  %v5777 = vld [vmem:[#allocation3 + $0x2c0] sm:$0xff]
  %v5778 = vld [vmem:[#allocation3 + $0x2c8] sm:$0xff]
  %v5779 = vld [vmem:[#allocation3 + $0x2d0] sm:$0xff]
  %v5780 = vld [vmem:[#allocation3 + $0x2d8] sm:$0xff]
  %v5781 = vld [vmem:[#allocation3 + $0x2e0] sm:$0xff]
  %v5782 = vld [vmem:[#allocation3 + $0x2e8] sm:$0xff]
  %v5783 = vld [vmem:[#allocation3 + $0x2f0] sm:$0xff]
  %v5784 = vld [vmem:[#allocation3 + $0x2f8] sm:$0xff]
  %v5785 = vld [vmem:[#allocation3 + $0x300] sm:$0xff]
  %v5786 = vld [vmem:[#allocation3 + $0x308] sm:$0xff]
  %v5787 = vld [vmem:[#allocation3 + $0x310] sm:$0xff]
  %v5788 = vld [vmem:[#allocation3 + $0x318] sm:$0xff]
  %v5789 = vld [vmem:[#allocation3 + $0x320] sm:$0xff]
  %v5790 = vld [vmem:[#allocation3 + $0x328] sm:$0xff]
  %v5791 = vld [vmem:[#allocation3 + $0x330] sm:$0xff]
  %v5792 = vld [vmem:[#allocation3 + $0x338] sm:$0xff]
  %v5793 = vld [vmem:[#allocation3 + $0x340] sm:$0xff]
  %v5794 = vld [vmem:[#allocation3 + $0x348] sm:$0xff]
  %v5795 = vld [vmem:[#allocation3 + $0x350] sm:$0xff]
  %v5796 = vld [vmem:[#allocation3 + $0x358] sm:$0xff]
  %v5797 = vld [vmem:[#allocation3 + $0x360] sm:$0xff]
  %v5798 = vld [vmem:[#allocation3 + $0x368] sm:$0xff]
  %v5799 = vld [vmem:[#allocation3 + $0x370] sm:$0xff]
  %v5800 = vld [vmem:[#allocation3 + $0x378] sm:$0xff]
  %v5801 = vld [vmem:[#allocation3 + $0x380] sm:$0xff]
  %v5802 = vld [vmem:[#allocation3 + $0x388] sm:$0xff]
  %v5803 = vld [vmem:[#allocation3 + $0x390] sm:$0xff]
  %v5804 = vld [vmem:[#allocation3 + $0x398] sm:$0xff]
  %v5805 = vld [vmem:[#allocation3 + $0x3a0] sm:$0xff]
  %v5806 = vld [vmem:[#allocation3 + $0x3a8] sm:$0xff]
  %v5807 = vld [vmem:[#allocation3 + $0x3b0] sm:$0xff]
  %v5808 = vld [vmem:[#allocation3 + $0x3b8] sm:$0xff]
  %v5809 = vld [vmem:[#allocation3 + $0x3c0] sm:$0xff]
  %v5810 = vld [vmem:[#allocation3 + $0x3c8] sm:$0xff]
  %v5811 = vld [vmem:[#allocation3 + $0x3d0] sm:$0xff]
  %v5812 = vld [vmem:[#allocation3 + $0x3d8] sm:$0xff]
  %v5813 = vld [vmem:[#allocation3 + $0x3e0] sm:$0xff]
  %v5814 = vld [vmem:[#allocation3 + $0x3e8] sm:$0xff]
  %v5815 = vld [vmem:[#allocation3 + $0x3f0] sm:$0xff]
  %v5816 = vld [vmem:[#allocation3 + $0x3f8] sm:$0xff]
  %v5817 = vld [vmem:[#allocation3 + $0x400] sm:$0xff]
  %v5818 = vld [vmem:[#allocation3 + $0x408] sm:$0xff]
  %v5819 = vld [vmem:[#allocation3 + $0x410] sm:$0xff]
  %v5820 = vld [vmem:[#allocation3 + $0x418] sm:$0xff]
  %v5821 = vld [vmem:[#allocation3 + $0x420] sm:$0xff]
  %v5822 = vld [vmem:[#allocation3 + $0x428] sm:$0xff]
  %v5823 = vld [vmem:[#allocation3 + $0x430] sm:$0xff]
  %v5824 = vld [vmem:[#allocation3 + $0x438] sm:$0xff]
  %v5825 = vld [vmem:[#allocation3 + $0x440] sm:$0xff]
  %v5826 = vld [vmem:[#allocation3 + $0x448] sm:$0xff]
  %v5827 = vld [vmem:[#allocation3 + $0x450] sm:$0xff]
  %v5828 = vld [vmem:[#allocation3 + $0x458] sm:$0xff]
  %v5829 = vld [vmem:[#allocation3 + $0x460] sm:$0xff]
  %v5830 = vld [vmem:[#allocation3 + $0x468] sm:$0xff]
  %v5831 = vld [vmem:[#allocation3 + $0x470] sm:$0xff]
  %v5832 = vld [vmem:[#allocation3 + $0x478] sm:$0xff]
  %v5833 = vld [vmem:[#allocation3 + $0x480] sm:$0xff]
  %v5834 = vld [vmem:[#allocation3 + $0x488] sm:$0xff]
  %v5835 = vld [vmem:[#allocation3 + $0x490] sm:$0xff]
  %v5836 = vld [vmem:[#allocation3 + $0x498] sm:$0xff]
  %v5837 = vld [vmem:[#allocation3 + $0x4a0] sm:$0xff]
  %v5838 = vld [vmem:[#allocation3 + $0x4a8] sm:$0xff]
  %v5839 = vld [vmem:[#allocation3 + $0x4b0] sm:$0xff]
  %v5840 = vld [vmem:[#allocation3 + $0x4b8] sm:$0xff]
  %v5841 = vld [vmem:[#allocation3 + $0x4c0] sm:$0xff]
  %v5842 = vld [vmem:[#allocation3 + $0x4c8] sm:$0xff]
  %v5843 = vld [vmem:[#allocation3 + $0x4d0] sm:$0xff]
  %v5844 = vld [vmem:[#allocation3 + $0x4d8] sm:$0xff]
  %v5845 = vld [vmem:[#allocation3 + $0x4e0] sm:$0xff]
  %v5846 = vld [vmem:[#allocation3 + $0x4e8] sm:$0xff]
  %v5847 = vld [vmem:[#allocation3 + $0x4f0] sm:$0xff]
  %v5848 = vld [vmem:[#allocation3 + $0x4f8] sm:$0xff]
  %v5849 = vld [vmem:[#allocation3 + $0x500] sm:$0xff]
  %v5850 = vld [vmem:[#allocation3 + $0x508] sm:$0xff]
  %v5851 = vld [vmem:[#allocation3 + $0x510] sm:$0xff]
  %v5852 = vld [vmem:[#allocation3 + $0x518] sm:$0xff]
  %v5853 = vld [vmem:[#allocation3 + $0x520] sm:$0xff]
  %v5854 = vld [vmem:[#allocation3 + $0x528] sm:$0xff]
  %v5855 = vld [vmem:[#allocation3 + $0x530] sm:$0xff]
  %v5856 = vld [vmem:[#allocation3 + $0x538] sm:$0xff]
  %v5857 = vld [vmem:[#allocation3 + $0x540] sm:$0xff]
  %v5858 = vld [vmem:[#allocation3 + $0x548] sm:$0xff]
  %v5859 = vld [vmem:[#allocation3 + $0x550] sm:$0xff]
  %v5860 = vld [vmem:[#allocation3 + $0x558] sm:$0xff]
  %v5861 = vld [vmem:[#allocation3 + $0x560] sm:$0xff]
  %v5862 = vld [vmem:[#allocation3 + $0x568] sm:$0xff]
  %v5863 = vld [vmem:[#allocation3 + $0x570] sm:$0xff]
  %v5864 = vld [vmem:[#allocation3 + $0x578] sm:$0xff]
  %v5865 = vld [vmem:[#allocation3 + $0x580] sm:$0xff]
  %v5866 = vld [vmem:[#allocation3 + $0x588] sm:$0xff]
  %v5867 = vld [vmem:[#allocation3 + $0x590] sm:$0xff]
  %v5868 = vld [vmem:[#allocation3 + $0x598] sm:$0xff]
  %v5869 = vld [vmem:[#allocation3 + $0x5a0] sm:$0xff]
  %v5870 = vld [vmem:[#allocation3 + $0x5a8] sm:$0xff]
  %v5871 = vld [vmem:[#allocation3 + $0x5b0] sm:$0xff]
  %v5872 = vld [vmem:[#allocation3 + $0x5b8] sm:$0xff]
  %v5873 = vld [vmem:[#allocation3 + $0x5c0] sm:$0xff]
  %v5874 = vld [vmem:[#allocation3 + $0x5c8] sm:$0xff]
  %v5875 = vld [vmem:[#allocation3 + $0x5d0] sm:$0xff]
  %v5876 = vld [vmem:[#allocation3 + $0x5d8] sm:$0xff]
  %v5877 = vld [vmem:[#allocation3 + $0x5e0] sm:$0xff]
  %v5878 = vld [vmem:[#allocation3 + $0x5e8] sm:$0xff]
  %v5879 = vld [vmem:[#allocation3 + $0x5f0] sm:$0xff]
  %v5880 = vld [vmem:[#allocation3 + $0x5f8] sm:$0xff]
  %v5881 = vld [vmem:[#allocation3 + $0x600] sm:$0xff]
  %v5882 = vld [vmem:[#allocation3 + $0x608] sm:$0xff]
  %v5883 = vld [vmem:[#allocation3 + $0x610] sm:$0xff]
  %v5884 = vld [vmem:[#allocation3 + $0x618] sm:$0xff]
  %v5885 = vld [vmem:[#allocation3 + $0x620] sm:$0xff]
  %v5886 = vld [vmem:[#allocation3 + $0x628] sm:$0xff]
  %v5887 = vld [vmem:[#allocation3 + $0x630] sm:$0xff]
  %v5888 = vld [vmem:[#allocation3 + $0x638] sm:$0xff]
  %5890 = vset.pattern.permute.xlu0 0
  %5891 = vperm.xlu0 %5890, %v4333
  %v5892 = vpop.permute.xlu0 %5891
  %5895 = vset.pattern.permute.xlu0 0
  %5896 = vperm.xlu0 %5895, %v4334
  %v5897 = vpop.permute.xlu0 %5896
  %5900 = vset.pattern.permute.xlu0 0
  %5901 = vperm.xlu0 %5900, %v4335
  %v5902 = vpop.permute.xlu0 %5901
  %5905 = vset.pattern.permute.xlu0 0
  %5906 = vperm.xlu0 %5905, %v4336
  %v5907 = vpop.permute.xlu0 %5906
  %v5910 = vsel %vm347, %v4311, 0
  %v5913 = vsel %vm347, %v4318, 0
  %v5916 = vsel %vm347, %v4325, 0
  %v5919 = vsel %vm347, %v4332, 0
  %5921 = vmatprep.subr.mxu0 %v5720
  %5922 = vmatpush1.msra.mxu0 %v5719
  %5923 = vmatprep.subr.mxu0 %v5718
  %5924 = vmatpush1.msra.mxu0 %v5717
  %5925 = vmatprep.subr.mxu0 %v5716
  %5926 = vmatpush1.msra.mxu0 %v5715
  %5927 = vmatprep.subr.mxu0 %v5714
  %5928 = vmatpush1.msra.mxu0 %v5713
  %5929 = vmatprep.subr.mxu0 %v5712
  %5930 = vmatpush1.msra.mxu0 %v5711
  %5931 = vmatprep.subr.mxu0 %v5710
  %5932 = vmatpush1.msra.mxu0 %v5709
  %5933 = vmatprep.subr.mxu0 %v5708
  %5934 = vmatpush1.msra.mxu0 %v5707
  %5935 = vmatprep.subr.mxu0 %v5706
  %5936 = vmatpush1.msra.mxu0 %v5705
  %5937 = vmatprep.subr.mxu0 %v5704
  %5938 = vmatpush1.msra.mxu0 %v5703
  %5939 = vmatprep.subr.mxu0 %v5702
  %5940 = vmatpush1.msra.mxu0 %v5701
  %5941 = vmatprep.subr.mxu0 %v5700
  %5942 = vmatpush1.msra.mxu0 %v5699
  %5943 = vmatprep.subr.mxu0 %v5698
  %5944 = vmatpush1.msra.mxu0 %v5697
  %5945 = vmatprep.subr.mxu0 %v5696
  %5946 = vmatpush1.msra.mxu0 %v5695
  %5947 = vmatprep.subr.mxu0 %v5694
  %5948 = vmatpush1.msra.mxu0 %v5693
  %5949 = vmatprep.subr.mxu0 %v5692
  %5950 = vmatpush1.msra.mxu0 %v5691
  %5951 = vmatprep.subr.mxu0 %v5690
  %5952 = vmatpush1.msra.mxu0 %v5689
  %5953 = vmatprep.subr.mxu0 %v5752
  %5954 = vmatpush2.msra.mxu0 %v5751
  %5955 = vmatprep.subr.mxu0 %v5750
  %5956 = vmatpush2.msra.mxu0 %v5749
  %5957 = vmatprep.subr.mxu0 %v5748
  %5958 = vmatpush2.msra.mxu0 %v5747
  %5959 = vmatprep.subr.mxu0 %v5746
  %5960 = vmatpush2.msra.mxu0 %v5745
  %5961 = vmatprep.subr.mxu0 %v5744
  %5962 = vmatpush2.msra.mxu0 %v5743
  %5963 = vmatprep.subr.mxu0 %v5742
  %5964 = vmatpush2.msra.mxu0 %v5741
  %5965 = vmatprep.subr.mxu0 %v5740
  %5966 = vmatpush2.msra.mxu0 %v5739
  %5967 = vmatprep.subr.mxu0 %v5738
  %5968 = vmatpush2.msra.mxu0 %v5737
  %5969 = vmatprep.subr.mxu0 %v5736
  %5970 = vmatpush2.msra.mxu0 %v5735
  %5971 = vmatprep.subr.mxu0 %v5734
  %5972 = vmatpush2.msra.mxu0 %v5733
  %5973 = vmatprep.subr.mxu0 %v5732
  %5974 = vmatpush2.msra.mxu0 %v5731
  %5975 = vmatprep.subr.mxu0 %v5730
  %5976 = vmatpush2.msra.mxu0 %v5729
  %5977 = vmatprep.subr.mxu0 %v5728
  %5978 = vmatpush2.msra.mxu0 %v5727
  %5979 = vmatprep.subr.mxu0 %v5726
  %5980 = vmatpush2.msra.mxu0 %v5725
  %5981 = vmatprep.subr.mxu0 %v5724
  %5982 = vmatpush2.msra.mxu0 %v5723
  %5983 = vmatprep.subr.mxu0 %v5722
  %5984 = vmatpush2.msra.mxu0 %v5721
  %5985 = vmatprep.mubr.f32.mxu0 %v4306
  %5986 = vmatmul.mubr.f32.gmra.mxu0 %v4305
  %v5987 = vpop.f32.mrf.mxu0
  %v5988 = vadd.f32 %v5892, %v5987
  %v5989 = vpop.f32.mrf.mxu0
  %v5990 = vadd.f32 %v5892, %v5989
  %5991 = vmatprep.mubr.f32.mxu0 %v4313
  %5992 = vmatmul.mubr.f32.gmra.mxu0 %v4312
  %v5993 = vpop.f32.mrf.mxu0
  %v5994 = vadd.f32 %v5897, %v5993
  %v5995 = vpop.f32.mrf.mxu0
  %v5996 = vadd.f32 %v5897, %v5995
  %5997 = vmatprep.mubr.f32.mxu0 %v4320
  %5998 = vmatmul.mubr.f32.gmra.mxu0 %v4319
  %v5999 = vpop.f32.mrf.mxu0
  %v6000 = vadd.f32 %v5902, %v5999
  %v6001 = vpop.f32.mrf.mxu0
  %v6002 = vadd.f32 %v5902, %v6001
  %6003 = vmatprep.mubr.f32.mxu0 %v4327
  %6004 = vmatmul.mubr.f32.gmra.mxu0 %v4326
  %v6005 = vpop.f32.mrf.mxu0
  %v6006 = vadd.f32 %v5907, %v6005
  %v6007 = vpop.f32.mrf.mxu0
  %v6008 = vadd.f32 %v5907, %v6007
  %6009 = vdwg.mxu0
  %6010 = vmatprep.subr.mxu0 %v5784
  %6011 = vmatpush1.msra.mxu0 %v5783
  %6012 = vmatprep.subr.mxu0 %v5782
  %6013 = vmatpush1.msra.mxu0 %v5781
  %6014 = vmatprep.subr.mxu0 %v5780
  %6015 = vmatpush1.msra.mxu0 %v5779
  %6016 = vmatprep.subr.mxu0 %v5778
  %6017 = vmatpush1.msra.mxu0 %v5777
  %6018 = vmatprep.subr.mxu0 %v5776
  %6019 = vmatpush1.msra.mxu0 %v5775
  %6020 = vmatprep.subr.mxu0 %v5774
  %6021 = vmatpush1.msra.mxu0 %v5773
  %6022 = vmatprep.subr.mxu0 %v5772
  %6023 = vmatpush1.msra.mxu0 %v5771
  %6024 = vmatprep.subr.mxu0 %v5770
  %6025 = vmatpush1.msra.mxu0 %v5769
  %6026 = vmatprep.subr.mxu0 %v5768
  %6027 = vmatpush1.msra.mxu0 %v5767
  %6028 = vmatprep.subr.mxu0 %v5766
  %6029 = vmatpush1.msra.mxu0 %v5765
  %6030 = vmatprep.subr.mxu0 %v5764
  %6031 = vmatpush1.msra.mxu0 %v5763
  %6032 = vmatprep.subr.mxu0 %v5762
  %6033 = vmatpush1.msra.mxu0 %v5761
  %6034 = vmatprep.subr.mxu0 %v5760
  %6035 = vmatpush1.msra.mxu0 %v5759
  %6036 = vmatprep.subr.mxu0 %v5758
  %6037 = vmatpush1.msra.mxu0 %v5757
  %6038 = vmatprep.subr.mxu0 %v5756
  %6039 = vmatpush1.msra.mxu0 %v5755
  %6040 = vmatprep.subr.mxu0 %v5754
  %6041 = vmatpush1.msra.mxu0 %v5753
  %6042 = vmatprep.subr.mxu0 %v5816
  %6043 = vmatpush2.msra.mxu0 %v5815
  %6044 = vmatprep.subr.mxu0 %v5814
  %6045 = vmatpush2.msra.mxu0 %v5813
  %6046 = vmatprep.subr.mxu0 %v5812
  %6047 = vmatpush2.msra.mxu0 %v5811
  %6048 = vmatprep.subr.mxu0 %v5810
  %6049 = vmatpush2.msra.mxu0 %v5809
  %6050 = vmatprep.subr.mxu0 %v5808
  %6051 = vmatpush2.msra.mxu0 %v5807
  %6052 = vmatprep.subr.mxu0 %v5806
  %6053 = vmatpush2.msra.mxu0 %v5805
  %6054 = vmatprep.subr.mxu0 %v5804
  %6055 = vmatpush2.msra.mxu0 %v5803
  %6056 = vmatprep.subr.mxu0 %v5802
  %6057 = vmatpush2.msra.mxu0 %v5801
  %6058 = vmatprep.subr.mxu0 %v5800
  %6059 = vmatpush2.msra.mxu0 %v5799
  %6060 = vmatprep.subr.mxu0 %v5798
  %6061 = vmatpush2.msra.mxu0 %v5797
  %6062 = vmatprep.subr.mxu0 %v5796
  %6063 = vmatpush2.msra.mxu0 %v5795
  %6064 = vmatprep.subr.mxu0 %v5794
  %6065 = vmatpush2.msra.mxu0 %v5793
  %6066 = vmatprep.subr.mxu0 %v5792
  %6067 = vmatpush2.msra.mxu0 %v5791
  %6068 = vmatprep.subr.mxu0 %v5790
  %6069 = vmatpush2.msra.mxu0 %v5789
  %6070 = vmatprep.subr.mxu0 %v5788
  %6071 = vmatpush2.msra.mxu0 %v5787
  %6072 = vmatprep.subr.mxu0 %v5786
  %6073 = vmatpush2.msra.mxu0 %v5785
  %6074 = vmatprep.mubr.f32.mxu0 %v4308
  %6075 = vmatmul.mubr.f32.gmra.mxu0 %v4307
  %v6076 = vpop.f32.mrf.mxu0
  %v6077 = vadd.f32 %v5988, %v6076
  %v6078 = vpop.f32.mrf.mxu0
  %v6079 = vadd.f32 %v5990, %v6078
  %6080 = vmatprep.mubr.f32.mxu0 %v4315
  %6081 = vmatmul.mubr.f32.gmra.mxu0 %v4314
  %v6082 = vpop.f32.mrf.mxu0
  %v6083 = vadd.f32 %v5994, %v6082
  %v6084 = vpop.f32.mrf.mxu0
  %v6085 = vadd.f32 %v5996, %v6084
  %6086 = vmatprep.mubr.f32.mxu0 %v4322
  %6087 = vmatmul.mubr.f32.gmra.mxu0 %v4321
  %v6088 = vpop.f32.mrf.mxu0
  %v6089 = vadd.f32 %v6000, %v6088
  %v6090 = vpop.f32.mrf.mxu0
  %v6091 = vadd.f32 %v6002, %v6090
  %6092 = vmatprep.mubr.f32.mxu0 %v4329
  %6093 = vmatmul.mubr.f32.gmra.mxu0 %v4328
  %v6094 = vpop.f32.mrf.mxu0
  %v6095 = vadd.f32 %v6006, %v6094
  %v6096 = vpop.f32.mrf.mxu0
  %v6097 = vadd.f32 %v6008, %v6096
  %6098 = vdwg.mxu0
  %6099 = vmatprep.subr.mxu0 %v5848
  %6100 = vmatpush1.msra.mxu0 %v5847
  %6101 = vmatprep.subr.mxu0 %v5846
  %6102 = vmatpush1.msra.mxu0 %v5845
  %6103 = vmatprep.subr.mxu0 %v5844
  %6104 = vmatpush1.msra.mxu0 %v5843
  %6105 = vmatprep.subr.mxu0 %v5842
  %6106 = vmatpush1.msra.mxu0 %v5841
  %6107 = vmatprep.subr.mxu0 %v5840
  %6108 = vmatpush1.msra.mxu0 %v5839
  %6109 = vmatprep.subr.mxu0 %v5838
  %6110 = vmatpush1.msra.mxu0 %v5837
  %6111 = vmatprep.subr.mxu0 %v5836
  %6112 = vmatpush1.msra.mxu0 %v5835
  %6113 = vmatprep.subr.mxu0 %v5834
  %6114 = vmatpush1.msra.mxu0 %v5833
  %6115 = vmatprep.subr.mxu0 %v5832
  %6116 = vmatpush1.msra.mxu0 %v5831
  %6117 = vmatprep.subr.mxu0 %v5830
  %6118 = vmatpush1.msra.mxu0 %v5829
  %6119 = vmatprep.subr.mxu0 %v5828
  %6120 = vmatpush1.msra.mxu0 %v5827
  %6121 = vmatprep.subr.mxu0 %v5826
  %6122 = vmatpush1.msra.mxu0 %v5825
  %6123 = vmatprep.subr.mxu0 %v5824
  %6124 = vmatpush1.msra.mxu0 %v5823
  %6125 = vmatprep.subr.mxu0 %v5822
  %6126 = vmatpush1.msra.mxu0 %v5821
  %6127 = vmatprep.subr.mxu0 %v5820
  %6128 = vmatpush1.msra.mxu0 %v5819
  %6129 = vmatprep.subr.mxu0 %v5818
  %6130 = vmatpush1.msra.mxu0 %v5817
  %6131 = vmatprep.subr.mxu0 %v5880
  %6132 = vmatpush2.msra.mxu0 %v5879
  %6133 = vmatprep.subr.mxu0 %v5878
  %6134 = vmatpush2.msra.mxu0 %v5877
  %6135 = vmatprep.subr.mxu0 %v5876
  %6136 = vmatpush2.msra.mxu0 %v5875
  %6137 = vmatprep.subr.mxu0 %v5874
  %6138 = vmatpush2.msra.mxu0 %v5873
  %6139 = vmatprep.subr.mxu0 %v5872
  %6140 = vmatpush2.msra.mxu0 %v5871
  %6141 = vmatprep.subr.mxu0 %v5870
  %6142 = vmatpush2.msra.mxu0 %v5869
  %6143 = vmatprep.subr.mxu0 %v5868
  %6144 = vmatpush2.msra.mxu0 %v5867
  %6145 = vmatprep.subr.mxu0 %v5866
  %6146 = vmatpush2.msra.mxu0 %v5865
  %6147 = vmatprep.subr.mxu0 %v5864
  %6148 = vmatpush2.msra.mxu0 %v5863
  %6149 = vmatprep.subr.mxu0 %v5862
  %6150 = vmatpush2.msra.mxu0 %v5861
  %6151 = vmatprep.subr.mxu0 %v5860
  %6152 = vmatpush2.msra.mxu0 %v5859
  %6153 = vmatprep.subr.mxu0 %v5858
  %6154 = vmatpush2.msra.mxu0 %v5857
  %6155 = vmatprep.subr.mxu0 %v5856
  %6156 = vmatpush2.msra.mxu0 %v5855
  %6157 = vmatprep.subr.mxu0 %v5854
  %6158 = vmatpush2.msra.mxu0 %v5853
  %6159 = vmatprep.subr.mxu0 %v5852
  %6160 = vmatpush2.msra.mxu0 %v5851
  %6161 = vmatprep.subr.mxu0 %v5850
  %6162 = vmatpush2.msra.mxu0 %v5849
  %6163 = vmatprep.mubr.f32.mxu0 %v4310
  %6164 = vmatmul.mubr.f32.gmra.mxu0 %v4309
  %v6165 = vpop.f32.mrf.mxu0
  %v6166 = vadd.f32 %v6077, %v6165
  %v6167 = vpop.f32.mrf.mxu0
  %v6168 = vadd.f32 %v6079, %v6167
  %6169 = vmatprep.mubr.f32.mxu0 %v4317
  %6170 = vmatmul.mubr.f32.gmra.mxu0 %v4316
  %v6171 = vpop.f32.mrf.mxu0
  %v6172 = vadd.f32 %v6083, %v6171
  %v6173 = vpop.f32.mrf.mxu0
  %v6174 = vadd.f32 %v6085, %v6173
  %6175 = vmatprep.mubr.f32.mxu0 %v4324
  %6176 = vmatmul.mubr.f32.gmra.mxu0 %v4323
  %v6177 = vpop.f32.mrf.mxu0
  %v6178 = vadd.f32 %v6089, %v6177
  %v6179 = vpop.f32.mrf.mxu0
  %v6180 = vadd.f32 %v6091, %v6179
  %6181 = vmatprep.mubr.f32.mxu0 %v4331
  %6182 = vmatmul.mubr.f32.gmra.mxu0 %v4330
  %v6183 = vpop.f32.mrf.mxu0
  %v6184 = vadd.f32 %v6095, %v6183
  %v6185 = vpop.f32.mrf.mxu0
  %v6186 = vadd.f32 %v6097, %v6185
  %6187 = vdwg.mxu0
  %6188 = vmatprep.subr.mxu0 0.0
  %6189 = vmatpush1.msra.mxu0 0.0
  %6190 = vmatprep.subr.mxu0 0.0
  %6191 = vmatpush1.msra.mxu0 0.0
  %6192 = vmatprep.subr.mxu0 0.0
  %6193 = vmatpush1.msra.mxu0 0.0
  %6194 = vmatprep.subr.mxu0 0.0
  %6195 = vmatpush1.msra.mxu0 0.0
  %6196 = vmatprep.subr.mxu0 0.0
  %6197 = vmatpush1.msra.mxu0 0.0
  %6198 = vmatprep.subr.mxu0 0.0
  %6199 = vmatpush1.msra.mxu0 0.0
  %6200 = vmatprep.subr.mxu0 0.0
  %6201 = vmatpush1.msra.mxu0 0.0
  %6202 = vmatprep.subr.mxu0 0.0
  %6203 = vmatpush1.msra.mxu0 0.0
  %6204 = vmatprep.subr.mxu0 0.0
  %6205 = vmatpush1.msra.mxu0 0.0
  %6206 = vmatprep.subr.mxu0 0.0
  %6207 = vmatpush1.msra.mxu0 0.0
  %6208 = vmatprep.subr.mxu0 0.0
  %6209 = vmatpush1.msra.mxu0 0.0
  %6210 = vmatprep.subr.mxu0 0.0
  %6211 = vmatpush1.msra.mxu0 0.0
  %6212 = vmatprep.subr.mxu0 %v5888
  %6213 = vmatpush1.msra.mxu0 %v5887
  %6214 = vmatprep.subr.mxu0 %v5886
  %6215 = vmatpush1.msra.mxu0 %v5885
  %6216 = vmatprep.subr.mxu0 %v5884
  %6217 = vmatpush1.msra.mxu0 %v5883
  %6218 = vmatprep.subr.mxu0 %v5882
  %6219 = vmatpush1.msra.mxu0 %v5881
  %6220 = vmatprep.subr.mxu0 0.0
  %6221 = vmatpush2.msra.mxu0 0.0
  %6222 = vmatprep.subr.mxu0 0.0
  %6223 = vmatpush2.msra.mxu0 0.0
  %6224 = vmatprep.subr.mxu0 0.0
  %6225 = vmatpush2.msra.mxu0 0.0
  %6226 = vmatprep.subr.mxu0 0.0
  %6227 = vmatpush2.msra.mxu0 0.0
  %6228 = vmatprep.subr.mxu0 0.0
  %6229 = vmatpush2.msra.mxu0 0.0
  %6230 = vmatprep.subr.mxu0 0.0
  %6231 = vmatpush2.msra.mxu0 0.0
  %6232 = vmatprep.subr.mxu0 0.0
  %6233 = vmatpush2.msra.mxu0 0.0
  %6234 = vmatprep.subr.mxu0 0.0
  %6235 = vmatpush2.msra.mxu0 0.0
  %6236 = vmatprep.subr.mxu0 0.0
  %6237 = vmatpush2.msra.mxu0 0.0
  %6238 = vmatprep.subr.mxu0 0.0
  %6239 = vmatpush2.msra.mxu0 0.0
  %6240 = vmatprep.subr.mxu0 0.0
  %6241 = vmatpush2.msra.mxu0 0.0
  %6242 = vmatprep.subr.mxu0 0.0
  %6243 = vmatpush2.msra.mxu0 0.0
  %6244 = vmatprep.subr.mxu0 0.0
  %6245 = vmatpush2.msra.mxu0 0.0
  %6246 = vmatprep.subr.mxu0 0.0
  %6247 = vmatpush2.msra.mxu0 0.0
  %6248 = vmatprep.subr.mxu0 0.0
  %6249 = vmatpush2.msra.mxu0 0.0
  %6250 = vmatprep.subr.mxu0 0.0
  %6251 = vmatpush2.msra.mxu0 0.0
  %6252 = vmatprep.mubr.f32.mxu0 0.0
  %6253 = vmatmul.mubr.f32.gmra.mxu0 %v5910
  %v6254 = vpop.f32.mrf.mxu0
  %v6255 = vadd.f32 %v6166, %v6254
  %v6256 = vpop.f32.mrf.mxu0
  %v6257 = vadd.f32 %v6168, %v6256
  %6258 = vmatprep.mubr.f32.mxu0 0.0
  %6259 = vmatmul.mubr.f32.gmra.mxu0 %v5913
  %v6260 = vpop.f32.mrf.mxu0
  %v6261 = vadd.f32 %v6172, %v6260
  %v6262 = vpop.f32.mrf.mxu0
  %v6263 = vadd.f32 %v6174, %v6262
  %6264 = vmatprep.mubr.f32.mxu0 0.0
  %6265 = vmatmul.mubr.f32.gmra.mxu0 %v5916
  %v6266 = vpop.f32.mrf.mxu0
  %v6267 = vadd.f32 %v6178, %v6266
  %v6268 = vpop.f32.mrf.mxu0
  %v6269 = vadd.f32 %v6180, %v6268
  %6270 = vmatprep.mubr.f32.mxu0 0.0
  %6271 = vmatmul.mubr.f32.gmra.mxu0 %v5919
  %v6272 = vpop.f32.mrf.mxu0
  %v6273 = vadd.f32 %v6184, %v6272
  %v6274 = vpop.f32.mrf.mxu0
  %v6275 = vadd.f32 %v6186, %v6274
  %6276 = vdwg.mxu0
  %v6277 = vld [vmem:[%s116] sm:$0xff]
  %v6278 = vld [vmem:[%s116 + $0x8] sm:$0xff]
  %v6279 = vld [vmem:[%s116 + $0x10] sm:$0xff]
  %v6280 = vld [vmem:[%s116 + $0x18] sm:$0xff]
  %v6281 = vld [vmem:[%s116 + $0x20] sm:$0xff]
  %v6282 = vld [vmem:[%s116 + $0x28] sm:$0xff]
  %v6283 = vld [vmem:[%s116 + $0x30] sm:$0xff]
  %v6284 = vld [vmem:[%s116 + $0x38] sm:$0xff]
  %v6285 = vld [vmem:[%s116 + $0x40] sm:$0xff]
  %v6286 = vld [vmem:[%s116 + $0x48] sm:$0xff]
  %v6287 = vld [vmem:[%s116 + $0x50] sm:$0xff]
  %v6288 = vld [vmem:[%s116 + $0x58] sm:$0xff]
  %v6289 = vld [vmem:[%s116 + $0x60] sm:$0xff]
  %v6290 = vld [vmem:[%s116 + $0x68] sm:$0xff]
  %v6291 = vld [vmem:[%s116 + $0x70] sm:$0xff]
  %v6292 = vld [vmem:[%s116 + $0x78] sm:$0xff]
  %6305 = vrot.lane.b32.xlu0 %v6277, 34
  %v6306 = vpop.permute.xlu0 %6305
  %6307 = vrot.lane.b32.xlu0 %v6278, 34
  %v6308 = vpop.permute.xlu0 %6307
  %6309 = vrot.lane.b32.xlu0 %v6279, 34
  %v6310 = vpop.permute.xlu0 %6309
  %6311 = vrot.lane.b32.xlu0 %v6281, 34
  %v6312 = vpop.permute.xlu0 %6311
  %6313 = vrot.lane.b32.xlu0 %v6282, 34
  %v6314 = vpop.permute.xlu0 %6313
  %6315 = vrot.lane.b32.xlu0 %v6283, 34
  %v6316 = vpop.permute.xlu0 %6315
  %6317 = vrot.lane.b32.xlu0 %v6285, 34
  %v6318 = vpop.permute.xlu0 %6317
  %6319 = vrot.lane.b32.xlu0 %v6286, 34
  %v6320 = vpop.permute.xlu0 %6319
  %6321 = vrot.lane.b32.xlu0 %v6287, 34
  %v6322 = vpop.permute.xlu0 %6321
  %6323 = vrot.lane.b32.xlu0 %v6289, 34
  %v6324 = vpop.permute.xlu0 %6323
  %6325 = vrot.lane.b32.xlu0 %v6290, 34
  %v6326 = vpop.permute.xlu0 %6325
  %6327 = vrot.lane.b32.xlu0 %v6291, 34
  %v6328 = vpop.permute.xlu0 %6327
  %v6329 = vsel %vm221, %v6306, %v6308
  %v6330 = vsel %vm221, %v6308, %v6310
  %v6331 = vsel %vm221, %v6312, %v6314
  %v6332 = vsel %vm221, %v6314, %v6316
  %v6333 = vsel %vm221, %v6318, %v6320
  %v6334 = vsel %vm221, %v6320, %v6322
  %v6335 = vsel %vm221, %v6324, %v6326
  %v6336 = vsel %vm221, %v6326, %v6328
  %v6345 = vsel %vm183, %v6329, 0.0
  %v6346 = vsel %vm184, %v6330, 0.0
  %v6347 = vsel %vm183, %v6331, 0.0
  %v6348 = vsel %vm184, %v6332, 0.0
  %v6349 = vsel %vm183, %v6333, 0.0
  %v6350 = vsel %vm184, %v6334, 0.0
  %v6351 = vsel %vm183, %v6335, 0.0
  %v6352 = vsel %vm184, %v6336, 0.0
  %6353 = vst [vmem:[#allocation3] sm:$0xff] %v6345
  %6354 = vst [vmem:[#allocation3 + $0x8] sm:$0xff] %v6346
  %6355 = vst [vmem:[#allocation3 + $0x10] sm:$0xff] %v6347
  %6356 = vst [vmem:[#allocation3 + $0x18] sm:$0xff] %v6348
  %6357 = vst [vmem:[#allocation3 + $0x20] sm:$0xff] %v6349
  %6358 = vst [vmem:[#allocation3 + $0x28] sm:$0xff] %v6350
  %6359 = vst [vmem:[#allocation3 + $0x30] sm:$0xff] %v6351
  %6360 = vst [vmem:[#allocation3 + $0x38] sm:$0xff] %v6352
  %6361 = vrot.lane.b32.xlu0 %v6277, 33
  %v6362 = vpop.permute.xlu0 %6361
  %6363 = vrot.lane.b32.xlu0 %v6278, 33
  %v6364 = vpop.permute.xlu0 %6363
  %6365 = vrot.lane.b32.xlu0 %v6279, 33
  %v6366 = vpop.permute.xlu0 %6365
  %6367 = vrot.lane.b32.xlu0 %v6281, 33
  %v6368 = vpop.permute.xlu0 %6367
  %6369 = vrot.lane.b32.xlu0 %v6282, 33
  %v6370 = vpop.permute.xlu0 %6369
  %6371 = vrot.lane.b32.xlu0 %v6283, 33
  %v6372 = vpop.permute.xlu0 %6371
  %6373 = vrot.lane.b32.xlu0 %v6285, 33
  %v6374 = vpop.permute.xlu0 %6373
  %6375 = vrot.lane.b32.xlu0 %v6286, 33
  %v6376 = vpop.permute.xlu0 %6375
  %6377 = vrot.lane.b32.xlu0 %v6287, 33
  %v6378 = vpop.permute.xlu0 %6377
  %6379 = vrot.lane.b32.xlu0 %v6289, 33
  %v6380 = vpop.permute.xlu0 %6379
  %6381 = vrot.lane.b32.xlu0 %v6290, 33
  %v6382 = vpop.permute.xlu0 %6381
  %6383 = vrot.lane.b32.xlu0 %v6291, 33
  %v6384 = vpop.permute.xlu0 %6383
  %v6385 = vsel %vm290, %v6362, %v6364
  %v6386 = vsel %vm290, %v6364, %v6366
  %v6387 = vsel %vm290, %v6368, %v6370
  %v6388 = vsel %vm290, %v6370, %v6372
  %v6389 = vsel %vm290, %v6374, %v6376
  %v6390 = vsel %vm290, %v6376, %v6378
  %v6391 = vsel %vm290, %v6380, %v6382
  %v6392 = vsel %vm290, %v6382, %v6384
  %v6401 = vsel %vm264, %v6385, 0.0
  %v6402 = vsel %vm265, %v6386, 0.0
  %v6403 = vsel %vm264, %v6387, 0.0
  %v6404 = vsel %vm265, %v6388, 0.0
  %v6405 = vsel %vm264, %v6389, 0.0
  %v6406 = vsel %vm265, %v6390, 0.0
  %v6407 = vsel %vm264, %v6391, 0.0
  %v6408 = vsel %vm265, %v6392, 0.0
  %6409 = vst [vmem:[#allocation3 + $0x40] sm:$0xff] %v6401
  %6410 = vst [vmem:[#allocation3 + $0x48] sm:$0xff] %v6402
  %6411 = vst [vmem:[#allocation3 + $0x50] sm:$0xff] %v6403
  %6412 = vst [vmem:[#allocation3 + $0x58] sm:$0xff] %v6404
  %6413 = vst [vmem:[#allocation3 + $0x60] sm:$0xff] %v6405
  %6414 = vst [vmem:[#allocation3 + $0x68] sm:$0xff] %v6406
  %6415 = vst [vmem:[#allocation3 + $0x70] sm:$0xff] %v6407
  %6416 = vst [vmem:[#allocation3 + $0x78] sm:$0xff] %v6408
  %6417 = vrot.lane.b32.xlu0 %v6277, 32
  %v6418 = vpop.permute.xlu0 %6417
  %6419 = vrot.lane.b32.xlu0 %v6278, 32
  %v6420 = vpop.permute.xlu0 %6419
  %6421 = vrot.lane.b32.xlu0 %v6279, 32
  %v6422 = vpop.permute.xlu0 %6421
  %6423 = vrot.lane.b32.xlu0 %v6281, 32
  %v6424 = vpop.permute.xlu0 %6423
  %6425 = vrot.lane.b32.xlu0 %v6282, 32
  %v6426 = vpop.permute.xlu0 %6425
  %6427 = vrot.lane.b32.xlu0 %v6283, 32
  %v6428 = vpop.permute.xlu0 %6427
  %6429 = vrot.lane.b32.xlu0 %v6285, 32
  %v6430 = vpop.permute.xlu0 %6429
  %6431 = vrot.lane.b32.xlu0 %v6286, 32
  %v6432 = vpop.permute.xlu0 %6431
  %6433 = vrot.lane.b32.xlu0 %v6287, 32
  %v6434 = vpop.permute.xlu0 %6433
  %6435 = vrot.lane.b32.xlu0 %v6289, 32
  %v6436 = vpop.permute.xlu0 %6435
  %6437 = vrot.lane.b32.xlu0 %v6290, 32
  %v6438 = vpop.permute.xlu0 %6437
  %6439 = vrot.lane.b32.xlu0 %v6291, 32
  %v6440 = vpop.permute.xlu0 %6439
  %v6441 = vsel %vm347, %v6418, %v6420
  %v6442 = vsel %vm347, %v6420, %v6422
  %v6443 = vsel %vm347, %v6424, %v6426
  %v6444 = vsel %vm347, %v6426, %v6428
  %v6445 = vsel %vm347, %v6430, %v6432
  %v6446 = vsel %vm347, %v6432, %v6434
  %v6447 = vsel %vm347, %v6436, %v6438
  %v6448 = vsel %vm347, %v6438, %v6440
  %6457 = vst [vmem:[#allocation3 + $0x80] sm:$0xff] %v6441
  %6458 = vst [vmem:[#allocation3 + $0x88] sm:$0xff] %v6442
  %6459 = vst [vmem:[#allocation3 + $0x90] sm:$0xff] %v6443
  %6460 = vst [vmem:[#allocation3 + $0x98] sm:$0xff] %v6444
  %6461 = vst [vmem:[#allocation3 + $0xa0] sm:$0xff] %v6445
  %6462 = vst [vmem:[#allocation3 + $0xa8] sm:$0xff] %v6446
  %6463 = vst [vmem:[#allocation3 + $0xb0] sm:$0xff] %v6447
  %6464 = vst [vmem:[#allocation3 + $0xb8] sm:$0xff] %v6448
  %6465 = vrot.lane.b32.xlu0 %v6277, 31
  %v6466 = vpop.permute.xlu0 %6465
  %6467 = vrot.lane.b32.xlu0 %v6278, 31
  %v6468 = vpop.permute.xlu0 %6467
  %6469 = vrot.lane.b32.xlu0 %v6279, 31
  %v6470 = vpop.permute.xlu0 %6469
  %6471 = vrot.lane.b32.xlu0 %v6281, 31
  %v6472 = vpop.permute.xlu0 %6471
  %6473 = vrot.lane.b32.xlu0 %v6282, 31
  %v6474 = vpop.permute.xlu0 %6473
  %6475 = vrot.lane.b32.xlu0 %v6283, 31
  %v6476 = vpop.permute.xlu0 %6475
  %6477 = vrot.lane.b32.xlu0 %v6285, 31
  %v6478 = vpop.permute.xlu0 %6477
  %6479 = vrot.lane.b32.xlu0 %v6286, 31
  %v6480 = vpop.permute.xlu0 %6479
  %6481 = vrot.lane.b32.xlu0 %v6287, 31
  %v6482 = vpop.permute.xlu0 %6481
  %6483 = vrot.lane.b32.xlu0 %v6289, 31
  %v6484 = vpop.permute.xlu0 %6483
  %6485 = vrot.lane.b32.xlu0 %v6290, 31
  %v6486 = vpop.permute.xlu0 %6485
  %6487 = vrot.lane.b32.xlu0 %v6291, 31
  %v6488 = vpop.permute.xlu0 %6487
  %v6489 = vsel %vm408, %v6466, %v6468
  %v6490 = vsel %vm408, %v6468, %v6470
  %v6491 = vsel %vm408, %v6472, %v6474
  %v6492 = vsel %vm408, %v6474, %v6476
  %v6493 = vsel %vm408, %v6478, %v6480
  %v6494 = vsel %vm408, %v6480, %v6482
  %v6495 = vsel %vm408, %v6484, %v6486
  %v6496 = vsel %vm408, %v6486, %v6488
  %v6505 = vsel %vm382, %v6489, 0.0
  %v6506 = vsel %vm383, %v6490, 0.0
  %v6507 = vsel %vm382, %v6491, 0.0
  %v6508 = vsel %vm383, %v6492, 0.0
  %v6509 = vsel %vm382, %v6493, 0.0
  %v6510 = vsel %vm383, %v6494, 0.0
  %v6511 = vsel %vm382, %v6495, 0.0
  %v6512 = vsel %vm383, %v6496, 0.0
  %6513 = vst [vmem:[#allocation3 + $0xc0] sm:$0xff] %v6505
  %6514 = vst [vmem:[#allocation3 + $0xc8] sm:$0xff] %v6506
  %6515 = vst [vmem:[#allocation3 + $0xd0] sm:$0xff] %v6507
  %6516 = vst [vmem:[#allocation3 + $0xd8] sm:$0xff] %v6508
  %6517 = vst [vmem:[#allocation3 + $0xe0] sm:$0xff] %v6509
  %6518 = vst [vmem:[#allocation3 + $0xe8] sm:$0xff] %v6510
  %6519 = vst [vmem:[#allocation3 + $0xf0] sm:$0xff] %v6511
  %6520 = vst [vmem:[#allocation3 + $0xf8] sm:$0xff] %v6512
  %6521 = vrot.lane.b32.xlu0 %v6277, 30
  %v6522 = vpop.permute.xlu0 %6521
  %6523 = vrot.lane.b32.xlu0 %v6278, 30
  %v6524 = vpop.permute.xlu0 %6523
  %6525 = vrot.lane.b32.xlu0 %v6279, 30
  %v6526 = vpop.permute.xlu0 %6525
  %6527 = vrot.lane.b32.xlu0 %v6281, 30
  %v6528 = vpop.permute.xlu0 %6527
  %6529 = vrot.lane.b32.xlu0 %v6282, 30
  %v6530 = vpop.permute.xlu0 %6529
  %6531 = vrot.lane.b32.xlu0 %v6283, 30
  %v6532 = vpop.permute.xlu0 %6531
  %6533 = vrot.lane.b32.xlu0 %v6285, 30
  %v6534 = vpop.permute.xlu0 %6533
  %6535 = vrot.lane.b32.xlu0 %v6286, 30
  %v6536 = vpop.permute.xlu0 %6535
  %6537 = vrot.lane.b32.xlu0 %v6287, 30
  %v6538 = vpop.permute.xlu0 %6537
  %6539 = vrot.lane.b32.xlu0 %v6289, 30
  %v6540 = vpop.permute.xlu0 %6539
  %6541 = vrot.lane.b32.xlu0 %v6290, 30
  %v6542 = vpop.permute.xlu0 %6541
  %6543 = vrot.lane.b32.xlu0 %v6291, 30
  %v6544 = vpop.permute.xlu0 %6543
  %v6545 = vsel %vm477, %v6522, %v6524
  %v6546 = vsel %vm477, %v6524, %v6526
  %v6547 = vsel %vm477, %v6528, %v6530
  %v6548 = vsel %vm477, %v6530, %v6532
  %v6549 = vsel %vm477, %v6534, %v6536
  %v6550 = vsel %vm477, %v6536, %v6538
  %v6551 = vsel %vm477, %v6540, %v6542
  %v6552 = vsel %vm477, %v6542, %v6544
  %v6561 = vsel %vm451, %v6545, 0.0
  %v6562 = vsel %vm452, %v6546, 0.0
  %v6563 = vsel %vm451, %v6547, 0.0
  %v6564 = vsel %vm452, %v6548, 0.0
  %v6565 = vsel %vm451, %v6549, 0.0
  %v6566 = vsel %vm452, %v6550, 0.0
  %v6567 = vsel %vm451, %v6551, 0.0
  %v6568 = vsel %vm452, %v6552, 0.0
  %6569 = vst [vmem:[#allocation3 + $0x100] sm:$0xff] %v6561
  %6570 = vst [vmem:[#allocation3 + $0x108] sm:$0xff] %v6562
  %6571 = vst [vmem:[#allocation3 + $0x110] sm:$0xff] %v6563
  %6572 = vst [vmem:[#allocation3 + $0x118] sm:$0xff] %v6564
  %6573 = vst [vmem:[#allocation3 + $0x120] sm:$0xff] %v6565
  %6574 = vst [vmem:[#allocation3 + $0x128] sm:$0xff] %v6566
  %6575 = vst [vmem:[#allocation3 + $0x130] sm:$0xff] %v6567
  %6576 = vst [vmem:[#allocation3 + $0x138] sm:$0xff] %v6568
  %6577 = vrot.lane.b32.xlu0 %v6277, 18
  %v6578 = vpop.permute.xlu0 %6577
  %6579 = vrot.lane.b32.xlu0 %v6278, 18
  %v6580 = vpop.permute.xlu0 %6579
  %6581 = vrot.lane.b32.xlu0 %v6279, 18
  %v6582 = vpop.permute.xlu0 %6581
  %6583 = vrot.lane.b32.xlu0 %v6281, 18
  %v6584 = vpop.permute.xlu0 %6583
  %6585 = vrot.lane.b32.xlu0 %v6282, 18
  %v6586 = vpop.permute.xlu0 %6585
  %6587 = vrot.lane.b32.xlu0 %v6283, 18
  %v6588 = vpop.permute.xlu0 %6587
  %6589 = vrot.lane.b32.xlu0 %v6285, 18
  %v6590 = vpop.permute.xlu0 %6589
  %6591 = vrot.lane.b32.xlu0 %v6286, 18
  %v6592 = vpop.permute.xlu0 %6591
  %6593 = vrot.lane.b32.xlu0 %v6287, 18
  %v6594 = vpop.permute.xlu0 %6593
  %6595 = vrot.lane.b32.xlu0 %v6289, 18
  %v6596 = vpop.permute.xlu0 %6595
  %6597 = vrot.lane.b32.xlu0 %v6290, 18
  %v6598 = vpop.permute.xlu0 %6597
  %6599 = vrot.lane.b32.xlu0 %v6291, 18
  %v6600 = vpop.permute.xlu0 %6599
  %v6601 = vsel %vm534, %v6578, %v6580
  %v6602 = vsel %vm534, %v6580, %v6582
  %v6603 = vsel %vm534, %v6584, %v6586
  %v6604 = vsel %vm534, %v6586, %v6588
  %v6605 = vsel %vm534, %v6590, %v6592
  %v6606 = vsel %vm534, %v6592, %v6594
  %v6607 = vsel %vm534, %v6596, %v6598
  %v6608 = vsel %vm534, %v6598, %v6600
  %v6617 = vsel %vm183, %v6601, 0.0
  %v6618 = vsel %vm184, %v6602, 0.0
  %v6619 = vsel %vm183, %v6603, 0.0
  %v6620 = vsel %vm184, %v6604, 0.0
  %v6621 = vsel %vm183, %v6605, 0.0
  %v6622 = vsel %vm184, %v6606, 0.0
  %v6623 = vsel %vm183, %v6607, 0.0
  %v6624 = vsel %vm184, %v6608, 0.0
  %6625 = vst [vmem:[#allocation3 + $0x140] sm:$0xff] %v6617
  %6626 = vst [vmem:[#allocation3 + $0x148] sm:$0xff] %v6618
  %6627 = vst [vmem:[#allocation3 + $0x150] sm:$0xff] %v6619
  %6628 = vst [vmem:[#allocation3 + $0x158] sm:$0xff] %v6620
  %6629 = vst [vmem:[#allocation3 + $0x160] sm:$0xff] %v6621
  %6630 = vst [vmem:[#allocation3 + $0x168] sm:$0xff] %v6622
  %6631 = vst [vmem:[#allocation3 + $0x170] sm:$0xff] %v6623
  %6632 = vst [vmem:[#allocation3 + $0x178] sm:$0xff] %v6624
  %6633 = vrot.lane.b32.xlu0 %v6277, 17
  %v6634 = vpop.permute.xlu0 %6633
  %6635 = vrot.lane.b32.xlu0 %v6278, 17
  %v6636 = vpop.permute.xlu0 %6635
  %6637 = vrot.lane.b32.xlu0 %v6279, 17
  %v6638 = vpop.permute.xlu0 %6637
  %6639 = vrot.lane.b32.xlu0 %v6281, 17
  %v6640 = vpop.permute.xlu0 %6639
  %6641 = vrot.lane.b32.xlu0 %v6282, 17
  %v6642 = vpop.permute.xlu0 %6641
  %6643 = vrot.lane.b32.xlu0 %v6283, 17
  %v6644 = vpop.permute.xlu0 %6643
  %6645 = vrot.lane.b32.xlu0 %v6285, 17
  %v6646 = vpop.permute.xlu0 %6645
  %6647 = vrot.lane.b32.xlu0 %v6286, 17
  %v6648 = vpop.permute.xlu0 %6647
  %6649 = vrot.lane.b32.xlu0 %v6287, 17
  %v6650 = vpop.permute.xlu0 %6649
  %6651 = vrot.lane.b32.xlu0 %v6289, 17
  %v6652 = vpop.permute.xlu0 %6651
  %6653 = vrot.lane.b32.xlu0 %v6290, 17
  %v6654 = vpop.permute.xlu0 %6653
  %6655 = vrot.lane.b32.xlu0 %v6291, 17
  %v6656 = vpop.permute.xlu0 %6655
  %v6657 = vsel %vm591, %v6634, %v6636
  %v6658 = vsel %vm591, %v6636, %v6638
  %v6659 = vsel %vm591, %v6640, %v6642
  %v6660 = vsel %vm591, %v6642, %v6644
  %v6661 = vsel %vm591, %v6646, %v6648
  %v6662 = vsel %vm591, %v6648, %v6650
  %v6663 = vsel %vm591, %v6652, %v6654
  %v6664 = vsel %vm591, %v6654, %v6656
  %v6673 = vsel %vm264, %v6657, 0.0
  %v6674 = vsel %vm265, %v6658, 0.0
  %v6675 = vsel %vm264, %v6659, 0.0
  %v6676 = vsel %vm265, %v6660, 0.0
  %v6677 = vsel %vm264, %v6661, 0.0
  %v6678 = vsel %vm265, %v6662, 0.0
  %v6679 = vsel %vm264, %v6663, 0.0
  %v6680 = vsel %vm265, %v6664, 0.0
  %6681 = vst [vmem:[#allocation3 + $0x180] sm:$0xff] %v6673
  %6682 = vst [vmem:[#allocation3 + $0x188] sm:$0xff] %v6674
  %6683 = vst [vmem:[#allocation3 + $0x190] sm:$0xff] %v6675
  %6684 = vst [vmem:[#allocation3 + $0x198] sm:$0xff] %v6676
  %6685 = vst [vmem:[#allocation3 + $0x1a0] sm:$0xff] %v6677
  %6686 = vst [vmem:[#allocation3 + $0x1a8] sm:$0xff] %v6678
  %6687 = vst [vmem:[#allocation3 + $0x1b0] sm:$0xff] %v6679
  %6688 = vst [vmem:[#allocation3 + $0x1b8] sm:$0xff] %v6680
  %6689 = vrot.lane.b32.xlu0 %v6277, 16
  %v6690 = vpop.permute.xlu0 %6689
  %6691 = vrot.lane.b32.xlu0 %v6278, 16
  %v6692 = vpop.permute.xlu0 %6691
  %6693 = vrot.lane.b32.xlu0 %v6279, 16
  %v6694 = vpop.permute.xlu0 %6693
  %6695 = vrot.lane.b32.xlu0 %v6281, 16
  %v6696 = vpop.permute.xlu0 %6695
  %6697 = vrot.lane.b32.xlu0 %v6282, 16
  %v6698 = vpop.permute.xlu0 %6697
  %6699 = vrot.lane.b32.xlu0 %v6283, 16
  %v6700 = vpop.permute.xlu0 %6699
  %6701 = vrot.lane.b32.xlu0 %v6285, 16
  %v6702 = vpop.permute.xlu0 %6701
  %6703 = vrot.lane.b32.xlu0 %v6286, 16
  %v6704 = vpop.permute.xlu0 %6703
  %6705 = vrot.lane.b32.xlu0 %v6287, 16
  %v6706 = vpop.permute.xlu0 %6705
  %6707 = vrot.lane.b32.xlu0 %v6289, 16
  %v6708 = vpop.permute.xlu0 %6707
  %6709 = vrot.lane.b32.xlu0 %v6290, 16
  %v6710 = vpop.permute.xlu0 %6709
  %6711 = vrot.lane.b32.xlu0 %v6291, 16
  %v6712 = vpop.permute.xlu0 %6711
  %v6713 = vsel %vm648, %v6690, %v6692
  %v6714 = vsel %vm648, %v6692, %v6694
  %v6715 = vsel %vm648, %v6696, %v6698
  %v6716 = vsel %vm648, %v6698, %v6700
  %v6717 = vsel %vm648, %v6702, %v6704
  %v6718 = vsel %vm648, %v6704, %v6706
  %v6719 = vsel %vm648, %v6708, %v6710
  %v6720 = vsel %vm648, %v6710, %v6712
  %6729 = vst [vmem:[#allocation3 + $0x1c0] sm:$0xff] %v6713
  %6730 = vst [vmem:[#allocation3 + $0x1c8] sm:$0xff] %v6714
  %6731 = vst [vmem:[#allocation3 + $0x1d0] sm:$0xff] %v6715
  %6732 = vst [vmem:[#allocation3 + $0x1d8] sm:$0xff] %v6716
  %6733 = vst [vmem:[#allocation3 + $0x1e0] sm:$0xff] %v6717
  %6734 = vst [vmem:[#allocation3 + $0x1e8] sm:$0xff] %v6718
  %6735 = vst [vmem:[#allocation3 + $0x1f0] sm:$0xff] %v6719
  %6736 = vst [vmem:[#allocation3 + $0x1f8] sm:$0xff] %v6720
  %6737 = vrot.lane.b32.xlu0 %v6277, 15
  %v6738 = vpop.permute.xlu0 %6737
  %6739 = vrot.lane.b32.xlu0 %v6278, 15
  %v6740 = vpop.permute.xlu0 %6739
  %6741 = vrot.lane.b32.xlu0 %v6279, 15
  %v6742 = vpop.permute.xlu0 %6741
  %6743 = vrot.lane.b32.xlu0 %v6281, 15
  %v6744 = vpop.permute.xlu0 %6743
  %6745 = vrot.lane.b32.xlu0 %v6282, 15
  %v6746 = vpop.permute.xlu0 %6745
  %6747 = vrot.lane.b32.xlu0 %v6283, 15
  %v6748 = vpop.permute.xlu0 %6747
  %6749 = vrot.lane.b32.xlu0 %v6285, 15
  %v6750 = vpop.permute.xlu0 %6749
  %6751 = vrot.lane.b32.xlu0 %v6286, 15
  %v6752 = vpop.permute.xlu0 %6751
  %6753 = vrot.lane.b32.xlu0 %v6287, 15
  %v6754 = vpop.permute.xlu0 %6753
  %6755 = vrot.lane.b32.xlu0 %v6289, 15
  %v6756 = vpop.permute.xlu0 %6755
  %6757 = vrot.lane.b32.xlu0 %v6290, 15
  %v6758 = vpop.permute.xlu0 %6757
  %6759 = vrot.lane.b32.xlu0 %v6291, 15
  %v6760 = vpop.permute.xlu0 %6759
  %v6761 = vsel %vm697, %v6738, %v6740
  %v6762 = vsel %vm697, %v6740, %v6742
  %v6763 = vsel %vm697, %v6744, %v6746
  %v6764 = vsel %vm697, %v6746, %v6748
  %v6765 = vsel %vm697, %v6750, %v6752
  %v6766 = vsel %vm697, %v6752, %v6754
  %v6767 = vsel %vm697, %v6756, %v6758
  %v6768 = vsel %vm697, %v6758, %v6760
  %v6777 = vsel %vm382, %v6761, 0.0
  %v6778 = vsel %vm383, %v6762, 0.0
  %v6779 = vsel %vm382, %v6763, 0.0
  %v6780 = vsel %vm383, %v6764, 0.0
  %v6781 = vsel %vm382, %v6765, 0.0
  %v6782 = vsel %vm383, %v6766, 0.0
  %v6783 = vsel %vm382, %v6767, 0.0
  %v6784 = vsel %vm383, %v6768, 0.0
  %6785 = vst [vmem:[#allocation3 + $0x200] sm:$0xff] %v6777
  %6786 = vst [vmem:[#allocation3 + $0x208] sm:$0xff] %v6778
  %6787 = vst [vmem:[#allocation3 + $0x210] sm:$0xff] %v6779
  %6788 = vst [vmem:[#allocation3 + $0x218] sm:$0xff] %v6780
  %6789 = vst [vmem:[#allocation3 + $0x220] sm:$0xff] %v6781
  %6790 = vst [vmem:[#allocation3 + $0x228] sm:$0xff] %v6782
  %6791 = vst [vmem:[#allocation3 + $0x230] sm:$0xff] %v6783
  %6792 = vst [vmem:[#allocation3 + $0x238] sm:$0xff] %v6784
  %6793 = vrot.lane.b32.xlu0 %v6277, 14
  %v6794 = vpop.permute.xlu0 %6793
  %6795 = vrot.lane.b32.xlu0 %v6278, 14
  %v6796 = vpop.permute.xlu0 %6795
  %6797 = vrot.lane.b32.xlu0 %v6279, 14
  %v6798 = vpop.permute.xlu0 %6797
  %6799 = vrot.lane.b32.xlu0 %v6281, 14
  %v6800 = vpop.permute.xlu0 %6799
  %6801 = vrot.lane.b32.xlu0 %v6282, 14
  %v6802 = vpop.permute.xlu0 %6801
  %6803 = vrot.lane.b32.xlu0 %v6283, 14
  %v6804 = vpop.permute.xlu0 %6803
  %6805 = vrot.lane.b32.xlu0 %v6285, 14
  %v6806 = vpop.permute.xlu0 %6805
  %6807 = vrot.lane.b32.xlu0 %v6286, 14
  %v6808 = vpop.permute.xlu0 %6807
  %6809 = vrot.lane.b32.xlu0 %v6287, 14
  %v6810 = vpop.permute.xlu0 %6809
  %6811 = vrot.lane.b32.xlu0 %v6289, 14
  %v6812 = vpop.permute.xlu0 %6811
  %6813 = vrot.lane.b32.xlu0 %v6290, 14
  %v6814 = vpop.permute.xlu0 %6813
  %6815 = vrot.lane.b32.xlu0 %v6291, 14
  %v6816 = vpop.permute.xlu0 %6815
  %v6817 = vsel %vm754, %v6794, %v6796
  %v6818 = vsel %vm754, %v6796, %v6798
  %v6819 = vsel %vm754, %v6800, %v6802
  %v6820 = vsel %vm754, %v6802, %v6804
  %v6821 = vsel %vm754, %v6806, %v6808
  %v6822 = vsel %vm754, %v6808, %v6810
  %v6823 = vsel %vm754, %v6812, %v6814
  %v6824 = vsel %vm754, %v6814, %v6816
  %v6833 = vsel %vm451, %v6817, 0.0
  %v6834 = vsel %vm452, %v6818, 0.0
  %v6835 = vsel %vm451, %v6819, 0.0
  %v6836 = vsel %vm452, %v6820, 0.0
  %v6837 = vsel %vm451, %v6821, 0.0
  %v6838 = vsel %vm452, %v6822, 0.0
  %v6839 = vsel %vm451, %v6823, 0.0
  %v6840 = vsel %vm452, %v6824, 0.0
  %6841 = vst [vmem:[#allocation3 + $0x240] sm:$0xff] %v6833
  %6842 = vst [vmem:[#allocation3 + $0x248] sm:$0xff] %v6834
  %6843 = vst [vmem:[#allocation3 + $0x250] sm:$0xff] %v6835
  %6844 = vst [vmem:[#allocation3 + $0x258] sm:$0xff] %v6836
  %6845 = vst [vmem:[#allocation3 + $0x260] sm:$0xff] %v6837
  %6846 = vst [vmem:[#allocation3 + $0x268] sm:$0xff] %v6838
  %6847 = vst [vmem:[#allocation3 + $0x270] sm:$0xff] %v6839
  %6848 = vst [vmem:[#allocation3 + $0x278] sm:$0xff] %v6840
  %6849 = vrot.lane.b32.xlu0 %v6277, 2
  %v6850 = vpop.permute.xlu0 %6849
  %6851 = vrot.lane.b32.xlu0 %v6278, 2
  %v6852 = vpop.permute.xlu0 %6851
  %6853 = vrot.lane.b32.xlu0 %v6279, 2
  %v6854 = vpop.permute.xlu0 %6853
  %6855 = vrot.lane.b32.xlu0 %v6281, 2
  %v6856 = vpop.permute.xlu0 %6855
  %6857 = vrot.lane.b32.xlu0 %v6282, 2
  %v6858 = vpop.permute.xlu0 %6857
  %6859 = vrot.lane.b32.xlu0 %v6283, 2
  %v6860 = vpop.permute.xlu0 %6859
  %6861 = vrot.lane.b32.xlu0 %v6285, 2
  %v6862 = vpop.permute.xlu0 %6861
  %6863 = vrot.lane.b32.xlu0 %v6286, 2
  %v6864 = vpop.permute.xlu0 %6863
  %6865 = vrot.lane.b32.xlu0 %v6287, 2
  %v6866 = vpop.permute.xlu0 %6865
  %6867 = vrot.lane.b32.xlu0 %v6289, 2
  %v6868 = vpop.permute.xlu0 %6867
  %6869 = vrot.lane.b32.xlu0 %v6290, 2
  %v6870 = vpop.permute.xlu0 %6869
  %6871 = vrot.lane.b32.xlu0 %v6291, 2
  %v6872 = vpop.permute.xlu0 %6871
  %v6873 = vsel %vm811, %v6850, %v6852
  %v6874 = vsel %vm811, %v6852, %v6854
  %v6875 = vsel %vm811, %v6856, %v6858
  %v6876 = vsel %vm811, %v6858, %v6860
  %v6877 = vsel %vm811, %v6862, %v6864
  %v6878 = vsel %vm811, %v6864, %v6866
  %v6879 = vsel %vm811, %v6868, %v6870
  %v6880 = vsel %vm811, %v6870, %v6872
  %v6889 = vsel %vm183, %v6873, 0.0
  %v6890 = vsel %vm184, %v6874, 0.0
  %v6891 = vsel %vm183, %v6875, 0.0
  %v6892 = vsel %vm184, %v6876, 0.0
  %v6893 = vsel %vm183, %v6877, 0.0
  %v6894 = vsel %vm184, %v6878, 0.0
  %v6895 = vsel %vm183, %v6879, 0.0
  %v6896 = vsel %vm184, %v6880, 0.0
  %6897 = vst [vmem:[#allocation3 + $0x280] sm:$0xff] %v6889
  %6898 = vst [vmem:[#allocation3 + $0x288] sm:$0xff] %v6890
  %6899 = vst [vmem:[#allocation3 + $0x290] sm:$0xff] %v6891
  %6900 = vst [vmem:[#allocation3 + $0x298] sm:$0xff] %v6892
  %6901 = vst [vmem:[#allocation3 + $0x2a0] sm:$0xff] %v6893
  %6902 = vst [vmem:[#allocation3 + $0x2a8] sm:$0xff] %v6894
  %6903 = vst [vmem:[#allocation3 + $0x2b0] sm:$0xff] %v6895
  %6904 = vst [vmem:[#allocation3 + $0x2b8] sm:$0xff] %v6896
  %6905 = vrot.lane.b32.xlu0 %v6277, 1
  %v6906 = vpop.permute.xlu0 %6905
  %6907 = vrot.lane.b32.xlu0 %v6278, 1
  %v6908 = vpop.permute.xlu0 %6907
  %6909 = vrot.lane.b32.xlu0 %v6279, 1
  %v6910 = vpop.permute.xlu0 %6909
  %6911 = vrot.lane.b32.xlu0 %v6281, 1
  %v6912 = vpop.permute.xlu0 %6911
  %6913 = vrot.lane.b32.xlu0 %v6282, 1
  %v6914 = vpop.permute.xlu0 %6913
  %6915 = vrot.lane.b32.xlu0 %v6283, 1
  %v6916 = vpop.permute.xlu0 %6915
  %6917 = vrot.lane.b32.xlu0 %v6285, 1
  %v6918 = vpop.permute.xlu0 %6917
  %6919 = vrot.lane.b32.xlu0 %v6286, 1
  %v6920 = vpop.permute.xlu0 %6919
  %6921 = vrot.lane.b32.xlu0 %v6287, 1
  %v6922 = vpop.permute.xlu0 %6921
  %6923 = vrot.lane.b32.xlu0 %v6289, 1
  %v6924 = vpop.permute.xlu0 %6923
  %6925 = vrot.lane.b32.xlu0 %v6290, 1
  %v6926 = vpop.permute.xlu0 %6925
  %6927 = vrot.lane.b32.xlu0 %v6291, 1
  %v6928 = vpop.permute.xlu0 %6927
  %v6929 = vsel %vm868, %v6906, %v6908
  %v6930 = vsel %vm868, %v6908, %v6910
  %v6931 = vsel %vm868, %v6912, %v6914
  %v6932 = vsel %vm868, %v6914, %v6916
  %v6933 = vsel %vm868, %v6918, %v6920
  %v6934 = vsel %vm868, %v6920, %v6922
  %v6935 = vsel %vm868, %v6924, %v6926
  %v6936 = vsel %vm868, %v6926, %v6928
  %v6945 = vsel %vm264, %v6929, 0.0
  %v6946 = vsel %vm265, %v6930, 0.0
  %v6947 = vsel %vm264, %v6931, 0.0
  %v6948 = vsel %vm265, %v6932, 0.0
  %v6949 = vsel %vm264, %v6933, 0.0
  %v6950 = vsel %vm265, %v6934, 0.0
  %v6951 = vsel %vm264, %v6935, 0.0
  %v6952 = vsel %vm265, %v6936, 0.0
  %6953 = vst [vmem:[#allocation3 + $0x2c0] sm:$0xff] %v6945
  %6954 = vst [vmem:[#allocation3 + $0x2c8] sm:$0xff] %v6946
  %6955 = vst [vmem:[#allocation3 + $0x2d0] sm:$0xff] %v6947
  %6956 = vst [vmem:[#allocation3 + $0x2d8] sm:$0xff] %v6948
  %6957 = vst [vmem:[#allocation3 + $0x2e0] sm:$0xff] %v6949
  %6958 = vst [vmem:[#allocation3 + $0x2e8] sm:$0xff] %v6950
  %6959 = vst [vmem:[#allocation3 + $0x2f0] sm:$0xff] %v6951
  %6960 = vst [vmem:[#allocation3 + $0x2f8] sm:$0xff] %v6952
  %6961 = vst [vmem:[#allocation3 + $0x300] sm:$0xff] %v6278
  %6962 = vst [vmem:[#allocation3 + $0x308] sm:$0xff] %v6279
  %6963 = vst [vmem:[#allocation3 + $0x310] sm:$0xff] %v6282
  %6964 = vst [vmem:[#allocation3 + $0x318] sm:$0xff] %v6283
  %6965 = vst [vmem:[#allocation3 + $0x320] sm:$0xff] %v6286
  %6966 = vst [vmem:[#allocation3 + $0x328] sm:$0xff] %v6287
  %6967 = vst [vmem:[#allocation3 + $0x330] sm:$0xff] %v6290
  %6968 = vst [vmem:[#allocation3 + $0x338] sm:$0xff] %v6291
  %6973 = vrot.lane.b32.xlu0 %v6278, 127
  %v6974 = vpop.permute.xlu0 %6973
  %6975 = vrot.lane.b32.xlu0 %v6279, 127
  %v6976 = vpop.permute.xlu0 %6975
  %6977 = vrot.lane.b32.xlu0 %v6280, 127
  %v6978 = vpop.permute.xlu0 %6977
  %6979 = vrot.lane.b32.xlu0 %v6282, 127
  %v6980 = vpop.permute.xlu0 %6979
  %6981 = vrot.lane.b32.xlu0 %v6283, 127
  %v6982 = vpop.permute.xlu0 %6981
  %6983 = vrot.lane.b32.xlu0 %v6284, 127
  %v6984 = vpop.permute.xlu0 %6983
  %6985 = vrot.lane.b32.xlu0 %v6286, 127
  %v6986 = vpop.permute.xlu0 %6985
  %6987 = vrot.lane.b32.xlu0 %v6287, 127
  %v6988 = vpop.permute.xlu0 %6987
  %6989 = vrot.lane.b32.xlu0 %v6288, 127
  %v6990 = vpop.permute.xlu0 %6989
  %6991 = vrot.lane.b32.xlu0 %v6290, 127
  %v6992 = vpop.permute.xlu0 %6991
  %6993 = vrot.lane.b32.xlu0 %v6291, 127
  %v6994 = vpop.permute.xlu0 %6993
  %6995 = vrot.lane.b32.xlu0 %v6292, 127
  %v6996 = vpop.permute.xlu0 %6995
  %v6997 = vsel %vm937, %v6974, %v6976
  %v6998 = vsel %vm937, %v6976, %v6978
  %v6999 = vsel %vm937, %v6980, %v6982
  %v7000 = vsel %vm937, %v6982, %v6984
  %v7001 = vsel %vm937, %v6986, %v6988
  %v7002 = vsel %vm937, %v6988, %v6990
  %v7003 = vsel %vm937, %v6992, %v6994
  %v7004 = vsel %vm937, %v6994, %v6996
  %v7013 = vsel %vm382, %v6997, 0.0
  %v7014 = vsel %vm383, %v6998, 0.0
  %v7015 = vsel %vm382, %v6999, 0.0
  %v7016 = vsel %vm383, %v7000, 0.0
  %v7017 = vsel %vm382, %v7001, 0.0
  %v7018 = vsel %vm383, %v7002, 0.0
  %v7019 = vsel %vm382, %v7003, 0.0
  %v7020 = vsel %vm383, %v7004, 0.0
  %7021 = vst [vmem:[#allocation3 + $0x340] sm:$0xff] %v7013
  %7022 = vst [vmem:[#allocation3 + $0x348] sm:$0xff] %v7014
  %7023 = vst [vmem:[#allocation3 + $0x350] sm:$0xff] %v7015
  %7024 = vst [vmem:[#allocation3 + $0x358] sm:$0xff] %v7016
  %7025 = vst [vmem:[#allocation3 + $0x360] sm:$0xff] %v7017
  %7026 = vst [vmem:[#allocation3 + $0x368] sm:$0xff] %v7018
  %7027 = vst [vmem:[#allocation3 + $0x370] sm:$0xff] %v7019
  %7028 = vst [vmem:[#allocation3 + $0x378] sm:$0xff] %v7020
  %7029 = vrot.lane.b32.xlu0 %v6278, 126
  %v7030 = vpop.permute.xlu0 %7029
  %7031 = vrot.lane.b32.xlu0 %v6279, 126
  %v7032 = vpop.permute.xlu0 %7031
  %7033 = vrot.lane.b32.xlu0 %v6280, 126
  %v7034 = vpop.permute.xlu0 %7033
  %7035 = vrot.lane.b32.xlu0 %v6282, 126
  %v7036 = vpop.permute.xlu0 %7035
  %7037 = vrot.lane.b32.xlu0 %v6283, 126
  %v7038 = vpop.permute.xlu0 %7037
  %7039 = vrot.lane.b32.xlu0 %v6284, 126
  %v7040 = vpop.permute.xlu0 %7039
  %7041 = vrot.lane.b32.xlu0 %v6286, 126
  %v7042 = vpop.permute.xlu0 %7041
  %7043 = vrot.lane.b32.xlu0 %v6287, 126
  %v7044 = vpop.permute.xlu0 %7043
  %7045 = vrot.lane.b32.xlu0 %v6288, 126
  %v7046 = vpop.permute.xlu0 %7045
  %7047 = vrot.lane.b32.xlu0 %v6290, 126
  %v7048 = vpop.permute.xlu0 %7047
  %7049 = vrot.lane.b32.xlu0 %v6291, 126
  %v7050 = vpop.permute.xlu0 %7049
  %7051 = vrot.lane.b32.xlu0 %v6292, 126
  %v7052 = vpop.permute.xlu0 %7051
  %v7053 = vsel %vm994, %v7030, %v7032
  %v7054 = vsel %vm994, %v7032, %v7034
  %v7055 = vsel %vm994, %v7036, %v7038
  %v7056 = vsel %vm994, %v7038, %v7040
  %v7057 = vsel %vm994, %v7042, %v7044
  %v7058 = vsel %vm994, %v7044, %v7046
  %v7059 = vsel %vm994, %v7048, %v7050
  %v7060 = vsel %vm994, %v7050, %v7052
  %v7069 = vsel %vm451, %v7053, 0.0
  %v7070 = vsel %vm452, %v7054, 0.0
  %v7071 = vsel %vm451, %v7055, 0.0
  %v7072 = vsel %vm452, %v7056, 0.0
  %v7073 = vsel %vm451, %v7057, 0.0
  %v7074 = vsel %vm452, %v7058, 0.0
  %v7075 = vsel %vm451, %v7059, 0.0
  %v7076 = vsel %vm452, %v7060, 0.0
  %7077 = vst [vmem:[#allocation3 + $0x380] sm:$0xff] %v7069
  %7078 = vst [vmem:[#allocation3 + $0x388] sm:$0xff] %v7070
  %7079 = vst [vmem:[#allocation3 + $0x390] sm:$0xff] %v7071
  %7080 = vst [vmem:[#allocation3 + $0x398] sm:$0xff] %v7072
  %7081 = vst [vmem:[#allocation3 + $0x3a0] sm:$0xff] %v7073
  %7082 = vst [vmem:[#allocation3 + $0x3a8] sm:$0xff] %v7074
  %7083 = vst [vmem:[#allocation3 + $0x3b0] sm:$0xff] %v7075
  %7084 = vst [vmem:[#allocation3 + $0x3b8] sm:$0xff] %v7076
  %7085 = vrot.lane.b32.xlu0 %v6278, 114
  %v7086 = vpop.permute.xlu0 %7085
  %7087 = vrot.lane.b32.xlu0 %v6279, 114
  %v7088 = vpop.permute.xlu0 %7087
  %7089 = vrot.lane.b32.xlu0 %v6280, 114
  %v7090 = vpop.permute.xlu0 %7089
  %7091 = vrot.lane.b32.xlu0 %v6282, 114
  %v7092 = vpop.permute.xlu0 %7091
  %7093 = vrot.lane.b32.xlu0 %v6283, 114
  %v7094 = vpop.permute.xlu0 %7093
  %7095 = vrot.lane.b32.xlu0 %v6284, 114
  %v7096 = vpop.permute.xlu0 %7095
  %7097 = vrot.lane.b32.xlu0 %v6286, 114
  %v7098 = vpop.permute.xlu0 %7097
  %7099 = vrot.lane.b32.xlu0 %v6287, 114
  %v7100 = vpop.permute.xlu0 %7099
  %7101 = vrot.lane.b32.xlu0 %v6288, 114
  %v7102 = vpop.permute.xlu0 %7101
  %7103 = vrot.lane.b32.xlu0 %v6290, 114
  %v7104 = vpop.permute.xlu0 %7103
  %7105 = vrot.lane.b32.xlu0 %v6291, 114
  %v7106 = vpop.permute.xlu0 %7105
  %7107 = vrot.lane.b32.xlu0 %v6292, 114
  %v7108 = vpop.permute.xlu0 %7107
  %v7109 = vsel %vm1051, %v7086, %v7088
  %v7110 = vsel %vm1051, %v7088, %v7090
  %v7111 = vsel %vm1051, %v7092, %v7094
  %v7112 = vsel %vm1051, %v7094, %v7096
  %v7113 = vsel %vm1051, %v7098, %v7100
  %v7114 = vsel %vm1051, %v7100, %v7102
  %v7115 = vsel %vm1051, %v7104, %v7106
  %v7116 = vsel %vm1051, %v7106, %v7108
  %v7125 = vsel %vm183, %v7109, 0.0
  %v7126 = vsel %vm184, %v7110, 0.0
  %v7127 = vsel %vm183, %v7111, 0.0
  %v7128 = vsel %vm184, %v7112, 0.0
  %v7129 = vsel %vm183, %v7113, 0.0
  %v7130 = vsel %vm184, %v7114, 0.0
  %v7131 = vsel %vm183, %v7115, 0.0
  %v7132 = vsel %vm184, %v7116, 0.0
  %7133 = vst [vmem:[#allocation3 + $0x3c0] sm:$0xff] %v7125
  %7134 = vst [vmem:[#allocation3 + $0x3c8] sm:$0xff] %v7126
  %7135 = vst [vmem:[#allocation3 + $0x3d0] sm:$0xff] %v7127
  %7136 = vst [vmem:[#allocation3 + $0x3d8] sm:$0xff] %v7128
  %7137 = vst [vmem:[#allocation3 + $0x3e0] sm:$0xff] %v7129
  %7138 = vst [vmem:[#allocation3 + $0x3e8] sm:$0xff] %v7130
  %7139 = vst [vmem:[#allocation3 + $0x3f0] sm:$0xff] %v7131
  %7140 = vst [vmem:[#allocation3 + $0x3f8] sm:$0xff] %v7132
  %7141 = vrot.lane.b32.xlu0 %v6278, 113
  %v7142 = vpop.permute.xlu0 %7141
  %7143 = vrot.lane.b32.xlu0 %v6279, 113
  %v7144 = vpop.permute.xlu0 %7143
  %7145 = vrot.lane.b32.xlu0 %v6280, 113
  %v7146 = vpop.permute.xlu0 %7145
  %7147 = vrot.lane.b32.xlu0 %v6282, 113
  %v7148 = vpop.permute.xlu0 %7147
  %7149 = vrot.lane.b32.xlu0 %v6283, 113
  %v7150 = vpop.permute.xlu0 %7149
  %7151 = vrot.lane.b32.xlu0 %v6284, 113
  %v7152 = vpop.permute.xlu0 %7151
  %7153 = vrot.lane.b32.xlu0 %v6286, 113
  %v7154 = vpop.permute.xlu0 %7153
  %7155 = vrot.lane.b32.xlu0 %v6287, 113
  %v7156 = vpop.permute.xlu0 %7155
  %7157 = vrot.lane.b32.xlu0 %v6288, 113
  %v7158 = vpop.permute.xlu0 %7157
  %7159 = vrot.lane.b32.xlu0 %v6290, 113
  %v7160 = vpop.permute.xlu0 %7159
  %7161 = vrot.lane.b32.xlu0 %v6291, 113
  %v7162 = vpop.permute.xlu0 %7161
  %7163 = vrot.lane.b32.xlu0 %v6292, 113
  %v7164 = vpop.permute.xlu0 %7163
  %v7165 = vsel %vm1108, %v7142, %v7144
  %v7166 = vsel %vm1108, %v7144, %v7146
  %v7167 = vsel %vm1108, %v7148, %v7150
  %v7168 = vsel %vm1108, %v7150, %v7152
  %v7169 = vsel %vm1108, %v7154, %v7156
  %v7170 = vsel %vm1108, %v7156, %v7158
  %v7171 = vsel %vm1108, %v7160, %v7162
  %v7172 = vsel %vm1108, %v7162, %v7164
  %v7181 = vsel %vm264, %v7165, 0.0
  %v7182 = vsel %vm265, %v7166, 0.0
  %v7183 = vsel %vm264, %v7167, 0.0
  %v7184 = vsel %vm265, %v7168, 0.0
  %v7185 = vsel %vm264, %v7169, 0.0
  %v7186 = vsel %vm265, %v7170, 0.0
  %v7187 = vsel %vm264, %v7171, 0.0
  %v7188 = vsel %vm265, %v7172, 0.0
  %7189 = vst [vmem:[#allocation3 + $0x400] sm:$0xff] %v7181
  %7190 = vst [vmem:[#allocation3 + $0x408] sm:$0xff] %v7182
  %7191 = vst [vmem:[#allocation3 + $0x410] sm:$0xff] %v7183
  %7192 = vst [vmem:[#allocation3 + $0x418] sm:$0xff] %v7184
  %7193 = vst [vmem:[#allocation3 + $0x420] sm:$0xff] %v7185
  %7194 = vst [vmem:[#allocation3 + $0x428] sm:$0xff] %v7186
  %7195 = vst [vmem:[#allocation3 + $0x430] sm:$0xff] %v7187
  %7196 = vst [vmem:[#allocation3 + $0x438] sm:$0xff] %v7188
  %7197 = vrot.lane.b32.xlu0 %v6278, 112
  %v7198 = vpop.permute.xlu0 %7197
  %7199 = vrot.lane.b32.xlu0 %v6279, 112
  %v7200 = vpop.permute.xlu0 %7199
  %7201 = vrot.lane.b32.xlu0 %v6280, 112
  %v7202 = vpop.permute.xlu0 %7201
  %7203 = vrot.lane.b32.xlu0 %v6282, 112
  %v7204 = vpop.permute.xlu0 %7203
  %7205 = vrot.lane.b32.xlu0 %v6283, 112
  %v7206 = vpop.permute.xlu0 %7205
  %7207 = vrot.lane.b32.xlu0 %v6284, 112
  %v7208 = vpop.permute.xlu0 %7207
  %7209 = vrot.lane.b32.xlu0 %v6286, 112
  %v7210 = vpop.permute.xlu0 %7209
  %7211 = vrot.lane.b32.xlu0 %v6287, 112
  %v7212 = vpop.permute.xlu0 %7211
  %7213 = vrot.lane.b32.xlu0 %v6288, 112
  %v7214 = vpop.permute.xlu0 %7213
  %7215 = vrot.lane.b32.xlu0 %v6290, 112
  %v7216 = vpop.permute.xlu0 %7215
  %7217 = vrot.lane.b32.xlu0 %v6291, 112
  %v7218 = vpop.permute.xlu0 %7217
  %7219 = vrot.lane.b32.xlu0 %v6292, 112
  %v7220 = vpop.permute.xlu0 %7219
  %v7221 = vsel %vm1165, %v7198, %v7200
  %v7222 = vsel %vm1165, %v7200, %v7202
  %v7223 = vsel %vm1165, %v7204, %v7206
  %v7224 = vsel %vm1165, %v7206, %v7208
  %v7225 = vsel %vm1165, %v7210, %v7212
  %v7226 = vsel %vm1165, %v7212, %v7214
  %v7227 = vsel %vm1165, %v7216, %v7218
  %v7228 = vsel %vm1165, %v7218, %v7220
  %7237 = vst [vmem:[#allocation3 + $0x440] sm:$0xff] %v7221
  %7238 = vst [vmem:[#allocation3 + $0x448] sm:$0xff] %v7222
  %7239 = vst [vmem:[#allocation3 + $0x450] sm:$0xff] %v7223
  %7240 = vst [vmem:[#allocation3 + $0x458] sm:$0xff] %v7224
  %7241 = vst [vmem:[#allocation3 + $0x460] sm:$0xff] %v7225
  %7242 = vst [vmem:[#allocation3 + $0x468] sm:$0xff] %v7226
  %7243 = vst [vmem:[#allocation3 + $0x470] sm:$0xff] %v7227
  %7244 = vst [vmem:[#allocation3 + $0x478] sm:$0xff] %v7228
  %7245 = vrot.lane.b32.xlu0 %v6278, 111
  %v7246 = vpop.permute.xlu0 %7245
  %7247 = vrot.lane.b32.xlu0 %v6279, 111
  %v7248 = vpop.permute.xlu0 %7247
  %7249 = vrot.lane.b32.xlu0 %v6280, 111
  %v7250 = vpop.permute.xlu0 %7249
  %7251 = vrot.lane.b32.xlu0 %v6282, 111
  %v7252 = vpop.permute.xlu0 %7251
  %7253 = vrot.lane.b32.xlu0 %v6283, 111
  %v7254 = vpop.permute.xlu0 %7253
  %7255 = vrot.lane.b32.xlu0 %v6284, 111
  %v7256 = vpop.permute.xlu0 %7255
  %7257 = vrot.lane.b32.xlu0 %v6286, 111
  %v7258 = vpop.permute.xlu0 %7257
  %7259 = vrot.lane.b32.xlu0 %v6287, 111
  %v7260 = vpop.permute.xlu0 %7259
  %7261 = vrot.lane.b32.xlu0 %v6288, 111
  %v7262 = vpop.permute.xlu0 %7261
  %7263 = vrot.lane.b32.xlu0 %v6290, 111
  %v7264 = vpop.permute.xlu0 %7263
  %7265 = vrot.lane.b32.xlu0 %v6291, 111
  %v7266 = vpop.permute.xlu0 %7265
  %7267 = vrot.lane.b32.xlu0 %v6292, 111
  %v7268 = vpop.permute.xlu0 %7267
  %v7269 = vsel %vm1214, %v7246, %v7248
  %v7270 = vsel %vm1214, %v7248, %v7250
  %v7271 = vsel %vm1214, %v7252, %v7254
  %v7272 = vsel %vm1214, %v7254, %v7256
  %v7273 = vsel %vm1214, %v7258, %v7260
  %v7274 = vsel %vm1214, %v7260, %v7262
  %v7275 = vsel %vm1214, %v7264, %v7266
  %v7276 = vsel %vm1214, %v7266, %v7268
  %v7285 = vsel %vm382, %v7269, 0.0
  %v7286 = vsel %vm383, %v7270, 0.0
  %v7287 = vsel %vm382, %v7271, 0.0
  %v7288 = vsel %vm383, %v7272, 0.0
  %v7289 = vsel %vm382, %v7273, 0.0
  %v7290 = vsel %vm383, %v7274, 0.0
  %v7291 = vsel %vm382, %v7275, 0.0
  %v7292 = vsel %vm383, %v7276, 0.0
  %7293 = vst [vmem:[#allocation3 + $0x480] sm:$0xff] %v7285
  %7294 = vst [vmem:[#allocation3 + $0x488] sm:$0xff] %v7286
  %7295 = vst [vmem:[#allocation3 + $0x490] sm:$0xff] %v7287
  %7296 = vst [vmem:[#allocation3 + $0x498] sm:$0xff] %v7288
  %7297 = vst [vmem:[#allocation3 + $0x4a0] sm:$0xff] %v7289
  %7298 = vst [vmem:[#allocation3 + $0x4a8] sm:$0xff] %v7290
  %7299 = vst [vmem:[#allocation3 + $0x4b0] sm:$0xff] %v7291
  %7300 = vst [vmem:[#allocation3 + $0x4b8] sm:$0xff] %v7292
  %7301 = vrot.lane.b32.xlu0 %v6278, 110
  %v7302 = vpop.permute.xlu0 %7301
  %7303 = vrot.lane.b32.xlu0 %v6279, 110
  %v7304 = vpop.permute.xlu0 %7303
  %7305 = vrot.lane.b32.xlu0 %v6280, 110
  %v7306 = vpop.permute.xlu0 %7305
  %7307 = vrot.lane.b32.xlu0 %v6282, 110
  %v7308 = vpop.permute.xlu0 %7307
  %7309 = vrot.lane.b32.xlu0 %v6283, 110
  %v7310 = vpop.permute.xlu0 %7309
  %7311 = vrot.lane.b32.xlu0 %v6284, 110
  %v7312 = vpop.permute.xlu0 %7311
  %7313 = vrot.lane.b32.xlu0 %v6286, 110
  %v7314 = vpop.permute.xlu0 %7313
  %7315 = vrot.lane.b32.xlu0 %v6287, 110
  %v7316 = vpop.permute.xlu0 %7315
  %7317 = vrot.lane.b32.xlu0 %v6288, 110
  %v7318 = vpop.permute.xlu0 %7317
  %7319 = vrot.lane.b32.xlu0 %v6290, 110
  %v7320 = vpop.permute.xlu0 %7319
  %7321 = vrot.lane.b32.xlu0 %v6291, 110
  %v7322 = vpop.permute.xlu0 %7321
  %7323 = vrot.lane.b32.xlu0 %v6292, 110
  %v7324 = vpop.permute.xlu0 %7323
  %v7325 = vsel %vm1271, %v7302, %v7304
  %v7326 = vsel %vm1271, %v7304, %v7306
  %v7327 = vsel %vm1271, %v7308, %v7310
  %v7328 = vsel %vm1271, %v7310, %v7312
  %v7329 = vsel %vm1271, %v7314, %v7316
  %v7330 = vsel %vm1271, %v7316, %v7318
  %v7331 = vsel %vm1271, %v7320, %v7322
  %v7332 = vsel %vm1271, %v7322, %v7324
  %v7341 = vsel %vm451, %v7325, 0.0
  %v7342 = vsel %vm452, %v7326, 0.0
  %v7343 = vsel %vm451, %v7327, 0.0
  %v7344 = vsel %vm452, %v7328, 0.0
  %v7345 = vsel %vm451, %v7329, 0.0
  %v7346 = vsel %vm452, %v7330, 0.0
  %v7347 = vsel %vm451, %v7331, 0.0
  %v7348 = vsel %vm452, %v7332, 0.0
  %7349 = vst [vmem:[#allocation3 + $0x4c0] sm:$0xff] %v7341
  %7350 = vst [vmem:[#allocation3 + $0x4c8] sm:$0xff] %v7342
  %7351 = vst [vmem:[#allocation3 + $0x4d0] sm:$0xff] %v7343
  %7352 = vst [vmem:[#allocation3 + $0x4d8] sm:$0xff] %v7344
  %7353 = vst [vmem:[#allocation3 + $0x4e0] sm:$0xff] %v7345
  %7354 = vst [vmem:[#allocation3 + $0x4e8] sm:$0xff] %v7346
  %7355 = vst [vmem:[#allocation3 + $0x4f0] sm:$0xff] %v7347
  %7356 = vst [vmem:[#allocation3 + $0x4f8] sm:$0xff] %v7348
  %7357 = vrot.lane.b32.xlu0 %v6278, 98
  %v7358 = vpop.permute.xlu0 %7357
  %7359 = vrot.lane.b32.xlu0 %v6279, 98
  %v7360 = vpop.permute.xlu0 %7359
  %7361 = vrot.lane.b32.xlu0 %v6280, 98
  %v7362 = vpop.permute.xlu0 %7361
  %7363 = vrot.lane.b32.xlu0 %v6282, 98
  %v7364 = vpop.permute.xlu0 %7363
  %7365 = vrot.lane.b32.xlu0 %v6283, 98
  %v7366 = vpop.permute.xlu0 %7365
  %7367 = vrot.lane.b32.xlu0 %v6284, 98
  %v7368 = vpop.permute.xlu0 %7367
  %7369 = vrot.lane.b32.xlu0 %v6286, 98
  %v7370 = vpop.permute.xlu0 %7369
  %7371 = vrot.lane.b32.xlu0 %v6287, 98
  %v7372 = vpop.permute.xlu0 %7371
  %7373 = vrot.lane.b32.xlu0 %v6288, 98
  %v7374 = vpop.permute.xlu0 %7373
  %7375 = vrot.lane.b32.xlu0 %v6290, 98
  %v7376 = vpop.permute.xlu0 %7375
  %7377 = vrot.lane.b32.xlu0 %v6291, 98
  %v7378 = vpop.permute.xlu0 %7377
  %7379 = vrot.lane.b32.xlu0 %v6292, 98
  %v7380 = vpop.permute.xlu0 %7379
  %v7381 = vsel %vm1328, %v7358, %v7360
  %v7382 = vsel %vm1328, %v7360, %v7362
  %v7383 = vsel %vm1328, %v7364, %v7366
  %v7384 = vsel %vm1328, %v7366, %v7368
  %v7385 = vsel %vm1328, %v7370, %v7372
  %v7386 = vsel %vm1328, %v7372, %v7374
  %v7387 = vsel %vm1328, %v7376, %v7378
  %v7388 = vsel %vm1328, %v7378, %v7380
  %v7397 = vsel %vm183, %v7381, 0.0
  %v7398 = vsel %vm184, %v7382, 0.0
  %v7399 = vsel %vm183, %v7383, 0.0
  %v7400 = vsel %vm184, %v7384, 0.0
  %v7401 = vsel %vm183, %v7385, 0.0
  %v7402 = vsel %vm184, %v7386, 0.0
  %v7403 = vsel %vm183, %v7387, 0.0
  %v7404 = vsel %vm184, %v7388, 0.0
  %7405 = vst [vmem:[#allocation3 + $0x500] sm:$0xff] %v7397
  %7406 = vst [vmem:[#allocation3 + $0x508] sm:$0xff] %v7398
  %7407 = vst [vmem:[#allocation3 + $0x510] sm:$0xff] %v7399
  %7408 = vst [vmem:[#allocation3 + $0x518] sm:$0xff] %v7400
  %7409 = vst [vmem:[#allocation3 + $0x520] sm:$0xff] %v7401
  %7410 = vst [vmem:[#allocation3 + $0x528] sm:$0xff] %v7402
  %7411 = vst [vmem:[#allocation3 + $0x530] sm:$0xff] %v7403
  %7412 = vst [vmem:[#allocation3 + $0x538] sm:$0xff] %v7404
  %7413 = vrot.lane.b32.xlu0 %v6278, 97
  %v7414 = vpop.permute.xlu0 %7413
  %7415 = vrot.lane.b32.xlu0 %v6279, 97
  %v7416 = vpop.permute.xlu0 %7415
  %7417 = vrot.lane.b32.xlu0 %v6280, 97
  %v7418 = vpop.permute.xlu0 %7417
  %7419 = vrot.lane.b32.xlu0 %v6282, 97
  %v7420 = vpop.permute.xlu0 %7419
  %7421 = vrot.lane.b32.xlu0 %v6283, 97
  %v7422 = vpop.permute.xlu0 %7421
  %7423 = vrot.lane.b32.xlu0 %v6284, 97
  %v7424 = vpop.permute.xlu0 %7423
  %7425 = vrot.lane.b32.xlu0 %v6286, 97
  %v7426 = vpop.permute.xlu0 %7425
  %7427 = vrot.lane.b32.xlu0 %v6287, 97
  %v7428 = vpop.permute.xlu0 %7427
  %7429 = vrot.lane.b32.xlu0 %v6288, 97
  %v7430 = vpop.permute.xlu0 %7429
  %7431 = vrot.lane.b32.xlu0 %v6290, 97
  %v7432 = vpop.permute.xlu0 %7431
  %7433 = vrot.lane.b32.xlu0 %v6291, 97
  %v7434 = vpop.permute.xlu0 %7433
  %7435 = vrot.lane.b32.xlu0 %v6292, 97
  %v7436 = vpop.permute.xlu0 %7435
  %v7437 = vsel %vm1385, %v7414, %v7416
  %v7438 = vsel %vm1385, %v7416, %v7418
  %v7439 = vsel %vm1385, %v7420, %v7422
  %v7440 = vsel %vm1385, %v7422, %v7424
  %v7441 = vsel %vm1385, %v7426, %v7428
  %v7442 = vsel %vm1385, %v7428, %v7430
  %v7443 = vsel %vm1385, %v7432, %v7434
  %v7444 = vsel %vm1385, %v7434, %v7436
  %v7453 = vsel %vm264, %v7437, 0.0
  %v7454 = vsel %vm265, %v7438, 0.0
  %v7455 = vsel %vm264, %v7439, 0.0
  %v7456 = vsel %vm265, %v7440, 0.0
  %v7457 = vsel %vm264, %v7441, 0.0
  %v7458 = vsel %vm265, %v7442, 0.0
  %v7459 = vsel %vm264, %v7443, 0.0
  %v7460 = vsel %vm265, %v7444, 0.0
  %7461 = vst [vmem:[#allocation3 + $0x540] sm:$0xff] %v7453
  %7462 = vst [vmem:[#allocation3 + $0x548] sm:$0xff] %v7454
  %7463 = vst [vmem:[#allocation3 + $0x550] sm:$0xff] %v7455
  %7464 = vst [vmem:[#allocation3 + $0x558] sm:$0xff] %v7456
  %7465 = vst [vmem:[#allocation3 + $0x560] sm:$0xff] %v7457
  %7466 = vst [vmem:[#allocation3 + $0x568] sm:$0xff] %v7458
  %7467 = vst [vmem:[#allocation3 + $0x570] sm:$0xff] %v7459
  %7468 = vst [vmem:[#allocation3 + $0x578] sm:$0xff] %v7460
  %7469 = vrot.lane.b32.xlu0 %v6278, 96
  %v7470 = vpop.permute.xlu0 %7469
  %7471 = vrot.lane.b32.xlu0 %v6279, 96
  %v7472 = vpop.permute.xlu0 %7471
  %7473 = vrot.lane.b32.xlu0 %v6280, 96
  %v7474 = vpop.permute.xlu0 %7473
  %7475 = vrot.lane.b32.xlu0 %v6282, 96
  %v7476 = vpop.permute.xlu0 %7475
  %7477 = vrot.lane.b32.xlu0 %v6283, 96
  %v7478 = vpop.permute.xlu0 %7477
  %7479 = vrot.lane.b32.xlu0 %v6284, 96
  %v7480 = vpop.permute.xlu0 %7479
  %7481 = vrot.lane.b32.xlu0 %v6286, 96
  %v7482 = vpop.permute.xlu0 %7481
  %7483 = vrot.lane.b32.xlu0 %v6287, 96
  %v7484 = vpop.permute.xlu0 %7483
  %7485 = vrot.lane.b32.xlu0 %v6288, 96
  %v7486 = vpop.permute.xlu0 %7485
  %7487 = vrot.lane.b32.xlu0 %v6290, 96
  %v7488 = vpop.permute.xlu0 %7487
  %7489 = vrot.lane.b32.xlu0 %v6291, 96
  %v7490 = vpop.permute.xlu0 %7489
  %7491 = vrot.lane.b32.xlu0 %v6292, 96
  %v7492 = vpop.permute.xlu0 %7491
  %v7493 = vsel %vm1442, %v7470, %v7472
  %v7494 = vsel %vm1442, %v7472, %v7474
  %v7495 = vsel %vm1442, %v7476, %v7478
  %v7496 = vsel %vm1442, %v7478, %v7480
  %v7497 = vsel %vm1442, %v7482, %v7484
  %v7498 = vsel %vm1442, %v7484, %v7486
  %v7499 = vsel %vm1442, %v7488, %v7490
  %v7500 = vsel %vm1442, %v7490, %v7492
  %7509 = vst [vmem:[#allocation3 + $0x580] sm:$0xff] %v7493
  %7510 = vst [vmem:[#allocation3 + $0x588] sm:$0xff] %v7494
  %7511 = vst [vmem:[#allocation3 + $0x590] sm:$0xff] %v7495
  %7512 = vst [vmem:[#allocation3 + $0x598] sm:$0xff] %v7496
  %7513 = vst [vmem:[#allocation3 + $0x5a0] sm:$0xff] %v7497
  %7514 = vst [vmem:[#allocation3 + $0x5a8] sm:$0xff] %v7498
  %7515 = vst [vmem:[#allocation3 + $0x5b0] sm:$0xff] %v7499
  %7516 = vst [vmem:[#allocation3 + $0x5b8] sm:$0xff] %v7500
  %7517 = vrot.lane.b32.xlu0 %v6278, 95
  %v7518 = vpop.permute.xlu0 %7517
  %7519 = vrot.lane.b32.xlu0 %v6279, 95
  %v7520 = vpop.permute.xlu0 %7519
  %7521 = vrot.lane.b32.xlu0 %v6280, 95
  %v7522 = vpop.permute.xlu0 %7521
  %7523 = vrot.lane.b32.xlu0 %v6282, 95
  %v7524 = vpop.permute.xlu0 %7523
  %7525 = vrot.lane.b32.xlu0 %v6283, 95
  %v7526 = vpop.permute.xlu0 %7525
  %7527 = vrot.lane.b32.xlu0 %v6284, 95
  %v7528 = vpop.permute.xlu0 %7527
  %7529 = vrot.lane.b32.xlu0 %v6286, 95
  %v7530 = vpop.permute.xlu0 %7529
  %7531 = vrot.lane.b32.xlu0 %v6287, 95
  %v7532 = vpop.permute.xlu0 %7531
  %7533 = vrot.lane.b32.xlu0 %v6288, 95
  %v7534 = vpop.permute.xlu0 %7533
  %7535 = vrot.lane.b32.xlu0 %v6290, 95
  %v7536 = vpop.permute.xlu0 %7535
  %7537 = vrot.lane.b32.xlu0 %v6291, 95
  %v7538 = vpop.permute.xlu0 %7537
  %7539 = vrot.lane.b32.xlu0 %v6292, 95
  %v7540 = vpop.permute.xlu0 %7539
  %v7541 = vsel %vm1491, %v7518, %v7520
  %v7542 = vsel %vm1491, %v7520, %v7522
  %v7543 = vsel %vm1491, %v7524, %v7526
  %v7544 = vsel %vm1491, %v7526, %v7528
  %v7545 = vsel %vm1491, %v7530, %v7532
  %v7546 = vsel %vm1491, %v7532, %v7534
  %v7547 = vsel %vm1491, %v7536, %v7538
  %v7548 = vsel %vm1491, %v7538, %v7540
  %v7557 = vsel %vm382, %v7541, 0.0
  %v7558 = vsel %vm383, %v7542, 0.0
  %v7559 = vsel %vm382, %v7543, 0.0
  %v7560 = vsel %vm383, %v7544, 0.0
  %v7561 = vsel %vm382, %v7545, 0.0
  %v7562 = vsel %vm383, %v7546, 0.0
  %v7563 = vsel %vm382, %v7547, 0.0
  %v7564 = vsel %vm383, %v7548, 0.0
  %7565 = vst [vmem:[#allocation3 + $0x5c0] sm:$0xff] %v7557
  %7566 = vst [vmem:[#allocation3 + $0x5c8] sm:$0xff] %v7558
  %7567 = vst [vmem:[#allocation3 + $0x5d0] sm:$0xff] %v7559
  %7568 = vst [vmem:[#allocation3 + $0x5d8] sm:$0xff] %v7560
  %7569 = vst [vmem:[#allocation3 + $0x5e0] sm:$0xff] %v7561
  %7570 = vst [vmem:[#allocation3 + $0x5e8] sm:$0xff] %v7562
  %7571 = vst [vmem:[#allocation3 + $0x5f0] sm:$0xff] %v7563
  %7572 = vst [vmem:[#allocation3 + $0x5f8] sm:$0xff] %v7564
  %7573 = vrot.lane.b32.xlu0 %v6278, 94
  %v7574 = vpop.permute.xlu0 %7573
  %7575 = vrot.lane.b32.xlu0 %v6279, 94
  %v7576 = vpop.permute.xlu0 %7575
  %7577 = vrot.lane.b32.xlu0 %v6280, 94
  %v7578 = vpop.permute.xlu0 %7577
  %7579 = vrot.lane.b32.xlu0 %v6282, 94
  %v7580 = vpop.permute.xlu0 %7579
  %7581 = vrot.lane.b32.xlu0 %v6283, 94
  %v7582 = vpop.permute.xlu0 %7581
  %7583 = vrot.lane.b32.xlu0 %v6284, 94
  %v7584 = vpop.permute.xlu0 %7583
  %7585 = vrot.lane.b32.xlu0 %v6286, 94
  %v7586 = vpop.permute.xlu0 %7585
  %7587 = vrot.lane.b32.xlu0 %v6287, 94
  %v7588 = vpop.permute.xlu0 %7587
  %7589 = vrot.lane.b32.xlu0 %v6288, 94
  %v7590 = vpop.permute.xlu0 %7589
  %7591 = vrot.lane.b32.xlu0 %v6290, 94
  %v7592 = vpop.permute.xlu0 %7591
  %7593 = vrot.lane.b32.xlu0 %v6291, 94
  %v7594 = vpop.permute.xlu0 %7593
  %7595 = vrot.lane.b32.xlu0 %v6292, 94
  %v7596 = vpop.permute.xlu0 %7595
  %v7597 = vsel %vm1548, %v7574, %v7576
  %v7598 = vsel %vm1548, %v7576, %v7578
  %v7599 = vsel %vm1548, %v7580, %v7582
  %v7600 = vsel %vm1548, %v7582, %v7584
  %v7601 = vsel %vm1548, %v7586, %v7588
  %v7602 = vsel %vm1548, %v7588, %v7590
  %v7603 = vsel %vm1548, %v7592, %v7594
  %v7604 = vsel %vm1548, %v7594, %v7596
  %v7613 = vsel %vm451, %v7597, 0.0
  %v7614 = vsel %vm452, %v7598, 0.0
  %v7615 = vsel %vm451, %v7599, 0.0
  %v7616 = vsel %vm452, %v7600, 0.0
  %v7617 = vsel %vm451, %v7601, 0.0
  %v7618 = vsel %vm452, %v7602, 0.0
  %v7619 = vsel %vm451, %v7603, 0.0
  %v7620 = vsel %vm452, %v7604, 0.0
  %7621 = vst [vmem:[#allocation3 + $0x600] sm:$0xff] %v7613
  %7622 = vst [vmem:[#allocation3 + $0x608] sm:$0xff] %v7614
  %7623 = vst [vmem:[#allocation3 + $0x610] sm:$0xff] %v7615
  %7624 = vst [vmem:[#allocation3 + $0x618] sm:$0xff] %v7616
  %7625 = vst [vmem:[#allocation3 + $0x620] sm:$0xff] %v7617
  %7626 = vst [vmem:[#allocation3 + $0x628] sm:$0xff] %v7618
  %7627 = vst [vmem:[#allocation3 + $0x630] sm:$0xff] %v7619
  %7628 = vst [vmem:[#allocation3 + $0x638] sm:$0xff] %v7620
  %v7629 = vld [vmem:[#allocation3] sm:$0xff]
  %v7630 = vld [vmem:[#allocation3 + $0x8] sm:$0xff]
  %v7631 = vld [vmem:[#allocation3 + $0x10] sm:$0xff]
  %v7632 = vld [vmem:[#allocation3 + $0x18] sm:$0xff]
  %v7633 = vld [vmem:[#allocation3 + $0x20] sm:$0xff]
  %v7634 = vld [vmem:[#allocation3 + $0x28] sm:$0xff]
  %v7635 = vld [vmem:[#allocation3 + $0x30] sm:$0xff]
  %v7636 = vld [vmem:[#allocation3 + $0x38] sm:$0xff]
  %v7637 = vld [vmem:[#allocation3 + $0x40] sm:$0xff]
  %v7638 = vld [vmem:[#allocation3 + $0x48] sm:$0xff]
  %v7639 = vld [vmem:[#allocation3 + $0x50] sm:$0xff]
  %v7640 = vld [vmem:[#allocation3 + $0x58] sm:$0xff]
  %v7641 = vld [vmem:[#allocation3 + $0x60] sm:$0xff]
  %v7642 = vld [vmem:[#allocation3 + $0x68] sm:$0xff]
  %v7643 = vld [vmem:[#allocation3 + $0x70] sm:$0xff]
  %v7644 = vld [vmem:[#allocation3 + $0x78] sm:$0xff]
  %v7645 = vld [vmem:[#allocation3 + $0x80] sm:$0xff]
  %v7646 = vld [vmem:[#allocation3 + $0x88] sm:$0xff]
  %v7647 = vld [vmem:[#allocation3 + $0x90] sm:$0xff]
  %v7648 = vld [vmem:[#allocation3 + $0x98] sm:$0xff]
  %v7649 = vld [vmem:[#allocation3 + $0xa0] sm:$0xff]
  %v7650 = vld [vmem:[#allocation3 + $0xa8] sm:$0xff]
  %v7651 = vld [vmem:[#allocation3 + $0xb0] sm:$0xff]
  %v7652 = vld [vmem:[#allocation3 + $0xb8] sm:$0xff]
  %v7653 = vld [vmem:[#allocation3 + $0xc0] sm:$0xff]
  %v7654 = vld [vmem:[#allocation3 + $0xc8] sm:$0xff]
  %v7655 = vld [vmem:[#allocation3 + $0xd0] sm:$0xff]
  %v7656 = vld [vmem:[#allocation3 + $0xd8] sm:$0xff]
  %v7657 = vld [vmem:[#allocation3 + $0xe0] sm:$0xff]
  %v7658 = vld [vmem:[#allocation3 + $0xe8] sm:$0xff]
  %v7659 = vld [vmem:[#allocation3 + $0xf0] sm:$0xff]
  %v7660 = vld [vmem:[#allocation3 + $0xf8] sm:$0xff]
  %v7661 = vld [vmem:[#allocation3 + $0x100] sm:$0xff]
  %v7662 = vld [vmem:[#allocation3 + $0x108] sm:$0xff]
  %v7663 = vld [vmem:[#allocation3 + $0x110] sm:$0xff]
  %v7664 = vld [vmem:[#allocation3 + $0x118] sm:$0xff]
  %v7665 = vld [vmem:[#allocation3 + $0x120] sm:$0xff]
  %v7666 = vld [vmem:[#allocation3 + $0x128] sm:$0xff]
  %v7667 = vld [vmem:[#allocation3 + $0x130] sm:$0xff]
  %v7668 = vld [vmem:[#allocation3 + $0x138] sm:$0xff]
  %v7669 = vld [vmem:[#allocation3 + $0x140] sm:$0xff]
  %v7670 = vld [vmem:[#allocation3 + $0x148] sm:$0xff]
  %v7671 = vld [vmem:[#allocation3 + $0x150] sm:$0xff]
  %v7672 = vld [vmem:[#allocation3 + $0x158] sm:$0xff]
  %v7673 = vld [vmem:[#allocation3 + $0x160] sm:$0xff]
  %v7674 = vld [vmem:[#allocation3 + $0x168] sm:$0xff]
  %v7675 = vld [vmem:[#allocation3 + $0x170] sm:$0xff]
  %v7676 = vld [vmem:[#allocation3 + $0x178] sm:$0xff]
  %v7677 = vld [vmem:[#allocation3 + $0x180] sm:$0xff]
  %v7678 = vld [vmem:[#allocation3 + $0x188] sm:$0xff]
  %v7679 = vld [vmem:[#allocation3 + $0x190] sm:$0xff]
  %v7680 = vld [vmem:[#allocation3 + $0x198] sm:$0xff]
  %v7681 = vld [vmem:[#allocation3 + $0x1a0] sm:$0xff]
  %v7682 = vld [vmem:[#allocation3 + $0x1a8] sm:$0xff]
  %v7683 = vld [vmem:[#allocation3 + $0x1b0] sm:$0xff]
  %v7684 = vld [vmem:[#allocation3 + $0x1b8] sm:$0xff]
  %v7685 = vld [vmem:[#allocation3 + $0x1c0] sm:$0xff]
  %v7686 = vld [vmem:[#allocation3 + $0x1c8] sm:$0xff]
  %v7687 = vld [vmem:[#allocation3 + $0x1d0] sm:$0xff]
  %v7688 = vld [vmem:[#allocation3 + $0x1d8] sm:$0xff]
  %v7689 = vld [vmem:[#allocation3 + $0x1e0] sm:$0xff]
  %v7690 = vld [vmem:[#allocation3 + $0x1e8] sm:$0xff]
  %v7691 = vld [vmem:[#allocation3 + $0x1f0] sm:$0xff]
  %v7692 = vld [vmem:[#allocation3 + $0x1f8] sm:$0xff]
  %v7693 = vld [vmem:[#allocation3 + $0x200] sm:$0xff]
  %v7694 = vld [vmem:[#allocation3 + $0x208] sm:$0xff]
  %v7695 = vld [vmem:[#allocation3 + $0x210] sm:$0xff]
  %v7696 = vld [vmem:[#allocation3 + $0x218] sm:$0xff]
  %v7697 = vld [vmem:[#allocation3 + $0x220] sm:$0xff]
  %v7698 = vld [vmem:[#allocation3 + $0x228] sm:$0xff]
  %v7699 = vld [vmem:[#allocation3 + $0x230] sm:$0xff]
  %v7700 = vld [vmem:[#allocation3 + $0x238] sm:$0xff]
  %v7701 = vld [vmem:[#allocation3 + $0x240] sm:$0xff]
  %v7702 = vld [vmem:[#allocation3 + $0x248] sm:$0xff]
  %v7703 = vld [vmem:[#allocation3 + $0x250] sm:$0xff]
  %v7704 = vld [vmem:[#allocation3 + $0x258] sm:$0xff]
  %v7705 = vld [vmem:[#allocation3 + $0x260] sm:$0xff]
  %v7706 = vld [vmem:[#allocation3 + $0x268] sm:$0xff]
  %v7707 = vld [vmem:[#allocation3 + $0x270] sm:$0xff]
  %v7708 = vld [vmem:[#allocation3 + $0x278] sm:$0xff]
  %v7709 = vld [vmem:[#allocation3 + $0x280] sm:$0xff]
  %v7710 = vld [vmem:[#allocation3 + $0x288] sm:$0xff]
  %v7711 = vld [vmem:[#allocation3 + $0x290] sm:$0xff]
  %v7712 = vld [vmem:[#allocation3 + $0x298] sm:$0xff]
  %v7713 = vld [vmem:[#allocation3 + $0x2a0] sm:$0xff]
  %v7714 = vld [vmem:[#allocation3 + $0x2a8] sm:$0xff]
  %v7715 = vld [vmem:[#allocation3 + $0x2b0] sm:$0xff]
  %v7716 = vld [vmem:[#allocation3 + $0x2b8] sm:$0xff]
  %v7717 = vld [vmem:[#allocation3 + $0x2c0] sm:$0xff]
  %v7718 = vld [vmem:[#allocation3 + $0x2c8] sm:$0xff]
  %v7719 = vld [vmem:[#allocation3 + $0x2d0] sm:$0xff]
  %v7720 = vld [vmem:[#allocation3 + $0x2d8] sm:$0xff]
  %v7721 = vld [vmem:[#allocation3 + $0x2e0] sm:$0xff]
  %v7722 = vld [vmem:[#allocation3 + $0x2e8] sm:$0xff]
  %v7723 = vld [vmem:[#allocation3 + $0x2f0] sm:$0xff]
  %v7724 = vld [vmem:[#allocation3 + $0x2f8] sm:$0xff]
  %v7725 = vld [vmem:[#allocation3 + $0x300] sm:$0xff]
  %v7726 = vld [vmem:[#allocation3 + $0x308] sm:$0xff]
  %v7727 = vld [vmem:[#allocation3 + $0x310] sm:$0xff]
  %v7728 = vld [vmem:[#allocation3 + $0x318] sm:$0xff]
  %v7729 = vld [vmem:[#allocation3 + $0x320] sm:$0xff]
  %v7730 = vld [vmem:[#allocation3 + $0x328] sm:$0xff]
  %v7731 = vld [vmem:[#allocation3 + $0x330] sm:$0xff]
  %v7732 = vld [vmem:[#allocation3 + $0x338] sm:$0xff]
  %v7733 = vld [vmem:[#allocation3 + $0x340] sm:$0xff]
  %v7734 = vld [vmem:[#allocation3 + $0x348] sm:$0xff]
  %v7735 = vld [vmem:[#allocation3 + $0x350] sm:$0xff]
  %v7736 = vld [vmem:[#allocation3 + $0x358] sm:$0xff]
  %v7737 = vld [vmem:[#allocation3 + $0x360] sm:$0xff]
  %v7738 = vld [vmem:[#allocation3 + $0x368] sm:$0xff]
  %v7739 = vld [vmem:[#allocation3 + $0x370] sm:$0xff]
  %v7740 = vld [vmem:[#allocation3 + $0x378] sm:$0xff]
  %v7741 = vld [vmem:[#allocation3 + $0x380] sm:$0xff]
  %v7742 = vld [vmem:[#allocation3 + $0x388] sm:$0xff]
  %v7743 = vld [vmem:[#allocation3 + $0x390] sm:$0xff]
  %v7744 = vld [vmem:[#allocation3 + $0x398] sm:$0xff]
  %v7745 = vld [vmem:[#allocation3 + $0x3a0] sm:$0xff]
  %v7746 = vld [vmem:[#allocation3 + $0x3a8] sm:$0xff]
  %v7747 = vld [vmem:[#allocation3 + $0x3b0] sm:$0xff]
  %v7748 = vld [vmem:[#allocation3 + $0x3b8] sm:$0xff]
  %v7749 = vld [vmem:[#allocation3 + $0x3c0] sm:$0xff]
  %v7750 = vld [vmem:[#allocation3 + $0x3c8] sm:$0xff]
  %v7751 = vld [vmem:[#allocation3 + $0x3d0] sm:$0xff]
  %v7752 = vld [vmem:[#allocation3 + $0x3d8] sm:$0xff]
  %v7753 = vld [vmem:[#allocation3 + $0x3e0] sm:$0xff]
  %v7754 = vld [vmem:[#allocation3 + $0x3e8] sm:$0xff]
  %v7755 = vld [vmem:[#allocation3 + $0x3f0] sm:$0xff]
  %v7756 = vld [vmem:[#allocation3 + $0x3f8] sm:$0xff]
  %v7757 = vld [vmem:[#allocation3 + $0x400] sm:$0xff]
  %v7758 = vld [vmem:[#allocation3 + $0x408] sm:$0xff]
  %v7759 = vld [vmem:[#allocation3 + $0x410] sm:$0xff]
  %v7760 = vld [vmem:[#allocation3 + $0x418] sm:$0xff]
  %v7761 = vld [vmem:[#allocation3 + $0x420] sm:$0xff]
  %v7762 = vld [vmem:[#allocation3 + $0x428] sm:$0xff]
  %v7763 = vld [vmem:[#allocation3 + $0x430] sm:$0xff]
  %v7764 = vld [vmem:[#allocation3 + $0x438] sm:$0xff]
  %v7765 = vld [vmem:[#allocation3 + $0x440] sm:$0xff]
  %v7766 = vld [vmem:[#allocation3 + $0x448] sm:$0xff]
  %v7767 = vld [vmem:[#allocation3 + $0x450] sm:$0xff]
  %v7768 = vld [vmem:[#allocation3 + $0x458] sm:$0xff]
  %v7769 = vld [vmem:[#allocation3 + $0x460] sm:$0xff]
  %v7770 = vld [vmem:[#allocation3 + $0x468] sm:$0xff]
  %v7771 = vld [vmem:[#allocation3 + $0x470] sm:$0xff]
  %v7772 = vld [vmem:[#allocation3 + $0x478] sm:$0xff]
  %v7773 = vld [vmem:[#allocation3 + $0x480] sm:$0xff]
  %v7774 = vld [vmem:[#allocation3 + $0x488] sm:$0xff]
  %v7775 = vld [vmem:[#allocation3 + $0x490] sm:$0xff]
  %v7776 = vld [vmem:[#allocation3 + $0x498] sm:$0xff]
  %v7777 = vld [vmem:[#allocation3 + $0x4a0] sm:$0xff]
  %v7778 = vld [vmem:[#allocation3 + $0x4a8] sm:$0xff]
  %v7779 = vld [vmem:[#allocation3 + $0x4b0] sm:$0xff]
  %v7780 = vld [vmem:[#allocation3 + $0x4b8] sm:$0xff]
  %v7781 = vld [vmem:[#allocation3 + $0x4c0] sm:$0xff]
  %v7782 = vld [vmem:[#allocation3 + $0x4c8] sm:$0xff]
  %v7783 = vld [vmem:[#allocation3 + $0x4d0] sm:$0xff]
  %v7784 = vld [vmem:[#allocation3 + $0x4d8] sm:$0xff]
  %v7785 = vld [vmem:[#allocation3 + $0x4e0] sm:$0xff]
  %v7786 = vld [vmem:[#allocation3 + $0x4e8] sm:$0xff]
  %v7787 = vld [vmem:[#allocation3 + $0x4f0] sm:$0xff]
  %v7788 = vld [vmem:[#allocation3 + $0x4f8] sm:$0xff]
  %v7789 = vld [vmem:[#allocation3 + $0x500] sm:$0xff]
  %v7790 = vld [vmem:[#allocation3 + $0x508] sm:$0xff]
  %v7791 = vld [vmem:[#allocation3 + $0x510] sm:$0xff]
  %v7792 = vld [vmem:[#allocation3 + $0x518] sm:$0xff]
  %v7793 = vld [vmem:[#allocation3 + $0x520] sm:$0xff]
  %v7794 = vld [vmem:[#allocation3 + $0x528] sm:$0xff]
  %v7795 = vld [vmem:[#allocation3 + $0x530] sm:$0xff]
  %v7796 = vld [vmem:[#allocation3 + $0x538] sm:$0xff]
  %v7797 = vld [vmem:[#allocation3 + $0x540] sm:$0xff]
  %v7798 = vld [vmem:[#allocation3 + $0x548] sm:$0xff]
  %v7799 = vld [vmem:[#allocation3 + $0x550] sm:$0xff]
  %v7800 = vld [vmem:[#allocation3 + $0x558] sm:$0xff]
  %v7801 = vld [vmem:[#allocation3 + $0x560] sm:$0xff]
  %v7802 = vld [vmem:[#allocation3 + $0x568] sm:$0xff]
  %v7803 = vld [vmem:[#allocation3 + $0x570] sm:$0xff]
  %v7804 = vld [vmem:[#allocation3 + $0x578] sm:$0xff]
  %v7805 = vld [vmem:[#allocation3 + $0x580] sm:$0xff]
  %v7806 = vld [vmem:[#allocation3 + $0x588] sm:$0xff]
  %v7807 = vld [vmem:[#allocation3 + $0x590] sm:$0xff]
  %v7808 = vld [vmem:[#allocation3 + $0x598] sm:$0xff]
  %v7809 = vld [vmem:[#allocation3 + $0x5a0] sm:$0xff]
  %v7810 = vld [vmem:[#allocation3 + $0x5a8] sm:$0xff]
  %v7811 = vld [vmem:[#allocation3 + $0x5b0] sm:$0xff]
  %v7812 = vld [vmem:[#allocation3 + $0x5b8] sm:$0xff]
  %v7813 = vld [vmem:[#allocation3 + $0x5c0] sm:$0xff]
  %v7814 = vld [vmem:[#allocation3 + $0x5c8] sm:$0xff]
  %v7815 = vld [vmem:[#allocation3 + $0x5d0] sm:$0xff]
  %v7816 = vld [vmem:[#allocation3 + $0x5d8] sm:$0xff]
  %v7817 = vld [vmem:[#allocation3 + $0x5e0] sm:$0xff]
  %v7818 = vld [vmem:[#allocation3 + $0x5e8] sm:$0xff]
  %v7819 = vld [vmem:[#allocation3 + $0x5f0] sm:$0xff]
  %v7820 = vld [vmem:[#allocation3 + $0x5f8] sm:$0xff]
  %v7821 = vld [vmem:[#allocation3 + $0x600] sm:$0xff]
  %v7822 = vld [vmem:[#allocation3 + $0x608] sm:$0xff]
  %v7823 = vld [vmem:[#allocation3 + $0x610] sm:$0xff]
  %v7824 = vld [vmem:[#allocation3 + $0x618] sm:$0xff]
  %v7825 = vld [vmem:[#allocation3 + $0x620] sm:$0xff]
  %v7826 = vld [vmem:[#allocation3 + $0x628] sm:$0xff]
  %v7827 = vld [vmem:[#allocation3 + $0x630] sm:$0xff]
  %v7828 = vld [vmem:[#allocation3 + $0x638] sm:$0xff]
  %7829 = vmatprep.subr.mxu0 %v7660
  %7830 = vmatpush1.msra.mxu0 %v7659
  %7831 = vmatprep.subr.mxu0 %v7658
  %7832 = vmatpush1.msra.mxu0 %v7657
  %7833 = vmatprep.subr.mxu0 %v7656
  %7834 = vmatpush1.msra.mxu0 %v7655
  %7835 = vmatprep.subr.mxu0 %v7654
  %7836 = vmatpush1.msra.mxu0 %v7653
  %7837 = vmatprep.subr.mxu0 %v7652
  %7838 = vmatpush1.msra.mxu0 %v7651
  %7839 = vmatprep.subr.mxu0 %v7650
  %7840 = vmatpush1.msra.mxu0 %v7649
  %7841 = vmatprep.subr.mxu0 %v7648
  %7842 = vmatpush1.msra.mxu0 %v7647
  %7843 = vmatprep.subr.mxu0 %v7646
  %7844 = vmatpush1.msra.mxu0 %v7645
  %7845 = vmatprep.subr.mxu0 %v7644
  %7846 = vmatpush1.msra.mxu0 %v7643
  %7847 = vmatprep.subr.mxu0 %v7642
  %7848 = vmatpush1.msra.mxu0 %v7641
  %7849 = vmatprep.subr.mxu0 %v7640
  %7850 = vmatpush1.msra.mxu0 %v7639
  %7851 = vmatprep.subr.mxu0 %v7638
  %7852 = vmatpush1.msra.mxu0 %v7637
  %7853 = vmatprep.subr.mxu0 %v7636
  %7854 = vmatpush1.msra.mxu0 %v7635
  %7855 = vmatprep.subr.mxu0 %v7634
  %7856 = vmatpush1.msra.mxu0 %v7633
  %7857 = vmatprep.subr.mxu0 %v7632
  %7858 = vmatpush1.msra.mxu0 %v7631
  %7859 = vmatprep.subr.mxu0 %v7630
  %7860 = vmatpush1.msra.mxu0 %v7629
  %7861 = vmatprep.subr.mxu0 %v7692
  %7862 = vmatpush2.msra.mxu0 %v7691
  %7863 = vmatprep.subr.mxu0 %v7690
  %7864 = vmatpush2.msra.mxu0 %v7689
  %7865 = vmatprep.subr.mxu0 %v7688
  %7866 = vmatpush2.msra.mxu0 %v7687
  %7867 = vmatprep.subr.mxu0 %v7686
  %7868 = vmatpush2.msra.mxu0 %v7685
  %7869 = vmatprep.subr.mxu0 %v7684
  %7870 = vmatpush2.msra.mxu0 %v7683
  %7871 = vmatprep.subr.mxu0 %v7682
  %7872 = vmatpush2.msra.mxu0 %v7681
  %7873 = vmatprep.subr.mxu0 %v7680
  %7874 = vmatpush2.msra.mxu0 %v7679
  %7875 = vmatprep.subr.mxu0 %v7678
  %7876 = vmatpush2.msra.mxu0 %v7677
  %7877 = vmatprep.subr.mxu0 %v7676
  %7878 = vmatpush2.msra.mxu0 %v7675
  %7879 = vmatprep.subr.mxu0 %v7674
  %7880 = vmatpush2.msra.mxu0 %v7673
  %7881 = vmatprep.subr.mxu0 %v7672
  %7882 = vmatpush2.msra.mxu0 %v7671
  %7883 = vmatprep.subr.mxu0 %v7670
  %7884 = vmatpush2.msra.mxu0 %v7669
  %7885 = vmatprep.subr.mxu0 %v7668
  %7886 = vmatpush2.msra.mxu0 %v7667
  %7887 = vmatprep.subr.mxu0 %v7666
  %7888 = vmatpush2.msra.mxu0 %v7665
  %7889 = vmatprep.subr.mxu0 %v7664
  %7890 = vmatpush2.msra.mxu0 %v7663
  %7891 = vmatprep.subr.mxu0 %v7662
  %7892 = vmatpush2.msra.mxu0 %v7661
  %7893 = vmatprep.mubr.f32.mxu0 %v4306
  %7894 = vmatmul.mubr.f32.gmra.mxu0 %v4305
  %v7895 = vpop.f32.mrf.mxu0
  %v7896 = vadd.f32 %v5892, %v7895
  %v7897 = vpop.f32.mrf.mxu0
  %v7898 = vadd.f32 %v5892, %v7897
  %7899 = vmatprep.mubr.f32.mxu0 %v4313
  %7900 = vmatmul.mubr.f32.gmra.mxu0 %v4312
  %v7901 = vpop.f32.mrf.mxu0
  %v7902 = vadd.f32 %v5897, %v7901
  %v7903 = vpop.f32.mrf.mxu0
  %v7904 = vadd.f32 %v5897, %v7903
  %7905 = vmatprep.mubr.f32.mxu0 %v4320
  %7906 = vmatmul.mubr.f32.gmra.mxu0 %v4319
  %v7907 = vpop.f32.mrf.mxu0
  %v7908 = vadd.f32 %v5902, %v7907
  %v7909 = vpop.f32.mrf.mxu0
  %v7910 = vadd.f32 %v5902, %v7909
  %7911 = vmatprep.mubr.f32.mxu0 %v4327
  %7912 = vmatmul.mubr.f32.gmra.mxu0 %v4326
  %v7913 = vpop.f32.mrf.mxu0
  %v7914 = vadd.f32 %v5907, %v7913
  %v7915 = vpop.f32.mrf.mxu0
  %v7916 = vadd.f32 %v5907, %v7915
  %7917 = vdwg.mxu0
  %7918 = vmatprep.subr.mxu0 %v7724
  %7919 = vmatpush1.msra.mxu0 %v7723
  %7920 = vmatprep.subr.mxu0 %v7722
  %7921 = vmatpush1.msra.mxu0 %v7721
  %7922 = vmatprep.subr.mxu0 %v7720
  %7923 = vmatpush1.msra.mxu0 %v7719
  %7924 = vmatprep.subr.mxu0 %v7718
  %7925 = vmatpush1.msra.mxu0 %v7717
  %7926 = vmatprep.subr.mxu0 %v7716
  %7927 = vmatpush1.msra.mxu0 %v7715
  %7928 = vmatprep.subr.mxu0 %v7714
  %7929 = vmatpush1.msra.mxu0 %v7713
  %7930 = vmatprep.subr.mxu0 %v7712
  %7931 = vmatpush1.msra.mxu0 %v7711
  %7932 = vmatprep.subr.mxu0 %v7710
  %7933 = vmatpush1.msra.mxu0 %v7709
  %7934 = vmatprep.subr.mxu0 %v7708
  %7935 = vmatpush1.msra.mxu0 %v7707
  %7936 = vmatprep.subr.mxu0 %v7706
  %7937 = vmatpush1.msra.mxu0 %v7705
  %7938 = vmatprep.subr.mxu0 %v7704
  %7939 = vmatpush1.msra.mxu0 %v7703
  %7940 = vmatprep.subr.mxu0 %v7702
  %7941 = vmatpush1.msra.mxu0 %v7701
  %7942 = vmatprep.subr.mxu0 %v7700
  %7943 = vmatpush1.msra.mxu0 %v7699
  %7944 = vmatprep.subr.mxu0 %v7698
  %7945 = vmatpush1.msra.mxu0 %v7697
  %7946 = vmatprep.subr.mxu0 %v7696
  %7947 = vmatpush1.msra.mxu0 %v7695
  %7948 = vmatprep.subr.mxu0 %v7694
  %7949 = vmatpush1.msra.mxu0 %v7693
  %7950 = vmatprep.subr.mxu0 %v7756
  %7951 = vmatpush2.msra.mxu0 %v7755
  %7952 = vmatprep.subr.mxu0 %v7754
  %7953 = vmatpush2.msra.mxu0 %v7753
  %7954 = vmatprep.subr.mxu0 %v7752
  %7955 = vmatpush2.msra.mxu0 %v7751
  %7956 = vmatprep.subr.mxu0 %v7750
  %7957 = vmatpush2.msra.mxu0 %v7749
  %7958 = vmatprep.subr.mxu0 %v7748
  %7959 = vmatpush2.msra.mxu0 %v7747
  %7960 = vmatprep.subr.mxu0 %v7746
  %7961 = vmatpush2.msra.mxu0 %v7745
  %7962 = vmatprep.subr.mxu0 %v7744
  %7963 = vmatpush2.msra.mxu0 %v7743
  %7964 = vmatprep.subr.mxu0 %v7742
  %7965 = vmatpush2.msra.mxu0 %v7741
  %7966 = vmatprep.subr.mxu0 %v7740
  %7967 = vmatpush2.msra.mxu0 %v7739
  %7968 = vmatprep.subr.mxu0 %v7738
  %7969 = vmatpush2.msra.mxu0 %v7737
  %7970 = vmatprep.subr.mxu0 %v7736
  %7971 = vmatpush2.msra.mxu0 %v7735
  %7972 = vmatprep.subr.mxu0 %v7734
  %7973 = vmatpush2.msra.mxu0 %v7733
  %7974 = vmatprep.subr.mxu0 %v7732
  %7975 = vmatpush2.msra.mxu0 %v7731
  %7976 = vmatprep.subr.mxu0 %v7730
  %7977 = vmatpush2.msra.mxu0 %v7729
  %7978 = vmatprep.subr.mxu0 %v7728
  %7979 = vmatpush2.msra.mxu0 %v7727
  %7980 = vmatprep.subr.mxu0 %v7726
  %7981 = vmatpush2.msra.mxu0 %v7725
  %7982 = vmatprep.mubr.f32.mxu0 %v4308
  %7983 = vmatmul.mubr.f32.gmra.mxu0 %v4307
  %v7984 = vpop.f32.mrf.mxu0
  %v7985 = vadd.f32 %v7896, %v7984
  %v7986 = vpop.f32.mrf.mxu0
  %v7987 = vadd.f32 %v7898, %v7986
  %7988 = vmatprep.mubr.f32.mxu0 %v4315
  %7989 = vmatmul.mubr.f32.gmra.mxu0 %v4314
  %v7990 = vpop.f32.mrf.mxu0
  %v7991 = vadd.f32 %v7902, %v7990
  %v7992 = vpop.f32.mrf.mxu0
  %v7993 = vadd.f32 %v7904, %v7992
  %7994 = vmatprep.mubr.f32.mxu0 %v4322
  %7995 = vmatmul.mubr.f32.gmra.mxu0 %v4321
  %v7996 = vpop.f32.mrf.mxu0
  %v7997 = vadd.f32 %v7908, %v7996
  %v7998 = vpop.f32.mrf.mxu0
  %v7999 = vadd.f32 %v7910, %v7998
  %8000 = vmatprep.mubr.f32.mxu0 %v4329
  %8001 = vmatmul.mubr.f32.gmra.mxu0 %v4328
  %v8002 = vpop.f32.mrf.mxu0
  %v8003 = vadd.f32 %v7914, %v8002
  %v8004 = vpop.f32.mrf.mxu0
  %v8005 = vadd.f32 %v7916, %v8004
  %8006 = vdwg.mxu0
  %8007 = vmatprep.subr.mxu0 %v7788
  %8008 = vmatpush1.msra.mxu0 %v7787
  %8009 = vmatprep.subr.mxu0 %v7786
  %8010 = vmatpush1.msra.mxu0 %v7785
  %8011 = vmatprep.subr.mxu0 %v7784
  %8012 = vmatpush1.msra.mxu0 %v7783
  %8013 = vmatprep.subr.mxu0 %v7782
  %8014 = vmatpush1.msra.mxu0 %v7781
  %8015 = vmatprep.subr.mxu0 %v7780
  %8016 = vmatpush1.msra.mxu0 %v7779
  %8017 = vmatprep.subr.mxu0 %v7778
  %8018 = vmatpush1.msra.mxu0 %v7777
  %8019 = vmatprep.subr.mxu0 %v7776
  %8020 = vmatpush1.msra.mxu0 %v7775
  %8021 = vmatprep.subr.mxu0 %v7774
  %8022 = vmatpush1.msra.mxu0 %v7773
  %8023 = vmatprep.subr.mxu0 %v7772
  %8024 = vmatpush1.msra.mxu0 %v7771
  %8025 = vmatprep.subr.mxu0 %v7770
  %8026 = vmatpush1.msra.mxu0 %v7769
  %8027 = vmatprep.subr.mxu0 %v7768
  %8028 = vmatpush1.msra.mxu0 %v7767
  %8029 = vmatprep.subr.mxu0 %v7766
  %8030 = vmatpush1.msra.mxu0 %v7765
  %8031 = vmatprep.subr.mxu0 %v7764
  %8032 = vmatpush1.msra.mxu0 %v7763
  %8033 = vmatprep.subr.mxu0 %v7762
  %8034 = vmatpush1.msra.mxu0 %v7761
  %8035 = vmatprep.subr.mxu0 %v7760
  %8036 = vmatpush1.msra.mxu0 %v7759
  %8037 = vmatprep.subr.mxu0 %v7758
  %8038 = vmatpush1.msra.mxu0 %v7757
  %8039 = vmatprep.subr.mxu0 %v7820
  %8040 = vmatpush2.msra.mxu0 %v7819
  %8041 = vmatprep.subr.mxu0 %v7818
  %8042 = vmatpush2.msra.mxu0 %v7817
  %8043 = vmatprep.subr.mxu0 %v7816
  %8044 = vmatpush2.msra.mxu0 %v7815
  %8045 = vmatprep.subr.mxu0 %v7814
  %8046 = vmatpush2.msra.mxu0 %v7813
  %8047 = vmatprep.subr.mxu0 %v7812
  %8048 = vmatpush2.msra.mxu0 %v7811
  %8049 = vmatprep.subr.mxu0 %v7810
  %8050 = vmatpush2.msra.mxu0 %v7809
  %8051 = vmatprep.subr.mxu0 %v7808
  %8052 = vmatpush2.msra.mxu0 %v7807
  %8053 = vmatprep.subr.mxu0 %v7806
  %8054 = vmatpush2.msra.mxu0 %v7805
  %8055 = vmatprep.subr.mxu0 %v7804
  %8056 = vmatpush2.msra.mxu0 %v7803
  %8057 = vmatprep.subr.mxu0 %v7802
  %8058 = vmatpush2.msra.mxu0 %v7801
  %8059 = vmatprep.subr.mxu0 %v7800
  %8060 = vmatpush2.msra.mxu0 %v7799
  %8061 = vmatprep.subr.mxu0 %v7798
  %8062 = vmatpush2.msra.mxu0 %v7797
  %8063 = vmatprep.subr.mxu0 %v7796
  %8064 = vmatpush2.msra.mxu0 %v7795
  %8065 = vmatprep.subr.mxu0 %v7794
  %8066 = vmatpush2.msra.mxu0 %v7793
  %8067 = vmatprep.subr.mxu0 %v7792
  %8068 = vmatpush2.msra.mxu0 %v7791
  %8069 = vmatprep.subr.mxu0 %v7790
  %8070 = vmatpush2.msra.mxu0 %v7789
  %8071 = vmatprep.mubr.f32.mxu0 %v4310
  %8072 = vmatmul.mubr.f32.gmra.mxu0 %v4309
  %v8073 = vpop.f32.mrf.mxu0
  %v8074 = vadd.f32 %v7985, %v8073
  %v8075 = vpop.f32.mrf.mxu0
  %v8076 = vadd.f32 %v7987, %v8075
  %8077 = vmatprep.mubr.f32.mxu0 %v4317
  %8078 = vmatmul.mubr.f32.gmra.mxu0 %v4316
  %v8079 = vpop.f32.mrf.mxu0
  %v8080 = vadd.f32 %v7991, %v8079
  %v8081 = vpop.f32.mrf.mxu0
  %v8082 = vadd.f32 %v7993, %v8081
  %8083 = vmatprep.mubr.f32.mxu0 %v4324
  %8084 = vmatmul.mubr.f32.gmra.mxu0 %v4323
  %v8085 = vpop.f32.mrf.mxu0
  %v8086 = vadd.f32 %v7997, %v8085
  %v8087 = vpop.f32.mrf.mxu0
  %v8088 = vadd.f32 %v7999, %v8087
  %8089 = vmatprep.mubr.f32.mxu0 %v4331
  %8090 = vmatmul.mubr.f32.gmra.mxu0 %v4330
  %v8091 = vpop.f32.mrf.mxu0
  %v8092 = vadd.f32 %v8003, %v8091
  %v8093 = vpop.f32.mrf.mxu0
  %v8094 = vadd.f32 %v8005, %v8093
  %8095 = vdwg.mxu0
  %8096 = vmatprep.subr.mxu0 0.0
  %8097 = vmatpush1.msra.mxu0 0.0
  %8098 = vmatprep.subr.mxu0 0.0
  %8099 = vmatpush1.msra.mxu0 0.0
  %8100 = vmatprep.subr.mxu0 0.0
  %8101 = vmatpush1.msra.mxu0 0.0
  %8102 = vmatprep.subr.mxu0 0.0
  %8103 = vmatpush1.msra.mxu0 0.0
  %8104 = vmatprep.subr.mxu0 0.0
  %8105 = vmatpush1.msra.mxu0 0.0
  %8106 = vmatprep.subr.mxu0 0.0
  %8107 = vmatpush1.msra.mxu0 0.0
  %8108 = vmatprep.subr.mxu0 0.0
  %8109 = vmatpush1.msra.mxu0 0.0
  %8110 = vmatprep.subr.mxu0 0.0
  %8111 = vmatpush1.msra.mxu0 0.0
  %8112 = vmatprep.subr.mxu0 0.0
  %8113 = vmatpush1.msra.mxu0 0.0
  %8114 = vmatprep.subr.mxu0 0.0
  %8115 = vmatpush1.msra.mxu0 0.0
  %8116 = vmatprep.subr.mxu0 0.0
  %8117 = vmatpush1.msra.mxu0 0.0
  %8118 = vmatprep.subr.mxu0 0.0
  %8119 = vmatpush1.msra.mxu0 0.0
  %8120 = vmatprep.subr.mxu0 %v7828
  %8121 = vmatpush1.msra.mxu0 %v7827
  %8122 = vmatprep.subr.mxu0 %v7826
  %8123 = vmatpush1.msra.mxu0 %v7825
  %8124 = vmatprep.subr.mxu0 %v7824
  %8125 = vmatpush1.msra.mxu0 %v7823
  %8126 = vmatprep.subr.mxu0 %v7822
  %8127 = vmatpush1.msra.mxu0 %v7821
  %8128 = vmatprep.subr.mxu0 0.0
  %8129 = vmatpush2.msra.mxu0 0.0
  %8130 = vmatprep.subr.mxu0 0.0
  %8131 = vmatpush2.msra.mxu0 0.0
  %8132 = vmatprep.subr.mxu0 0.0
  %8133 = vmatpush2.msra.mxu0 0.0
  %8134 = vmatprep.subr.mxu0 0.0
  %8135 = vmatpush2.msra.mxu0 0.0
  %8136 = vmatprep.subr.mxu0 0.0
  %8137 = vmatpush2.msra.mxu0 0.0
  %8138 = vmatprep.subr.mxu0 0.0
  %8139 = vmatpush2.msra.mxu0 0.0
  %8140 = vmatprep.subr.mxu0 0.0
  %8141 = vmatpush2.msra.mxu0 0.0
  %8142 = vmatprep.subr.mxu0 0.0
  %8143 = vmatpush2.msra.mxu0 0.0
  %8144 = vmatprep.subr.mxu0 0.0
  %8145 = vmatpush2.msra.mxu0 0.0
  %8146 = vmatprep.subr.mxu0 0.0
  %8147 = vmatpush2.msra.mxu0 0.0
  %8148 = vmatprep.subr.mxu0 0.0
  %8149 = vmatpush2.msra.mxu0 0.0
  %8150 = vmatprep.subr.mxu0 0.0
  %8151 = vmatpush2.msra.mxu0 0.0
  %8152 = vmatprep.subr.mxu0 0.0
  %8153 = vmatpush2.msra.mxu0 0.0
  %8154 = vmatprep.subr.mxu0 0.0
  %8155 = vmatpush2.msra.mxu0 0.0
  %8156 = vmatprep.subr.mxu0 0.0
  %8157 = vmatpush2.msra.mxu0 0.0
  %8158 = vmatprep.subr.mxu0 0.0
  %8159 = vmatpush2.msra.mxu0 0.0
  %8160 = vmatprep.mubr.f32.mxu0 0.0
  %8161 = vmatmul.mubr.f32.gmra.mxu0 %v5910
  %v8162 = vpop.f32.mrf.mxu0
  %v8163 = vadd.f32 %v8074, %v8162
  %v8164 = vpop.f32.mrf.mxu0
  %v8165 = vadd.f32 %v8076, %v8164
  %8166 = vmatprep.mubr.f32.mxu0 0.0
  %8167 = vmatmul.mubr.f32.gmra.mxu0 %v5913
  %v8168 = vpop.f32.mrf.mxu0
  %v8169 = vadd.f32 %v8080, %v8168
  %v8170 = vpop.f32.mrf.mxu0
  %v8171 = vadd.f32 %v8082, %v8170
  %8172 = vmatprep.mubr.f32.mxu0 0.0
  %8173 = vmatmul.mubr.f32.gmra.mxu0 %v5916
  %v8174 = vpop.f32.mrf.mxu0
  %v8175 = vadd.f32 %v8086, %v8174
  %v8176 = vpop.f32.mrf.mxu0
  %v8177 = vadd.f32 %v8088, %v8176
  %8178 = vmatprep.mubr.f32.mxu0 0.0
  %8179 = vmatmul.mubr.f32.gmra.mxu0 %v5919
  %v8180 = vpop.f32.mrf.mxu0
  %v8181 = vadd.f32 %v8092, %v8180
  %v8182 = vpop.f32.mrf.mxu0
  %v8183 = vadd.f32 %v8094, %v8182
  %8184 = vdwg.mxu0
  %v8185 = vadd.f32 %v6255, %v6257
  %8186 = vadd.xlane.f32.xlu0 %v8185
  %v8187 = vpop.xlane.xlu0 %8186
  %v8188 = vadd.f32 %v6261, %v6263
  %8189 = vadd.xlane.f32.xlu0 %v8188
  %v8190 = vpop.xlane.xlu0 %8189
  %v8191 = vadd.f32 %v6267, %v6269
  %8192 = vadd.xlane.f32.xlu0 %v8191
  %v8193 = vpop.xlane.xlu0 %8192
  %v8194 = vadd.f32 %v6273, %v6275
  %8195 = vadd.xlane.f32.xlu0 %v8194
  %v8196 = vpop.xlane.xlu0 %8195
  %v8197 = vadd.f32 %v8187, 0.0
  %v8198 = vadd.f32 %v8190, 0.0
  %v8199 = vadd.f32 %v8193, 0.0
  %v8200 = vadd.f32 %v8196, 0.0
  %v8201 = vadd.f32 %v8163, %v8165
  %8202 = vadd.xlane.f32.xlu0 %v8201
  %v8203 = vpop.xlane.xlu0 %8202
  %v8204 = vadd.f32 %v8169, %v8171
  %8205 = vadd.xlane.f32.xlu0 %v8204
  %v8206 = vpop.xlane.xlu0 %8205
  %v8207 = vadd.f32 %v8175, %v8177
  %8208 = vadd.xlane.f32.xlu0 %v8207
  %v8209 = vpop.xlane.xlu0 %8208
  %v8210 = vadd.f32 %v8181, %v8183
  %8211 = vadd.xlane.f32.xlu0 %v8210
  %v8212 = vpop.xlane.xlu0 %8211
  %v8213 = vadd.f32 %v8197, %v8203
  %v8214 = vadd.f32 %v8198, %v8206
  %v8215 = vadd.f32 %v8199, %v8209
  %v8216 = vadd.f32 %v8200, %v8212
  %v8217 = vmul.f32 %v6255, %v6255
  %v8218 = vmul.f32 %v6257, %v6257
  %v8219 = vmul.f32 %v6261, %v6261
  %v8220 = vmul.f32 %v6263, %v6263
  %v8221 = vmul.f32 %v6267, %v6267
  %v8222 = vmul.f32 %v6269, %v6269
  %v8223 = vmul.f32 %v6273, %v6273
  %v8224 = vmul.f32 %v6275, %v6275
  %v8225 = vadd.f32 %v8217, %v8218
  %8226 = vadd.xlane.f32.xlu0 %v8225
  %v8227 = vpop.xlane.xlu0 %8226
  %v8228 = vadd.f32 %v8219, %v8220
  %8229 = vadd.xlane.f32.xlu0 %v8228
  %v8230 = vpop.xlane.xlu0 %8229
  %v8231 = vadd.f32 %v8221, %v8222
  %8232 = vadd.xlane.f32.xlu0 %v8231
  %v8233 = vpop.xlane.xlu0 %8232
  %v8234 = vadd.f32 %v8223, %v8224
  %8235 = vadd.xlane.f32.xlu0 %v8234
  %v8236 = vpop.xlane.xlu0 %8235
  %v8237 = vadd.f32 %v8227, 0.0
  %v8238 = vadd.f32 %v8230, 0.0
  %v8239 = vadd.f32 %v8233, 0.0
  %v8240 = vadd.f32 %v8236, 0.0
  %v8241 = vmul.f32 %v8163, %v8163
  %v8242 = vmul.f32 %v8165, %v8165
  %v8243 = vmul.f32 %v8169, %v8169
  %v8244 = vmul.f32 %v8171, %v8171
  %v8245 = vmul.f32 %v8175, %v8175
  %v8246 = vmul.f32 %v8177, %v8177
  %v8247 = vmul.f32 %v8181, %v8181
  %v8248 = vmul.f32 %v8183, %v8183
  %v8249 = vadd.f32 %v8241, %v8242
  %8250 = vadd.xlane.f32.xlu0 %v8249
  %v8251 = vpop.xlane.xlu0 %8250
  %v8252 = vadd.f32 %v8243, %v8244
  %8253 = vadd.xlane.f32.xlu0 %v8252
  %v8254 = vpop.xlane.xlu0 %8253
  %v8255 = vadd.f32 %v8245, %v8246
  %8256 = vadd.xlane.f32.xlu0 %v8255
  %v8257 = vpop.xlane.xlu0 %8256
  %v8258 = vadd.f32 %v8247, %v8248
  %8259 = vadd.xlane.f32.xlu0 %v8258
  %v8260 = vpop.xlane.xlu0 %8259
  %v8261 = vadd.f32 %v8237, %v8251
  %v8262 = vadd.f32 %v8238, %v8254
  %v8263 = vadd.f32 %v8239, %v8257
  %v8264 = vadd.f32 %v8240, %v8260
  %v8265 = vmul.f32 %v8213, 0.001953125
  %v8266 = vmul.f32 %v8214, 0.001953125
  %v8267 = vmul.f32 %v8215, 0.001953125
  %v8268 = vmul.f32 %v8216, 0.001953125
  %v8269 = vmul.f32 %v8261, 0.001953125
  %v8270 = vmul.f32 %v8262, 0.001953125
  %v8271 = vmul.f32 %v8263, 0.001953125
  %v8272 = vmul.f32 %v8264, 0.001953125
  %v8273 = vmul.f32 %v8265, %v8265
  %v8274 = vmul.f32 %v8266, %v8266
  %v8275 = vmul.f32 %v8267, %v8267
  %v8276 = vmul.f32 %v8268, %v8268
  %v8277 = vsub.f32 %v8269, %v8273
  %v8278 = vsub.f32 %v8270, %v8274
  %v8279 = vsub.f32 %v8271, %v8275
  %v8280 = vsub.f32 %v8272, %v8276
  %v8281 = vld [vmem:[%s7] sm:$0xff]
  %v8282 = vld [vmem:[%s7 + $0x8] sm:$0xff]
  %v8283 = vld [vmem:[%s7 + $0x10] sm:$0xff]
  %v8284 = vld [vmem:[%s7 + $0x18] sm:$0xff]
  %v8285 = vadd.f32 %v8277, 1e-05
  %v8286 = vadd.f32 %v8278, 1e-05
  %v8287 = vadd.f32 %v8279, 1e-05
  %v8288 = vadd.f32 %v8280, 1e-05
  %v8289 = vrsqrt.pop %v8285
  %v8290 = vrsqrt.pop %v8286
  %v8291 = vrsqrt.pop %v8287
  %v8292 = vrsqrt.pop %v8288
  %v8293 = vmul.f32 %v8281, %v8289
  %v8294 = vmul.f32 %v8282, %v8290
  %v8295 = vmul.f32 %v8283, %v8291
  %v8296 = vmul.f32 %v8284, %v8292
  %v8297 = vld [vmem:[%s8] sm:$0xff]
  %v8298 = vld [vmem:[%s8 + $0x8] sm:$0xff]
  %v8299 = vld [vmem:[%s8 + $0x10] sm:$0xff]
  %v8300 = vld [vmem:[%s8 + $0x18] sm:$0xff]
  %v8301 = vmul.f32 %v8265, %v8293
  %v8302 = vmul.f32 %v8266, %v8294
  %v8303 = vmul.f32 %v8267, %v8295
  %v8304 = vmul.f32 %v8268, %v8296
  %v8305 = vsub.f32 %v8297, %v8301
  %v8306 = vsub.f32 %v8298, %v8302
  %v8307 = vsub.f32 %v8299, %v8303
  %v8308 = vsub.f32 %v8300, %v8304
  %8310 = vset.pattern.permute.xlu0 0
  %8311 = vperm.xlu0 %8310, %v8293
  %v8312 = vpop.permute.xlu0 %8311
  %8315 = vset.pattern.permute.xlu0 0
  %8316 = vperm.xlu0 %8315, %v8294
  %v8317 = vpop.permute.xlu0 %8316
  %8320 = vset.pattern.permute.xlu0 0
  %8321 = vperm.xlu0 %8320, %v8295
  %v8322 = vpop.permute.xlu0 %8321
  %8325 = vset.pattern.permute.xlu0 0
  %8326 = vperm.xlu0 %8325, %v8296
  %v8327 = vpop.permute.xlu0 %8326
  %v8329 = vmul.f32 %v6255, %v8312
  %v8330 = vmul.f32 %v6257, %v8312
  %v8331 = vmul.f32 %v6261, %v8317
  %v8332 = vmul.f32 %v6263, %v8317
  %v8333 = vmul.f32 %v6267, %v8322
  %v8334 = vmul.f32 %v6269, %v8322
  %v8335 = vmul.f32 %v6273, %v8327
  %v8336 = vmul.f32 %v6275, %v8327
  %8338 = vset.pattern.permute.xlu0 0
  %8339 = vperm.xlu0 %8338, %v8305
  %v8340 = vpop.permute.xlu0 %8339
  %8343 = vset.pattern.permute.xlu0 0
  %8344 = vperm.xlu0 %8343, %v8306
  %v8345 = vpop.permute.xlu0 %8344
  %8348 = vset.pattern.permute.xlu0 0
  %8349 = vperm.xlu0 %8348, %v8307
  %v8350 = vpop.permute.xlu0 %8349
  %8353 = vset.pattern.permute.xlu0 0
  %8354 = vperm.xlu0 %8353, %v8308
  %v8355 = vpop.permute.xlu0 %8354
  %v8357 = vadd.f32 %v8329, %v8340
  %v8358 = vadd.f32 %v8330, %v8340
  %v8359 = vadd.f32 %v8331, %v8345
  %v8360 = vadd.f32 %v8332, %v8345
  %v8361 = vadd.f32 %v8333, %v8350
  %v8362 = vadd.f32 %v8334, %v8350
  %v8363 = vadd.f32 %v8335, %v8355
  %v8364 = vadd.f32 %v8336, %v8355
  %v8365 = vmul.f32 %v8163, %v8312
  %v8366 = vmul.f32 %v8165, %v8312
  %v8367 = vmul.f32 %v8169, %v8317
  %v8368 = vmul.f32 %v8171, %v8317
  %v8369 = vmul.f32 %v8175, %v8322
  %v8370 = vmul.f32 %v8177, %v8322
  %v8371 = vmul.f32 %v8181, %v8327
  %v8372 = vmul.f32 %v8183, %v8327
  %v8373 = vadd.f32 %v8365, %v8340
  %v8374 = vadd.f32 %v8366, %v8340
  %v8375 = vadd.f32 %v8367, %v8345
  %v8376 = vadd.f32 %v8368, %v8345
  %v8377 = vadd.f32 %v8369, %v8350
  %v8378 = vadd.f32 %v8370, %v8350
  %v8379 = vadd.f32 %v8371, %v8355
  %v8380 = vadd.f32 %v8372, %v8355
  %v8381 = vadd.f32 %v8357, %v91
  %v8382 = vadd.f32 %v8358, %v92
  %v8383 = vadd.f32 %v8359, %v93
  %v8384 = vadd.f32 %v8360, %v94
  %v8385 = vadd.f32 %v8361, %v95
  %v8386 = vadd.f32 %v8362, %v96
  %v8387 = vadd.f32 %v8363, %v97
  %v8388 = vadd.f32 %v8364, %v98
  %v8389 = vmax.f32 %v8381, 0.0
  %v8390 = vmax.f32 %v8382, 0.0
  %v8391 = vmax.f32 %v8383, 0.0
  %v8392 = vmax.f32 %v8384, 0.0
  %v8393 = vmax.f32 %v8385, 0.0
  %v8394 = vmax.f32 %v8386, 0.0
  %v8395 = vmax.f32 %v8387, 0.0
  %v8396 = vmax.f32 %v8388, 0.0
  %8397 = vst [vmem:[%s9] sm:$0xff] %v8389
  %8398 = vst [vmem:[%s9 + $0x8] sm:$0xff] %v8390
  %8399 = vst [vmem:[%s9 + $0x10] sm:$0xff] %v8391
  %8400 = vst [vmem:[%s9 + $0x18] sm:$0xff] %v8392
  %8401 = vst [vmem:[%s9 + $0x20] sm:$0xff] %v8393
  %8402 = vst [vmem:[%s9 + $0x28] sm:$0xff] %v8394
  %8403 = vst [vmem:[%s9 + $0x30] sm:$0xff] %v8395
  %8404 = vst [vmem:[%s9 + $0x38] sm:$0xff] %v8396
  %v8405 = vadd.f32 %v8373, %v100
  %v8406 = vadd.f32 %v8374, %v101
  %v8407 = vadd.f32 %v8375, %v102
  %v8408 = vadd.f32 %v8376, %v103
  %v8409 = vadd.f32 %v8377, %v104
  %v8410 = vadd.f32 %v8378, %v105
  %v8411 = vadd.f32 %v8379, %v106
  %v8412 = vadd.f32 %v8380, %v107
  %v8413 = vmax.f32 %v8405, 0.0
  %v8414 = vmax.f32 %v8406, 0.0
  %v8415 = vmax.f32 %v8407, 0.0
  %v8416 = vmax.f32 %v8408, 0.0
  %v8417 = vmax.f32 %v8409, 0.0
  %v8418 = vmax.f32 %v8410, 0.0
  %v8419 = vmax.f32 %v8411, 0.0
  %v8420 = vmax.f32 %v8412, 0.0
  %s8421 = scalar_lea.vmem %s9, 64
  %8422 = vst [vmem:[%s8421] sm:$0xff] %v8413
  %8423 = vst [vmem:[%s8421 + $0x8] sm:$0xff] %v8414
  %8424 = vst [vmem:[%s8421 + $0x10] sm:$0xff] %v8415
  %8425 = vst [vmem:[%s8421 + $0x18] sm:$0xff] %v8416
  %8426 = vst [vmem:[%s8421 + $0x20] sm:$0xff] %v8417
  %8427 = vst [vmem:[%s8421 + $0x28] sm:$0xff] %v8418
  %8428 = vst [vmem:[%s8421 + $0x30] sm:$0xff] %v8419
  %8429 = vst [vmem:[%s8421 + $0x38] sm:$0xff] %v8420
  // Predicated region
  $region38: #{resblock_forward.1} parent=0 // pred_check
    _
  $region39: #{resblock_forward.1} parent=0 // pred_check_branch
    %8431 = sbr.rel (0) target = $region41
  $region40: #{resblock_forward.1} parent=0 // pred_region
    _
  $region41: #{resblock_forward.1} parent=0 // pred_fallthru
    _
  // Predicated region
  $region42: #{resblock_forward.1} parent=0 // pred_check
    _
  $region43: #{resblock_forward.1} parent=0 // pred_check_branch
    %8433 = sbr.rel (0) target = $region45
  $region44: #{resblock_forward.1} parent=0 // pred_region
    _
  $region45: #{resblock_forward.1} parent=0 // pred_fallthru
    _

</llo_original>
